<compile_context>
chip_gen: v6e
topology: v6e:2x2x1
jax: 0.10.0
libtpu: 0.0.40
codegen_flags: <defaults>
</compile_context>

<pallas_src>
import math
from functools import partial

import jax
import jax.numpy as jnp
from jax import lax
from jax.experimental import pallas as pl
from jax.experimental.pallas import tpu as pltpu


LAYER_KEYS = ("wqkv", "bqkv", "wo", "bo", "ln1_g", "ln1_b",
              "w1", "b1", "w2", "b2", "ln2_g", "ln2_b")
_NEG_INF = -1e30


# -------------------------------- kernel body ------------------------------- #

def _encoder_block(x, prm, mask_bias, oh_ref, *, q, v, h):
    """One full encoder layer on a batch-folded slab x:[B*S, D] (VMEM values)."""
    (wqkv, bqkv, wo, bo, ln1g, ln1b, w1, b1, w2, b2, ln2g, ln2b) = prm
    n_rows = x.shape[0]
    scale = 1.0 / math.sqrt(q)
    qh_tot = q * h

    # fused QKV projection: one lane-dense [B*S, (2q+v)*h] MXU push
    qkv = jnp.dot(x, wqkv, preferred_element_type=jnp.float32) + bqkv

    # per-head attention over the folded slab; cross-batch pairs are removed by the
    # block-diagonal additive mask (exact: exp(-1e30 - m) == 0).
    for hh in range(h):
        qs = qkv[:, hh * q:(hh + 1) * q]
        ks = qkv[:, qh_tot + hh * q: qh_tot + (hh + 1) * q]
        vs = qkv[:, 2 * qh_tot + hh * v: 2 * qh_tot + (hh + 1) * v]
        s = lax.dot_general(qs, ks, (((1,), (1,)), ((), ())),
                            preferred_element_type=jnp.float32) * scale + mask_bias
        m = jnp.max(s, axis=-1, keepdims=True)
        e = jnp.exp(s - m)
        p = e / jnp.sum(e, axis=-1, keepdims=True)
        # park this head's PV result in its lane slot so the output projection
        # below is a single [B*S, v*h] @ [v*h, D] matmul.
        oh_ref[0:n_rows, hh * v:(hh + 1) * v] = jnp.dot(
            p, vs, preferred_element_type=jnp.float32)
    attn = jnp.dot(oh_ref[0:n_rows, :], wo,
                   preferred_element_type=jnp.float32) + bo

    # residual + LayerNorm 1
    x1 = x + attn
    mu = jnp.mean(x1, axis=-1, keepdims=True)
    var = jnp.mean(jnp.square(x1 - mu), axis=-1, keepdims=True)
    x1 = (x1 - mu) * lax.rsqrt(var + 1e-5) * ln1g + ln1b

    # FFN (Linear -> ReLU -> Linear); intermediate never leaves VMEM
    ff = jnp.dot(x1, w1, preferred_element_type=jnp.float32) + b1
    ff = jnp.maximum(ff, 0.0)
    ff = jnp.dot(ff, w2, preferred_element_type=jnp.float32) + b2

    # residual + LayerNorm 2
    x2 = x1 + ff
    mu2 = jnp.mean(x2, axis=-1, keepdims=True)
    var2 = jnp.mean(jnp.square(x2 - mu2), axis=-1, keepdims=True)
    return (x2 - mu2) * lax.rsqrt(var2 + 1e-5) * ln2g + ln2b


def _gtn_kernel(*refs, q, v, h, N, B, S1, S2, D, use_pe):
    n_in = 2 + (1 if use_pe else 0) + 2 + 4 + 12 * 2 * N + 3
    in_refs = refs[:n_in]
    o_ref = refs[n_in]
    oh_ref, f1_ref, f2_ref = refs[n_in + 1:]

    pos = [0]

    def take(k):
        r = in_refs[pos[0]:pos[0] + k]
        pos[0] += k
        return r

    x1_ref, x2_ref = take(2)
    pe_ref = take(1)[0] if use_pe else None
    mask1_ref, mask2_ref = take(2)
    ecw_ref, ecb_ref, eiw_ref, eib_ref = take(4)
    layer_refs = [take(12) for _ in range(2 * N)]
    wh1_ref, wh2_ref, hb_ref = take(3)

    # ------------------ step-wise branch (seq len = d_input) ----------------- #
    e1 = jnp.dot(x1_ref[...], ecw_ref[...],
                 preferred_element_type=jnp.float32) + ecb_ref[...]
    if use_pe:
        e1 = e1 + pe_ref[...]                 # PE add fused; pre-tiled over batch
    mask1 = mask1_ref[...]
    for li in range(N):
        prm = [r[...] for r in layer_refs[li]]
        e1 = _encoder_block(e1, prm, mask1, oh_ref, q=q, v=v, h=h)

    # ---------------- channel-wise branch (seq len = d_channel) -------------- #
    e2 = jnp.dot(x2_ref[...], eiw_ref[...],
                 preferred_element_type=jnp.float32) + eib_ref[...]
    mask2 = mask2_ref[...]
    for li in range(N):
        prm = [r[...] for r in layer_refs[N + li]]
        e2 = _encoder_block(e2, prm, mask2, oh_ref, q=q, v=v, h=h)

    # ------------------- head: gate softmax + output linear ------------------ #
    # Flatten [B*S, D] -> [B, S*D] through VMEM scratch (static sub-tile stores),
    # then one dot per branch against the init-time-concatenated [gate | out] weight.
    for b in range(B):
        for s in range(S1):
            f1_ref[b:b + 1, s * D:(s + 1) * D] = e1[b * S1 + s: b * S1 + s + 1, :]
        for s in range(S2):
            f2_ref[b:b + 1, s * D:(s + 1) * D] = e2[b * S2 + s: b * S2 + s + 1, :]
    z1 = jnp.dot(f1_ref[...], wh1_ref[...], preferred_element_type=jnp.float32)
    z2 = jnp.dot(f2_ref[...], wh2_ref[...], preferred_element_type=jnp.float32)
    hb = hb_ref[...]
    logits = z1[:, :2] + z2[:, :2] + hb[:, :2]
    m = jnp.max(logits, axis=-1, keepdims=True)
    ex = jnp.exp(logits - m)
    g = ex / jnp.sum(ex, axis=-1, keepdims=True)                 # [B, 2]
    # output = gate0 * (f1 @ out_w1) + gate1 * (f2 @ out_w2) + out_b
    o_ref[...] = g[:, 0:1] * z1[:, 2:] + g[:, 1:2] * z2[:, 2:] + hb[:, 2:]


# --------------------------------- wrapper ---------------------------------- #

def gtn_forward(params, x, pe_b, cfg):
    B, T, C = x.shape
    D = cfg["d_model"]
    x1 = x.reshape(B * T, C)                          # step-wise tokens  [B*T, C]
    x2 = jnp.swapaxes(x, 1, 2).reshape(B * C, T)      # channel-wise tokens [B*C, T]

    def block_mask(n_rows, seg):                      # constant -> folded by XLA
        bid = jnp.arange(n_rows, dtype=jnp.int32) // seg
        return jnp.where(bid[:, None] == bid[None, :], 0.0, _NEG_INF).astype(jnp.float32)

    args = [x1, x2]
    if cfg["pe"]:
        args.append(pe_b)
    args += [block_mask(B * T, T), block_mask(B * C, C)]
    args += [params["emb_ch_w"], params["emb_ch_b"],
             params["emb_in_w"], params["emb_in_b"]]
    for layer in params["enc1"] + params["enc2"]:
        args += [layer[k] for k in LAYER_KEYS]
    args += [params["wh1"], params["wh2"], params["hb"]]

    kern = partial(_gtn_kernel, q=cfg["q"], v=cfg["v"], h=cfg["h"], N=cfg["N"],
                   B=B, S1=T, S2=C, D=D, use_pe=cfg["pe"])
    return pl.pallas_call(
        kern,
        grid=(1,),
        in_specs=[pl.BlockSpec(a.shape, lambda i: (0, 0)) for a in args],
        out_specs=pl.BlockSpec((B, cfg["d_output"]), lambda i: (0, 0)),
        out_shape=jax.ShapeDtypeStruct((B, cfg["d_output"]), jnp.float32),
        scratch_shapes=[
            pltpu.VMEM((B * max(T, C), cfg["v"] * cfg["h"]), jnp.float32),  # per-head PV stash
            pltpu.VMEM((B, T * D), jnp.float32),                            # flat branch-1 feats
            pltpu.VMEM((B, C * D), jnp.float32),                            # flat branch-2 feats
        ],
        compiler_params=pltpu.CompilerParams(dimension_semantics=("arbitrary",)),
    )(*args)


# ------------------------- parameter init (deterministic) ------------------- #

def init_linear(key, fan_in, fan_out):
    # PyTorch nn.Linear default: U(-1/sqrt(fan_in), 1/sqrt(fan_in)); stored [in, out].
    kw, kb = jax.random.split(key)
    bound = 1.0 / math.sqrt(fan_in)
    w = jax.random.uniform(kw, (fan_in, fan_out), jnp.float32, -bound, bound)
    b = jax.random.uniform(kb, (fan_out,), jnp.float32, -bound, bound)
    return w, b


def init_encoder(key, d_model, d_hidden, q, v, h):
    keys = jax.random.split(key, 6)
    wq, bq = init_linear(keys[0], d_model, q * h)
    wk, bk = init_linear(keys[1], d_model, q * h)
    wv, bv = init_linear(keys[2], d_model, v * h)
    wo, bo = init_linear(keys[3], v * h, d_model)
    w1, b1 = init_linear(keys[4], d_model, d_hidden)
    w2, b2 = init_linear(keys[5], d_hidden, d_model)
    return {
        "wqkv": jnp.concatenate([wq, wk, wv], axis=1),            # [D, (2q+v)*h]
        "bqkv": jnp.concatenate([bq, bk, bv], axis=0)[None, :],
        "wo": wo, "bo": bo[None, :],
        "ln1_g": jnp.ones((1, d_model), jnp.float32),
        "ln1_b": jnp.zeros((1, d_model), jnp.float32),
        "w1": w1, "b1": b1[None, :],
        "w2": w2, "b2": b2[None, :],
        "ln2_g": jnp.ones((1, d_model), jnp.float32),
        "ln2_b": jnp.zeros((1, d_model), jnp.float32),
    }


def init_gtn(key, cfg):
    keys = jax.random.split(key, 4 + 2 * cfg["N"])
    feat1 = cfg["d_model"] * cfg["d_input"]
    feat2 = cfg["d_model"] * cfg["d_channel"]
    emb_ch_w, emb_ch_b = init_linear(keys[0], cfg["d_channel"], cfg["d_model"])
    emb_in_w, emb_in_b = init_linear(keys[1], cfg["d_input"], cfg["d_model"])
    gate_w, gate_b = init_linear(keys[2], feat1 + feat2, 2)
    out_w, out_b = init_linear(keys[3], feat1 + feat2, cfg["d_output"])
    return {
        "emb_ch_w": emb_ch_w, "emb_ch_b": emb_ch_b[None, :],
        "emb_in_w": emb_in_w, "emb_in_b": emb_in_b[None, :],
        # gate + output-linear weights concatenated per branch (one dot each in-kernel)
        "wh1": jnp.concatenate([gate_w[:feat1], out_w[:feat1]], axis=1),   # [feat1, 2+d_out]
        "wh2": jnp.concatenate([gate_w[feat1:], out_w[feat1:]], axis=1),   # [feat2, 2+d_out]
        "hb": jnp.concatenate([gate_b, out_b], axis=0)[None, :],           # [1, 2+d_out]
        "enc1": [init_encoder(keys[4 + i], cfg["d_model"], cfg["d_hidden"],
                              cfg["q"], cfg["v"], cfg["h"]) for i in range(cfg["N"])],
        "enc2": [init_encoder(keys[4 + cfg["N"] + i], cfg["d_model"], cfg["d_hidden"],
                              cfg["q"], cfg["v"], cfg["h"]) for i in range(cfg["N"])],
    }


def make_pe(d_input, d_model):
    # Computed ONCE at setup (hoisted out of the forward).
    pe = jnp.ones((d_input, d_model), dtype=jnp.float32)
    position = jnp.arange(d_input, dtype=jnp.float32)[:, None]
    temp = jnp.arange(0, d_model, 2, dtype=jnp.float32)
    temp = jnp.exp(temp * (-math.log(10000.0) / d_model))[None, :]
    ang = position @ temp
    pe = pe.at[:, 0::2].set(jnp.sin(ang))
    n_cos = pe[:, 1::2].shape[1]
    pe = pe.at[:, 1::2].set(jnp.cos(ang)[:, :n_cos])
    return pe


# ------------------------------------ main ----------------------------------- #

if __name__ == "__main__":
    cfg = dict(d_model=32, d_input=8, d_channel=4, d_output=4, d_hidden=64,
               q=8, v=8, h=4, N=2, dropout=0.0, pe=True, mask=False)

    key = jax.random.PRNGKey(0)
    k_param, k_x = jax.random.split(key)
    params = init_gtn(k_param, cfg)

    B = 2
    pe_b = jnp.tile(make_pe(cfg["d_input"], cfg["d_model"]), (B, 1))   # batch-tiled, once
    x = jax.random.normal(k_x, (B, cfg["d_input"], cfg["d_channel"]), dtype=jnp.float32)

    fwd = jax.jit(partial(gtn_forward, cfg=cfg))
    out = jax.block_until_ready(fwd(params, x, pe_b))
    assert out.shape == (B, cfg["d_output"]) and out.dtype == jnp.float32
    assert bool(jnp.all(jnp.isfinite(out)))
    print("KERNEL_OK")
</pallas_src>

<mosaic_0001>
module attributes {stable_mosaic.version = 11 : i64} {
  func.func @_gtn_kernel(%arg0: i32, %arg1: memref<16x4xf32, #tpu.memory_space<vmem>>, %arg2: memref<8x8xf32, #tpu.memory_space<vmem>>, %arg3: memref<16x32xf32, #tpu.memory_space<vmem>>, %arg4: memref<16x16xf32, #tpu.memory_space<vmem>>, %arg5: memref<8x8xf32, #tpu.memory_space<vmem>>, %arg6: memref<4x32xf32, #tpu.memory_space<vmem>>, %arg7: memref<1x32xf32, #tpu.memory_space<vmem>>, %arg8: memref<8x32xf32, #tpu.memory_space<vmem>>, %arg9: memref<1x32xf32, #tpu.memory_space<vmem>>, %arg10: memref<32x96xf32, #tpu.memory_space<vmem>>, %arg11: memref<1x96xf32, #tpu.memory_space<vmem>>, %arg12: memref<32x32xf32, #tpu.memory_space<vmem>>, %arg13: memref<1x32xf32, #tpu.memory_space<vmem>>, %arg14: memref<1x32xf32, #tpu.memory_space<vmem>>, %arg15: memref<1x32xf32, #tpu.memory_space<vmem>>, %arg16: memref<32x64xf32, #tpu.memory_space<vmem>>, %arg17: memref<1x64xf32, #tpu.memory_space<vmem>>, %arg18: memref<64x32xf32, #tpu.memory_space<vmem>>, %arg19: memref<1x32xf32, #tpu.memory_space<vmem>>, %arg20: memref<1x32xf32, #tpu.memory_space<vmem>>, %arg21: memref<1x32xf32, #tpu.memory_space<vmem>>, %arg22: memref<32x96xf32, #tpu.memory_space<vmem>>, %arg23: memref<1x96xf32, #tpu.memory_space<vmem>>, %arg24: memref<32x32xf32, #tpu.memory_space<vmem>>, %arg25: memref<1x32xf32, #tpu.memory_space<vmem>>, %arg26: memref<1x32xf32, #tpu.memory_space<vmem>>, %arg27: memref<1x32xf32, #tpu.memory_space<vmem>>, %arg28: memref<32x64xf32, #tpu.memory_space<vmem>>, %arg29: memref<1x64xf32, #tpu.memory_space<vmem>>, %arg30: memref<64x32xf32, #tpu.memory_space<vmem>>, %arg31: memref<1x32xf32, #tpu.memory_space<vmem>>, %arg32: memref<1x32xf32, #tpu.memory_space<vmem>>, %arg33: memref<1x32xf32, #tpu.memory_space<vmem>>, %arg34: memref<32x96xf32, #tpu.memory_space<vmem>>, %arg35: memref<1x96xf32, #tpu.memory_space<vmem>>, %arg36: memref<32x32xf32, #tpu.memory_space<vmem>>, %arg37: memref<1x32xf32, #tpu.memory_space<vmem>>, %arg38: memref<1x32xf32, #tpu.memory_space<vmem>>, %arg39: memref<1x32xf32, #tpu.memory_space<vmem>>, %arg40: memref<32x64xf32, #tpu.memory_space<vmem>>, %arg41: memref<1x64xf32, #tpu.memory_space<vmem>>, %arg42: memref<64x32xf32, #tpu.memory_space<vmem>>, %arg43: memref<1x32xf32, #tpu.memory_space<vmem>>, %arg44: memref<1x32xf32, #tpu.memory_space<vmem>>, %arg45: memref<1x32xf32, #tpu.memory_space<vmem>>, %arg46: memref<32x96xf32, #tpu.memory_space<vmem>>, %arg47: memref<1x96xf32, #tpu.memory_space<vmem>>, %arg48: memref<32x32xf32, #tpu.memory_space<vmem>>, %arg49: memref<1x32xf32, #tpu.memory_space<vmem>>, %arg50: memref<1x32xf32, #tpu.memory_space<vmem>>, %arg51: memref<1x32xf32, #tpu.memory_space<vmem>>, %arg52: memref<32x64xf32, #tpu.memory_space<vmem>>, %arg53: memref<1x64xf32, #tpu.memory_space<vmem>>, %arg54: memref<64x32xf32, #tpu.memory_space<vmem>>, %arg55: memref<1x32xf32, #tpu.memory_space<vmem>>, %arg56: memref<1x32xf32, #tpu.memory_space<vmem>>, %arg57: memref<1x32xf32, #tpu.memory_space<vmem>>, %arg58: memref<256x6xf32, #tpu.memory_space<vmem>>, %arg59: memref<128x6xf32, #tpu.memory_space<vmem>>, %arg60: memref<1x6xf32, #tpu.memory_space<vmem>>, %arg61: memref<2x4xf32, #tpu.memory_space<vmem>>, %arg62: memref<16x32xf32, #tpu.memory_space<vmem>>, %arg63: memref<2x256xf32, #tpu.memory_space<vmem>>, %arg64: memref<2x128xf32, #tpu.memory_space<vmem>>) attributes {dimension_semantics = [#tpu.dimension_semantics<arbitrary>], iteration_bounds = array<i64: 1>, scalar_prefetch = 0 : i64, scratch_operands = 3 : i64, tpu.core_type = #tpu.core_type<tc>, window_params = [{pipeline_mode = #tpu.pipeline_mode<synchronous>, transform_indices = @transform_0, window_bounds = array<i64: 16, 4>}, {pipeline_mode = #tpu.pipeline_mode<synchronous>, transform_indices = @transform_1, window_bounds = array<i64: 8, 8>}, {pipeline_mode = #tpu.pipeline_mode<synchronous>, transform_indices = @transform_2, window_bounds = array<i64: 16, 32>}, {pipeline_mode = #tpu.pipeline_mode<synchronous>, transform_indices = @transform_3, window_bounds = array<i64: 16, 16>}, {pipeline_mode = #tpu.pipeline_mode<synchronous>, transform_indices = @transform_4, window_bounds = array<i64: 8, 8>}, {pipeline_mode = #tpu.pipeline_mode<synchronous>, transform_indices = @transform_5, window_bounds = array<i64: 4, 32>}, {pipeline_mode = #tpu.pipeline_mode<synchronous>, transform_indices = @transform_6, window_bounds = array<i64: 1, 32>}, {pipeline_mode = #tpu.pipeline_mode<synchronous>, transform_indices = @transform_7, window_bounds = array<i64: 8, 32>}, {pipeline_mode = #tpu.pipeline_mode<synchronous>, transform_indices = @transform_8, window_bounds = array<i64: 1, 32>}, {pipeline_mode = #tpu.pipeline_mode<synchronous>, transform_indices = @transform_9, window_bounds = array<i64: 32, 96>}, {pipeline_mode = #tpu.pipeline_mode<synchronous>, transform_indices = @transform_10, window_bounds = array<i64: 1, 96>}, {pipeline_mode = #tpu.pipeline_mode<synchronous>, transform_indices = @transform_11, window_bounds = array<i64: 32, 32>}, {pipeline_mode = #tpu.pipeline_mode<synchronous>, transform_indices = @transform_12, window_bounds = array<i64: 1, 32>}, {pipeline_mode = #tpu.pipeline_mode<synchronous>, transform_indices = @transform_13, window_bounds = array<i64: 1, 32>}, {pipeline_mode = #tpu.pipeline_mode<synchronous>, transform_indices = @transform_14, window_bounds = array<i64: 1, 32>}, {pipeline_mode = #tpu.pipeline_mode<synchronous>, transform_indices = @transform_15, window_bounds = array<i64: 32, 64>}, {pipeline_mode = #tpu.pipeline_mode<synchronous>, transform_indices = @transform_16, window_bounds = array<i64: 1, 64>}, {pipeline_mode = #tpu.pipeline_mode<synchronous>, transform_indices = @transform_17, window_bounds = array<i64: 64, 32>}, {pipeline_mode = #tpu.pipeline_mode<synchronous>, transform_indices = @transform_18, window_bounds = array<i64: 1, 32>}, {pipeline_mode = #tpu.pipeline_mode<synchronous>, transform_indices = @transform_19, window_bounds = array<i64: 1, 32>}, {pipeline_mode = #tpu.pipeline_mode<synchronous>, transform_indices = @transform_20, window_bounds = array<i64: 1, 32>}, {pipeline_mode = #tpu.pipeline_mode<synchronous>, transform_indices = @transform_21, window_bounds = array<i64: 32, 96>}, {pipeline_mode = #tpu.pipeline_mode<synchronous>, transform_indices = @transform_22, window_bounds = array<i64: 1, 96>}, {pipeline_mode = #tpu.pipeline_mode<synchronous>, transform_indices = @transform_23, window_bounds = array<i64: 32, 32>}, {pipeline_mode = #tpu.pipeline_mode<synchronous>, transform_indices = @transform_24, window_bounds = array<i64: 1, 32>}, {pipeline_mode = #tpu.pipeline_mode<synchronous>, transform_indices = @transform_25, window_bounds = array<i64: 1, 32>}, {pipeline_mode = #tpu.pipeline_mode<synchronous>, transform_indices = @transform_26, window_bounds = array<i64: 1, 32>}, {pipeline_mode = #tpu.pipeline_mode<synchronous>, transform_indices = @transform_27, window_bounds = array<i64: 32, 64>}, {pipeline_mode = #tpu.pipeline_mode<synchronous>, transform_indices = @transform_28, window_bounds = array<i64: 1, 64>}, {pipeline_mode = #tpu.pipeline_mode<synchronous>, transform_indices = @transform_29, window_bounds = array<i64: 64, 32>}, {pipeline_mode = #tpu.pipeline_mode<synchronous>, transform_indices = @transform_30, window_bounds = array<i64: 1, 32>}, {pipeline_mode = #tpu.pipeline_mode<synchronous>, transform_indices = @transform_31, window_bounds = array<i64: 1, 32>}, {pipeline_mode = #tpu.pipeline_mode<synchronous>, transform_indices = @transform_32, window_bounds = array<i64: 1, 32>}, {pipeline_mode = #tpu.pipeline_mode<synchronous>, transform_indices = @transform_33, window_bounds = array<i64: 32, 96>}, {pipeline_mode = #tpu.pipeline_mode<synchronous>, transform_indices = @transform_34, window_bounds = array<i64: 1, 96>}, {pipeline_mode = #tpu.pipeline_mode<synchronous>, transform_indices = @transform_35, window_bounds = array<i64: 32, 32>}, {pipeline_mode = #tpu.pipeline_mode<synchronous>, transform_indices = @transform_36, window_bounds = array<i64: 1, 32>}, {pipeline_mode = #tpu.pipeline_mode<synchronous>, transform_indices = @transform_37, window_bounds = array<i64: 1, 32>}, {pipeline_mode = #tpu.pipeline_mode<synchronous>, transform_indices = @transform_38, window_bounds = array<i64: 1, 32>}, {pipeline_mode = #tpu.pipeline_mode<synchronous>, transform_indices = @transform_39, window_bounds = array<i64: 32, 64>}, {pipeline_mode = #tpu.pipeline_mode<synchronous>, transform_indices = @transform_40, window_bounds = array<i64: 1, 64>}, {pipeline_mode = #tpu.pipeline_mode<synchronous>, transform_indices = @transform_41, window_bounds = array<i64: 64, 32>}, {pipeline_mode = #tpu.pipeline_mode<synchronous>, transform_indices = @transform_42, window_bounds = array<i64: 1, 32>}, {pipeline_mode = #tpu.pipeline_mode<synchronous>, transform_indices = @transform_43, window_bounds = array<i64: 1, 32>}, {pipeline_mode = #tpu.pipeline_mode<synchronous>, transform_indices = @transform_44, window_bounds = array<i64: 1, 32>}, {pipeline_mode = #tpu.pipeline_mode<synchronous>, transform_indices = @transform_45, window_bounds = array<i64: 32, 96>}, {pipeline_mode = #tpu.pipeline_mode<synchronous>, transform_indices = @transform_46, window_bounds = array<i64: 1, 96>}, {pipeline_mode = #tpu.pipeline_mode<synchronous>, transform_indices = @transform_47, window_bounds = array<i64: 32, 32>}, {pipeline_mode = #tpu.pipeline_mode<synchronous>, transform_indices = @transform_48, window_bounds = array<i64: 1, 32>}, {pipeline_mode = #tpu.pipeline_mode<synchronous>, transform_indices = @transform_49, window_bounds = array<i64: 1, 32>}, {pipeline_mode = #tpu.pipeline_mode<synchronous>, transform_indices = @transform_50, window_bounds = array<i64: 1, 32>}, {pipeline_mode = #tpu.pipeline_mode<synchronous>, transform_indices = @transform_51, window_bounds = array<i64: 32, 64>}, {pipeline_mode = #tpu.pipeline_mode<synchronous>, transform_indices = @transform_52, window_bounds = array<i64: 1, 64>}, {pipeline_mode = #tpu.pipeline_mode<synchronous>, transform_indices = @transform_53, window_bounds = array<i64: 64, 32>}, {pipeline_mode = #tpu.pipeline_mode<synchronous>, transform_indices = @transform_54, window_bounds = array<i64: 1, 32>}, {pipeline_mode = #tpu.pipeline_mode<synchronous>, transform_indices = @transform_55, window_bounds = array<i64: 1, 32>}, {pipeline_mode = #tpu.pipeline_mode<synchronous>, transform_indices = @transform_56, window_bounds = array<i64: 1, 32>}, {pipeline_mode = #tpu.pipeline_mode<synchronous>, transform_indices = @transform_57, window_bounds = array<i64: 256, 6>}, {pipeline_mode = #tpu.pipeline_mode<synchronous>, transform_indices = @transform_58, window_bounds = array<i64: 128, 6>}, {pipeline_mode = #tpu.pipeline_mode<synchronous>, transform_indices = @transform_59, window_bounds = array<i64: 1, 6>}, {pipeline_mode = #tpu.pipeline_mode<synchronous>, transform_indices = @transform_60, window_bounds = array<i64: 2, 4>}]} {
    %c0 = arith.constant 0 : index
    %c0_0 = arith.constant 0 : index
    %0 = vector.load %arg1[%c0, %c0_0] : memref<16x4xf32, #tpu.memory_space<vmem>>, vector<16x4xf32>
    %c0_1 = arith.constant 0 : index
    %c0_2 = arith.constant 0 : index
    %1 = vector.load %arg6[%c0_1, %c0_2] : memref<4x32xf32, #tpu.memory_space<vmem>>, vector<4x32xf32>
    %cst = arith.constant dense<0.000000e+00> : vector<16x32xf32>
    %2 = tpu.matmul %0, %1, %cst {dimension_numbers = #tpu.dot_dimension_numbers<[1], [0], [0], [1], [0, 0, 1, 1], [], []>} : vector<16x4xf32>, vector<4x32xf32>, vector<16x32xf32> -> vector<16x32xf32>
    %c0_3 = arith.constant 0 : index
    %c0_4 = arith.constant 0 : index
    %3 = vector.load %arg7[%c0_3, %c0_4] : memref<1x32xf32, #tpu.memory_space<vmem>>, vector<1x32xf32>
    %4 = vector.broadcast %3 : vector<1x32xf32> to vector<16x32xf32>
    %5 = arith.addf %2, %4 : vector<16x32xf32>
    %c0_5 = arith.constant 0 : index
    %c0_6 = arith.constant 0 : index
    %6 = vector.load %arg3[%c0_5, %c0_6] : memref<16x32xf32, #tpu.memory_space<vmem>>, vector<16x32xf32>
    %7 = arith.addf %5, %6 : vector<16x32xf32>
    %c0_7 = arith.constant 0 : index
    %c0_8 = arith.constant 0 : index
    %8 = vector.load %arg4[%c0_7, %c0_8] : memref<16x16xf32, #tpu.memory_space<vmem>>, vector<16x16xf32>
    %c0_9 = arith.constant 0 : index
    %c0_10 = arith.constant 0 : index
    %9 = vector.load %arg10[%c0_9, %c0_10] : memref<32x96xf32, #tpu.memory_space<vmem>>, vector<32x96xf32>
    %c0_11 = arith.constant 0 : index
    %c0_12 = arith.constant 0 : index
    %10 = vector.load %arg11[%c0_11, %c0_12] : memref<1x96xf32, #tpu.memory_space<vmem>>, vector<1x96xf32>
    %c0_13 = arith.constant 0 : index
    %c0_14 = arith.constant 0 : index
    %11 = vector.load %arg12[%c0_13, %c0_14] : memref<32x32xf32, #tpu.memory_space<vmem>>, vector<32x32xf32>
    %c0_15 = arith.constant 0 : index
    %c0_16 = arith.constant 0 : index
    %12 = vector.load %arg13[%c0_15, %c0_16] : memref<1x32xf32, #tpu.memory_space<vmem>>, vector<1x32xf32>
    %c0_17 = arith.constant 0 : index
    %c0_18 = arith.constant 0 : index
    %13 = vector.load %arg14[%c0_17, %c0_18] : memref<1x32xf32, #tpu.memory_space<vmem>>, vector<1x32xf32>
    %c0_19 = arith.constant 0 : index
    %c0_20 = arith.constant 0 : index
    %14 = vector.load %arg15[%c0_19, %c0_20] : memref<1x32xf32, #tpu.memory_space<vmem>>, vector<1x32xf32>
    %c0_21 = arith.constant 0 : index
    %c0_22 = arith.constant 0 : index
    %15 = vector.load %arg16[%c0_21, %c0_22] : memref<32x64xf32, #tpu.memory_space<vmem>>, vector<32x64xf32>
    %c0_23 = arith.constant 0 : index
    %c0_24 = arith.constant 0 : index
    %16 = vector.load %arg17[%c0_23, %c0_24] : memref<1x64xf32, #tpu.memory_space<vmem>>, vector<1x64xf32>
    %c0_25 = arith.constant 0 : index
    %c0_26 = arith.constant 0 : index
    %17 = vector.load %arg18[%c0_25, %c0_26] : memref<64x32xf32, #tpu.memory_space<vmem>>, vector<64x32xf32>
    %c0_27 = arith.constant 0 : index
    %c0_28 = arith.constant 0 : index
    %18 = vector.load %arg19[%c0_27, %c0_28] : memref<1x32xf32, #tpu.memory_space<vmem>>, vector<1x32xf32>
    %c0_29 = arith.constant 0 : index
    %c0_30 = arith.constant 0 : index
    %19 = vector.load %arg20[%c0_29, %c0_30] : memref<1x32xf32, #tpu.memory_space<vmem>>, vector<1x32xf32>
    %c0_31 = arith.constant 0 : index
    %c0_32 = arith.constant 0 : index
    %20 = vector.load %arg21[%c0_31, %c0_32] : memref<1x32xf32, #tpu.memory_space<vmem>>, vector<1x32xf32>
    %cst_33 = arith.constant dense<0.000000e+00> : vector<16x96xf32>
    %21 = tpu.matmul %7, %9, %cst_33 {dimension_numbers = #tpu.dot_dimension_numbers<[1], [0], [0], [1], [0, 0, 1, 1], [], []>} : vector<16x32xf32>, vector<32x96xf32>, vector<16x96xf32> -> vector<16x96xf32>
    %22 = vector.broadcast %10 : vector<1x96xf32> to vector<16x96xf32>
    %23 = arith.addf %21, %22 : vector<16x96xf32>
    %24 = vector.extract_strided_slice %23 {offsets = [0, 0], sizes = [16, 8], strides = [1, 1]} : vector<16x96xf32> to vector<16x8xf32>
    %25 = vector.extract_strided_slice %23 {offsets = [0, 32], sizes = [16, 8], strides = [1, 1]} : vector<16x96xf32> to vector<16x8xf32>
    %26 = vector.extract_strided_slice %23 {offsets = [0, 64], sizes = [16, 8], strides = [1, 1]} : vector<16x96xf32> to vector<16x8xf32>
    %cst_34 = arith.constant dense<0.000000e+00> : vector<16x16xf32>
    %27 = tpu.matmul %24, %25, %cst_34 {dimension_numbers = #tpu.dot_dimension_numbers<[1], [1], [0], [0], [0, 0, 1, 0], [], []>} : vector<16x8xf32>, vector<16x8xf32>, vector<16x16xf32> -> vector<16x16xf32>
    %cst_35 = arith.constant 0.353553385 : f32
    %28 = vector.broadcast %cst_35 : f32 to vector<16x16xf32>
    %29 = arith.mulf %27, %28 : vector<16x16xf32>
    %30 = arith.addf %29, %8 : vector<16x16xf32>
    %cst_36 = arith.constant dense<0xFF800000> : vector<16xf32>
    %31 = vector.multi_reduction <maximumf>, %30, %cst_36 [1] : vector<16x16xf32> to vector<16xf32>
    %32 = vector.shape_cast %31 : vector<16xf32> to vector<16x1xf32>
    %33 = vector.broadcast %32 : vector<16x1xf32> to vector<16x16xf32>
    %34 = arith.subf %30, %33 : vector<16x16xf32>
    %35 = math.exp %34 : vector<16x16xf32>
    %cst_37 = arith.constant dense<0.000000e+00> : vector<16xf32>
    %36 = vector.multi_reduction <add>, %35, %cst_37 [1] : vector<16x16xf32> to vector<16xf32>
    %37 = vector.shape_cast %36 : vector<16xf32> to vector<16x1xf32>
    %38 = vector.broadcast %37 : vector<16x1xf32> to vector<16x16xf32>
    %39 = arith.divf %35, %38 : vector<16x16xf32>
    %cst_38 = arith.constant dense<0.000000e+00> : vector<16x8xf32>
    %40 = tpu.matmul %39, %26, %cst_38 {dimension_numbers = #tpu.dot_dimension_numbers<[1], [0], [0], [1], [0, 0, 1, 1], [], []>} : vector<16x16xf32>, vector<16x8xf32>, vector<16x8xf32> -> vector<16x8xf32>
    %c0_39 = arith.constant 0 : index
    %c0_40 = arith.constant 0 : index
    %41 = vector.load %arg62[%c0_39, %c0_40] : memref<16x32xf32, #tpu.memory_space<vmem>>, vector<16x8xf32>
    tpu.vector_store %arg62[%c0_39, %c0_40], %40 {strides = array<i32>} : memref<16x32xf32, #tpu.memory_space<vmem>>, vector<16x8xf32>,
    %42 = vector.extract_strided_slice %23 {offsets = [0, 8], sizes = [16, 8], strides = [1, 1]} : vector<16x96xf32> to vector<16x8xf32>
    %43 = vector.extract_strided_slice %23 {offsets = [0, 40], sizes = [16, 8], strides = [1, 1]} : vector<16x96xf32> to vector<16x8xf32>
    %44 = vector.extract_strided_slice %23 {offsets = [0, 72], sizes = [16, 8], strides = [1, 1]} : vector<16x96xf32> to vector<16x8xf32>
    %cst_41 = arith.constant dense<0.000000e+00> : vector<16x16xf32>
    %45 = tpu.matmul %42, %43, %cst_41 {dimension_numbers = #tpu.dot_dimension_numbers<[1], [1], [0], [0], [0, 0, 1, 0], [], []>} : vector<16x8xf32>, vector<16x8xf32>, vector<16x16xf32> -> vector<16x16xf32>
    %cst_42 = arith.constant 0.353553385 : f32
    %46 = vector.broadcast %cst_42 : f32 to vector<16x16xf32>
    %47 = arith.mulf %45, %46 : vector<16x16xf32>
    %48 = arith.addf %47, %8 : vector<16x16xf32>
    %cst_43 = arith.constant dense<0xFF800000> : vector<16xf32>
    %49 = vector.multi_reduction <maximumf>, %48, %cst_43 [1] : vector<16x16xf32> to vector<16xf32>
    %50 = vector.shape_cast %49 : vector<16xf32> to vector<16x1xf32>
    %51 = vector.broadcast %50 : vector<16x1xf32> to vector<16x16xf32>
    %52 = arith.subf %48, %51 : vector<16x16xf32>
    %53 = math.exp %52 : vector<16x16xf32>
    %cst_44 = arith.constant dense<0.000000e+00> : vector<16xf32>
    %54 = vector.multi_reduction <add>, %53, %cst_44 [1] : vector<16x16xf32> to vector<16xf32>
    %55 = vector.shape_cast %54 : vector<16xf32> to vector<16x1xf32>
    %56 = vector.broadcast %55 : vector<16x1xf32> to vector<16x16xf32>
    %57 = arith.divf %53, %56 : vector<16x16xf32>
    %cst_45 = arith.constant dense<0.000000e+00> : vector<16x8xf32>
    %58 = tpu.matmul %57, %44, %cst_45 {dimension_numbers = #tpu.dot_dimension_numbers<[1], [0], [0], [1], [0, 0, 1, 1], [], []>} : vector<16x16xf32>, vector<16x8xf32>, vector<16x8xf32> -> vector<16x8xf32>
    %c0_46 = arith.constant 0 : index
    %c8 = arith.constant 8 : index
    %59 = vector.load %arg62[%c0_46, %c8] : memref<16x32xf32, #tpu.memory_space<vmem>>, vector<16x8xf32>
    tpu.vector_store %arg62[%c0_46, %c8], %58 {strides = array<i32>} : memref<16x32xf32, #tpu.memory_space<vmem>>, vector<16x8xf32>,
    %60 = vector.extract_strided_slice %23 {offsets = [0, 16], sizes = [16, 8], strides = [1, 1]} : vector<16x96xf32> to vector<16x8xf32>
    %61 = vector.extract_strided_slice %23 {offsets = [0, 48], sizes = [16, 8], strides = [1, 1]} : vector<16x96xf32> to vector<16x8xf32>
    %62 = vector.extract_strided_slice %23 {offsets = [0, 80], sizes = [16, 8], strides = [1, 1]} : vector<16x96xf32> to vector<16x8xf32>
    %cst_47 = arith.constant dense<0.000000e+00> : vector<16x16xf32>
    %63 = tpu.matmul %60, %61, %cst_47 {dimension_numbers = #tpu.dot_dimension_numbers<[1], [1], [0], [0], [0, 0, 1, 0], [], []>} : vector<16x8xf32>, vector<16x8xf32>, vector<16x16xf32> -> vector<16x16xf32>
    %cst_48 = arith.constant 0.353553385 : f32
    %64 = vector.broadcast %cst_48 : f32 to vector<16x16xf32>
    %65 = arith.mulf %63, %64 : vector<16x16xf32>
    %66 = arith.addf %65, %8 : vector<16x16xf32>
    %cst_49 = arith.constant dense<0xFF800000> : vector<16xf32>
    %67 = vector.multi_reduction <maximumf>, %66, %cst_49 [1] : vector<16x16xf32> to vector<16xf32>
    %68 = vector.shape_cast %67 : vector<16xf32> to vector<16x1xf32>
    %69 = vector.broadcast %68 : vector<16x1xf32> to vector<16x16xf32>
    %70 = arith.subf %66, %69 : vector<16x16xf32>
    %71 = math.exp %70 : vector<16x16xf32>
    %cst_50 = arith.constant dense<0.000000e+00> : vector<16xf32>
    %72 = vector.multi_reduction <add>, %71, %cst_50 [1] : vector<16x16xf32> to vector<16xf32>
    %73 = vector.shape_cast %72 : vector<16xf32> to vector<16x1xf32>
    %74 = vector.broadcast %73 : vector<16x1xf32> to vector<16x16xf32>
    %75 = arith.divf %71, %74 : vector<16x16xf32>
    %cst_51 = arith.constant dense<0.000000e+00> : vector<16x8xf32>
    %76 = tpu.matmul %75, %62, %cst_51 {dimension_numbers = #tpu.dot_dimension_numbers<[1], [0], [0], [1], [0, 0, 1, 1], [], []>} : vector<16x16xf32>, vector<16x8xf32>, vector<16x8xf32> -> vector<16x8xf32>
    %c0_52 = arith.constant 0 : index
    %c16 = arith.constant 16 : index
    %77 = vector.load %arg62[%c0_52, %c16] : memref<16x32xf32, #tpu.memory_space<vmem>>, vector<16x8xf32>
    tpu.vector_store %arg62[%c0_52, %c16], %76 {strides = array<i32>} : memref<16x32xf32, #tpu.memory_space<vmem>>, vector<16x8xf32>,
    %78 = vector.extract_strided_slice %23 {offsets = [0, 24], sizes = [16, 8], strides = [1, 1]} : vector<16x96xf32> to vector<16x8xf32>
    %79 = vector.extract_strided_slice %23 {offsets = [0, 56], sizes = [16, 8], strides = [1, 1]} : vector<16x96xf32> to vector<16x8xf32>
    %80 = vector.extract_strided_slice %23 {offsets = [0, 88], sizes = [16, 8], strides = [1, 1]} : vector<16x96xf32> to vector<16x8xf32>
    %cst_53 = arith.constant dense<0.000000e+00> : vector<16x16xf32>
    %81 = tpu.matmul %78, %79, %cst_53 {dimension_numbers = #tpu.dot_dimension_numbers<[1], [1], [0], [0], [0, 0, 1, 0], [], []>} : vector<16x8xf32>, vector<16x8xf32>, vector<16x16xf32> -> vector<16x16xf32>
    %cst_54 = arith.constant 0.353553385 : f32
    %82 = vector.broadcast %cst_54 : f32 to vector<16x16xf32>
    %83 = arith.mulf %81, %82 : vector<16x16xf32>
    %84 = arith.addf %83, %8 : vector<16x16xf32>
    %cst_55 = arith.constant dense<0xFF800000> : vector<16xf32>
    %85 = vector.multi_reduction <maximumf>, %84, %cst_55 [1] : vector<16x16xf32> to vector<16xf32>
    %86 = vector.shape_cast %85 : vector<16xf32> to vector<16x1xf32>
    %87 = vector.broadcast %86 : vector<16x1xf32> to vector<16x16xf32>
    %88 = arith.subf %84, %87 : vector<16x16xf32>
    %89 = math.exp %88 : vector<16x16xf32>
    %cst_56 = arith.constant dense<0.000000e+00> : vector<16xf32>
    %90 = vector.multi_reduction <add>, %89, %cst_56 [1] : vector<16x16xf32> to vector<16xf32>
    %91 = vector.shape_cast %90 : vector<16xf32> to vector<16x1xf32>
    %92 = vector.broadcast %91 : vector<16x1xf32> to vector<16x16xf32>
    %93 = arith.divf %89, %92 : vector<16x16xf32>
    %cst_57 = arith.constant dense<0.000000e+00> : vector<16x8xf32>
    %94 = tpu.matmul %93, %80, %cst_57 {dimension_numbers = #tpu.dot_dimension_numbers<[1], [0], [0], [1], [0, 0, 1, 1], [], []>} : vector<16x16xf32>, vector<16x8xf32>, vector<16x8xf32> -> vector<16x8xf32>
    %c0_58 = arith.constant 0 : index
    %c24 = arith.constant 24 : index
    %95 = vector.load %arg62[%c0_58, %c24] : memref<16x32xf32, #tpu.memory_space<vmem>>, vector<16x8xf32>
    tpu.vector_store %arg62[%c0_58, %c24], %94 {strides = array<i32>} : memref<16x32xf32, #tpu.memory_space<vmem>>, vector<16x8xf32>,
    %c0_59 = arith.constant 0 : index
    %c0_60 = arith.constant 0 : index
    %96 = vector.load %arg62[%c0_59, %c0_60] : memref<16x32xf32, #tpu.memory_space<vmem>>, vector<16x32xf32>
    %cst_61 = arith.constant dense<0.000000e+00> : vector<16x32xf32>
    %97 = tpu.matmul %96, %11, %cst_61 {dimension_numbers = #tpu.dot_dimension_numbers<[1], [0], [0], [1], [0, 0, 1, 1], [], []>} : vector<16x32xf32>, vector<32x32xf32>, vector<16x32xf32> -> vector<16x32xf32>
    %98 = vector.broadcast %12 : vector<1x32xf32> to vector<16x32xf32>
    %99 = arith.addf %97, %98 : vector<16x32xf32>
    %100 = arith.addf %7, %99 : vector<16x32xf32>
    %cst_62 = arith.constant dense<0.000000e+00> : vector<16xf32>
    %101 = vector.multi_reduction <add>, %100, %cst_62 [1] : vector<16x32xf32> to vector<16xf32>
    %102 = vector.shape_cast %101 : vector<16xf32> to vector<16x1xf32>
    %cst_63 = arith.constant 3.200000e+01 : f32
    %103 = vector.broadcast %cst_63 : f32 to vector<16x1xf32>
    %104 = arith.divf %102, %103 : vector<16x1xf32>
    %105 = vector.broadcast %104 : vector<16x1xf32> to vector<16x32xf32>
    %106 = arith.subf %100, %105 : vector<16x32xf32>
    %107 = arith.mulf %106, %106 : vector<16x32xf32>
    %cst_64 = arith.constant dense<0.000000e+00> : vector<16xf32>
    %108 = vector.multi_reduction <add>, %107, %cst_64 [1] : vector<16x32xf32> to vector<16xf32>
    %109 = vector.shape_cast %108 : vector<16xf32> to vector<16x1xf32>
    %cst_65 = arith.constant 3.200000e+01 : f32
    %110 = vector.broadcast %cst_65 : f32 to vector<16x1xf32>
    %111 = arith.divf %109, %110 : vector<16x1xf32>
    %112 = vector.broadcast %104 : vector<16x1xf32> to vector<16x32xf32>
    %113 = arith.subf %100, %112 : vector<16x32xf32>
    %cst_66 = arith.constant 9.99999974E-6 : f32
    %114 = vector.broadcast %cst_66 : f32 to vector<16x1xf32>
    %115 = arith.addf %111, %114 : vector<16x1xf32>
    %116 = math.rsqrt %115 : vector<16x1xf32>
    %117 = vector.broadcast %116 : vector<16x1xf32> to vector<16x32xf32>
    %118 = arith.mulf %113, %117 : vector<16x32xf32>
    %119 = vector.broadcast %13 : vector<1x32xf32> to vector<16x32xf32>
    %120 = arith.mulf %118, %119 : vector<16x32xf32>
    %121 = vector.broadcast %14 : vector<1x32xf32> to vector<16x32xf32>
    %122 = arith.addf %120, %121 : vector<16x32xf32>
    %cst_67 = arith.constant dense<0.000000e+00> : vector<16x64xf32>
    %123 = tpu.matmul %122, %15, %cst_67 {dimension_numbers = #tpu.dot_dimension_numbers<[1], [0], [0], [1], [0, 0, 1, 1], [], []>} : vector<16x32xf32>, vector<32x64xf32>, vector<16x64xf32> -> vector<16x64xf32>
    %124 = vector.broadcast %16 : vector<1x64xf32> to vector<16x64xf32>
    %125 = arith.addf %123, %124 : vector<16x64xf32>
    %cst_68 = arith.constant 0.000000e+00 : f32
    %126 = vector.broadcast %cst_68 : f32 to vector<16x64xf32>
    %127 = arith.maximumf %125, %126 : vector<16x64xf32>
    %cst_69 = arith.constant dense<0.000000e+00> : vector<16x32xf32>
    %128 = tpu.matmul %127, %17, %cst_69 {dimension_numbers = #tpu.dot_dimension_numbers<[1], [0], [0], [1], [0, 0, 1, 1], [], []>} : vector<16x64xf32>, vector<64x32xf32>, vector<16x32xf32> -> vector<16x32xf32>
    %129 = vector.broadcast %18 : vector<1x32xf32> to vector<16x32xf32>
    %130 = arith.addf %128, %129 : vector<16x32xf32>
    %131 = arith.addf %122, %130 : vector<16x32xf32>
    %cst_70 = arith.constant dense<0.000000e+00> : vector<16xf32>
    %132 = vector.multi_reduction <add>, %131, %cst_70 [1] : vector<16x32xf32> to vector<16xf32>
    %133 = vector.shape_cast %132 : vector<16xf32> to vector<16x1xf32>
    %cst_71 = arith.constant 3.200000e+01 : f32
    %134 = vector.broadcast %cst_71 : f32 to vector<16x1xf32>
    %135 = arith.divf %133, %134 : vector<16x1xf32>
    %136 = vector.broadcast %135 : vector<16x1xf32> to vector<16x32xf32>
    %137 = arith.subf %131, %136 : vector<16x32xf32>
    %138 = arith.mulf %137, %137 : vector<16x32xf32>
    %cst_72 = arith.constant dense<0.000000e+00> : vector<16xf32>
    %139 = vector.multi_reduction <add>, %138, %cst_72 [1] : vector<16x32xf32> to vector<16xf32>
    %140 = vector.shape_cast %139 : vector<16xf32> to vector<16x1xf32>
    %cst_73 = arith.constant 3.200000e+01 : f32
    %141 = vector.broadcast %cst_73 : f32 to vector<16x1xf32>
    %142 = arith.divf %140, %141 : vector<16x1xf32>
    %143 = vector.broadcast %135 : vector<16x1xf32> to vector<16x32xf32>
    %144 = arith.subf %131, %143 : vector<16x32xf32>
    %cst_74 = arith.constant 9.99999974E-6 : f32
    %145 = vector.broadcast %cst_74 : f32 to vector<16x1xf32>
    %146 = arith.addf %142, %145 : vector<16x1xf32>
    %147 = math.rsqrt %146 : vector<16x1xf32>
    %148 = vector.broadcast %147 : vector<16x1xf32> to vector<16x32xf32>
    %149 = arith.mulf %144, %148 : vector<16x32xf32>
    %150 = vector.broadcast %19 : vector<1x32xf32> to vector<16x32xf32>
    %151 = arith.mulf %149, %150 : vector<16x32xf32>
    %152 = vector.broadcast %20 : vector<1x32xf32> to vector<16x32xf32>
    %153 = arith.addf %151, %152 : vector<16x32xf32>
    %c0_75 = arith.constant 0 : index
    %c0_76 = arith.constant 0 : index
    %154 = vector.load %arg22[%c0_75, %c0_76] : memref<32x96xf32, #tpu.memory_space<vmem>>, vector<32x96xf32>
    %c0_77 = arith.constant 0 : index
    %c0_78 = arith.constant 0 : index
    %155 = vector.load %arg23[%c0_77, %c0_78] : memref<1x96xf32, #tpu.memory_space<vmem>>, vector<1x96xf32>
    %c0_79 = arith.constant 0 : index
    %c0_80 = arith.constant 0 : index
    %156 = vector.load %arg24[%c0_79, %c0_80] : memref<32x32xf32, #tpu.memory_space<vmem>>, vector<32x32xf32>
    %c0_81 = arith.constant 0 : index
    %c0_82 = arith.constant 0 : index
    %157 = vector.load %arg25[%c0_81, %c0_82] : memref<1x32xf32, #tpu.memory_space<vmem>>, vector<1x32xf32>
    %c0_83 = arith.constant 0 : index
    %c0_84 = arith.constant 0 : index
    %158 = vector.load %arg26[%c0_83, %c0_84] : memref<1x32xf32, #tpu.memory_space<vmem>>, vector<1x32xf32>
    %c0_85 = arith.constant 0 : index
    %c0_86 = arith.constant 0 : index
    %159 = vector.load %arg27[%c0_85, %c0_86] : memref<1x32xf32, #tpu.memory_space<vmem>>, vector<1x32xf32>
    %c0_87 = arith.constant 0 : index
    %c0_88 = arith.constant 0 : index
    %160 = vector.load %arg28[%c0_87, %c0_88] : memref<32x64xf32, #tpu.memory_space<vmem>>, vector<32x64xf32>
    %c0_89 = arith.constant 0 : index
    %c0_90 = arith.constant 0 : index
    %161 = vector.load %arg29[%c0_89, %c0_90] : memref<1x64xf32, #tpu.memory_space<vmem>>, vector<1x64xf32>
    %c0_91 = arith.constant 0 : index
    %c0_92 = arith.constant 0 : index
    %162 = vector.load %arg30[%c0_91, %c0_92] : memref<64x32xf32, #tpu.memory_space<vmem>>, vector<64x32xf32>
    %c0_93 = arith.constant 0 : index
    %c0_94 = arith.constant 0 : index
    %163 = vector.load %arg31[%c0_93, %c0_94] : memref<1x32xf32, #tpu.memory_space<vmem>>, vector<1x32xf32>
    %c0_95 = arith.constant 0 : index
    %c0_96 = arith.constant 0 : index
    %164 = vector.load %arg32[%c0_95, %c0_96] : memref<1x32xf32, #tpu.memory_space<vmem>>, vector<1x32xf32>
    %c0_97 = arith.constant 0 : index
    %c0_98 = arith.constant 0 : index
    %165 = vector.load %arg33[%c0_97, %c0_98] : memref<1x32xf32, #tpu.memory_space<vmem>>, vector<1x32xf32>
    %cst_99 = arith.constant dense<0.000000e+00> : vector<16x96xf32>
    %166 = tpu.matmul %153, %154, %cst_99 {dimension_numbers = #tpu.dot_dimension_numbers<[1], [0], [0], [1], [0, 0, 1, 1], [], []>} : vector<16x32xf32>, vector<32x96xf32>, vector<16x96xf32> -> vector<16x96xf32>
    %167 = vector.broadcast %155 : vector<1x96xf32> to vector<16x96xf32>
    %168 = arith.addf %166, %167 : vector<16x96xf32>
    %169 = vector.extract_strided_slice %168 {offsets = [0, 0], sizes = [16, 8], strides = [1, 1]} : vector<16x96xf32> to vector<16x8xf32>
    %170 = vector.extract_strided_slice %168 {offsets = [0, 32], sizes = [16, 8], strides = [1, 1]} : vector<16x96xf32> to vector<16x8xf32>
    %171 = vector.extract_strided_slice %168 {offsets = [0, 64], sizes = [16, 8], strides = [1, 1]} : vector<16x96xf32> to vector<16x8xf32>
    %cst_100 = arith.constant dense<0.000000e+00> : vector<16x16xf32>
    %172 = tpu.matmul %169, %170, %cst_100 {dimension_numbers = #tpu.dot_dimension_numbers<[1], [1], [0], [0], [0, 0, 1, 0], [], []>} : vector<16x8xf32>, vector<16x8xf32>, vector<16x16xf32> -> vector<16x16xf32>
    %cst_101 = arith.constant 0.353553385 : f32
    %173 = vector.broadcast %cst_101 : f32 to vector<16x16xf32>
    %174 = arith.mulf %172, %173 : vector<16x16xf32>
    %175 = arith.addf %174, %8 : vector<16x16xf32>
    %cst_102 = arith.constant dense<0xFF800000> : vector<16xf32>
    %176 = vector.multi_reduction <maximumf>, %175, %cst_102 [1] : vector<16x16xf32> to vector<16xf32>
    %177 = vector.shape_cast %176 : vector<16xf32> to vector<16x1xf32>
    %178 = vector.broadcast %177 : vector<16x1xf32> to vector<16x16xf32>
    %179 = arith.subf %175, %178 : vector<16x16xf32>
    %180 = math.exp %179 : vector<16x16xf32>
    %cst_103 = arith.constant dense<0.000000e+00> : vector<16xf32>
    %181 = vector.multi_reduction <add>, %180, %cst_103 [1] : vector<16x16xf32> to vector<16xf32>
    %182 = vector.shape_cast %181 : vector<16xf32> to vector<16x1xf32>
    %183 = vector.broadcast %182 : vector<16x1xf32> to vector<16x16xf32>
    %184 = arith.divf %180, %183 : vector<16x16xf32>
    %cst_104 = arith.constant dense<0.000000e+00> : vector<16x8xf32>
    %185 = tpu.matmul %184, %171, %cst_104 {dimension_numbers = #tpu.dot_dimension_numbers<[1], [0], [0], [1], [0, 0, 1, 1], [], []>} : vector<16x16xf32>, vector<16x8xf32>, vector<16x8xf32> -> vector<16x8xf32>
    %c0_105 = arith.constant 0 : index
    %c0_106 = arith.constant 0 : index
    %186 = vector.load %arg62[%c0_105, %c0_106] : memref<16x32xf32, #tpu.memory_space<vmem>>, vector<16x8xf32>
    tpu.vector_store %arg62[%c0_105, %c0_106], %185 {strides = array<i32>} : memref<16x32xf32, #tpu.memory_space<vmem>>, vector<16x8xf32>,
    %187 = vector.extract_strided_slice %168 {offsets = [0, 8], sizes = [16, 8], strides = [1, 1]} : vector<16x96xf32> to vector<16x8xf32>
    %188 = vector.extract_strided_slice %168 {offsets = [0, 40], sizes = [16, 8], strides = [1, 1]} : vector<16x96xf32> to vector<16x8xf32>
    %189 = vector.extract_strided_slice %168 {offsets = [0, 72], sizes = [16, 8], strides = [1, 1]} : vector<16x96xf32> to vector<16x8xf32>
    %cst_107 = arith.constant dense<0.000000e+00> : vector<16x16xf32>
    %190 = tpu.matmul %187, %188, %cst_107 {dimension_numbers = #tpu.dot_dimension_numbers<[1], [1], [0], [0], [0, 0, 1, 0], [], []>} : vector<16x8xf32>, vector<16x8xf32>, vector<16x16xf32> -> vector<16x16xf32>
    %cst_108 = arith.constant 0.353553385 : f32
    %191 = vector.broadcast %cst_108 : f32 to vector<16x16xf32>
    %192 = arith.mulf %190, %191 : vector<16x16xf32>
    %193 = arith.addf %192, %8 : vector<16x16xf32>
    %cst_109 = arith.constant dense<0xFF800000> : vector<16xf32>
    %194 = vector.multi_reduction <maximumf>, %193, %cst_109 [1] : vector<16x16xf32> to vector<16xf32>
    %195 = vector.shape_cast %194 : vector<16xf32> to vector<16x1xf32>
    %196 = vector.broadcast %195 : vector<16x1xf32> to vector<16x16xf32>
    %197 = arith.subf %193, %196 : vector<16x16xf32>
    %198 = math.exp %197 : vector<16x16xf32>
    %cst_110 = arith.constant dense<0.000000e+00> : vector<16xf32>
    %199 = vector.multi_reduction <add>, %198, %cst_110 [1] : vector<16x16xf32> to vector<16xf32>
    %200 = vector.shape_cast %199 : vector<16xf32> to vector<16x1xf32>
    %201 = vector.broadcast %200 : vector<16x1xf32> to vector<16x16xf32>
    %202 = arith.divf %198, %201 : vector<16x16xf32>
    %cst_111 = arith.constant dense<0.000000e+00> : vector<16x8xf32>
    %203 = tpu.matmul %202, %189, %cst_111 {dimension_numbers = #tpu.dot_dimension_numbers<[1], [0], [0], [1], [0, 0, 1, 1], [], []>} : vector<16x16xf32>, vector<16x8xf32>, vector<16x8xf32> -> vector<16x8xf32>
    %c0_112 = arith.constant 0 : index
    %c8_113 = arith.constant 8 : index
    %204 = vector.load %arg62[%c0_112, %c8_113] : memref<16x32xf32, #tpu.memory_space<vmem>>, vector<16x8xf32>
    tpu.vector_store %arg62[%c0_112, %c8_113], %203 {strides = array<i32>} : memref<16x32xf32, #tpu.memory_space<vmem>>, vector<16x8xf32>,
    %205 = vector.extract_strided_slice %168 {offsets = [0, 16], sizes = [16, 8], strides = [1, 1]} : vector<16x96xf32> to vector<16x8xf32>
    %206 = vector.extract_strided_slice %168 {offsets = [0, 48], sizes = [16, 8], strides = [1, 1]} : vector<16x96xf32> to vector<16x8xf32>
    %207 = vector.extract_strided_slice %168 {offsets = [0, 80], sizes = [16, 8], strides = [1, 1]} : vector<16x96xf32> to vector<16x8xf32>
    %cst_114 = arith.constant dense<0.000000e+00> : vector<16x16xf32>
    %208 = tpu.matmul %205, %206, %cst_114 {dimension_numbers = #tpu.dot_dimension_numbers<[1], [1], [0], [0], [0, 0, 1, 0], [], []>} : vector<16x8xf32>, vector<16x8xf32>, vector<16x16xf32> -> vector<16x16xf32>
    %cst_115 = arith.constant 0.353553385 : f32
    %209 = vector.broadcast %cst_115 : f32 to vector<16x16xf32>
    %210 = arith.mulf %208, %209 : vector<16x16xf32>
    %211 = arith.addf %210, %8 : vector<16x16xf32>
    %cst_116 = arith.constant dense<0xFF800000> : vector<16xf32>
    %212 = vector.multi_reduction <maximumf>, %211, %cst_116 [1] : vector<16x16xf32> to vector<16xf32>
    %213 = vector.shape_cast %212 : vector<16xf32> to vector<16x1xf32>
    %214 = vector.broadcast %213 : vector<16x1xf32> to vector<16x16xf32>
    %215 = arith.subf %211, %214 : vector<16x16xf32>
    %216 = math.exp %215 : vector<16x16xf32>
    %cst_117 = arith.constant dense<0.000000e+00> : vector<16xf32>
    %217 = vector.multi_reduction <add>, %216, %cst_117 [1] : vector<16x16xf32> to vector<16xf32>
    %218 = vector.shape_cast %217 : vector<16xf32> to vector<16x1xf32>
    %219 = vector.broadcast %218 : vector<16x1xf32> to vector<16x16xf32>
    %220 = arith.divf %216, %219 : vector<16x16xf32>
    %cst_118 = arith.constant dense<0.000000e+00> : vector<16x8xf32>
    %221 = tpu.matmul %220, %207, %cst_118 {dimension_numbers = #tpu.dot_dimension_numbers<[1], [0], [0], [1], [0, 0, 1, 1], [], []>} : vector<16x16xf32>, vector<16x8xf32>, vector<16x8xf32> -> vector<16x8xf32>
    %c0_119 = arith.constant 0 : index
    %c16_120 = arith.constant 16 : index
    %222 = vector.load %arg62[%c0_119, %c16_120] : memref<16x32xf32, #tpu.memory_space<vmem>>, vector<16x8xf32>
    tpu.vector_store %arg62[%c0_119, %c16_120], %221 {strides = array<i32>} : memref<16x32xf32, #tpu.memory_space<vmem>>, vector<16x8xf32>,
    %223 = vector.extract_strided_slice %168 {offsets = [0, 24], sizes = [16, 8], strides = [1, 1]} : vector<16x96xf32> to vector<16x8xf32>
    %224 = vector.extract_strided_slice %168 {offsets = [0, 56], sizes = [16, 8], strides = [1, 1]} : vector<16x96xf32> to vector<16x8xf32>
    %225 = vector.extract_strided_slice %168 {offsets = [0, 88], sizes = [16, 8], strides = [1, 1]} : vector<16x96xf32> to vector<16x8xf32>
    %cst_121 = arith.constant dense<0.000000e+00> : vector<16x16xf32>
    %226 = tpu.matmul %223, %224, %cst_121 {dimension_numbers = #tpu.dot_dimension_numbers<[1], [1], [0], [0], [0, 0, 1, 0], [], []>} : vector<16x8xf32>, vector<16x8xf32>, vector<16x16xf32> -> vector<16x16xf32>
    %cst_122 = arith.constant 0.353553385 : f32
    %227 = vector.broadcast %cst_122 : f32 to vector<16x16xf32>
    %228 = arith.mulf %226, %227 : vector<16x16xf32>
    %229 = arith.addf %228, %8 : vector<16x16xf32>
    %cst_123 = arith.constant dense<0xFF800000> : vector<16xf32>
    %230 = vector.multi_reduction <maximumf>, %229, %cst_123 [1] : vector<16x16xf32> to vector<16xf32>
    %231 = vector.shape_cast %230 : vector<16xf32> to vector<16x1xf32>
    %232 = vector.broadcast %231 : vector<16x1xf32> to vector<16x16xf32>
    %233 = arith.subf %229, %232 : vector<16x16xf32>
    %234 = math.exp %233 : vector<16x16xf32>
    %cst_124 = arith.constant dense<0.000000e+00> : vector<16xf32>
    %235 = vector.multi_reduction <add>, %234, %cst_124 [1] : vector<16x16xf32> to vector<16xf32>
    %236 = vector.shape_cast %235 : vector<16xf32> to vector<16x1xf32>
    %237 = vector.broadcast %236 : vector<16x1xf32> to vector<16x16xf32>
    %238 = arith.divf %234, %237 : vector<16x16xf32>
    %cst_125 = arith.constant dense<0.000000e+00> : vector<16x8xf32>
    %239 = tpu.matmul %238, %225, %cst_125 {dimension_numbers = #tpu.dot_dimension_numbers<[1], [0], [0], [1], [0, 0, 1, 1], [], []>} : vector<16x16xf32>, vector<16x8xf32>, vector<16x8xf32> -> vector<16x8xf32>
    %c0_126 = arith.constant 0 : index
    %c24_127 = arith.constant 24 : index
    %240 = vector.load %arg62[%c0_126, %c24_127] : memref<16x32xf32, #tpu.memory_space<vmem>>, vector<16x8xf32>
    tpu.vector_store %arg62[%c0_126, %c24_127], %239 {strides = array<i32>} : memref<16x32xf32, #tpu.memory_space<vmem>>, vector<16x8xf32>,
    %c0_128 = arith.constant 0 : index
    %c0_129 = arith.constant 0 : index
    %241 = vector.load %arg62[%c0_128, %c0_129] : memref<16x32xf32, #tpu.memory_space<vmem>>, vector<16x32xf32>
    %cst_130 = arith.constant dense<0.000000e+00> : vector<16x32xf32>
    %242 = tpu.matmul %241, %156, %cst_130 {dimension_numbers = #tpu.dot_dimension_numbers<[1], [0], [0], [1], [0, 0, 1, 1], [], []>} : vector<16x32xf32>, vector<32x32xf32>, vector<16x32xf32> -> vector<16x32xf32>
    %243 = vector.broadcast %157 : vector<1x32xf32> to vector<16x32xf32>
    %244 = arith.addf %242, %243 : vector<16x32xf32>
    %245 = arith.addf %153, %244 : vector<16x32xf32>
    %cst_131 = arith.constant dense<0.000000e+00> : vector<16xf32>
    %246 = vector.multi_reduction <add>, %245, %cst_131 [1] : vector<16x32xf32> to vector<16xf32>
    %247 = vector.shape_cast %246 : vector<16xf32> to vector<16x1xf32>
    %cst_132 = arith.constant 3.200000e+01 : f32
    %248 = vector.broadcast %cst_132 : f32 to vector<16x1xf32>
    %249 = arith.divf %247, %248 : vector<16x1xf32>
    %250 = vector.broadcast %249 : vector<16x1xf32> to vector<16x32xf32>
    %251 = arith.subf %245, %250 : vector<16x32xf32>
    %252 = arith.mulf %251, %251 : vector<16x32xf32>
    %cst_133 = arith.constant dense<0.000000e+00> : vector<16xf32>
    %253 = vector.multi_reduction <add>, %252, %cst_133 [1] : vector<16x32xf32> to vector<16xf32>
    %254 = vector.shape_cast %253 : vector<16xf32> to vector<16x1xf32>
    %cst_134 = arith.constant 3.200000e+01 : f32
    %255 = vector.broadcast %cst_134 : f32 to vector<16x1xf32>
    %256 = arith.divf %254, %255 : vector<16x1xf32>
    %257 = vector.broadcast %249 : vector<16x1xf32> to vector<16x32xf32>
    %258 = arith.subf %245, %257 : vector<16x32xf32>
    %cst_135 = arith.constant 9.99999974E-6 : f32
    %259 = vector.broadcast %cst_135 : f32 to vector<16x1xf32>
    %260 = arith.addf %256, %259 : vector<16x1xf32>
    %261 = math.rsqrt %260 : vector<16x1xf32>
    %262 = vector.broadcast %261 : vector<16x1xf32> to vector<16x32xf32>
    %263 = arith.mulf %258, %262 : vector<16x32xf32>
    %264 = vector.broadcast %158 : vector<1x32xf32> to vector<16x32xf32>
    %265 = arith.mulf %263, %264 : vector<16x32xf32>
    %266 = vector.broadcast %159 : vector<1x32xf32> to vector<16x32xf32>
    %267 = arith.addf %265, %266 : vector<16x32xf32>
    %cst_136 = arith.constant dense<0.000000e+00> : vector<16x64xf32>
    %268 = tpu.matmul %267, %160, %cst_136 {dimension_numbers = #tpu.dot_dimension_numbers<[1], [0], [0], [1], [0, 0, 1, 1], [], []>} : vector<16x32xf32>, vector<32x64xf32>, vector<16x64xf32> -> vector<16x64xf32>
    %269 = vector.broadcast %161 : vector<1x64xf32> to vector<16x64xf32>
    %270 = arith.addf %268, %269 : vector<16x64xf32>
    %cst_137 = arith.constant 0.000000e+00 : f32
    %271 = vector.broadcast %cst_137 : f32 to vector<16x64xf32>
    %272 = arith.maximumf %270, %271 : vector<16x64xf32>
    %cst_138 = arith.constant dense<0.000000e+00> : vector<16x32xf32>
    %273 = tpu.matmul %272, %162, %cst_138 {dimension_numbers = #tpu.dot_dimension_numbers<[1], [0], [0], [1], [0, 0, 1, 1], [], []>} : vector<16x64xf32>, vector<64x32xf32>, vector<16x32xf32> -> vector<16x32xf32>
    %274 = vector.broadcast %163 : vector<1x32xf32> to vector<16x32xf32>
    %275 = arith.addf %273, %274 : vector<16x32xf32>
    %276 = arith.addf %267, %275 : vector<16x32xf32>
    %cst_139 = arith.constant dense<0.000000e+00> : vector<16xf32>
    %277 = vector.multi_reduction <add>, %276, %cst_139 [1] : vector<16x32xf32> to vector<16xf32>
    %278 = vector.shape_cast %277 : vector<16xf32> to vector<16x1xf32>
    %cst_140 = arith.constant 3.200000e+01 : f32
    %279 = vector.broadcast %cst_140 : f32 to vector<16x1xf32>
    %280 = arith.divf %278, %279 : vector<16x1xf32>
    %281 = vector.broadcast %280 : vector<16x1xf32> to vector<16x32xf32>
    %282 = arith.subf %276, %281 : vector<16x32xf32>
    %283 = arith.mulf %282, %282 : vector<16x32xf32>
    %cst_141 = arith.constant dense<0.000000e+00> : vector<16xf32>
    %284 = vector.multi_reduction <add>, %283, %cst_141 [1] : vector<16x32xf32> to vector<16xf32>
    %285 = vector.shape_cast %284 : vector<16xf32> to vector<16x1xf32>
    %cst_142 = arith.constant 3.200000e+01 : f32
    %286 = vector.broadcast %cst_142 : f32 to vector<16x1xf32>
    %287 = arith.divf %285, %286 : vector<16x1xf32>
    %288 = vector.broadcast %280 : vector<16x1xf32> to vector<16x32xf32>
    %289 = arith.subf %276, %288 : vector<16x32xf32>
    %cst_143 = arith.constant 9.99999974E-6 : f32
    %290 = vector.broadcast %cst_143 : f32 to vector<16x1xf32>
    %291 = arith.addf %287, %290 : vector<16x1xf32>
    %292 = math.rsqrt %291 : vector<16x1xf32>
    %293 = vector.broadcast %292 : vector<16x1xf32> to vector<16x32xf32>
    %294 = arith.mulf %289, %293 : vector<16x32xf32>
    %295 = vector.broadcast %164 : vector<1x32xf32> to vector<16x32xf32>
    %296 = arith.mulf %294, %295 : vector<16x32xf32>
    %297 = vector.broadcast %165 : vector<1x32xf32> to vector<16x32xf32>
    %298 = arith.addf %296, %297 : vector<16x32xf32>
    %c0_144 = arith.constant 0 : index
    %c0_145 = arith.constant 0 : index
    %299 = vector.load %arg2[%c0_144, %c0_145] : memref<8x8xf32, #tpu.memory_space<vmem>>, vector<8x8xf32>
    %c0_146 = arith.constant 0 : index
    %c0_147 = arith.constant 0 : index
    %300 = vector.load %arg8[%c0_146, %c0_147] : memref<8x32xf32, #tpu.memory_space<vmem>>, vector<8x32xf32>
    %cst_148 = arith.constant dense<0.000000e+00> : vector<8x32xf32>
    %301 = tpu.matmul %299, %300, %cst_148 {dimension_numbers = #tpu.dot_dimension_numbers<[1], [0], [0], [1], [0, 0, 1, 1], [], []>} : vector<8x8xf32>, vector<8x32xf32>, vector<8x32xf32> -> vector<8x32xf32>
    %c0_149 = arith.constant 0 : index
    %c0_150 = arith.constant 0 : index
    %302 = vector.load %arg9[%c0_149, %c0_150] : memref<1x32xf32, #tpu.memory_space<vmem>>, vector<1x32xf32>
    %303 = vector.broadcast %302 : vector<1x32xf32> to vector<8x32xf32>
    %304 = arith.addf %301, %303 : vector<8x32xf32>
    %c0_151 = arith.constant 0 : index
    %c0_152 = arith.constant 0 : index
    %305 = vector.load %arg5[%c0_151, %c0_152] : memref<8x8xf32, #tpu.memory_space<vmem>>, vector<8x8xf32>
    %c0_153 = arith.constant 0 : index
    %c0_154 = arith.constant 0 : index
    %306 = vector.load %arg34[%c0_153, %c0_154] : memref<32x96xf32, #tpu.memory_space<vmem>>, vector<32x96xf32>
    %c0_155 = arith.constant 0 : index
    %c0_156 = arith.constant 0 : index
    %307 = vector.load %arg35[%c0_155, %c0_156] : memref<1x96xf32, #tpu.memory_space<vmem>>, vector<1x96xf32>
    %c0_157 = arith.constant 0 : index
    %c0_158 = arith.constant 0 : index
    %308 = vector.load %arg36[%c0_157, %c0_158] : memref<32x32xf32, #tpu.memory_space<vmem>>, vector<32x32xf32>
    %c0_159 = arith.constant 0 : index
    %c0_160 = arith.constant 0 : index
    %309 = vector.load %arg37[%c0_159, %c0_160] : memref<1x32xf32, #tpu.memory_space<vmem>>, vector<1x32xf32>
    %c0_161 = arith.constant 0 : index
    %c0_162 = arith.constant 0 : index
    %310 = vector.load %arg38[%c0_161, %c0_162] : memref<1x32xf32, #tpu.memory_space<vmem>>, vector<1x32xf32>
    %c0_163 = arith.constant 0 : index
    %c0_164 = arith.constant 0 : index
    %311 = vector.load %arg39[%c0_163, %c0_164] : memref<1x32xf32, #tpu.memory_space<vmem>>, vector<1x32xf32>
    %c0_165 = arith.constant 0 : index
    %c0_166 = arith.constant 0 : index
    %312 = vector.load %arg40[%c0_165, %c0_166] : memref<32x64xf32, #tpu.memory_space<vmem>>, vector<32x64xf32>
    %c0_167 = arith.constant 0 : index
    %c0_168 = arith.constant 0 : index
    %313 = vector.load %arg41[%c0_167, %c0_168] : memref<1x64xf32, #tpu.memory_space<vmem>>, vector<1x64xf32>
    %c0_169 = arith.constant 0 : index
    %c0_170 = arith.constant 0 : index
    %314 = vector.load %arg42[%c0_169, %c0_170] : memref<64x32xf32, #tpu.memory_space<vmem>>, vector<64x32xf32>
    %c0_171 = arith.constant 0 : index
    %c0_172 = arith.constant 0 : index
    %315 = vector.load %arg43[%c0_171, %c0_172] : memref<1x32xf32, #tpu.memory_space<vmem>>, vector<1x32xf32>
    %c0_173 = arith.constant 0 : index
    %c0_174 = arith.constant 0 : index
    %316 = vector.load %arg44[%c0_173, %c0_174] : memref<1x32xf32, #tpu.memory_space<vmem>>, vector<1x32xf32>
    %c0_175 = arith.constant 0 : index
    %c0_176 = arith.constant 0 : index
    %317 = vector.load %arg45[%c0_175, %c0_176] : memref<1x32xf32, #tpu.memory_space<vmem>>, vector<1x32xf32>
    %cst_177 = arith.constant dense<0.000000e+00> : vector<8x96xf32>
    %318 = tpu.matmul %304, %306, %cst_177 {dimension_numbers = #tpu.dot_dimension_numbers<[1], [0], [0], [1], [0, 0, 1, 1], [], []>} : vector<8x32xf32>, vector<32x96xf32>, vector<8x96xf32> -> vector<8x96xf32>
    %319 = vector.broadcast %307 : vector<1x96xf32> to vector<8x96xf32>
    %320 = arith.addf %318, %319 : vector<8x96xf32>
    %321 = vector.extract_strided_slice %320 {offsets = [0, 0], sizes = [8, 8], strides = [1, 1]} : vector<8x96xf32> to vector<8x8xf32>
    %322 = vector.extract_strided_slice %320 {offsets = [0, 32], sizes = [8, 8], strides = [1, 1]} : vector<8x96xf32> to vector<8x8xf32>
    %323 = vector.extract_strided_slice %320 {offsets = [0, 64], sizes = [8, 8], strides = [1, 1]} : vector<8x96xf32> to vector<8x8xf32>
    %cst_178 = arith.constant dense<0.000000e+00> : vector<8x8xf32>
    %324 = tpu.matmul %321, %322, %cst_178 {dimension_numbers = #tpu.dot_dimension_numbers<[1], [1], [0], [0], [0, 0, 1, 0], [], []>} : vector<8x8xf32>, vector<8x8xf32>, vector<8x8xf32> -> vector<8x8xf32>
    %cst_179 = arith.constant 0.353553385 : f32
    %325 = vector.broadcast %cst_179 : f32 to vector<8x8xf32>
    %326 = arith.mulf %324, %325 : vector<8x8xf32>
    %327 = arith.addf %326, %305 : vector<8x8xf32>
    %cst_180 = arith.constant dense<0xFF800000> : vector<8xf32>
    %328 = vector.multi_reduction <maximumf>, %327, %cst_180 [1] : vector<8x8xf32> to vector<8xf32>
    %329 = vector.shape_cast %328 : vector<8xf32> to vector<8x1xf32>
    %330 = vector.broadcast %329 : vector<8x1xf32> to vector<8x8xf32>
    %331 = arith.subf %327, %330 : vector<8x8xf32>
    %332 = math.exp %331 : vector<8x8xf32>
    %cst_181 = arith.constant dense<0.000000e+00> : vector<8xf32>
    %333 = vector.multi_reduction <add>, %332, %cst_181 [1] : vector<8x8xf32> to vector<8xf32>
    %334 = vector.shape_cast %333 : vector<8xf32> to vector<8x1xf32>
    %335 = vector.broadcast %334 : vector<8x1xf32> to vector<8x8xf32>
    %336 = arith.divf %332, %335 : vector<8x8xf32>
    %cst_182 = arith.constant dense<0.000000e+00> : vector<8x8xf32>
    %337 = tpu.matmul %336, %323, %cst_182 {dimension_numbers = #tpu.dot_dimension_numbers<[1], [0], [0], [1], [0, 0, 1, 1], [], []>} : vector<8x8xf32>, vector<8x8xf32>, vector<8x8xf32> -> vector<8x8xf32>
    %c0_183 = arith.constant 0 : index
    %c0_184 = arith.constant 0 : index
    %338 = vector.load %arg62[%c0_183, %c0_184] : memref<16x32xf32, #tpu.memory_space<vmem>>, vector<8x8xf32>
    tpu.vector_store %arg62[%c0_183, %c0_184], %337 {strides = array<i32>} : memref<16x32xf32, #tpu.memory_space<vmem>>, vector<8x8xf32>,
    %339 = vector.extract_strided_slice %320 {offsets = [0, 8], sizes = [8, 8], strides = [1, 1]} : vector<8x96xf32> to vector<8x8xf32>
    %340 = vector.extract_strided_slice %320 {offsets = [0, 40], sizes = [8, 8], strides = [1, 1]} : vector<8x96xf32> to vector<8x8xf32>
    %341 = vector.extract_strided_slice %320 {offsets = [0, 72], sizes = [8, 8], strides = [1, 1]} : vector<8x96xf32> to vector<8x8xf32>
    %cst_185 = arith.constant dense<0.000000e+00> : vector<8x8xf32>
    %342 = tpu.matmul %339, %340, %cst_185 {dimension_numbers = #tpu.dot_dimension_numbers<[1], [1], [0], [0], [0, 0, 1, 0], [], []>} : vector<8x8xf32>, vector<8x8xf32>, vector<8x8xf32> -> vector<8x8xf32>
    %cst_186 = arith.constant 0.353553385 : f32
    %343 = vector.broadcast %cst_186 : f32 to vector<8x8xf32>
    %344 = arith.mulf %342, %343 : vector<8x8xf32>
    %345 = arith.addf %344, %305 : vector<8x8xf32>
    %cst_187 = arith.constant dense<0xFF800000> : vector<8xf32>
    %346 = vector.multi_reduction <maximumf>, %345, %cst_187 [1] : vector<8x8xf32> to vector<8xf32>
    %347 = vector.shape_cast %346 : vector<8xf32> to vector<8x1xf32>
    %348 = vector.broadcast %347 : vector<8x1xf32> to vector<8x8xf32>
    %349 = arith.subf %345, %348 : vector<8x8xf32>
    %350 = math.exp %349 : vector<8x8xf32>
    %cst_188 = arith.constant dense<0.000000e+00> : vector<8xf32>
    %351 = vector.multi_reduction <add>, %350, %cst_188 [1] : vector<8x8xf32> to vector<8xf32>
    %352 = vector.shape_cast %351 : vector<8xf32> to vector<8x1xf32>
    %353 = vector.broadcast %352 : vector<8x1xf32> to vector<8x8xf32>
    %354 = arith.divf %350, %353 : vector<8x8xf32>
    %cst_189 = arith.constant dense<0.000000e+00> : vector<8x8xf32>
    %355 = tpu.matmul %354, %341, %cst_189 {dimension_numbers = #tpu.dot_dimension_numbers<[1], [0], [0], [1], [0, 0, 1, 1], [], []>} : vector<8x8xf32>, vector<8x8xf32>, vector<8x8xf32> -> vector<8x8xf32>
    %c0_190 = arith.constant 0 : index
    %c8_191 = arith.constant 8 : index
    %356 = vector.load %arg62[%c0_190, %c8_191] : memref<16x32xf32, #tpu.memory_space<vmem>>, vector<8x8xf32>
    tpu.vector_store %arg62[%c0_190, %c8_191], %355 {strides = array<i32>} : memref<16x32xf32, #tpu.memory_space<vmem>>, vector<8x8xf32>,
    %357 = vector.extract_strided_slice %320 {offsets = [0, 16], sizes = [8, 8], strides = [1, 1]} : vector<8x96xf32> to vector<8x8xf32>
    %358 = vector.extract_strided_slice %320 {offsets = [0, 48], sizes = [8, 8], strides = [1, 1]} : vector<8x96xf32> to vector<8x8xf32>
    %359 = vector.extract_strided_slice %320 {offsets = [0, 80], sizes = [8, 8], strides = [1, 1]} : vector<8x96xf32> to vector<8x8xf32>
    %cst_192 = arith.constant dense<0.000000e+00> : vector<8x8xf32>
    %360 = tpu.matmul %357, %358, %cst_192 {dimension_numbers = #tpu.dot_dimension_numbers<[1], [1], [0], [0], [0, 0, 1, 0], [], []>} : vector<8x8xf32>, vector<8x8xf32>, vector<8x8xf32> -> vector<8x8xf32>
    %cst_193 = arith.constant 0.353553385 : f32
    %361 = vector.broadcast %cst_193 : f32 to vector<8x8xf32>
    %362 = arith.mulf %360, %361 : vector<8x8xf32>
    %363 = arith.addf %362, %305 : vector<8x8xf32>
    %cst_194 = arith.constant dense<0xFF800000> : vector<8xf32>
    %364 = vector.multi_reduction <maximumf>, %363, %cst_194 [1] : vector<8x8xf32> to vector<8xf32>
    %365 = vector.shape_cast %364 : vector<8xf32> to vector<8x1xf32>
    %366 = vector.broadcast %365 : vector<8x1xf32> to vector<8x8xf32>
    %367 = arith.subf %363, %366 : vector<8x8xf32>
    %368 = math.exp %367 : vector<8x8xf32>
    %cst_195 = arith.constant dense<0.000000e+00> : vector<8xf32>
    %369 = vector.multi_reduction <add>, %368, %cst_195 [1] : vector<8x8xf32> to vector<8xf32>
    %370 = vector.shape_cast %369 : vector<8xf32> to vector<8x1xf32>
    %371 = vector.broadcast %370 : vector<8x1xf32> to vector<8x8xf32>
    %372 = arith.divf %368, %371 : vector<8x8xf32>
    %cst_196 = arith.constant dense<0.000000e+00> : vector<8x8xf32>
    %373 = tpu.matmul %372, %359, %cst_196 {dimension_numbers = #tpu.dot_dimension_numbers<[1], [0], [0], [1], [0, 0, 1, 1], [], []>} : vector<8x8xf32>, vector<8x8xf32>, vector<8x8xf32> -> vector<8x8xf32>
    %c0_197 = arith.constant 0 : index
    %c16_198 = arith.constant 16 : index
    %374 = vector.load %arg62[%c0_197, %c16_198] : memref<16x32xf32, #tpu.memory_space<vmem>>, vector<8x8xf32>
    tpu.vector_store %arg62[%c0_197, %c16_198], %373 {strides = array<i32>} : memref<16x32xf32, #tpu.memory_space<vmem>>, vector<8x8xf32>,
    %375 = vector.extract_strided_slice %320 {offsets = [0, 24], sizes = [8, 8], strides = [1, 1]} : vector<8x96xf32> to vector<8x8xf32>
    %376 = vector.extract_strided_slice %320 {offsets = [0, 56], sizes = [8, 8], strides = [1, 1]} : vector<8x96xf32> to vector<8x8xf32>
    %377 = vector.extract_strided_slice %320 {offsets = [0, 88], sizes = [8, 8], strides = [1, 1]} : vector<8x96xf32> to vector<8x8xf32>
    %cst_199 = arith.constant dense<0.000000e+00> : vector<8x8xf32>
    %378 = tpu.matmul %375, %376, %cst_199 {dimension_numbers = #tpu.dot_dimension_numbers<[1], [1], [0], [0], [0, 0, 1, 0], [], []>} : vector<8x8xf32>, vector<8x8xf32>, vector<8x8xf32> -> vector<8x8xf32>
    %cst_200 = arith.constant 0.353553385 : f32
    %379 = vector.broadcast %cst_200 : f32 to vector<8x8xf32>
    %380 = arith.mulf %378, %379 : vector<8x8xf32>
    %381 = arith.addf %380, %305 : vector<8x8xf32>
    %cst_201 = arith.constant dense<0xFF800000> : vector<8xf32>
    %382 = vector.multi_reduction <maximumf>, %381, %cst_201 [1] : vector<8x8xf32> to vector<8xf32>
    %383 = vector.shape_cast %382 : vector<8xf32> to vector<8x1xf32>
    %384 = vector.broadcast %383 : vector<8x1xf32> to vector<8x8xf32>
    %385 = arith.subf %381, %384 : vector<8x8xf32>
    %386 = math.exp %385 : vector<8x8xf32>
    %cst_202 = arith.constant dense<0.000000e+00> : vector<8xf32>
    %387 = vector.multi_reduction <add>, %386, %cst_202 [1] : vector<8x8xf32> to vector<8xf32>
    %388 = vector.shape_cast %387 : vector<8xf32> to vector<8x1xf32>
    %389 = vector.broadcast %388 : vector<8x1xf32> to vector<8x8xf32>
    %390 = arith.divf %386, %389 : vector<8x8xf32>
    %cst_203 = arith.constant dense<0.000000e+00> : vector<8x8xf32>
    %391 = tpu.matmul %390, %377, %cst_203 {dimension_numbers = #tpu.dot_dimension_numbers<[1], [0], [0], [1], [0, 0, 1, 1], [], []>} : vector<8x8xf32>, vector<8x8xf32>, vector<8x8xf32> -> vector<8x8xf32>
    %c0_204 = arith.constant 0 : index
    %c24_205 = arith.constant 24 : index
    %392 = vector.load %arg62[%c0_204, %c24_205] : memref<16x32xf32, #tpu.memory_space<vmem>>, vector<8x8xf32>
    tpu.vector_store %arg62[%c0_204, %c24_205], %391 {strides = array<i32>} : memref<16x32xf32, #tpu.memory_space<vmem>>, vector<8x8xf32>,
    %c0_206 = arith.constant 0 : index
    %c0_207 = arith.constant 0 : index
    %393 = vector.load %arg62[%c0_206, %c0_207] : memref<16x32xf32, #tpu.memory_space<vmem>>, vector<8x32xf32>
    %cst_208 = arith.constant dense<0.000000e+00> : vector<8x32xf32>
    %394 = tpu.matmul %393, %308, %cst_208 {dimension_numbers = #tpu.dot_dimension_numbers<[1], [0], [0], [1], [0, 0, 1, 1], [], []>} : vector<8x32xf32>, vector<32x32xf32>, vector<8x32xf32> -> vector<8x32xf32>
    %395 = vector.broadcast %309 : vector<1x32xf32> to vector<8x32xf32>
    %396 = arith.addf %394, %395 : vector<8x32xf32>
    %397 = arith.addf %304, %396 : vector<8x32xf32>
    %cst_209 = arith.constant dense<0.000000e+00> : vector<8xf32>
    %398 = vector.multi_reduction <add>, %397, %cst_209 [1] : vector<8x32xf32> to vector<8xf32>
    %399 = vector.shape_cast %398 : vector<8xf32> to vector<8x1xf32>
    %cst_210 = arith.constant 3.200000e+01 : f32
    %400 = vector.broadcast %cst_210 : f32 to vector<8x1xf32>
    %401 = arith.divf %399, %400 : vector<8x1xf32>
    %402 = vector.broadcast %401 : vector<8x1xf32> to vector<8x32xf32>
    %403 = arith.subf %397, %402 : vector<8x32xf32>
    %404 = arith.mulf %403, %403 : vector<8x32xf32>
    %cst_211 = arith.constant dense<0.000000e+00> : vector<8xf32>
    %405 = vector.multi_reduction <add>, %404, %cst_211 [1] : vector<8x32xf32> to vector<8xf32>
    %406 = vector.shape_cast %405 : vector<8xf32> to vector<8x1xf32>
    %cst_212 = arith.constant 3.200000e+01 : f32
    %407 = vector.broadcast %cst_212 : f32 to vector<8x1xf32>
    %408 = arith.divf %406, %407 : vector<8x1xf32>
    %409 = vector.broadcast %401 : vector<8x1xf32> to vector<8x32xf32>
    %410 = arith.subf %397, %409 : vector<8x32xf32>
    %cst_213 = arith.constant 9.99999974E-6 : f32
    %411 = vector.broadcast %cst_213 : f32 to vector<8x1xf32>
    %412 = arith.addf %408, %411 : vector<8x1xf32>
    %413 = math.rsqrt %412 : vector<8x1xf32>
    %414 = vector.broadcast %413 : vector<8x1xf32> to vector<8x32xf32>
    %415 = arith.mulf %410, %414 : vector<8x32xf32>
    %416 = vector.broadcast %310 : vector<1x32xf32> to vector<8x32xf32>
    %417 = arith.mulf %415, %416 : vector<8x32xf32>
    %418 = vector.broadcast %311 : vector<1x32xf32> to vector<8x32xf32>
    %419 = arith.addf %417, %418 : vector<8x32xf32>
    %cst_214 = arith.constant dense<0.000000e+00> : vector<8x64xf32>
    %420 = tpu.matmul %419, %312, %cst_214 {dimension_numbers = #tpu.dot_dimension_numbers<[1], [0], [0], [1], [0, 0, 1, 1], [], []>} : vector<8x32xf32>, vector<32x64xf32>, vector<8x64xf32> -> vector<8x64xf32>
    %421 = vector.broadcast %313 : vector<1x64xf32> to vector<8x64xf32>
    %422 = arith.addf %420, %421 : vector<8x64xf32>
    %cst_215 = arith.constant 0.000000e+00 : f32
    %423 = vector.broadcast %cst_215 : f32 to vector<8x64xf32>
    %424 = arith.maximumf %422, %423 : vector<8x64xf32>
    %cst_216 = arith.constant dense<0.000000e+00> : vector<8x32xf32>
    %425 = tpu.matmul %424, %314, %cst_216 {dimension_numbers = #tpu.dot_dimension_numbers<[1], [0], [0], [1], [0, 0, 1, 1], [], []>} : vector<8x64xf32>, vector<64x32xf32>, vector<8x32xf32> -> vector<8x32xf32>
    %426 = vector.broadcast %315 : vector<1x32xf32> to vector<8x32xf32>
    %427 = arith.addf %425, %426 : vector<8x32xf32>
    %428 = arith.addf %419, %427 : vector<8x32xf32>
    %cst_217 = arith.constant dense<0.000000e+00> : vector<8xf32>
    %429 = vector.multi_reduction <add>, %428, %cst_217 [1] : vector<8x32xf32> to vector<8xf32>
    %430 = vector.shape_cast %429 : vector<8xf32> to vector<8x1xf32>
    %cst_218 = arith.constant 3.200000e+01 : f32
    %431 = vector.broadcast %cst_218 : f32 to vector<8x1xf32>
    %432 = arith.divf %430, %431 : vector<8x1xf32>
    %433 = vector.broadcast %432 : vector<8x1xf32> to vector<8x32xf32>
    %434 = arith.subf %428, %433 : vector<8x32xf32>
    %435 = arith.mulf %434, %434 : vector<8x32xf32>
    %cst_219 = arith.constant dense<0.000000e+00> : vector<8xf32>
    %436 = vector.multi_reduction <add>, %435, %cst_219 [1] : vector<8x32xf32> to vector<8xf32>
    %437 = vector.shape_cast %436 : vector<8xf32> to vector<8x1xf32>
    %cst_220 = arith.constant 3.200000e+01 : f32
    %438 = vector.broadcast %cst_220 : f32 to vector<8x1xf32>
    %439 = arith.divf %437, %438 : vector<8x1xf32>
    %440 = vector.broadcast %432 : vector<8x1xf32> to vector<8x32xf32>
    %441 = arith.subf %428, %440 : vector<8x32xf32>
    %cst_221 = arith.constant 9.99999974E-6 : f32
    %442 = vector.broadcast %cst_221 : f32 to vector<8x1xf32>
    %443 = arith.addf %439, %442 : vector<8x1xf32>
    %444 = math.rsqrt %443 : vector<8x1xf32>
    %445 = vector.broadcast %444 : vector<8x1xf32> to vector<8x32xf32>
    %446 = arith.mulf %441, %445 : vector<8x32xf32>
    %447 = vector.broadcast %316 : vector<1x32xf32> to vector<8x32xf32>
    %448 = arith.mulf %446, %447 : vector<8x32xf32>
    %449 = vector.broadcast %317 : vector<1x32xf32> to vector<8x32xf32>
    %450 = arith.addf %448, %449 : vector<8x32xf32>
    %c0_222 = arith.constant 0 : index
    %c0_223 = arith.constant 0 : index
    %451 = vector.load %arg46[%c0_222, %c0_223] : memref<32x96xf32, #tpu.memory_space<vmem>>, vector<32x96xf32>
    %c0_224 = arith.constant 0 : index
    %c0_225 = arith.constant 0 : index
    %452 = vector.load %arg47[%c0_224, %c0_225] : memref<1x96xf32, #tpu.memory_space<vmem>>, vector<1x96xf32>
    %c0_226 = arith.constant 0 : index
    %c0_227 = arith.constant 0 : index
    %453 = vector.load %arg48[%c0_226, %c0_227] : memref<32x32xf32, #tpu.memory_space<vmem>>, vector<32x32xf32>
    %c0_228 = arith.constant 0 : index
    %c0_229 = arith.constant 0 : index
    %454 = vector.load %arg49[%c0_228, %c0_229] : memref<1x32xf32, #tpu.memory_space<vmem>>, vector<1x32xf32>
    %c0_230 = arith.constant 0 : index
    %c0_231 = arith.constant 0 : index
    %455 = vector.load %arg50[%c0_230, %c0_231] : memref<1x32xf32, #tpu.memory_space<vmem>>, vector<1x32xf32>
    %c0_232 = arith.constant 0 : index
    %c0_233 = arith.constant 0 : index
    %456 = vector.load %arg51[%c0_232, %c0_233] : memref<1x32xf32, #tpu.memory_space<vmem>>, vector<1x32xf32>
    %c0_234 = arith.constant 0 : index
    %c0_235 = arith.constant 0 : index
    %457 = vector.load %arg52[%c0_234, %c0_235] : memref<32x64xf32, #tpu.memory_space<vmem>>, vector<32x64xf32>
    %c0_236 = arith.constant 0 : index
    %c0_237 = arith.constant 0 : index
    %458 = vector.load %arg53[%c0_236, %c0_237] : memref<1x64xf32, #tpu.memory_space<vmem>>, vector<1x64xf32>
    %c0_238 = arith.constant 0 : index
    %c0_239 = arith.constant 0 : index
    %459 = vector.load %arg54[%c0_238, %c0_239] : memref<64x32xf32, #tpu.memory_space<vmem>>, vector<64x32xf32>
    %c0_240 = arith.constant 0 : index
    %c0_241 = arith.constant 0 : index
    %460 = vector.load %arg55[%c0_240, %c0_241] : memref<1x32xf32, #tpu.memory_space<vmem>>, vector<1x32xf32>
    %c0_242 = arith.constant 0 : index
    %c0_243 = arith.constant 0 : index
    %461 = vector.load %arg56[%c0_242, %c0_243] : memref<1x32xf32, #tpu.memory_space<vmem>>, vector<1x32xf32>
    %c0_244 = arith.constant 0 : index
    %c0_245 = arith.constant 0 : index
    %462 = vector.load %arg57[%c0_244, %c0_245] : memref<1x32xf32, #tpu.memory_space<vmem>>, vector<1x32xf32>
    %cst_246 = arith.constant dense<0.000000e+00> : vector<8x96xf32>
    %463 = tpu.matmul %450, %451, %cst_246 {dimension_numbers = #tpu.dot_dimension_numbers<[1], [0], [0], [1], [0, 0, 1, 1], [], []>} : vector<8x32xf32>, vector<32x96xf32>, vector<8x96xf32> -> vector<8x96xf32>
    %464 = vector.broadcast %452 : vector<1x96xf32> to vector<8x96xf32>
    %465 = arith.addf %463, %464 : vector<8x96xf32>
    %466 = vector.extract_strided_slice %465 {offsets = [0, 0], sizes = [8, 8], strides = [1, 1]} : vector<8x96xf32> to vector<8x8xf32>
    %467 = vector.extract_strided_slice %465 {offsets = [0, 32], sizes = [8, 8], strides = [1, 1]} : vector<8x96xf32> to vector<8x8xf32>
    %468 = vector.extract_strided_slice %465 {offsets = [0, 64], sizes = [8, 8], strides = [1, 1]} : vector<8x96xf32> to vector<8x8xf32>
    %cst_247 = arith.constant dense<0.000000e+00> : vector<8x8xf32>
    %469 = tpu.matmul %466, %467, %cst_247 {dimension_numbers = #tpu.dot_dimension_numbers<[1], [1], [0], [0], [0, 0, 1, 0], [], []>} : vector<8x8xf32>, vector<8x8xf32>, vector<8x8xf32> -> vector<8x8xf32>
    %cst_248 = arith.constant 0.353553385 : f32
    %470 = vector.broadcast %cst_248 : f32 to vector<8x8xf32>
    %471 = arith.mulf %469, %470 : vector<8x8xf32>
    %472 = arith.addf %471, %305 : vector<8x8xf32>
    %cst_249 = arith.constant dense<0xFF800000> : vector<8xf32>
    %473 = vector.multi_reduction <maximumf>, %472, %cst_249 [1] : vector<8x8xf32> to vector<8xf32>
    %474 = vector.shape_cast %473 : vector<8xf32> to vector<8x1xf32>
    %475 = vector.broadcast %474 : vector<8x1xf32> to vector<8x8xf32>
    %476 = arith.subf %472, %475 : vector<8x8xf32>
    %477 = math.exp %476 : vector<8x8xf32>
    %cst_250 = arith.constant dense<0.000000e+00> : vector<8xf32>
    %478 = vector.multi_reduction <add>, %477, %cst_250 [1] : vector<8x8xf32> to vector<8xf32>
    %479 = vector.shape_cast %478 : vector<8xf32> to vector<8x1xf32>
    %480 = vector.broadcast %479 : vector<8x1xf32> to vector<8x8xf32>
    %481 = arith.divf %477, %480 : vector<8x8xf32>
    %cst_251 = arith.constant dense<0.000000e+00> : vector<8x8xf32>
    %482 = tpu.matmul %481, %468, %cst_251 {dimension_numbers = #tpu.dot_dimension_numbers<[1], [0], [0], [1], [0, 0, 1, 1], [], []>} : vector<8x8xf32>, vector<8x8xf32>, vector<8x8xf32> -> vector<8x8xf32>
    %c0_252 = arith.constant 0 : index
    %c0_253 = arith.constant 0 : index
    %483 = vector.load %arg62[%c0_252, %c0_253] : memref<16x32xf32, #tpu.memory_space<vmem>>, vector<8x8xf32>
    tpu.vector_store %arg62[%c0_252, %c0_253], %482 {strides = array<i32>} : memref<16x32xf32, #tpu.memory_space<vmem>>, vector<8x8xf32>,
    %484 = vector.extract_strided_slice %465 {offsets = [0, 8], sizes = [8, 8], strides = [1, 1]} : vector<8x96xf32> to vector<8x8xf32>
    %485 = vector.extract_strided_slice %465 {offsets = [0, 40], sizes = [8, 8], strides = [1, 1]} : vector<8x96xf32> to vector<8x8xf32>
    %486 = vector.extract_strided_slice %465 {offsets = [0, 72], sizes = [8, 8], strides = [1, 1]} : vector<8x96xf32> to vector<8x8xf32>
    %cst_254 = arith.constant dense<0.000000e+00> : vector<8x8xf32>
    %487 = tpu.matmul %484, %485, %cst_254 {dimension_numbers = #tpu.dot_dimension_numbers<[1], [1], [0], [0], [0, 0, 1, 0], [], []>} : vector<8x8xf32>, vector<8x8xf32>, vector<8x8xf32> -> vector<8x8xf32>
    %cst_255 = arith.constant 0.353553385 : f32
    %488 = vector.broadcast %cst_255 : f32 to vector<8x8xf32>
    %489 = arith.mulf %487, %488 : vector<8x8xf32>
    %490 = arith.addf %489, %305 : vector<8x8xf32>
    %cst_256 = arith.constant dense<0xFF800000> : vector<8xf32>
    %491 = vector.multi_reduction <maximumf>, %490, %cst_256 [1] : vector<8x8xf32> to vector<8xf32>
    %492 = vector.shape_cast %491 : vector<8xf32> to vector<8x1xf32>
    %493 = vector.broadcast %492 : vector<8x1xf32> to vector<8x8xf32>
    %494 = arith.subf %490, %493 : vector<8x8xf32>
    %495 = math.exp %494 : vector<8x8xf32>
    %cst_257 = arith.constant dense<0.000000e+00> : vector<8xf32>
    %496 = vector.multi_reduction <add>, %495, %cst_257 [1] : vector<8x8xf32> to vector<8xf32>
    %497 = vector.shape_cast %496 : vector<8xf32> to vector<8x1xf32>
    %498 = vector.broadcast %497 : vector<8x1xf32> to vector<8x8xf32>
    %499 = arith.divf %495, %498 : vector<8x8xf32>
    %cst_258 = arith.constant dense<0.000000e+00> : vector<8x8xf32>
    %500 = tpu.matmul %499, %486, %cst_258 {dimension_numbers = #tpu.dot_dimension_numbers<[1], [0], [0], [1], [0, 0, 1, 1], [], []>} : vector<8x8xf32>, vector<8x8xf32>, vector<8x8xf32> -> vector<8x8xf32>
    %c0_259 = arith.constant 0 : index
    %c8_260 = arith.constant 8 : index
    %501 = vector.load %arg62[%c0_259, %c8_260] : memref<16x32xf32, #tpu.memory_space<vmem>>, vector<8x8xf32>
    tpu.vector_store %arg62[%c0_259, %c8_260], %500 {strides = array<i32>} : memref<16x32xf32, #tpu.memory_space<vmem>>, vector<8x8xf32>,
    %502 = vector.extract_strided_slice %465 {offsets = [0, 16], sizes = [8, 8], strides = [1, 1]} : vector<8x96xf32> to vector<8x8xf32>
    %503 = vector.extract_strided_slice %465 {offsets = [0, 48], sizes = [8, 8], strides = [1, 1]} : vector<8x96xf32> to vector<8x8xf32>
    %504 = vector.extract_strided_slice %465 {offsets = [0, 80], sizes = [8, 8], strides = [1, 1]} : vector<8x96xf32> to vector<8x8xf32>
    %cst_261 = arith.constant dense<0.000000e+00> : vector<8x8xf32>
    %505 = tpu.matmul %502, %503, %cst_261 {dimension_numbers = #tpu.dot_dimension_numbers<[1], [1], [0], [0], [0, 0, 1, 0], [], []>} : vector<8x8xf32>, vector<8x8xf32>, vector<8x8xf32> -> vector<8x8xf32>
    %cst_262 = arith.constant 0.353553385 : f32
    %506 = vector.broadcast %cst_262 : f32 to vector<8x8xf32>
    %507 = arith.mulf %505, %506 : vector<8x8xf32>
    %508 = arith.addf %507, %305 : vector<8x8xf32>
    %cst_263 = arith.constant dense<0xFF800000> : vector<8xf32>
    %509 = vector.multi_reduction <maximumf>, %508, %cst_263 [1] : vector<8x8xf32> to vector<8xf32>
    %510 = vector.shape_cast %509 : vector<8xf32> to vector<8x1xf32>
    %511 = vector.broadcast %510 : vector<8x1xf32> to vector<8x8xf32>
    %512 = arith.subf %508, %511 : vector<8x8xf32>
    %513 = math.exp %512 : vector<8x8xf32>
    %cst_264 = arith.constant dense<0.000000e+00> : vector<8xf32>
    %514 = vector.multi_reduction <add>, %513, %cst_264 [1] : vector<8x8xf32> to vector<8xf32>
    %515 = vector.shape_cast %514 : vector<8xf32> to vector<8x1xf32>
    %516 = vector.broadcast %515 : vector<8x1xf32> to vector<8x8xf32>
    %517 = arith.divf %513, %516 : vector<8x8xf32>
    %cst_265 = arith.constant dense<0.000000e+00> : vector<8x8xf32>
    %518 = tpu.matmul %517, %504, %cst_265 {dimension_numbers = #tpu.dot_dimension_numbers<[1], [0], [0], [1], [0, 0, 1, 1], [], []>} : vector<8x8xf32>, vector<8x8xf32>, vector<8x8xf32> -> vector<8x8xf32>
    %c0_266 = arith.constant 0 : index
    %c16_267 = arith.constant 16 : index
    %519 = vector.load %arg62[%c0_266, %c16_267] : memref<16x32xf32, #tpu.memory_space<vmem>>, vector<8x8xf32>
    tpu.vector_store %arg62[%c0_266, %c16_267], %518 {strides = array<i32>} : memref<16x32xf32, #tpu.memory_space<vmem>>, vector<8x8xf32>,
    %520 = vector.extract_strided_slice %465 {offsets = [0, 24], sizes = [8, 8], strides = [1, 1]} : vector<8x96xf32> to vector<8x8xf32>
    %521 = vector.extract_strided_slice %465 {offsets = [0, 56], sizes = [8, 8], strides = [1, 1]} : vector<8x96xf32> to vector<8x8xf32>
    %522 = vector.extract_strided_slice %465 {offsets = [0, 88], sizes = [8, 8], strides = [1, 1]} : vector<8x96xf32> to vector<8x8xf32>
    %cst_268 = arith.constant dense<0.000000e+00> : vector<8x8xf32>
    %523 = tpu.matmul %520, %521, %cst_268 {dimension_numbers = #tpu.dot_dimension_numbers<[1], [1], [0], [0], [0, 0, 1, 0], [], []>} : vector<8x8xf32>, vector<8x8xf32>, vector<8x8xf32> -> vector<8x8xf32>
    %cst_269 = arith.constant 0.353553385 : f32
    %524 = vector.broadcast %cst_269 : f32 to vector<8x8xf32>
    %525 = arith.mulf %523, %524 : vector<8x8xf32>
    %526 = arith.addf %525, %305 : vector<8x8xf32>
    %cst_270 = arith.constant dense<0xFF800000> : vector<8xf32>
    %527 = vector.multi_reduction <maximumf>, %526, %cst_270 [1] : vector<8x8xf32> to vector<8xf32>
    %528 = vector.shape_cast %527 : vector<8xf32> to vector<8x1xf32>
    %529 = vector.broadcast %528 : vector<8x1xf32> to vector<8x8xf32>
    %530 = arith.subf %526, %529 : vector<8x8xf32>
    %531 = math.exp %530 : vector<8x8xf32>
    %cst_271 = arith.constant dense<0.000000e+00> : vector<8xf32>
    %532 = vector.multi_reduction <add>, %531, %cst_271 [1] : vector<8x8xf32> to vector<8xf32>
    %533 = vector.shape_cast %532 : vector<8xf32> to vector<8x1xf32>
    %534 = vector.broadcast %533 : vector<8x1xf32> to vector<8x8xf32>
    %535 = arith.divf %531, %534 : vector<8x8xf32>
    %cst_272 = arith.constant dense<0.000000e+00> : vector<8x8xf32>
    %536 = tpu.matmul %535, %522, %cst_272 {dimension_numbers = #tpu.dot_dimension_numbers<[1], [0], [0], [1], [0, 0, 1, 1], [], []>} : vector<8x8xf32>, vector<8x8xf32>, vector<8x8xf32> -> vector<8x8xf32>
    %c0_273 = arith.constant 0 : index
    %c24_274 = arith.constant 24 : index
    %537 = vector.load %arg62[%c0_273, %c24_274] : memref<16x32xf32, #tpu.memory_space<vmem>>, vector<8x8xf32>
    tpu.vector_store %arg62[%c0_273, %c24_274], %536 {strides = array<i32>} : memref<16x32xf32, #tpu.memory_space<vmem>>, vector<8x8xf32>,
    %c0_275 = arith.constant 0 : index
    %c0_276 = arith.constant 0 : index
    %538 = vector.load %arg62[%c0_275, %c0_276] : memref<16x32xf32, #tpu.memory_space<vmem>>, vector<8x32xf32>
    %cst_277 = arith.constant dense<0.000000e+00> : vector<8x32xf32>
    %539 = tpu.matmul %538, %453, %cst_277 {dimension_numbers = #tpu.dot_dimension_numbers<[1], [0], [0], [1], [0, 0, 1, 1], [], []>} : vector<8x32xf32>, vector<32x32xf32>, vector<8x32xf32> -> vector<8x32xf32>
    %540 = vector.broadcast %454 : vector<1x32xf32> to vector<8x32xf32>
    %541 = arith.addf %539, %540 : vector<8x32xf32>
    %542 = arith.addf %450, %541 : vector<8x32xf32>
    %cst_278 = arith.constant dense<0.000000e+00> : vector<8xf32>
    %543 = vector.multi_reduction <add>, %542, %cst_278 [1] : vector<8x32xf32> to vector<8xf32>
    %544 = vector.shape_cast %543 : vector<8xf32> to vector<8x1xf32>
    %cst_279 = arith.constant 3.200000e+01 : f32
    %545 = vector.broadcast %cst_279 : f32 to vector<8x1xf32>
    %546 = arith.divf %544, %545 : vector<8x1xf32>
    %547 = vector.broadcast %546 : vector<8x1xf32> to vector<8x32xf32>
    %548 = arith.subf %542, %547 : vector<8x32xf32>
    %549 = arith.mulf %548, %548 : vector<8x32xf32>
    %cst_280 = arith.constant dense<0.000000e+00> : vector<8xf32>
    %550 = vector.multi_reduction <add>, %549, %cst_280 [1] : vector<8x32xf32> to vector<8xf32>
    %551 = vector.shape_cast %550 : vector<8xf32> to vector<8x1xf32>
    %cst_281 = arith.constant 3.200000e+01 : f32
    %552 = vector.broadcast %cst_281 : f32 to vector<8x1xf32>
    %553 = arith.divf %551, %552 : vector<8x1xf32>
    %554 = vector.broadcast %546 : vector<8x1xf32> to vector<8x32xf32>
    %555 = arith.subf %542, %554 : vector<8x32xf32>
    %cst_282 = arith.constant 9.99999974E-6 : f32
    %556 = vector.broadcast %cst_282 : f32 to vector<8x1xf32>
    %557 = arith.addf %553, %556 : vector<8x1xf32>
    %558 = math.rsqrt %557 : vector<8x1xf32>
    %559 = vector.broadcast %558 : vector<8x1xf32> to vector<8x32xf32>
    %560 = arith.mulf %555, %559 : vector<8x32xf32>
    %561 = vector.broadcast %455 : vector<1x32xf32> to vector<8x32xf32>
    %562 = arith.mulf %560, %561 : vector<8x32xf32>
    %563 = vector.broadcast %456 : vector<1x32xf32> to vector<8x32xf32>
    %564 = arith.addf %562, %563 : vector<8x32xf32>
    %cst_283 = arith.constant dense<0.000000e+00> : vector<8x64xf32>
    %565 = tpu.matmul %564, %457, %cst_283 {dimension_numbers = #tpu.dot_dimension_numbers<[1], [0], [0], [1], [0, 0, 1, 1], [], []>} : vector<8x32xf32>, vector<32x64xf32>, vector<8x64xf32> -> vector<8x64xf32>
    %566 = vector.broadcast %458 : vector<1x64xf32> to vector<8x64xf32>
    %567 = arith.addf %565, %566 : vector<8x64xf32>
    %cst_284 = arith.constant 0.000000e+00 : f32
    %568 = vector.broadcast %cst_284 : f32 to vector<8x64xf32>
    %569 = arith.maximumf %567, %568 : vector<8x64xf32>
    %cst_285 = arith.constant dense<0.000000e+00> : vector<8x32xf32>
    %570 = tpu.matmul %569, %459, %cst_285 {dimension_numbers = #tpu.dot_dimension_numbers<[1], [0], [0], [1], [0, 0, 1, 1], [], []>} : vector<8x64xf32>, vector<64x32xf32>, vector<8x32xf32> -> vector<8x32xf32>
    %571 = vector.broadcast %460 : vector<1x32xf32> to vector<8x32xf32>
    %572 = arith.addf %570, %571 : vector<8x32xf32>
    %573 = arith.addf %564, %572 : vector<8x32xf32>
    %cst_286 = arith.constant dense<0.000000e+00> : vector<8xf32>
    %574 = vector.multi_reduction <add>, %573, %cst_286 [1] : vector<8x32xf32> to vector<8xf32>
    %575 = vector.shape_cast %574 : vector<8xf32> to vector<8x1xf32>
    %cst_287 = arith.constant 3.200000e+01 : f32
    %576 = vector.broadcast %cst_287 : f32 to vector<8x1xf32>
    %577 = arith.divf %575, %576 : vector<8x1xf32>
    %578 = vector.broadcast %577 : vector<8x1xf32> to vector<8x32xf32>
    %579 = arith.subf %573, %578 : vector<8x32xf32>
    %580 = arith.mulf %579, %579 : vector<8x32xf32>
    %cst_288 = arith.constant dense<0.000000e+00> : vector<8xf32>
    %581 = vector.multi_reduction <add>, %580, %cst_288 [1] : vector<8x32xf32> to vector<8xf32>
    %582 = vector.shape_cast %581 : vector<8xf32> to vector<8x1xf32>
    %cst_289 = arith.constant 3.200000e+01 : f32
    %583 = vector.broadcast %cst_289 : f32 to vector<8x1xf32>
    %584 = arith.divf %582, %583 : vector<8x1xf32>
    %585 = vector.broadcast %577 : vector<8x1xf32> to vector<8x32xf32>
    %586 = arith.subf %573, %585 : vector<8x32xf32>
    %cst_290 = arith.constant 9.99999974E-6 : f32
    %587 = vector.broadcast %cst_290 : f32 to vector<8x1xf32>
    %588 = arith.addf %584, %587 : vector<8x1xf32>
    %589 = math.rsqrt %588 : vector<8x1xf32>
    %590 = vector.broadcast %589 : vector<8x1xf32> to vector<8x32xf32>
    %591 = arith.mulf %586, %590 : vector<8x32xf32>
    %592 = vector.broadcast %461 : vector<1x32xf32> to vector<8x32xf32>
    %593 = arith.mulf %591, %592 : vector<8x32xf32>
    %594 = vector.broadcast %462 : vector<1x32xf32> to vector<8x32xf32>
    %595 = arith.addf %593, %594 : vector<8x32xf32>
    %596 = vector.extract_strided_slice %298 {offsets = [0, 0], sizes = [1, 32], strides = [1, 1]} : vector<16x32xf32> to vector<1x32xf32>
    %c0_291 = arith.constant 0 : index
    %c0_292 = arith.constant 0 : index
    %597 = vector.load %arg63[%c0_291, %c0_292] : memref<2x256xf32, #tpu.memory_space<vmem>>, vector<1x32xf32>
    tpu.vector_store %arg63[%c0_291, %c0_292], %596 {strides = array<i32>} : memref<2x256xf32, #tpu.memory_space<vmem>>, vector<1x32xf32>,
    %598 = vector.extract_strided_slice %298 {offsets = [1, 0], sizes = [1, 32], strides = [1, 1]} : vector<16x32xf32> to vector<1x32xf32>
    %c0_293 = arith.constant 0 : index
    %c32 = arith.constant 32 : index
    %599 = vector.load %arg63[%c0_293, %c32] : memref<2x256xf32, #tpu.memory_space<vmem>>, vector<1x32xf32>
    tpu.vector_store %arg63[%c0_293, %c32], %598 {strides = array<i32>} : memref<2x256xf32, #tpu.memory_space<vmem>>, vector<1x32xf32>,
    %600 = vector.extract_strided_slice %298 {offsets = [2, 0], sizes = [1, 32], strides = [1, 1]} : vector<16x32xf32> to vector<1x32xf32>
    %c0_294 = arith.constant 0 : index
    %c64 = arith.constant 64 : index
    %601 = vector.load %arg63[%c0_294, %c64] : memref<2x256xf32, #tpu.memory_space<vmem>>, vector<1x32xf32>
    tpu.vector_store %arg63[%c0_294, %c64], %600 {strides = array<i32>} : memref<2x256xf32, #tpu.memory_space<vmem>>, vector<1x32xf32>,
    %602 = vector.extract_strided_slice %298 {offsets = [3, 0], sizes = [1, 32], strides = [1, 1]} : vector<16x32xf32> to vector<1x32xf32>
    %c0_295 = arith.constant 0 : index
    %c96 = arith.constant 96 : index
    %603 = vector.load %arg63[%c0_295, %c96] : memref<2x256xf32, #tpu.memory_space<vmem>>, vector<1x32xf32>
    tpu.vector_store %arg63[%c0_295, %c96], %602 {strides = array<i32>} : memref<2x256xf32, #tpu.memory_space<vmem>>, vector<1x32xf32>,
    %604 = vector.extract_strided_slice %298 {offsets = [4, 0], sizes = [1, 32], strides = [1, 1]} : vector<16x32xf32> to vector<1x32xf32>
    %c0_296 = arith.constant 0 : index
    %c128 = arith.constant 128 : index
    %605 = vector.load %arg63[%c0_296, %c128] : memref<2x256xf32, #tpu.memory_space<vmem>>, vector<1x32xf32>
    tpu.vector_store %arg63[%c0_296, %c128], %604 {strides = array<i32>} : memref<2x256xf32, #tpu.memory_space<vmem>>, vector<1x32xf32>,
    %606 = vector.extract_strided_slice %298 {offsets = [5, 0], sizes = [1, 32], strides = [1, 1]} : vector<16x32xf32> to vector<1x32xf32>
    %c0_297 = arith.constant 0 : index
    %c160 = arith.constant 160 : index
    %607 = vector.load %arg63[%c0_297, %c160] : memref<2x256xf32, #tpu.memory_space<vmem>>, vector<1x32xf32>
    tpu.vector_store %arg63[%c0_297, %c160], %606 {strides = array<i32>} : memref<2x256xf32, #tpu.memory_space<vmem>>, vector<1x32xf32>,
    %608 = vector.extract_strided_slice %298 {offsets = [6, 0], sizes = [1, 32], strides = [1, 1]} : vector<16x32xf32> to vector<1x32xf32>
    %c0_298 = arith.constant 0 : index
    %c192 = arith.constant 192 : index
    %609 = vector.load %arg63[%c0_298, %c192] : memref<2x256xf32, #tpu.memory_space<vmem>>, vector<1x32xf32>
    tpu.vector_store %arg63[%c0_298, %c192], %608 {strides = array<i32>} : memref<2x256xf32, #tpu.memory_space<vmem>>, vector<1x32xf32>,
    %610 = vector.extract_strided_slice %298 {offsets = [7, 0], sizes = [1, 32], strides = [1, 1]} : vector<16x32xf32> to vector<1x32xf32>
    %c0_299 = arith.constant 0 : index
    %c224 = arith.constant 224 : index
    %611 = vector.load %arg63[%c0_299, %c224] : memref<2x256xf32, #tpu.memory_space<vmem>>, vector<1x32xf32>
    tpu.vector_store %arg63[%c0_299, %c224], %610 {strides = array<i32>} : memref<2x256xf32, #tpu.memory_space<vmem>>, vector<1x32xf32>,
    %612 = vector.extract_strided_slice %595 {offsets = [0, 0], sizes = [1, 32], strides = [1, 1]} : vector<8x32xf32> to vector<1x32xf32>
    %c0_300 = arith.constant 0 : index
    %c0_301 = arith.constant 0 : index
    %613 = vector.load %arg64[%c0_300, %c0_301] : memref<2x128xf32, #tpu.memory_space<vmem>>, vector<1x32xf32>
    tpu.vector_store %arg64[%c0_300, %c0_301], %612 {strides = array<i32>} : memref<2x128xf32, #tpu.memory_space<vmem>>, vector<1x32xf32>,
    %614 = vector.extract_strided_slice %595 {offsets = [1, 0], sizes = [1, 32], strides = [1, 1]} : vector<8x32xf32> to vector<1x32xf32>
    %c0_302 = arith.constant 0 : index
    %c32_303 = arith.constant 32 : index
    %615 = vector.load %arg64[%c0_302, %c32_303] : memref<2x128xf32, #tpu.memory_space<vmem>>, vector<1x32xf32>
    tpu.vector_store %arg64[%c0_302, %c32_303], %614 {strides = array<i32>} : memref<2x128xf32, #tpu.memory_space<vmem>>, vector<1x32xf32>,
    %616 = vector.extract_strided_slice %595 {offsets = [2, 0], sizes = [1, 32], strides = [1, 1]} : vector<8x32xf32> to vector<1x32xf32>
    %c0_304 = arith.constant 0 : index
    %c64_305 = arith.constant 64 : index
    %617 = vector.load %arg64[%c0_304, %c64_305] : memref<2x128xf32, #tpu.memory_space<vmem>>, vector<1x32xf32>
    tpu.vector_store %arg64[%c0_304, %c64_305], %616 {strides = array<i32>} : memref<2x128xf32, #tpu.memory_space<vmem>>, vector<1x32xf32>,
    %618 = vector.extract_strided_slice %595 {offsets = [3, 0], sizes = [1, 32], strides = [1, 1]} : vector<8x32xf32> to vector<1x32xf32>
    %c0_306 = arith.constant 0 : index
    %c96_307 = arith.constant 96 : index
    %619 = vector.load %arg64[%c0_306, %c96_307] : memref<2x128xf32, #tpu.memory_space<vmem>>, vector<1x32xf32>
    tpu.vector_store %arg64[%c0_306, %c96_307], %618 {strides = array<i32>} : memref<2x128xf32, #tpu.memory_space<vmem>>, vector<1x32xf32>,
    %620 = vector.extract_strided_slice %298 {offsets = [8, 0], sizes = [1, 32], strides = [1, 1]} : vector<16x32xf32> to vector<1x32xf32>
    %c1 = arith.constant 1 : index
    %c0_308 = arith.constant 0 : index
    %621 = vector.load %arg63[%c1, %c0_308] : memref<2x256xf32, #tpu.memory_space<vmem>>, vector<1x32xf32>
    tpu.vector_store %arg63[%c1, %c0_308], %620 {strides = array<i32>} : memref<2x256xf32, #tpu.memory_space<vmem>>, vector<1x32xf32>,
    %622 = vector.extract_strided_slice %298 {offsets = [9, 0], sizes = [1, 32], strides = [1, 1]} : vector<16x32xf32> to vector<1x32xf32>
    %c1_309 = arith.constant 1 : index
    %c32_310 = arith.constant 32 : index
    %623 = vector.load %arg63[%c1_309, %c32_310] : memref<2x256xf32, #tpu.memory_space<vmem>>, vector<1x32xf32>
    tpu.vector_store %arg63[%c1_309, %c32_310], %622 {strides = array<i32>} : memref<2x256xf32, #tpu.memory_space<vmem>>, vector<1x32xf32>,
    %624 = vector.extract_strided_slice %298 {offsets = [10, 0], sizes = [1, 32], strides = [1, 1]} : vector<16x32xf32> to vector<1x32xf32>
    %c1_311 = arith.constant 1 : index
    %c64_312 = arith.constant 64 : index
    %625 = vector.load %arg63[%c1_311, %c64_312] : memref<2x256xf32, #tpu.memory_space<vmem>>, vector<1x32xf32>
    tpu.vector_store %arg63[%c1_311, %c64_312], %624 {strides = array<i32>} : memref<2x256xf32, #tpu.memory_space<vmem>>, vector<1x32xf32>,
    %626 = vector.extract_strided_slice %298 {offsets = [11, 0], sizes = [1, 32], strides = [1, 1]} : vector<16x32xf32> to vector<1x32xf32>
    %c1_313 = arith.constant 1 : index
    %c96_314 = arith.constant 96 : index
    %627 = vector.load %arg63[%c1_313, %c96_314] : memref<2x256xf32, #tpu.memory_space<vmem>>, vector<1x32xf32>
    tpu.vector_store %arg63[%c1_313, %c96_314], %626 {strides = array<i32>} : memref<2x256xf32, #tpu.memory_space<vmem>>, vector<1x32xf32>,
    %628 = vector.extract_strided_slice %298 {offsets = [12, 0], sizes = [1, 32], strides = [1, 1]} : vector<16x32xf32> to vector<1x32xf32>
    %c1_315 = arith.constant 1 : index
    %c128_316 = arith.constant 128 : index
    %629 = vector.load %arg63[%c1_315, %c128_316] : memref<2x256xf32, #tpu.memory_space<vmem>>, vector<1x32xf32>
    tpu.vector_store %arg63[%c1_315, %c128_316], %628 {strides = array<i32>} : memref<2x256xf32, #tpu.memory_space<vmem>>, vector<1x32xf32>,
    %630 = vector.extract_strided_slice %298 {offsets = [13, 0], sizes = [1, 32], strides = [1, 1]} : vector<16x32xf32> to vector<1x32xf32>
    %c1_317 = arith.constant 1 : index
    %c160_318 = arith.constant 160 : index
    %631 = vector.load %arg63[%c1_317, %c160_318] : memref<2x256xf32, #tpu.memory_space<vmem>>, vector<1x32xf32>
    tpu.vector_store %arg63[%c1_317, %c160_318], %630 {strides = array<i32>} : memref<2x256xf32, #tpu.memory_space<vmem>>, vector<1x32xf32>,
    %632 = vector.extract_strided_slice %298 {offsets = [14, 0], sizes = [1, 32], strides = [1, 1]} : vector<16x32xf32> to vector<1x32xf32>
    %c1_319 = arith.constant 1 : index
    %c192_320 = arith.constant 192 : index
    %633 = vector.load %arg63[%c1_319, %c192_320] : memref<2x256xf32, #tpu.memory_space<vmem>>, vector<1x32xf32>
    tpu.vector_store %arg63[%c1_319, %c192_320], %632 {strides = array<i32>} : memref<2x256xf32, #tpu.memory_space<vmem>>, vector<1x32xf32>,
    %634 = vector.extract_strided_slice %298 {offsets = [15, 0], sizes = [1, 32], strides = [1, 1]} : vector<16x32xf32> to vector<1x32xf32>
    %c1_321 = arith.constant 1 : index
    %c224_322 = arith.constant 224 : index
    %635 = vector.load %arg63[%c1_321, %c224_322] : memref<2x256xf32, #tpu.memory_space<vmem>>, vector<1x32xf32>
    tpu.vector_store %arg63[%c1_321, %c224_322], %634 {strides = array<i32>} : memref<2x256xf32, #tpu.memory_space<vmem>>, vector<1x32xf32>,
    %636 = vector.extract_strided_slice %595 {offsets = [4, 0], sizes = [1, 32], strides = [1, 1]} : vector<8x32xf32> to vector<1x32xf32>
    %c1_323 = arith.constant 1 : index
    %c0_324 = arith.constant 0 : index
    %637 = vector.load %arg64[%c1_323, %c0_324] : memref<2x128xf32, #tpu.memory_space<vmem>>, vector<1x32xf32>
    tpu.vector_store %arg64[%c1_323, %c0_324], %636 {strides = array<i32>} : memref<2x128xf32, #tpu.memory_space<vmem>>, vector<1x32xf32>,
    %638 = vector.extract_strided_slice %595 {offsets = [5, 0], sizes = [1, 32], strides = [1, 1]} : vector<8x32xf32> to vector<1x32xf32>
    %c1_325 = arith.constant 1 : index
    %c32_326 = arith.constant 32 : index
    %639 = vector.load %arg64[%c1_325, %c32_326] : memref<2x128xf32, #tpu.memory_space<vmem>>, vector<1x32xf32>
    tpu.vector_store %arg64[%c1_325, %c32_326], %638 {strides = array<i32>} : memref<2x128xf32, #tpu.memory_space<vmem>>, vector<1x32xf32>,
    %640 = vector.extract_strided_slice %595 {offsets = [6, 0], sizes = [1, 32], strides = [1, 1]} : vector<8x32xf32> to vector<1x32xf32>
    %c1_327 = arith.constant 1 : index
    %c64_328 = arith.constant 64 : index
    %641 = vector.load %arg64[%c1_327, %c64_328] : memref<2x128xf32, #tpu.memory_space<vmem>>, vector<1x32xf32>
    tpu.vector_store %arg64[%c1_327, %c64_328], %640 {strides = array<i32>} : memref<2x128xf32, #tpu.memory_space<vmem>>, vector<1x32xf32>,
    %642 = vector.extract_strided_slice %595 {offsets = [7, 0], sizes = [1, 32], strides = [1, 1]} : vector<8x32xf32> to vector<1x32xf32>
    %c1_329 = arith.constant 1 : index
    %c96_330 = arith.constant 96 : index
    %643 = vector.load %arg64[%c1_329, %c96_330] : memref<2x128xf32, #tpu.memory_space<vmem>>, vector<1x32xf32>
    tpu.vector_store %arg64[%c1_329, %c96_330], %642 {strides = array<i32>} : memref<2x128xf32, #tpu.memory_space<vmem>>, vector<1x32xf32>,
    %c0_331 = arith.constant 0 : index
    %c0_332 = arith.constant 0 : index
    %644 = vector.load %arg63[%c0_331, %c0_332] : memref<2x256xf32, #tpu.memory_space<vmem>>, vector<2x256xf32>
    %c0_333 = arith.constant 0 : index
    %c0_334 = arith.constant 0 : index
    %645 = vector.load %arg58[%c0_333, %c0_334] : memref<256x6xf32, #tpu.memory_space<vmem>>, vector<256x6xf32>
    %cst_335 = arith.constant dense<0.000000e+00> : vector<2x6xf32>
    %646 = tpu.matmul %644, %645, %cst_335 {dimension_numbers = #tpu.dot_dimension_numbers<[1], [0], [0], [1], [0, 0, 1, 1], [], []>} : vector<2x256xf32>, vector<256x6xf32>, vector<2x6xf32> -> vector<2x6xf32>
    %c0_336 = arith.constant 0 : index
    %c0_337 = arith.constant 0 : index
    %647 = vector.load %arg64[%c0_336, %c0_337] : memref<2x128xf32, #tpu.memory_space<vmem>>, vector<2x128xf32>
    %c0_338 = arith.constant 0 : index
    %c0_339 = arith.constant 0 : index
    %648 = vector.load %arg59[%c0_338, %c0_339] : memref<128x6xf32, #tpu.memory_space<vmem>>, vector<128x6xf32>
    %cst_340 = arith.constant dense<0.000000e+00> : vector<2x6xf32>
    %649 = tpu.matmul %647, %648, %cst_340 {dimension_numbers = #tpu.dot_dimension_numbers<[1], [0], [0], [1], [0, 0, 1, 1], [], []>} : vector<2x128xf32>, vector<128x6xf32>, vector<2x6xf32> -> vector<2x6xf32>
    %c0_341 = arith.constant 0 : index
    %c0_342 = arith.constant 0 : index
    %650 = vector.load %arg60[%c0_341, %c0_342] : memref<1x6xf32, #tpu.memory_space<vmem>>, vector<1x6xf32>
    %651 = vector.extract_strided_slice %646 {offsets = [0, 0], sizes = [2, 2], strides = [1, 1]} : vector<2x6xf32> to vector<2x2xf32>
    %652 = vector.extract_strided_slice %649 {offsets = [0, 0], sizes = [2, 2], strides = [1, 1]} : vector<2x6xf32> to vector<2x2xf32>
    %653 = arith.addf %651, %652 : vector<2x2xf32>
    %654 = vector.extract_strided_slice %650 {offsets = [0, 0], sizes = [1, 2], strides = [1, 1]} : vector<1x6xf32> to vector<1x2xf32>
    %655 = vector.broadcast %654 : vector<1x2xf32> to vector<2x2xf32>
    %656 = arith.addf %653, %655 : vector<2x2xf32>
    %cst_343 = arith.constant dense<0xFF800000> : vector<2xf32>
    %657 = vector.multi_reduction <maximumf>, %656, %cst_343 [1] : vector<2x2xf32> to vector<2xf32>
    %658 = vector.shape_cast %657 : vector<2xf32> to vector<2x1xf32>
    %659 = vector.broadcast %658 : vector<2x1xf32> to vector<2x2xf32>
    %660 = arith.subf %656, %659 : vector<2x2xf32>
    %661 = math.exp %660 : vector<2x2xf32>
    %cst_344 = arith.constant dense<0.000000e+00> : vector<2xf32>
    %662 = vector.multi_reduction <add>, %661, %cst_344 [1] : vector<2x2xf32> to vector<2xf32>
    %663 = vector.shape_cast %662 : vector<2xf32> to vector<2x1xf32>
    %664 = vector.broadcast %663 : vector<2x1xf32> to vector<2x2xf32>
    %665 = arith.divf %661, %664 : vector<2x2xf32>
    %666 = vector.extract_strided_slice %665 {offsets = [0, 0], sizes = [2, 1], strides = [1, 1]} : vector<2x2xf32> to vector<2x1xf32>
    %667 = vector.extract_strided_slice %646 {offsets = [0, 2], sizes = [2, 4], strides = [1, 1]} : vector<2x6xf32> to vector<2x4xf32>
    %668 = vector.broadcast %666 : vector<2x1xf32> to vector<2x4xf32>
    %669 = arith.mulf %668, %667 : vector<2x4xf32>
    %670 = vector.extract_strided_slice %665 {offsets = [0, 1], sizes = [2, 1], strides = [1, 1]} : vector<2x2xf32> to vector<2x1xf32>
    %671 = vector.extract_strided_slice %649 {offsets = [0, 2], sizes = [2, 4], strides = [1, 1]} : vector<2x6xf32> to vector<2x4xf32>
    %672 = vector.broadcast %670 : vector<2x1xf32> to vector<2x4xf32>
    %673 = arith.mulf %672, %671 : vector<2x4xf32>
    %674 = arith.addf %669, %673 : vector<2x4xf32>
    %675 = vector.extract_strided_slice %650 {offsets = [0, 2], sizes = [1, 4], strides = [1, 1]} : vector<1x6xf32> to vector<1x4xf32>
    %676 = vector.broadcast %675 : vector<1x4xf32> to vector<2x4xf32>
    %677 = arith.addf %674, %676 : vector<2x4xf32>
    %c0_345 = arith.constant 0 : index
    %c0_346 = arith.constant 0 : index
    %678 = vector.load %arg61[%c0_345, %c0_346] : memref<2x4xf32, #tpu.memory_space<vmem>>, vector<2x4xf32>
    tpu.vector_store %arg61[%c0_345, %c0_346], %677 {strides = array<i32>} : memref<2x4xf32, #tpu.memory_space<vmem>>, vector<2x4xf32>,
    return
  }
  func.func @transform_0(%arg0: i32) -> (i32, i32) {
    %c0_i32 = arith.constant 0 : i32
    %c0_i32_0 = arith.constant 0 : i32
    %c0_i32_1 = arith.constant 0 : i32
    return %c0_i32, %c0_i32_0 : i32, i32
  }
  func.func @transform_1(%arg0: i32) -> (i32, i32) {
    %c0_i32 = arith.constant 0 : i32
    %c0_i32_0 = arith.constant 0 : i32
    %c0_i32_1 = arith.constant 0 : i32
    return %c0_i32, %c0_i32_0 : i32, i32
  }
  func.func @transform_2(%arg0: i32) -> (i32, i32) {
    %c0_i32 = arith.constant 0 : i32
    %c0_i32_0 = arith.constant 0 : i32
    %c0_i32_1 = arith.constant 0 : i32
    return %c0_i32, %c0_i32_0 : i32, i32
  }
  func.func @transform_3(%arg0: i32) -> (i32, i32) {
    %c0_i32 = arith.constant 0 : i32
    %c0_i32_0 = arith.constant 0 : i32
    %c0_i32_1 = arith.constant 0 : i32
    return %c0_i32, %c0_i32_0 : i32, i32
  }
  func.func @transform_4(%arg0: i32) -> (i32, i32) {
    %c0_i32 = arith.constant 0 : i32
    %c0_i32_0 = arith.constant 0 : i32
    %c0_i32_1 = arith.constant 0 : i32
    return %c0_i32, %c0_i32_0 : i32, i32
  }
  func.func @transform_5(%arg0: i32) -> (i32, i32) {
    %c0_i32 = arith.constant 0 : i32
    %c0_i32_0 = arith.constant 0 : i32
    %c0_i32_1 = arith.constant 0 : i32
    return %c0_i32, %c0_i32_0 : i32, i32
  }
  func.func @transform_6(%arg0: i32) -> (i32, i32) {
    %c0_i32 = arith.constant 0 : i32
    %c0_i32_0 = arith.constant 0 : i32
    %c0_i32_1 = arith.constant 0 : i32
    return %c0_i32, %c0_i32_0 : i32, i32
  }
  func.func @transform_7(%arg0: i32) -> (i32, i32) {
    %c0_i32 = arith.constant 0 : i32
    %c0_i32_0 = arith.constant 0 : i32
    %c0_i32_1 = arith.constant 0 : i32
    return %c0_i32, %c0_i32_0 : i32, i32
  }
  func.func @transform_8(%arg0: i32) -> (i32, i32) {
    %c0_i32 = arith.constant 0 : i32
    %c0_i32_0 = arith.constant 0 : i32
    %c0_i32_1 = arith.constant 0 : i32
    return %c0_i32, %c0_i32_0 : i32, i32
  }
  func.func @transform_9(%arg0: i32) -> (i32, i32) {
    %c0_i32 = arith.constant 0 : i32
    %c0_i32_0 = arith.constant 0 : i32
    %c0_i32_1 = arith.constant 0 : i32
    return %c0_i32, %c0_i32_0 : i32, i32
  }
  func.func @transform_10(%arg0: i32) -> (i32, i32) {
    %c0_i32 = arith.constant 0 : i32
    %c0_i32_0 = arith.constant 0 : i32
    %c0_i32_1 = arith.constant 0 : i32
    return %c0_i32, %c0_i32_0 : i32, i32
  }
  func.func @transform_11(%arg0: i32) -> (i32, i32) {
    %c0_i32 = arith.constant 0 : i32
    %c0_i32_0 = arith.constant 0 : i32
    %c0_i32_1 = arith.constant 0 : i32
    return %c0_i32, %c0_i32_0 : i32, i32
  }
  func.func @transform_12(%arg0: i32) -> (i32, i32) {
    %c0_i32 = arith.constant 0 : i32
    %c0_i32_0 = arith.constant 0 : i32
    %c0_i32_1 = arith.constant 0 : i32
    return %c0_i32, %c0_i32_0 : i32, i32
  }
  func.func @transform_13(%arg0: i32) -> (i32, i32) {
    %c0_i32 = arith.constant 0 : i32
    %c0_i32_0 = arith.constant 0 : i32
    %c0_i32_1 = arith.constant 0 : i32
    return %c0_i32, %c0_i32_0 : i32, i32
  }
  func.func @transform_14(%arg0: i32) -> (i32, i32) {
    %c0_i32 = arith.constant 0 : i32
    %c0_i32_0 = arith.constant 0 : i32
    %c0_i32_1 = arith.constant 0 : i32
    return %c0_i32, %c0_i32_0 : i32, i32
  }
  func.func @transform_15(%arg0: i32) -> (i32, i32) {
    %c0_i32 = arith.constant 0 : i32
    %c0_i32_0 = arith.constant 0 : i32
    %c0_i32_1 = arith.constant 0 : i32
    return %c0_i32, %c0_i32_0 : i32, i32
  }
  func.func @transform_16(%arg0: i32) -> (i32, i32) {
    %c0_i32 = arith.constant 0 : i32
    %c0_i32_0 = arith.constant 0 : i32
    %c0_i32_1 = arith.constant 0 : i32
    return %c0_i32, %c0_i32_0 : i32, i32
  }
  func.func @transform_17(%arg0: i32) -> (i32, i32) {
    %c0_i32 = arith.constant 0 : i32
    %c0_i32_0 = arith.constant 0 : i32
    %c0_i32_1 = arith.constant 0 : i32
    return %c0_i32, %c0_i32_0 : i32, i32
  }
  func.func @transform_18(%arg0: i32) -> (i32, i32) {
    %c0_i32 = arith.constant 0 : i32
    %c0_i32_0 = arith.constant 0 : i32
    %c0_i32_1 = arith.constant 0 : i32
    return %c0_i32, %c0_i32_0 : i32, i32
  }
  func.func @transform_19(%arg0: i32) -> (i32, i32) {
    %c0_i32 = arith.constant 0 : i32
    %c0_i32_0 = arith.constant 0 : i32
    %c0_i32_1 = arith.constant 0 : i32
    return %c0_i32, %c0_i32_0 : i32, i32
  }
  func.func @transform_20(%arg0: i32) -> (i32, i32) {
    %c0_i32 = arith.constant 0 : i32
    %c0_i32_0 = arith.constant 0 : i32
    %c0_i32_1 = arith.constant 0 : i32
    return %c0_i32, %c0_i32_0 : i32, i32
  }
  func.func @transform_21(%arg0: i32) -> (i32, i32) {
    %c0_i32 = arith.constant 0 : i32
    %c0_i32_0 = arith.constant 0 : i32
    %c0_i32_1 = arith.constant 0 : i32
    return %c0_i32, %c0_i32_0 : i32, i32
  }
  func.func @transform_22(%arg0: i32) -> (i32, i32) {
    %c0_i32 = arith.constant 0 : i32
    %c0_i32_0 = arith.constant 0 : i32
    %c0_i32_1 = arith.constant 0 : i32
    return %c0_i32, %c0_i32_0 : i32, i32
  }
  func.func @transform_23(%arg0: i32) -> (i32, i32) {
    %c0_i32 = arith.constant 0 : i32
    %c0_i32_0 = arith.constant 0 : i32
    %c0_i32_1 = arith.constant 0 : i32
    return %c0_i32, %c0_i32_0 : i32, i32
  }
  func.func @transform_24(%arg0: i32) -> (i32, i32) {
    %c0_i32 = arith.constant 0 : i32
    %c0_i32_0 = arith.constant 0 : i32
    %c0_i32_1 = arith.constant 0 : i32
    return %c0_i32, %c0_i32_0 : i32, i32
  }
  func.func @transform_25(%arg0: i32) -> (i32, i32) {
    %c0_i32 = arith.constant 0 : i32
    %c0_i32_0 = arith.constant 0 : i32
    %c0_i32_1 = arith.constant 0 : i32
    return %c0_i32, %c0_i32_0 : i32, i32
  }
  func.func @transform_26(%arg0: i32) -> (i32, i32) {
    %c0_i32 = arith.constant 0 : i32
    %c0_i32_0 = arith.constant 0 : i32
    %c0_i32_1 = arith.constant 0 : i32
    return %c0_i32, %c0_i32_0 : i32, i32
  }
  func.func @transform_27(%arg0: i32) -> (i32, i32) {
    %c0_i32 = arith.constant 0 : i32
    %c0_i32_0 = arith.constant 0 : i32
    %c0_i32_1 = arith.constant 0 : i32
    return %c0_i32, %c0_i32_0 : i32, i32
  }
  func.func @transform_28(%arg0: i32) -> (i32, i32) {
    %c0_i32 = arith.constant 0 : i32
    %c0_i32_0 = arith.constant 0 : i32
    %c0_i32_1 = arith.constant 0 : i32
    return %c0_i32, %c0_i32_0 : i32, i32
  }
  func.func @transform_29(%arg0: i32) -> (i32, i32) {
    %c0_i32 = arith.constant 0 : i32
    %c0_i32_0 = arith.constant 0 : i32
    %c0_i32_1 = arith.constant 0 : i32
    return %c0_i32, %c0_i32_0 : i32, i32
  }
  func.func @transform_30(%arg0: i32) -> (i32, i32) {
    %c0_i32 = arith.constant 0 : i32
    %c0_i32_0 = arith.constant 0 : i32
    %c0_i32_1 = arith.constant 0 : i32
    return %c0_i32, %c0_i32_0 : i32, i32
  }
  func.func @transform_31(%arg0: i32) -> (i32, i32) {
    %c0_i32 = arith.constant 0 : i32
    %c0_i32_0 = arith.constant 0 : i32
    %c0_i32_1 = arith.constant 0 : i32
    return %c0_i32, %c0_i32_0 : i32, i32
  }
  func.func @transform_32(%arg0: i32) -> (i32, i32) {
    %c0_i32 = arith.constant 0 : i32
    %c0_i32_0 = arith.constant 0 : i32
    %c0_i32_1 = arith.constant 0 : i32
    return %c0_i32, %c0_i32_0 : i32, i32
  }
  func.func @transform_33(%arg0: i32) -> (i32, i32) {
    %c0_i32 = arith.constant 0 : i32
    %c0_i32_0 = arith.constant 0 : i32
    %c0_i32_1 = arith.constant 0 : i32
    return %c0_i32, %c0_i32_0 : i32, i32
  }
  func.func @transform_34(%arg0: i32) -> (i32, i32) {
    %c0_i32 = arith.constant 0 : i32
    %c0_i32_0 = arith.constant 0 : i32
    %c0_i32_1 = arith.constant 0 : i32
    return %c0_i32, %c0_i32_0 : i32, i32
  }
  func.func @transform_35(%arg0: i32) -> (i32, i32) {
    %c0_i32 = arith.constant 0 : i32
    %c0_i32_0 = arith.constant 0 : i32
    %c0_i32_1 = arith.constant 0 : i32
    return %c0_i32, %c0_i32_0 : i32, i32
  }
  func.func @transform_36(%arg0: i32) -> (i32, i32) {
    %c0_i32 = arith.constant 0 : i32
    %c0_i32_0 = arith.constant 0 : i32
    %c0_i32_1 = arith.constant 0 : i32
    return %c0_i32, %c0_i32_0 : i32, i32
  }
  func.func @transform_37(%arg0: i32) -> (i32, i32) {
    %c0_i32 = arith.constant 0 : i32
    %c0_i32_0 = arith.constant 0 : i32
    %c0_i32_1 = arith.constant 0 : i32
    return %c0_i32, %c0_i32_0 : i32, i32
  }
  func.func @transform_38(%arg0: i32) -> (i32, i32) {
    %c0_i32 = arith.constant 0 : i32
    %c0_i32_0 = arith.constant 0 : i32
    %c0_i32_1 = arith.constant 0 : i32
    return %c0_i32, %c0_i32_0 : i32, i32
  }
  func.func @transform_39(%arg0: i32) -> (i32, i32) {
    %c0_i32 = arith.constant 0 : i32
    %c0_i32_0 = arith.constant 0 : i32
    %c0_i32_1 = arith.constant 0 : i32
    return %c0_i32, %c0_i32_0 : i32, i32
  }
  func.func @transform_40(%arg0: i32) -> (i32, i32) {
    %c0_i32 = arith.constant 0 : i32
    %c0_i32_0 = arith.constant 0 : i32
    %c0_i32_1 = arith.constant 0 : i32
    return %c0_i32, %c0_i32_0 : i32, i32
  }
  func.func @transform_41(%arg0: i32) -> (i32, i32) {
    %c0_i32 = arith.constant 0 : i32
    %c0_i32_0 = arith.constant 0 : i32
    %c0_i32_1 = arith.constant 0 : i32
    return %c0_i32, %c0_i32_0 : i32, i32
  }
  func.func @transform_42(%arg0: i32) -> (i32, i32) {
    %c0_i32 = arith.constant 0 : i32
    %c0_i32_0 = arith.constant 0 : i32
    %c0_i32_1 = arith.constant 0 : i32
    return %c0_i32, %c0_i32_0 : i32, i32
  }
  func.func @transform_43(%arg0: i32) -> (i32, i32) {
    %c0_i32 = arith.constant 0 : i32
    %c0_i32_0 = arith.constant 0 : i32
    %c0_i32_1 = arith.constant 0 : i32
    return %c0_i32, %c0_i32_0 : i32, i32
  }
  func.func @transform_44(%arg0: i32) -> (i32, i32) {
    %c0_i32 = arith.constant 0 : i32
    %c0_i32_0 = arith.constant 0 : i32
    %c0_i32_1 = arith.constant 0 : i32
    return %c0_i32, %c0_i32_0 : i32, i32
  }
  func.func @transform_45(%arg0: i32) -> (i32, i32) {
    %c0_i32 = arith.constant 0 : i32
    %c0_i32_0 = arith.constant 0 : i32
    %c0_i32_1 = arith.constant 0 : i32
    return %c0_i32, %c0_i32_0 : i32, i32
  }
  func.func @transform_46(%arg0: i32) -> (i32, i32) {
    %c0_i32 = arith.constant 0 : i32
    %c0_i32_0 = arith.constant 0 : i32
    %c0_i32_1 = arith.constant 0 : i32
    return %c0_i32, %c0_i32_0 : i32, i32
  }
  func.func @transform_47(%arg0: i32) -> (i32, i32) {
    %c0_i32 = arith.constant 0 : i32
    %c0_i32_0 = arith.constant 0 : i32
    %c0_i32_1 = arith.constant 0 : i32
    return %c0_i32, %c0_i32_0 : i32, i32
  }
  func.func @transform_48(%arg0: i32) -> (i32, i32) {
    %c0_i32 = arith.constant 0 : i32
    %c0_i32_0 = arith.constant 0 : i32
    %c0_i32_1 = arith.constant 0 : i32
    return %c0_i32, %c0_i32_0 : i32, i32
  }
  func.func @transform_49(%arg0: i32) -> (i32, i32) {
    %c0_i32 = arith.constant 0 : i32
    %c0_i32_0 = arith.constant 0 : i32
    %c0_i32_1 = arith.constant 0 : i32
    return %c0_i32, %c0_i32_0 : i32, i32
  }
  func.func @transform_50(%arg0: i32) -> (i32, i32) {
    %c0_i32 = arith.constant 0 : i32
    %c0_i32_0 = arith.constant 0 : i32
    %c0_i32_1 = arith.constant 0 : i32
    return %c0_i32, %c0_i32_0 : i32, i32
  }
  func.func @transform_51(%arg0: i32) -> (i32, i32) {
    %c0_i32 = arith.constant 0 : i32
    %c0_i32_0 = arith.constant 0 : i32
    %c0_i32_1 = arith.constant 0 : i32
    return %c0_i32, %c0_i32_0 : i32, i32
  }
  func.func @transform_52(%arg0: i32) -> (i32, i32) {
    %c0_i32 = arith.constant 0 : i32
    %c0_i32_0 = arith.constant 0 : i32
    %c0_i32_1 = arith.constant 0 : i32
    return %c0_i32, %c0_i32_0 : i32, i32
  }
  func.func @transform_53(%arg0: i32) -> (i32, i32) {
    %c0_i32 = arith.constant 0 : i32
    %c0_i32_0 = arith.constant 0 : i32
    %c0_i32_1 = arith.constant 0 : i32
    return %c0_i32, %c0_i32_0 : i32, i32
  }
  func.func @transform_54(%arg0: i32) -> (i32, i32) {
    %c0_i32 = arith.constant 0 : i32
    %c0_i32_0 = arith.constant 0 : i32
    %c0_i32_1 = arith.constant 0 : i32
    return %c0_i32, %c0_i32_0 : i32, i32
  }
  func.func @transform_55(%arg0: i32) -> (i32, i32) {
    %c0_i32 = arith.constant 0 : i32
    %c0_i32_0 = arith.constant 0 : i32
    %c0_i32_1 = arith.constant 0 : i32
    return %c0_i32, %c0_i32_0 : i32, i32
  }
  func.func @transform_56(%arg0: i32) -> (i32, i32) {
    %c0_i32 = arith.constant 0 : i32
    %c0_i32_0 = arith.constant 0 : i32
    %c0_i32_1 = arith.constant 0 : i32
    return %c0_i32, %c0_i32_0 : i32, i32
  }
  func.func @transform_57(%arg0: i32) -> (i32, i32) {
    %c0_i32 = arith.constant 0 : i32
    %c0_i32_0 = arith.constant 0 : i32
    %c0_i32_1 = arith.constant 0 : i32
    return %c0_i32, %c0_i32_0 : i32, i32
  }
  func.func @transform_58(%arg0: i32) -> (i32, i32) {
    %c0_i32 = arith.constant 0 : i32
    %c0_i32_0 = arith.constant 0 : i32
    %c0_i32_1 = arith.constant 0 : i32
    return %c0_i32, %c0_i32_0 : i32, i32
  }
  func.func @transform_59(%arg0: i32) -> (i32, i32) {
    %c0_i32 = arith.constant 0 : i32
    %c0_i32_0 = arith.constant 0 : i32
    %c0_i32_1 = arith.constant 0 : i32
    return %c0_i32, %c0_i32_0 : i32, i32
  }
  func.func @transform_60(%arg0: i32) -> (i32, i32) {
    %c0_i32 = arith.constant 0 : i32
    %c0_i32_0 = arith.constant 0 : i32
    %c0_i32_1 = arith.constant 0 : i32
    return %c0_i32, %c0_i32_0 : i32, i32
  }
}

</mosaic_0001>

<llo_original>
// kernel: gtn_forward.1
$region0: #{gtn_forward.1}
  #allocation0 [shape = 'u32[]', space=smem, size = 0x4, offset = 0x4, fixed_abs, tag = 'smem constant byte address 0x4 - core index']
  #allocation1 [shape = 'u32[144,128]{1,0:T(1,128)}', space=vmem, size = 0x12000, scoped, tag = 'internal scratch']
  #allocation2 [shape = 'f32[16,32]{1,0:T(8,128)}', space=vmem, size = 0x2000, scoped, tag = 'scratch operand']
  #allocation3 [shape = 'f32[2,256]{1,0:T(2,128)}', space=vmem, size = 0x800, scoped, tag = 'scratch operand']
  #allocation4 [shape = 'f32[2,128]{1,0:T(2,128)}', space=vmem, size = 0x400, scoped, tag = 'scratch operand']
  %s0 = inlined_call_operand.smem [shape: u32[61], index: -1, kind: input, shape index: {}]
  %s1 = sld [smem:[%s0]]
  %s2 = scalar_lea.smem %s0, 1
  %s3 = sld [smem:[%s2]]
  %s4 = scalar_lea.smem %s0, 2
  %s5 = sld [smem:[%s4]]
  %s6 = scalar_lea.smem %s0, 3
  %s7 = sld [smem:[%s6]]
  %s8 = scalar_lea.smem %s0, 4
  %s9 = sld [smem:[%s8]]
  %s10 = scalar_lea.smem %s0, 5
  %s11 = sld [smem:[%s10]]
  %s12 = scalar_lea.smem %s0, 6
  %s13 = sld [smem:[%s12]]
  %s14 = scalar_lea.smem %s0, 7
  %s15 = sld [smem:[%s14]]
  %s16 = scalar_lea.smem %s0, 8
  %s17 = sld [smem:[%s16]]
  %s18 = scalar_lea.smem %s0, 9
  %s19 = sld [smem:[%s18]]
  %s20 = scalar_lea.smem %s0, 10
  %s21 = sld [smem:[%s20]]
  %s22 = scalar_lea.smem %s0, 11
  %s23 = sld [smem:[%s22]]
  %s24 = scalar_lea.smem %s0, 12
  %s25 = sld [smem:[%s24]]
  %s26 = scalar_lea.smem %s0, 13
  %s27 = sld [smem:[%s26]]
  %s28 = scalar_lea.smem %s0, 14
  %s29 = sld [smem:[%s28]]
  %s30 = scalar_lea.smem %s0, 15
  %s31 = sld [smem:[%s30]]
  %s32 = scalar_lea.smem %s0, 16
  %s33 = sld [smem:[%s32]]
  %s34 = scalar_lea.smem %s0, 17
  %s35 = sld [smem:[%s34]]
  %s36 = scalar_lea.smem %s0, 18
  %s37 = sld [smem:[%s36]]
  %s38 = scalar_lea.smem %s0, 19
  %s39 = sld [smem:[%s38]]
  %s40 = scalar_lea.smem %s0, 20
  %s41 = sld [smem:[%s40]]
  %s42 = scalar_lea.smem %s0, 21
  %s43 = sld [smem:[%s42]]
  %s44 = scalar_lea.smem %s0, 22
  %s45 = sld [smem:[%s44]]
  %s46 = scalar_lea.smem %s0, 23
  %s47 = sld [smem:[%s46]]
  %s48 = scalar_lea.smem %s0, 24
  %s49 = sld [smem:[%s48]]
  %s50 = scalar_lea.smem %s0, 25
  %s51 = sld [smem:[%s50]]
  %s52 = scalar_lea.smem %s0, 26
  %s53 = sld [smem:[%s52]]
  %s54 = scalar_lea.smem %s0, 27
  %s55 = sld [smem:[%s54]]
  %s56 = scalar_lea.smem %s0, 28
  %s57 = sld [smem:[%s56]]
  %s58 = scalar_lea.smem %s0, 29
  %s59 = sld [smem:[%s58]]
  %s60 = scalar_lea.smem %s0, 30
  %s61 = sld [smem:[%s60]]
  %s62 = scalar_lea.smem %s0, 31
  %s63 = sld [smem:[%s62]]
  %s64 = scalar_lea.smem %s0, 32
  %s65 = sld [smem:[%s64]]
  %s66 = scalar_lea.smem %s0, 33
  %s67 = sld [smem:[%s66]]
  %s68 = scalar_lea.smem %s0, 34
  %s69 = sld [smem:[%s68]]
  %s70 = scalar_lea.smem %s0, 35
  %s71 = sld [smem:[%s70]]
  %s72 = scalar_lea.smem %s0, 36
  %s73 = sld [smem:[%s72]]
  %s74 = scalar_lea.smem %s0, 37
  %s75 = sld [smem:[%s74]]
  %s76 = scalar_lea.smem %s0, 38
  %s77 = sld [smem:[%s76]]
  %s78 = scalar_lea.smem %s0, 39
  %s79 = sld [smem:[%s78]]
  %s80 = scalar_lea.smem %s0, 40
  %s81 = sld [smem:[%s80]]
  %s82 = scalar_lea.smem %s0, 41
  %s83 = sld [smem:[%s82]]
  %s84 = scalar_lea.smem %s0, 42
  %s85 = sld [smem:[%s84]]
  %s86 = scalar_lea.smem %s0, 43
  %s87 = sld [smem:[%s86]]
  %s88 = scalar_lea.smem %s0, 44
  %s89 = sld [smem:[%s88]]
  %s90 = scalar_lea.smem %s0, 45
  %s91 = sld [smem:[%s90]]
  %s92 = scalar_lea.smem %s0, 46
  %s93 = sld [smem:[%s92]]
  %s94 = scalar_lea.smem %s0, 47
  %s95 = sld [smem:[%s94]]
  %s96 = scalar_lea.smem %s0, 48
  %s97 = sld [smem:[%s96]]
  %s98 = scalar_lea.smem %s0, 49
  %s99 = sld [smem:[%s98]]
  %s100 = scalar_lea.smem %s0, 50
  %s101 = sld [smem:[%s100]]
  %s102 = scalar_lea.smem %s0, 51
  %s103 = sld [smem:[%s102]]
  %s104 = scalar_lea.smem %s0, 52
  %s105 = sld [smem:[%s104]]
  %s106 = scalar_lea.smem %s0, 53
  %s107 = sld [smem:[%s106]]
  %s108 = scalar_lea.smem %s0, 54
  %s109 = sld [smem:[%s108]]
  %s110 = scalar_lea.smem %s0, 55
  %s111 = sld [smem:[%s110]]
  %s112 = scalar_lea.smem %s0, 56
  %s113 = sld [smem:[%s112]]
  %s114 = scalar_lea.smem %s0, 57
  %s115 = sld [smem:[%s114]]
  %s116 = scalar_lea.smem %s0, 58
  %s117 = sld [smem:[%s116]]
  %s118 = scalar_lea.smem %s0, 59
  %s119 = sld [smem:[%s118]]
  %s120 = scalar_lea.smem %s0, 60
  %s121 = sld [smem:[%s120]]
  %s122 = sld [smem:[#allocation0]]
  $region306: #{gtn_forward.1} parent=0
    _
  %s124 = ssub.s32 1, %s122
  %s125 = scalar_select 0, %s124, %s122
  $region1: #{gtn_forward.1} parent=0
    #allocation5 [shape = 'u8[512]{0}', space=vmem, size = 0x400, scoped, tag = 'input window, operand 38, single buffered']
    #allocation6 [shape = 's32[1]{0}', space=sflag, size = 0x4, scoped, tag = 'scoped memory for gtn_forward.1']
    #allocation7 [shape = 's32[1]{0}', space=sflag, size = 0x4, scoped, tag = 'scoped memory for gtn_forward.1']
    #allocation8 [shape = 'u8[512]{0}', space=vmem, size = 0x400, scoped, tag = 'input window, operand 40, single buffered']
    #allocation9 [shape = 's32[1]{0}', space=sflag, size = 0x4, scoped, tag = 'scoped memory for gtn_forward.1']
    #allocation10 [shape = 'u8[512]{0}', space=vmem, size = 0x400, scoped, tag = 'input window, operand 42, single buffered']
    #allocation11 [shape = 'u8[512]{0}', space=vmem, size = 0x400, scoped, tag = 'input window, operand 43, single buffered']
    #allocation12 [shape = 's32[1]{0}', space=sflag, size = 0x4, scoped, tag = 'scoped memory for gtn_forward.1']
    #allocation13 [shape = 'u8[512]{0}', space=vmem, size = 0x400, scoped, tag = 'input window, operand 44, single buffered']
    #allocation14 [shape = 'u8[512]{0}', space=vmem, size = 0x400, scoped, tag = 'input window, operand 46, single buffered']
    #allocation15 [shape = 's32[1]{0}', space=sflag, size = 0x4, scoped, tag = 'scoped memory for gtn_forward.1']
    #allocation16 [shape = 'u8[512]{0}', space=vmem, size = 0x400, scoped, tag = 'input window, operand 48, single buffered']
    #allocation17 [shape = 'u8[512]{0}', space=vmem, size = 0x400, scoped, tag = 'input window, operand 49, single buffered']
    #allocation18 [shape = 's32[1]{0}', space=sflag, size = 0x4, scoped, tag = 'scoped memory for gtn_forward.1']
    #allocation19 [shape = 'u8[512]{0}', space=vmem, size = 0x400, scoped, tag = 'input window, operand 50, single buffered']
    #allocation20 [shape = 'u8[512]{0}', space=vmem, size = 0x400, scoped, tag = 'input window, operand 52, single buffered']
    #allocation21 [shape = 's32[1]{0}', space=sflag, size = 0x4, scoped, tag = 'scoped memory for gtn_forward.1']
    #allocation22 [shape = 'u8[512]{0}', space=vmem, size = 0x400, scoped, tag = 'input window, operand 54, single buffered']
    #allocation23 [shape = 'u8[512]{0}', space=vmem, size = 0x400, scoped, tag = 'input window, operand 55, single buffered']
    #allocation24 [shape = 's32[1]{0}', space=sflag, size = 0x4, scoped, tag = 'scoped memory for gtn_forward.1']
    #allocation25 [shape = 'u8[512]{0}', space=vmem, size = 0x400, scoped, tag = 'input window, operand 56, single buffered']
    #allocation26 [shape = 'u8[512]{0}', space=vmem, size = 0x400, scoped, tag = 'input window, operand 59, single buffered']
    #allocation27 [shape = 's32[1]{0}', space=sflag, size = 0x4, scoped, tag = 'scoped memory for gtn_forward.1']
    #allocation28 [shape = 'u8[1024]{0}', space=vmem, size = 0x400, scoped, tag = 'output window, operand 0, single buffered']
    %126 = vsyncpa [#allocation6], 0
    %127 = vsyncpa [#allocation9], 0
    %128 = vsyncpa [#allocation12], 0
    %129 = vsyncpa [#allocation15], 0
    %130 = vsyncpa [#allocation18], 0
    %131 = vsyncpa [#allocation21], 0
    %132 = vsyncpa [#allocation24], 0
    %133 = vsyncpa [#allocation27], 0
    %134 = vsyncpa [#allocation7], 0
    // Predicated region
    $region2: #{gtn_forward.1} parent=1 // pred_check
      _
    $region3: #{gtn_forward.1} parent=1 // pred_check_branch
      %136 = sbr.rel (0) target = $region5
    $region4: #{gtn_forward.1} parent=1 // pred_region
      _
    $region5: #{gtn_forward.1} parent=1 // pred_fallthru
      _
    // Predicated region
    $region6: #{gtn_forward.1} parent=1 // pred_check
      _
    $region7: #{gtn_forward.1} parent=1 // pred_check_branch
      %138 = sbr.rel (0) target = $region9
    $region8: #{gtn_forward.1} parent=1 // pred_region
      _
    $region9: #{gtn_forward.1} parent=1 // pred_fallthru
      _
    // Predicated region
    $region10: #{gtn_forward.1} parent=1 // pred_check
      _
    $region11: #{gtn_forward.1} parent=1 // pred_check_branch
      %140 = sbr.rel (0) target = $region13
    $region12: #{gtn_forward.1} parent=1 // pred_region
      _
    $region13: #{gtn_forward.1} parent=1 // pred_fallthru
      _
    // Predicated region
    $region14: #{gtn_forward.1} parent=1 // pred_check
      _
    $region15: #{gtn_forward.1} parent=1 // pred_check_branch
      %142 = sbr.rel (0) target = $region17
    $region16: #{gtn_forward.1} parent=1 // pred_region
      _
    $region17: #{gtn_forward.1} parent=1 // pred_fallthru
      _
    // Predicated region
    $region18: #{gtn_forward.1} parent=1 // pred_check
      _
    $region19: #{gtn_forward.1} parent=1 // pred_check_branch
      %144 = sbr.rel (0) target = $region21
    $region20: #{gtn_forward.1} parent=1 // pred_region
      _
    $region21: #{gtn_forward.1} parent=1 // pred_fallthru
      _
    // Predicated region
    $region22: #{gtn_forward.1} parent=1 // pred_check
      _
    $region23: #{gtn_forward.1} parent=1 // pred_check_branch
      %146 = sbr.rel (0) target = $region25
    $region24: #{gtn_forward.1} parent=1 // pred_region
      _
    $region25: #{gtn_forward.1} parent=1 // pred_fallthru
      _
    // Predicated region
    $region26: #{gtn_forward.1} parent=1 // pred_check
      _
    $region27: #{gtn_forward.1} parent=1 // pred_check_branch
      %148 = sbr.rel (0) target = $region29
    $region28: #{gtn_forward.1} parent=1 // pred_region
      _
    $region29: #{gtn_forward.1} parent=1 // pred_fallthru
      _
    // Predicated region
    $region30: #{gtn_forward.1} parent=1 // pred_check
      _
    $region31: #{gtn_forward.1} parent=1 // pred_check_branch
      %150 = sbr.rel (0) target = $region33
    $region32: #{gtn_forward.1} parent=1 // pred_region
      _
    $region33: #{gtn_forward.1} parent=1 // pred_fallthru
      _
    // Predicated region
    $region34: #{gtn_forward.1} parent=1 // pred_check
      _
    $region35: #{gtn_forward.1} parent=1 // pred_check_branch
      %152 = sbr.rel (0) target = $region37
    $region36: #{gtn_forward.1} parent=1 // pred_region
      _
    $region37: #{gtn_forward.1} parent=1 // pred_fallthru
      _
    // Predicated region
    $region38: #{gtn_forward.1} parent=1 // pred_check
      _
    $region39: #{gtn_forward.1} parent=1 // pred_check_branch
      %154 = sbr.rel (0) target = $region41
    $region40: #{gtn_forward.1} parent=1 // pred_region
      _
    $region41: #{gtn_forward.1} parent=1 // pred_fallthru
      _
    // Predicated region
    $region42: #{gtn_forward.1} parent=1 // pred_check
      _
    $region43: #{gtn_forward.1} parent=1 // pred_check_branch
      %156 = sbr.rel (0) target = $region45
    $region44: #{gtn_forward.1} parent=1 // pred_region
      _
    $region45: #{gtn_forward.1} parent=1 // pred_fallthru
      _
    // Predicated region
    $region46: #{gtn_forward.1} parent=1 // pred_check
      _
    $region47: #{gtn_forward.1} parent=1 // pred_check_branch
      %158 = sbr.rel (0) target = $region49
    $region48: #{gtn_forward.1} parent=1 // pred_region
      _
    $region49: #{gtn_forward.1} parent=1 // pred_fallthru
      _
    // Predicated region
    $region50: #{gtn_forward.1} parent=1 // pred_check
      _
    $region51: #{gtn_forward.1} parent=1 // pred_check_branch
      %160 = sbr.rel (0) target = $region53
    $region52: #{gtn_forward.1} parent=1 // pred_region
      _
    $region53: #{gtn_forward.1} parent=1 // pred_fallthru
      _
    // Predicated region
    $region54: #{gtn_forward.1} parent=1 // pred_check
      _
    $region55: #{gtn_forward.1} parent=1 // pred_check_branch
      %162 = sbr.rel (0) target = $region57
    $region56: #{gtn_forward.1} parent=1 // pred_region
      _
    $region57: #{gtn_forward.1} parent=1 // pred_fallthru
      _
    // Predicated region
    $region58: #{gtn_forward.1} parent=1 // pred_check
      _
    $region59: #{gtn_forward.1} parent=1 // pred_check_branch
      %164 = sbr.rel (0) target = $region61
    $region60: #{gtn_forward.1} parent=1 // pred_region
      _
    $region61: #{gtn_forward.1} parent=1 // pred_fallthru
      _
    // Predicated region
    $region62: #{gtn_forward.1} parent=1 // pred_check
      _
    $region63: #{gtn_forward.1} parent=1 // pred_check_branch
      %166 = sbr.rel (0) target = $region65
    $region64: #{gtn_forward.1} parent=1 // pred_region
      _
    $region65: #{gtn_forward.1} parent=1 // pred_fallthru
      _
    // Predicated region
    $region66: #{gtn_forward.1} parent=1 // pred_check
      _
    $region67: #{gtn_forward.1} parent=1 // pred_check_branch
      %168 = sbr.rel (0) target = $region69
    $region68: #{gtn_forward.1} parent=1 // pred_region
      _
    $region69: #{gtn_forward.1} parent=1 // pred_fallthru
      _
    // Predicated region
    $region70: #{gtn_forward.1} parent=1 // pred_check
      _
    $region71: #{gtn_forward.1} parent=1 // pred_check_branch
      %170 = sbr.rel (0) target = $region73
    $region72: #{gtn_forward.1} parent=1 // pred_region
      _
    $region73: #{gtn_forward.1} parent=1 // pred_fallthru
      _
    // Predicated region
    $region74: #{gtn_forward.1} parent=1 // pred_check
      _
    $region75: #{gtn_forward.1} parent=1 // pred_check_branch
      %172 = sbr.rel (0) target = $region77
    $region76: #{gtn_forward.1} parent=1 // pred_region
      _
    $region77: #{gtn_forward.1} parent=1 // pred_fallthru
      _
    // Predicated region
    $region78: #{gtn_forward.1} parent=1 // pred_check
      _
    $region79: #{gtn_forward.1} parent=1 // pred_check_branch
      %174 = sbr.rel (0) target = $region81
    $region80: #{gtn_forward.1} parent=1 // pred_region
      _
    $region81: #{gtn_forward.1} parent=1 // pred_fallthru
      _
    // Predicated region
    $region82: #{gtn_forward.1} parent=1 // pred_check
      _
    $region83: #{gtn_forward.1} parent=1 // pred_check_branch
      %176 = sbr.rel (0) target = $region85
    $region84: #{gtn_forward.1} parent=1 // pred_region
      _
    $region85: #{gtn_forward.1} parent=1 // pred_fallthru
      _
    // Predicated region
    $region86: #{gtn_forward.1} parent=1 // pred_check
      _
    $region87: #{gtn_forward.1} parent=1 // pred_check_branch
      %178 = sbr.rel (0) target = $region89
    $region88: #{gtn_forward.1} parent=1 // pred_region
      _
    $region89: #{gtn_forward.1} parent=1 // pred_fallthru
      _
    // Predicated region
    $region90: #{gtn_forward.1} parent=1 // pred_check
      _
    $region91: #{gtn_forward.1} parent=1 // pred_check_branch
      %180 = sbr.rel (0) target = $region93
    $region92: #{gtn_forward.1} parent=1 // pred_region
      _
    $region93: #{gtn_forward.1} parent=1 // pred_fallthru
      _
    // Predicated region
    $region94: #{gtn_forward.1} parent=1 // pred_check
      _
    $region95: #{gtn_forward.1} parent=1 // pred_check_branch
      %182 = sbr.rel (0) target = $region97
    $region96: #{gtn_forward.1} parent=1 // pred_region
      _
    $region97: #{gtn_forward.1} parent=1 // pred_fallthru
      _
    // Predicated region
    $region98: #{gtn_forward.1} parent=1 // pred_check
      _
    $region99: #{gtn_forward.1} parent=1 // pred_check_branch
      %184 = sbr.rel (0) target = $region101
    $region100: #{gtn_forward.1} parent=1 // pred_region
      _
    $region101: #{gtn_forward.1} parent=1 // pred_fallthru
      _
    // Predicated region
    $region102: #{gtn_forward.1} parent=1 // pred_check
      _
    $region103: #{gtn_forward.1} parent=1 // pred_check_branch
      %186 = sbr.rel (0) target = $region105
    $region104: #{gtn_forward.1} parent=1 // pred_region
      _
    $region105: #{gtn_forward.1} parent=1 // pred_fallthru
      _
    // Predicated region
    $region106: #{gtn_forward.1} parent=1 // pred_check
      _
    $region107: #{gtn_forward.1} parent=1 // pred_check_branch
      %188 = sbr.rel (0) target = $region109
    $region108: #{gtn_forward.1} parent=1 // pred_region
      _
    $region109: #{gtn_forward.1} parent=1 // pred_fallthru
      _
    // Predicated region
    $region110: #{gtn_forward.1} parent=1 // pred_check
      _
    $region111: #{gtn_forward.1} parent=1 // pred_check_branch
      %190 = sbr.rel (0) target = $region113
    $region112: #{gtn_forward.1} parent=1 // pred_region
      _
    $region113: #{gtn_forward.1} parent=1 // pred_fallthru
      _
    // Predicated region
    $region114: #{gtn_forward.1} parent=1 // pred_check
      _
    $region115: #{gtn_forward.1} parent=1 // pred_check_branch
      %192 = sbr.rel (0) target = $region117
    $region116: #{gtn_forward.1} parent=1 // pred_region
      _
    $region117: #{gtn_forward.1} parent=1 // pred_fallthru
      _
    // Predicated region
    $region118: #{gtn_forward.1} parent=1 // pred_check
      _
    $region119: #{gtn_forward.1} parent=1 // pred_check_branch
      %194 = sbr.rel (0) target = $region121
    $region120: #{gtn_forward.1} parent=1 // pred_region
      _
    $region121: #{gtn_forward.1} parent=1 // pred_fallthru
      _
    // Predicated region
    $region122: #{gtn_forward.1} parent=1 // pred_check
      _
    $region123: #{gtn_forward.1} parent=1 // pred_check_branch
      %196 = sbr.rel (0) target = $region125
    $region124: #{gtn_forward.1} parent=1 // pred_region
      _
    $region125: #{gtn_forward.1} parent=1 // pred_fallthru
      _
    // Predicated region
    $region126: #{gtn_forward.1} parent=1 // pred_check
      _
    $region127: #{gtn_forward.1} parent=1 // pred_check_branch
      %198 = sbr.rel (0) target = $region129
    $region128: #{gtn_forward.1} parent=1 // pred_region
      _
    $region129: #{gtn_forward.1} parent=1 // pred_fallthru
      _
    // Predicated region
    $region130: #{gtn_forward.1} parent=1 // pred_check
      _
    $region131: #{gtn_forward.1} parent=1 // pred_check_branch
      %200 = sbr.rel (0) target = $region133
    $region132: #{gtn_forward.1} parent=1 // pred_region
      _
    $region133: #{gtn_forward.1} parent=1 // pred_fallthru
      _
    // Predicated region
    $region134: #{gtn_forward.1} parent=1 // pred_check
      _
    $region135: #{gtn_forward.1} parent=1 // pred_check_branch
      %202 = sbr.rel (0) target = $region137
    $region136: #{gtn_forward.1} parent=1 // pred_region
      _
    $region137: #{gtn_forward.1} parent=1 // pred_fallthru
      _
    // Predicated region
    $region138: #{gtn_forward.1} parent=1 // pred_check
      _
    $region139: #{gtn_forward.1} parent=1 // pred_check_branch
      %204 = sbr.rel (0) target = $region141
    $region140: #{gtn_forward.1} parent=1 // pred_region
      _
    $region141: #{gtn_forward.1} parent=1 // pred_fallthru
      _
    // Predicated region
    $region142: #{gtn_forward.1} parent=1 // pred_check
      _
    $region143: #{gtn_forward.1} parent=1 // pred_check_branch
      %206 = sbr.rel (0) target = $region145
    $region144: #{gtn_forward.1} parent=1 // pred_region
      _
    $region145: #{gtn_forward.1} parent=1 // pred_fallthru
      _
    // Predicated region
    $region146: #{gtn_forward.1} parent=1 // pred_check
      _
    $region147: #{gtn_forward.1} parent=1 // pred_check_branch
      %208 = sbr.rel (0) target = $region149
    $region148: #{gtn_forward.1} parent=1 // pred_region
      _
    $region149: #{gtn_forward.1} parent=1 // pred_fallthru
      _
    // Predicated region
    $region150: #{gtn_forward.1} parent=1 // pred_check
      _
    $region151: #{gtn_forward.1} parent=1 // pred_check_branch
      %210 = sbr.rel (0) target = $region153
    $region152: #{gtn_forward.1} parent=1 // pred_region
      _
    $region153: #{gtn_forward.1} parent=1 // pred_fallthru
      _
    // Predicated region
    $region154: #{gtn_forward.1} parent=1 // pred_check
      _
    $region155: #{gtn_forward.1} parent=1 // pred_check_branch
      %212 = sbr.rel (0) target = $region157
    $region156: #{gtn_forward.1} parent=1 // pred_region
      %s214 = ssub.s32 16, 16
      %215 = vsyncadd [#allocation6], %s214
      %s217 = sshll.u32 [#allocation5], 4
      %s218 = int_to_ptr.vmem [resolvable:$true] %s217
      %220 = dma.hbm_to_vmem [thread:$0]  %s77, 16, %s218, [#allocation6]
    $region157: #{gtn_forward.1} parent=1 // pred_fallthru
      _
    // Predicated region
    $region158: #{gtn_forward.1} parent=1 // pred_check
      _
    $region159: #{gtn_forward.1} parent=1 // pred_check_branch
      %222 = sbr.rel (0) target = $region161
    $region160: #{gtn_forward.1} parent=1 // pred_region
      _
    $region161: #{gtn_forward.1} parent=1 // pred_fallthru
      _
    // Predicated region
    $region162: #{gtn_forward.1} parent=1 // pred_check
      _
    $region163: #{gtn_forward.1} parent=1 // pred_check_branch
      %224 = sbr.rel (0) target = $region165
    $region164: #{gtn_forward.1} parent=1 // pred_region
      %s226 = ssub.s32 16, 16
      %227 = vsyncadd [#allocation9], %s226
      %s229 = sshll.u32 [#allocation8], 4
      %s230 = int_to_ptr.vmem [resolvable:$true] %s229
      %232 = dma.hbm_to_vmem [thread:$0]  %s81, 16, %s230, [#allocation9]
    $region165: #{gtn_forward.1} parent=1 // pred_fallthru
      _
    // Predicated region
    $region166: #{gtn_forward.1} parent=1 // pred_check
      _
    $region167: #{gtn_forward.1} parent=1 // pred_check_branch
      %234 = sbr.rel (0) target = $region169
    $region168: #{gtn_forward.1} parent=1 // pred_region
      _
    $region169: #{gtn_forward.1} parent=1 // pred_fallthru
      _
    // Predicated region
    $region170: #{gtn_forward.1} parent=1 // pred_check
      _
    $region171: #{gtn_forward.1} parent=1 // pred_check_branch
      %236 = sbr.rel (0) target = $region173
    $region172: #{gtn_forward.1} parent=1 // pred_region
      %s238 = ssub.s32 16, 16
      %239 = vsyncadd [#allocation9], %s238
      %s241 = sshll.u32 [#allocation10], 4
      %s242 = int_to_ptr.vmem [resolvable:$true] %s241
      %244 = dma.hbm_to_vmem [thread:$0]  %s85, 16, %s242, [#allocation9]
    $region173: #{gtn_forward.1} parent=1 // pred_fallthru
      _
    // Predicated region
    $region174: #{gtn_forward.1} parent=1 // pred_check
      _
    $region175: #{gtn_forward.1} parent=1 // pred_check_branch
      %246 = sbr.rel (0) target = $region177
    $region176: #{gtn_forward.1} parent=1 // pred_region
      %s248 = ssub.s32 16, 16
      %249 = vsyncadd [#allocation12], %s248
      %s251 = sshll.u32 [#allocation11], 4
      %s252 = int_to_ptr.vmem [resolvable:$true] %s251
      %254 = dma.hbm_to_vmem [thread:$0]  %s87, 16, %s252, [#allocation12]
    $region177: #{gtn_forward.1} parent=1 // pred_fallthru
      _
    // Predicated region
    $region178: #{gtn_forward.1} parent=1 // pred_check
      _
    $region179: #{gtn_forward.1} parent=1 // pred_check_branch
      %256 = sbr.rel (0) target = $region181
    $region180: #{gtn_forward.1} parent=1 // pred_region
      %s258 = ssub.s32 16, 16
      %259 = vsyncadd [#allocation12], %s258
      %s261 = sshll.u32 [#allocation13], 4
      %s262 = int_to_ptr.vmem [resolvable:$true] %s261
      %264 = dma.hbm_to_vmem [thread:$0]  %s89, 16, %s262, [#allocation12]
    $region181: #{gtn_forward.1} parent=1 // pred_fallthru
      _
    // Predicated region
    $region182: #{gtn_forward.1} parent=1 // pred_check
      _
    $region183: #{gtn_forward.1} parent=1 // pred_check_branch
      %266 = sbr.rel (0) target = $region185
    $region184: #{gtn_forward.1} parent=1 // pred_region
      _
    $region185: #{gtn_forward.1} parent=1 // pred_fallthru
      _
    // Predicated region
    $region186: #{gtn_forward.1} parent=1 // pred_check
      _
    $region187: #{gtn_forward.1} parent=1 // pred_check_branch
      %268 = sbr.rel (0) target = $region189
    $region188: #{gtn_forward.1} parent=1 // pred_region
      %s270 = ssub.s32 16, 16
      %271 = vsyncadd [#allocation15], %s270
      %s273 = sshll.u32 [#allocation14], 4
      %s274 = int_to_ptr.vmem [resolvable:$true] %s273
      %276 = dma.hbm_to_vmem [thread:$0]  %s93, 16, %s274, [#allocation15]
    $region189: #{gtn_forward.1} parent=1 // pred_fallthru
      _
    // Predicated region
    $region190: #{gtn_forward.1} parent=1 // pred_check
      _
    $region191: #{gtn_forward.1} parent=1 // pred_check_branch
      %278 = sbr.rel (0) target = $region193
    $region192: #{gtn_forward.1} parent=1 // pred_region
      _
    $region193: #{gtn_forward.1} parent=1 // pred_fallthru
      _
    // Predicated region
    $region194: #{gtn_forward.1} parent=1 // pred_check
      _
    $region195: #{gtn_forward.1} parent=1 // pred_check_branch
      %280 = sbr.rel (0) target = $region197
    $region196: #{gtn_forward.1} parent=1 // pred_region
      %s282 = ssub.s32 16, 16
      %283 = vsyncadd [#allocation15], %s282
      %s285 = sshll.u32 [#allocation16], 4
      %s286 = int_to_ptr.vmem [resolvable:$true] %s285
      %288 = dma.hbm_to_vmem [thread:$0]  %s97, 16, %s286, [#allocation15]
    $region197: #{gtn_forward.1} parent=1 // pred_fallthru
      _
    // Predicated region
    $region198: #{gtn_forward.1} parent=1 // pred_check
      _
    $region199: #{gtn_forward.1} parent=1 // pred_check_branch
      %290 = sbr.rel (0) target = $region201
    $region200: #{gtn_forward.1} parent=1 // pred_region
      %s292 = ssub.s32 16, 16
      %293 = vsyncadd [#allocation18], %s292
      %s295 = sshll.u32 [#allocation17], 4
      %s296 = int_to_ptr.vmem [resolvable:$true] %s295
      %298 = dma.hbm_to_vmem [thread:$0]  %s99, 16, %s296, [#allocation18]
    $region201: #{gtn_forward.1} parent=1 // pred_fallthru
      _
    // Predicated region
    $region202: #{gtn_forward.1} parent=1 // pred_check
      _
    $region203: #{gtn_forward.1} parent=1 // pred_check_branch
      %300 = sbr.rel (0) target = $region205
    $region204: #{gtn_forward.1} parent=1 // pred_region
      %s302 = ssub.s32 16, 16
      %303 = vsyncadd [#allocation18], %s302
      %s305 = sshll.u32 [#allocation19], 4
      %s306 = int_to_ptr.vmem [resolvable:$true] %s305
      %308 = dma.hbm_to_vmem [thread:$0]  %s101, 16, %s306, [#allocation18]
    $region205: #{gtn_forward.1} parent=1 // pred_fallthru
      _
    // Predicated region
    $region206: #{gtn_forward.1} parent=1 // pred_check
      _
    $region207: #{gtn_forward.1} parent=1 // pred_check_branch
      %310 = sbr.rel (0) target = $region209
    $region208: #{gtn_forward.1} parent=1 // pred_region
      _
    $region209: #{gtn_forward.1} parent=1 // pred_fallthru
      _
    // Predicated region
    $region210: #{gtn_forward.1} parent=1 // pred_check
      _
    $region211: #{gtn_forward.1} parent=1 // pred_check_branch
      %312 = sbr.rel (0) target = $region213
    $region212: #{gtn_forward.1} parent=1 // pred_region
      %s314 = ssub.s32 16, 16
      %315 = vsyncadd [#allocation21], %s314
      %s317 = sshll.u32 [#allocation20], 4
      %s318 = int_to_ptr.vmem [resolvable:$true] %s317
      %320 = dma.hbm_to_vmem [thread:$0]  %s105, 16, %s318, [#allocation21]
    $region213: #{gtn_forward.1} parent=1 // pred_fallthru
      _
    // Predicated region
    $region214: #{gtn_forward.1} parent=1 // pred_check
      _
    $region215: #{gtn_forward.1} parent=1 // pred_check_branch
      %322 = sbr.rel (0) target = $region217
    $region216: #{gtn_forward.1} parent=1 // pred_region
      _
    $region217: #{gtn_forward.1} parent=1 // pred_fallthru
      _
    // Predicated region
    $region218: #{gtn_forward.1} parent=1 // pred_check
      _
    $region219: #{gtn_forward.1} parent=1 // pred_check_branch
      %324 = sbr.rel (0) target = $region221
    $region220: #{gtn_forward.1} parent=1 // pred_region
      %s326 = ssub.s32 16, 16
      %327 = vsyncadd [#allocation21], %s326
      %s329 = sshll.u32 [#allocation22], 4
      %s330 = int_to_ptr.vmem [resolvable:$true] %s329
      %332 = dma.hbm_to_vmem [thread:$0]  %s109, 16, %s330, [#allocation21]
    $region221: #{gtn_forward.1} parent=1 // pred_fallthru
      _
    // Predicated region
    $region222: #{gtn_forward.1} parent=1 // pred_check
      _
    $region223: #{gtn_forward.1} parent=1 // pred_check_branch
      %334 = sbr.rel (0) target = $region225
    $region224: #{gtn_forward.1} parent=1 // pred_region
      %s336 = ssub.s32 16, 16
      %337 = vsyncadd [#allocation24], %s336
      %s339 = sshll.u32 [#allocation23], 4
      %s340 = int_to_ptr.vmem [resolvable:$true] %s339
      %342 = dma.hbm_to_vmem [thread:$0]  %s111, 16, %s340, [#allocation24]
    $region225: #{gtn_forward.1} parent=1 // pred_fallthru
      _
    // Predicated region
    $region226: #{gtn_forward.1} parent=1 // pred_check
      _
    $region227: #{gtn_forward.1} parent=1 // pred_check_branch
      %344 = sbr.rel (0) target = $region229
    $region228: #{gtn_forward.1} parent=1 // pred_region
      %s346 = ssub.s32 16, 16
      %347 = vsyncadd [#allocation24], %s346
      %s349 = sshll.u32 [#allocation25], 4
      %s350 = int_to_ptr.vmem [resolvable:$true] %s349
      %352 = dma.hbm_to_vmem [thread:$0]  %s113, 16, %s350, [#allocation24]
    $region229: #{gtn_forward.1} parent=1 // pred_fallthru
      _
    // Predicated region
    $region230: #{gtn_forward.1} parent=1 // pred_check
      _
    $region231: #{gtn_forward.1} parent=1 // pred_check_branch
      %354 = sbr.rel (0) target = $region233
    $region232: #{gtn_forward.1} parent=1 // pred_region
      _
    $region233: #{gtn_forward.1} parent=1 // pred_fallthru
      _
    // Predicated region
    $region234: #{gtn_forward.1} parent=1 // pred_check
      _
    $region235: #{gtn_forward.1} parent=1 // pred_check_branch
      %356 = sbr.rel (0) target = $region237
    $region236: #{gtn_forward.1} parent=1 // pred_region
      _
    $region237: #{gtn_forward.1} parent=1 // pred_fallthru
      _
    // Predicated region
    $region238: #{gtn_forward.1} parent=1 // pred_check
      _
    $region239: #{gtn_forward.1} parent=1 // pred_check_branch
      %358 = sbr.rel (0) target = $region241
    $region240: #{gtn_forward.1} parent=1 // pred_region
      %s360 = ssub.s32 16, 16
      %361 = vsyncadd [#allocation27], %s360
      %s363 = sshll.u32 [#allocation26], 4
      %s364 = int_to_ptr.vmem [resolvable:$true] %s363
      %366 = dma.hbm_to_vmem [thread:$0]  %s119, 16, %s364, [#allocation27]
    $region241: #{gtn_forward.1} parent=1 // pred_fallthru
      _
    // Predicated region
    $region242: #{gtn_forward.1} parent=1 // pred_check
      _
    $region243: #{gtn_forward.1} parent=1 // pred_check_branch
      %368 = sbr.rel (0) target = $region245
    $region244: #{gtn_forward.1} parent=1 // pred_region
      %369 = dma.done [#allocation6], 16
    $region245: #{gtn_forward.1} parent=1 // pred_fallthru
      _
    // Predicated region
    $region246: #{gtn_forward.1} parent=1 // pred_check
      _
    $region247: #{gtn_forward.1} parent=1 // pred_check_branch
      %371 = sbr.rel (0) target = $region249
    $region248: #{gtn_forward.1} parent=1 // pred_region
      %372 = dma.done [#allocation9], 16
    $region249: #{gtn_forward.1} parent=1 // pred_fallthru
      _
    // Predicated region
    $region250: #{gtn_forward.1} parent=1 // pred_check
      _
    $region251: #{gtn_forward.1} parent=1 // pred_check_branch
      %374 = sbr.rel (0) target = $region253
    $region252: #{gtn_forward.1} parent=1 // pred_region
      %375 = dma.done [#allocation9], 16
    $region253: #{gtn_forward.1} parent=1 // pred_fallthru
      _
    // Predicated region
    $region254: #{gtn_forward.1} parent=1 // pred_check
      _
    $region255: #{gtn_forward.1} parent=1 // pred_check_branch
      %377 = sbr.rel (0) target = $region257
    $region256: #{gtn_forward.1} parent=1 // pred_region
      %378 = dma.done [#allocation12], 16
    $region257: #{gtn_forward.1} parent=1 // pred_fallthru
      _
    // Predicated region
    $region258: #{gtn_forward.1} parent=1 // pred_check
      _
    $region259: #{gtn_forward.1} parent=1 // pred_check_branch
      %380 = sbr.rel (0) target = $region261
    $region260: #{gtn_forward.1} parent=1 // pred_region
      %381 = dma.done [#allocation12], 16
    $region261: #{gtn_forward.1} parent=1 // pred_fallthru
      _
    // Predicated region
    $region262: #{gtn_forward.1} parent=1 // pred_check
      _
    $region263: #{gtn_forward.1} parent=1 // pred_check_branch
      %383 = sbr.rel (0) target = $region265
    $region264: #{gtn_forward.1} parent=1 // pred_region
      %384 = dma.done [#allocation15], 16
    $region265: #{gtn_forward.1} parent=1 // pred_fallthru
      _
    // Predicated region
    $region266: #{gtn_forward.1} parent=1 // pred_check
      _
    $region267: #{gtn_forward.1} parent=1 // pred_check_branch
      %386 = sbr.rel (0) target = $region269
    $region268: #{gtn_forward.1} parent=1 // pred_region
      %387 = dma.done [#allocation15], 16
    $region269: #{gtn_forward.1} parent=1 // pred_fallthru
      _
    // Predicated region
    $region270: #{gtn_forward.1} parent=1 // pred_check
      _
    $region271: #{gtn_forward.1} parent=1 // pred_check_branch
      %389 = sbr.rel (0) target = $region273
    $region272: #{gtn_forward.1} parent=1 // pred_region
      %390 = dma.done [#allocation18], 16
    $region273: #{gtn_forward.1} parent=1 // pred_fallthru
      _
    // Predicated region
    $region274: #{gtn_forward.1} parent=1 // pred_check
      _
    $region275: #{gtn_forward.1} parent=1 // pred_check_branch
      %392 = sbr.rel (0) target = $region277
    $region276: #{gtn_forward.1} parent=1 // pred_region
      %393 = dma.done [#allocation18], 16
    $region277: #{gtn_forward.1} parent=1 // pred_fallthru
      _
    // Predicated region
    $region278: #{gtn_forward.1} parent=1 // pred_check
      _
    $region279: #{gtn_forward.1} parent=1 // pred_check_branch
      %395 = sbr.rel (0) target = $region281
    $region280: #{gtn_forward.1} parent=1 // pred_region
      %396 = dma.done [#allocation21], 16
    $region281: #{gtn_forward.1} parent=1 // pred_fallthru
      _
    // Predicated region
    $region282: #{gtn_forward.1} parent=1 // pred_check
      _
    $region283: #{gtn_forward.1} parent=1 // pred_check_branch
      %398 = sbr.rel (0) target = $region285
    $region284: #{gtn_forward.1} parent=1 // pred_region
      %399 = dma.done [#allocation21], 16
    $region285: #{gtn_forward.1} parent=1 // pred_fallthru
      _
    // Predicated region
    $region286: #{gtn_forward.1} parent=1 // pred_check
      _
    $region287: #{gtn_forward.1} parent=1 // pred_check_branch
      %401 = sbr.rel (0) target = $region289
    $region288: #{gtn_forward.1} parent=1 // pred_region
      %402 = dma.done [#allocation24], 16
    $region289: #{gtn_forward.1} parent=1 // pred_fallthru
      _
    // Predicated region
    $region290: #{gtn_forward.1} parent=1 // pred_check
      _
    $region291: #{gtn_forward.1} parent=1 // pred_check_branch
      %404 = sbr.rel (0) target = $region293
    $region292: #{gtn_forward.1} parent=1 // pred_region
      %405 = dma.done [#allocation24], 16
    $region293: #{gtn_forward.1} parent=1 // pred_fallthru
      _
    // Predicated region
    $region294: #{gtn_forward.1} parent=1 // pred_check
      _
    $region295: #{gtn_forward.1} parent=1 // pred_check_branch
      %407 = sbr.rel (0) target = $region297
    $region296: #{gtn_forward.1} parent=1 // pred_region
      %408 = dma.done [#allocation27], 16
    $region297: #{gtn_forward.1} parent=1 // pred_fallthru
      _
    %v409 = vld [vmem:[%s1] sm:$0xff]
    %v410 = vld [vmem:[%s1 + $0x8] sm:$0xff]
    %v411 = vld [vmem:[%s11] sm:$0xf]
    %v412 = vld [vmem:[%s13] sm:$0x1]
    %v414 = vlaneseq
    %v415 = vshrl.u32 %v414, 7
    %v416 = vsub.s32 0, %v415
    %v417 = vrot.slane %v412, %v416
    %vm419 = vcmask 31744
    %v421 = vsel %vm419, %v409, 0
    %v424 = vsel %vm419, %v410, 0
    %vm426 = vcmask 1043456
    %v428 = vsel %vm426, %v411, 0
    %430 = vmatprep.subr.mxu0 0.0
    %431 = vmatpush1.msra.mxu0 0.0
    %432 = vmatprep.subr.mxu0 0.0
    %433 = vmatpush1.msra.mxu0 0.0
    %434 = vmatprep.subr.mxu0 0.0
    %435 = vmatpush1.msra.mxu0 0.0
    %436 = vmatprep.subr.mxu0 0.0
    %437 = vmatpush1.msra.mxu0 0.0
    %438 = vmatprep.subr.mxu0 0.0
    %439 = vmatpush1.msra.mxu0 0.0
    %440 = vmatprep.subr.mxu0 0.0
    %441 = vmatpush1.msra.mxu0 0.0
    %442 = vmatprep.subr.mxu0 0.0
    %443 = vmatpush1.msra.mxu0 0.0
    %444 = vmatprep.subr.mxu0 0.0
    %445 = vmatpush1.msra.mxu0 0.0
    %446 = vmatprep.subr.mxu0 0.0
    %447 = vmatpush1.msra.mxu0 0.0
    %448 = vmatprep.subr.mxu0 0.0
    %449 = vmatpush1.msra.mxu0 0.0
    %450 = vmatprep.subr.mxu0 0.0
    %451 = vmatpush1.msra.mxu0 0.0
    %452 = vmatprep.subr.mxu0 0.0
    %453 = vmatpush1.msra.mxu0 0.0
    %454 = vmatprep.subr.mxu0 0.0
    %455 = vmatpush1.msra.mxu0 0.0
    %456 = vmatprep.subr.mxu0 0.0
    %457 = vmatpush1.msra.mxu0 0.0
    %458 = vmatprep.subr.mxu0 0.0
    %459 = vmatpush1.msra.mxu0 0.0
    %460 = vmatprep.subr.mxu0 0.0
    %461 = vmatpush1.msra.mxu0 %v428
    %462 = vmatprep.subr.mxu0 0.0
    %463 = vmatpush2.msra.mxu0 0.0
    %464 = vmatprep.subr.mxu0 0.0
    %465 = vmatpush2.msra.mxu0 0.0
    %466 = vmatprep.subr.mxu0 0.0
    %467 = vmatpush2.msra.mxu0 0.0
    %468 = vmatprep.subr.mxu0 0.0
    %469 = vmatpush2.msra.mxu0 0.0
    %470 = vmatprep.subr.mxu0 0.0
    %471 = vmatpush2.msra.mxu0 0.0
    %472 = vmatprep.subr.mxu0 0.0
    %473 = vmatpush2.msra.mxu0 0.0
    %474 = vmatprep.subr.mxu0 0.0
    %475 = vmatpush2.msra.mxu0 0.0
    %476 = vmatprep.subr.mxu0 0.0
    %477 = vmatpush2.msra.mxu0 0.0
    %478 = vmatprep.subr.mxu0 0.0
    %479 = vmatpush2.msra.mxu0 0.0
    %480 = vmatprep.subr.mxu0 0.0
    %481 = vmatpush2.msra.mxu0 0.0
    %482 = vmatprep.subr.mxu0 0.0
    %483 = vmatpush2.msra.mxu0 0.0
    %484 = vmatprep.subr.mxu0 0.0
    %485 = vmatpush2.msra.mxu0 0.0
    %486 = vmatprep.subr.mxu0 0.0
    %487 = vmatpush2.msra.mxu0 0.0
    %488 = vmatprep.subr.mxu0 0.0
    %489 = vmatpush2.msra.mxu0 0.0
    %490 = vmatprep.subr.mxu0 0.0
    %491 = vmatpush2.msra.mxu0 0.0
    %492 = vmatprep.subr.mxu0 0.0
    %493 = vmatpush2.msra.mxu0 0.0
    %494 = vmatprep.mubr.f32.mxu0 0.0
    %495 = vmatmul.mubr.f32.gmra.mxu0 %v421
    %v496 = vpop.f32.mrf.mxu0
    %v497 = vadd.f32 %v417, %v496
    %v498 = vpop.f32.mrf.mxu0
    %499 = vmatprep.mubr.f32.mxu0 0.0
    %500 = vmatmul.mubr.f32.gmra.mxu0 %v424
    %v501 = vpop.f32.mrf.mxu0
    %v502 = vadd.f32 %v417, %v501
    %v503 = vpop.f32.mrf.mxu0
    %504 = vdwg.mxu0
    %v505 = vld [vmem:[%s5] sm:$0xff]
    %v506 = vld [vmem:[%s5 + $0x8] sm:$0xff]
    %v507 = vadd.f32 %v497, %v505
    %v508 = vadd.f32 %v502, %v506
    %v509 = vld [vmem:[%s7] sm:$0xff]
    %v510 = vld [vmem:[%s7 + $0x8] sm:$0xff]
    %v511 = vld [vmem:[%s19] sm:$0xff]
    %v512 = vld [vmem:[%s19 + $0x8] sm:$0xff]
    %v513 = vld [vmem:[%s19 + $0x10] sm:$0xff]
    %v514 = vld [vmem:[%s19 + $0x18] sm:$0xff]
    %v515 = vld [vmem:[%s21] sm:$0x1]
    %v516 = vld [vmem:[%s23] sm:$0xff]
    %v517 = vld [vmem:[%s23 + $0x8] sm:$0xff]
    %v518 = vld [vmem:[%s23 + $0x10] sm:$0xff]
    %v519 = vld [vmem:[%s23 + $0x18] sm:$0xff]
    %v520 = vld [vmem:[%s25] sm:$0x1]
    %v521 = vld [vmem:[%s27] sm:$0x1]
    %v522 = vld [vmem:[%s29] sm:$0x1]
    %v523 = vld [vmem:[%s31] sm:$0xff]
    %v524 = vld [vmem:[%s31 + $0x8] sm:$0xff]
    %v525 = vld [vmem:[%s31 + $0x10] sm:$0xff]
    %v526 = vld [vmem:[%s31 + $0x18] sm:$0xff]
    %v527 = vld [vmem:[%s33] sm:$0x1]
    %v528 = vld [vmem:[%s35] sm:$0xff]
    %v529 = vld [vmem:[%s35 + $0x8] sm:$0xff]
    %v530 = vld [vmem:[%s35 + $0x10] sm:$0xff]
    %v531 = vld [vmem:[%s35 + $0x18] sm:$0xff]
    %v532 = vld [vmem:[%s35 + $0x20] sm:$0xff]
    %v533 = vld [vmem:[%s35 + $0x28] sm:$0xff]
    %v534 = vld [vmem:[%s35 + $0x30] sm:$0xff]
    %v535 = vld [vmem:[%s35 + $0x38] sm:$0xff]
    %v536 = vld [vmem:[%s37] sm:$0x1]
    %v537 = vld [vmem:[%s39] sm:$0x1]
    %v538 = vld [vmem:[%s41] sm:$0x1]
    %v540 = vlaneseq
    %v541 = vshrl.u32 %v540, 7
    %v542 = vsub.s32 0, %v541
    %v543 = vrot.slane %v515, %v542
    %vm545 = vcmask 261120
    %v547 = vsel %vm545, %v507, 0
    %v550 = vsel %vm545, %v508, 0
    %552 = vmatprep.subr.mxu0 0.0
    %553 = vmatpush1.msra.mxu0 0.0
    %554 = vmatprep.subr.mxu0 0.0
    %555 = vmatpush1.msra.mxu0 0.0
    %556 = vmatprep.subr.mxu0 0.0
    %557 = vmatpush1.msra.mxu0 0.0
    %558 = vmatprep.subr.mxu0 0.0
    %559 = vmatpush1.msra.mxu0 0.0
    %560 = vmatprep.subr.mxu0 0.0
    %561 = vmatpush1.msra.mxu0 0.0
    %562 = vmatprep.subr.mxu0 0.0
    %563 = vmatpush1.msra.mxu0 0.0
    %564 = vmatprep.subr.mxu0 0.0
    %565 = vmatpush1.msra.mxu0 0.0
    %566 = vmatprep.subr.mxu0 0.0
    %567 = vmatpush1.msra.mxu0 0.0
    %568 = vmatprep.subr.mxu0 0.0
    %569 = vmatpush1.msra.mxu0 0.0
    %570 = vmatprep.subr.mxu0 0.0
    %571 = vmatpush1.msra.mxu0 0.0
    %572 = vmatprep.subr.mxu0 0.0
    %573 = vmatpush1.msra.mxu0 0.0
    %574 = vmatprep.subr.mxu0 0.0
    %575 = vmatpush1.msra.mxu0 0.0
    %576 = vmatprep.subr.mxu0 0.0
    %577 = vmatpush1.msra.mxu0 %v514
    %578 = vmatprep.subr.mxu0 0.0
    %579 = vmatpush1.msra.mxu0 %v513
    %580 = vmatprep.subr.mxu0 0.0
    %581 = vmatpush1.msra.mxu0 %v512
    %582 = vmatprep.subr.mxu0 0.0
    %583 = vmatpush1.msra.mxu0 %v511
    %584 = vmatprep.subr.mxu0 0.0
    %585 = vmatpush2.msra.mxu0 0.0
    %586 = vmatprep.subr.mxu0 0.0
    %587 = vmatpush2.msra.mxu0 0.0
    %588 = vmatprep.subr.mxu0 0.0
    %589 = vmatpush2.msra.mxu0 0.0
    %590 = vmatprep.subr.mxu0 0.0
    %591 = vmatpush2.msra.mxu0 0.0
    %592 = vmatprep.subr.mxu0 0.0
    %593 = vmatpush2.msra.mxu0 0.0
    %594 = vmatprep.subr.mxu0 0.0
    %595 = vmatpush2.msra.mxu0 0.0
    %596 = vmatprep.subr.mxu0 0.0
    %597 = vmatpush2.msra.mxu0 0.0
    %598 = vmatprep.subr.mxu0 0.0
    %599 = vmatpush2.msra.mxu0 0.0
    %600 = vmatprep.subr.mxu0 0.0
    %601 = vmatpush2.msra.mxu0 0.0
    %602 = vmatprep.subr.mxu0 0.0
    %603 = vmatpush2.msra.mxu0 0.0
    %604 = vmatprep.subr.mxu0 0.0
    %605 = vmatpush2.msra.mxu0 0.0
    %606 = vmatprep.subr.mxu0 0.0
    %607 = vmatpush2.msra.mxu0 0.0
    %608 = vmatprep.subr.mxu0 0.0
    %609 = vmatpush2.msra.mxu0 0.0
    %610 = vmatprep.subr.mxu0 0.0
    %611 = vmatpush2.msra.mxu0 0.0
    %612 = vmatprep.subr.mxu0 0.0
    %613 = vmatpush2.msra.mxu0 0.0
    %614 = vmatprep.subr.mxu0 0.0
    %615 = vmatpush2.msra.mxu0 0.0
    %616 = vmatprep.mubr.f32.mxu0 0.0
    %617 = vmatmul.mubr.f32.gmra.mxu0 %v547
    %v618 = vpop.f32.mrf.mxu0
    %v619 = vadd.f32 %v543, %v618
    %v620 = vpop.f32.mrf.mxu0
    %621 = vmatprep.mubr.f32.mxu0 0.0
    %622 = vmatmul.mubr.f32.gmra.mxu0 %v550
    %v623 = vpop.f32.mrf.mxu0
    %v624 = vadd.f32 %v543, %v623
    %v625 = vpop.f32.mrf.mxu0
    %626 = vdwg.mxu0
    %629 = vrot.lane.b32.xlu0 %v619, 96
    %v630 = vpop.permute.xlu0 %629
    %631 = vrot.lane.b32.xlu0 %v624, 96
    %v632 = vpop.permute.xlu0 %631
    %vm633 = vcmask 64512
    %v634 = vsel %vm633, %v619, 0
    %v636 = vsel %vm633, %v624, 0
    %v638 = vsel %vm633, %v630, 0
    %v640 = vsel %vm633, %v632, 0
    %642 = vmatprep.subr.mxu0 0.0
    %643 = vmatpush1.xpose.msra.mxu0 0.0
    %644 = vmatprep.subr.mxu0 0.0
    %645 = vmatpush1.xpose.msra.mxu0 0.0
    %646 = vmatprep.subr.mxu0 0.0
    %647 = vmatpush1.xpose.msra.mxu0 0.0
    %648 = vmatprep.subr.mxu0 0.0
    %649 = vmatpush1.xpose.msra.mxu0 0.0
    %650 = vmatprep.subr.mxu0 0.0
    %651 = vmatpush1.xpose.msra.mxu0 0.0
    %652 = vmatprep.subr.mxu0 0.0
    %653 = vmatpush1.xpose.msra.mxu0 0.0
    %654 = vmatprep.subr.mxu0 0.0
    %655 = vmatpush1.xpose.msra.mxu0 0.0
    %656 = vmatprep.subr.mxu0 0.0
    %657 = vmatpush1.xpose.msra.mxu0 0.0
    %658 = vmatprep.subr.mxu0 0.0
    %659 = vmatpush1.xpose.msra.mxu0 0.0
    %660 = vmatprep.subr.mxu0 0.0
    %661 = vmatpush1.xpose.msra.mxu0 0.0
    %662 = vmatprep.subr.mxu0 0.0
    %663 = vmatpush1.xpose.msra.mxu0 0.0
    %664 = vmatprep.subr.mxu0 0.0
    %665 = vmatpush1.xpose.msra.mxu0 0.0
    %666 = vmatprep.subr.mxu0 0.0
    %667 = vmatpush1.xpose.msra.mxu0 0.0
    %668 = vmatprep.subr.mxu0 0.0
    %669 = vmatpush1.xpose.msra.mxu0 0.0
    %670 = vmatprep.subr.mxu0 0.0
    %671 = vmatpush1.xpose.msra.mxu0 %v640
    %672 = vmatprep.subr.mxu0 0.0
    %673 = vmatpush1.xpose.msra.mxu0 %v638
    %674 = vmatprep.subr.mxu0 0.0
    %675 = vmatpush2.xpose.msra.mxu0 0.0
    %676 = vmatprep.subr.mxu0 0.0
    %677 = vmatpush2.xpose.msra.mxu0 0.0
    %678 = vmatprep.subr.mxu0 0.0
    %679 = vmatpush2.xpose.msra.mxu0 0.0
    %680 = vmatprep.subr.mxu0 0.0
    %681 = vmatpush2.xpose.msra.mxu0 0.0
    %682 = vmatprep.subr.mxu0 0.0
    %683 = vmatpush2.xpose.msra.mxu0 0.0
    %684 = vmatprep.subr.mxu0 0.0
    %685 = vmatpush2.xpose.msra.mxu0 0.0
    %686 = vmatprep.subr.mxu0 0.0
    %687 = vmatpush2.xpose.msra.mxu0 0.0
    %688 = vmatprep.subr.mxu0 0.0
    %689 = vmatpush2.xpose.msra.mxu0 0.0
    %690 = vmatprep.subr.mxu0 0.0
    %691 = vmatpush2.xpose.msra.mxu0 0.0
    %692 = vmatprep.subr.mxu0 0.0
    %693 = vmatpush2.xpose.msra.mxu0 0.0
    %694 = vmatprep.subr.mxu0 0.0
    %695 = vmatpush2.xpose.msra.mxu0 0.0
    %696 = vmatprep.subr.mxu0 0.0
    %697 = vmatpush2.xpose.msra.mxu0 0.0
    %698 = vmatprep.subr.mxu0 0.0
    %699 = vmatpush2.xpose.msra.mxu0 0.0
    %700 = vmatprep.subr.mxu0 0.0
    %701 = vmatpush2.xpose.msra.mxu0 0.0
    %702 = vmatprep.subr.mxu0 0.0
    %703 = vmatpush2.xpose.msra.mxu0 0.0
    %704 = vmatprep.subr.mxu0 0.0
    %705 = vmatpush2.xpose.msra.mxu0 0.0
    %706 = vmatprep.mubr.f32.mxu0 0.0
    %707 = vmatmul.mubr.f32.gmra.mxu0 %v634
    %v708 = vpop.f32.mrf.mxu0
    %v709 = vadd.f32 0.0, %v708
    %v710 = vpop.f32.mrf.mxu0
    %711 = vmatprep.mubr.f32.mxu0 0.0
    %712 = vmatmul.mubr.f32.gmra.mxu0 %v636
    %v713 = vpop.f32.mrf.mxu0
    %v714 = vadd.f32 0.0, %v713
    %v715 = vpop.f32.mrf.mxu0
    %716 = vdwg.mxu0
    %v717 = vmul.f32 %v709, 0.35355338
    %v718 = vmul.f32 %v714, 0.35355338
    %v719 = vadd.f32 %v717, %v509
    %v720 = vadd.f32 %v718, %v510
    %vm721 = vcmask 130048
    %v722 = vsel %vm721, %v719, -inf
    %723 = vmax.xlane.f32.xlu0 %v722
    %v724 = vpop.xlane.xlu0 %723
    %v725 = vsel %vm721, %v720, -inf
    %726 = vmax.xlane.f32.xlu0 %v725
    %v727 = vpop.xlane.xlu0 %726
    %v728 = vsub.f32 %v719, %v724
    %v729 = vsub.f32 %v720, %v727
    %v730 = vmul.f32 %v728, 1.442695
    %v731 = vpow.pop %v730
    %v732 = vmul.f32 %v729, 1.442695
    %v733 = vpow.pop %v732
    %v734 = vsel %vm721, %v731, 0.0
    %735 = vadd.xlane.f32.xlu0 %v734
    %v736 = vpop.xlane.xlu0 %735
    %v737 = vsel %vm721, %v733, 0.0
    %738 = vadd.xlane.f32.xlu0 %v737
    %v739 = vpop.xlane.xlu0 %738
    %v740 = vrcp.pop %v736
    %v741 = vmul.f32 %v731, %v740
    %v742 = vrcp.pop %v739
    %v743 = vmul.f32 %v733, %v742
    %744 = vrot.lane.b32.xlu0 %v619, 64
    %v745 = vpop.permute.xlu0 %744
    %746 = vrot.lane.b32.xlu0 %v624, 64
    %v747 = vpop.permute.xlu0 %746
    %v751 = vsel %vm721, %v741, 0
    %v754 = vsel %vm721, %v743, 0
    %756 = vmatprep.subr.mxu0 0.0
    %757 = vmatpush1.msra.mxu0 0.0
    %758 = vmatprep.subr.mxu0 0.0
    %759 = vmatpush1.msra.mxu0 0.0
    %760 = vmatprep.subr.mxu0 0.0
    %761 = vmatpush1.msra.mxu0 0.0
    %762 = vmatprep.subr.mxu0 0.0
    %763 = vmatpush1.msra.mxu0 0.0
    %764 = vmatprep.subr.mxu0 0.0
    %765 = vmatpush1.msra.mxu0 0.0
    %766 = vmatprep.subr.mxu0 0.0
    %767 = vmatpush1.msra.mxu0 0.0
    %768 = vmatprep.subr.mxu0 0.0
    %769 = vmatpush1.msra.mxu0 0.0
    %770 = vmatprep.subr.mxu0 0.0
    %771 = vmatpush1.msra.mxu0 0.0
    %772 = vmatprep.subr.mxu0 0.0
    %773 = vmatpush1.msra.mxu0 0.0
    %774 = vmatprep.subr.mxu0 0.0
    %775 = vmatpush1.msra.mxu0 0.0
    %776 = vmatprep.subr.mxu0 0.0
    %777 = vmatpush1.msra.mxu0 0.0
    %778 = vmatprep.subr.mxu0 0.0
    %779 = vmatpush1.msra.mxu0 0.0
    %780 = vmatprep.subr.mxu0 0.0
    %781 = vmatpush1.msra.mxu0 0.0
    %782 = vmatprep.subr.mxu0 0.0
    %783 = vmatpush1.msra.mxu0 0.0
    %784 = vmatprep.subr.mxu0 0.0
    %785 = vmatpush1.msra.mxu0 %v747
    %786 = vmatprep.subr.mxu0 0.0
    %787 = vmatpush1.msra.mxu0 %v745
    %788 = vmatprep.subr.mxu0 0.0
    %789 = vmatpush2.msra.mxu0 0.0
    %790 = vmatprep.subr.mxu0 0.0
    %791 = vmatpush2.msra.mxu0 0.0
    %792 = vmatprep.subr.mxu0 0.0
    %793 = vmatpush2.msra.mxu0 0.0
    %794 = vmatprep.subr.mxu0 0.0
    %795 = vmatpush2.msra.mxu0 0.0
    %796 = vmatprep.subr.mxu0 0.0
    %797 = vmatpush2.msra.mxu0 0.0
    %798 = vmatprep.subr.mxu0 0.0
    %799 = vmatpush2.msra.mxu0 0.0
    %800 = vmatprep.subr.mxu0 0.0
    %801 = vmatpush2.msra.mxu0 0.0
    %802 = vmatprep.subr.mxu0 0.0
    %803 = vmatpush2.msra.mxu0 0.0
    %804 = vmatprep.subr.mxu0 0.0
    %805 = vmatpush2.msra.mxu0 0.0
    %806 = vmatprep.subr.mxu0 0.0
    %807 = vmatpush2.msra.mxu0 0.0
    %808 = vmatprep.subr.mxu0 0.0
    %809 = vmatpush2.msra.mxu0 0.0
    %810 = vmatprep.subr.mxu0 0.0
    %811 = vmatpush2.msra.mxu0 0.0
    %812 = vmatprep.subr.mxu0 0.0
    %813 = vmatpush2.msra.mxu0 0.0
    %814 = vmatprep.subr.mxu0 0.0
    %815 = vmatpush2.msra.mxu0 0.0
    %816 = vmatprep.subr.mxu0 0.0
    %817 = vmatpush2.msra.mxu0 0.0
    %818 = vmatprep.subr.mxu0 0.0
    %819 = vmatpush2.msra.mxu0 0.0
    %820 = vmatprep.mubr.f32.mxu0 0.0
    %821 = vmatmul.mubr.f32.gmra.mxu0 %v751
    %v822 = vpop.f32.mrf.mxu0
    %v823 = vadd.f32 0.0, %v822
    %v824 = vpop.f32.mrf.mxu0
    %825 = vmatprep.mubr.f32.mxu0 0.0
    %826 = vmatmul.mubr.f32.gmra.mxu0 %v754
    %v827 = vpop.f32.mrf.mxu0
    %v828 = vadd.f32 0.0, %v827
    %v829 = vpop.f32.mrf.mxu0
    %830 = vdwg.mxu0
    %831 = vst.msk [vmem:[#allocation2] sm:$0xff] %vm633, %v823
    %832 = vst.msk [vmem:[#allocation2 + $0x8] sm:$0xff] %vm633, %v828
    %833 = vrot.lane.b32.xlu0 %v619, 120
    %v834 = vpop.permute.xlu0 %833
    %835 = vrot.lane.b32.xlu0 %v624, 120
    %v836 = vpop.permute.xlu0 %835
    %837 = vrot.lane.b32.xlu0 %v619, 88
    %v838 = vpop.permute.xlu0 %837
    %839 = vrot.lane.b32.xlu0 %v624, 88
    %v840 = vpop.permute.xlu0 %839
    %v841 = vsel %vm633, %v834, 0
    %v843 = vsel %vm633, %v836, 0
    %v845 = vsel %vm633, %v838, 0
    %v847 = vsel %vm633, %v840, 0
    %849 = vmatprep.subr.mxu0 0.0
    %850 = vmatpush1.xpose.msra.mxu0 0.0
    %851 = vmatprep.subr.mxu0 0.0
    %852 = vmatpush1.xpose.msra.mxu0 0.0
    %853 = vmatprep.subr.mxu0 0.0
    %854 = vmatpush1.xpose.msra.mxu0 0.0
    %855 = vmatprep.subr.mxu0 0.0
    %856 = vmatpush1.xpose.msra.mxu0 0.0
    %857 = vmatprep.subr.mxu0 0.0
    %858 = vmatpush1.xpose.msra.mxu0 0.0
    %859 = vmatprep.subr.mxu0 0.0
    %860 = vmatpush1.xpose.msra.mxu0 0.0
    %861 = vmatprep.subr.mxu0 0.0
    %862 = vmatpush1.xpose.msra.mxu0 0.0
    %863 = vmatprep.subr.mxu0 0.0
    %864 = vmatpush1.xpose.msra.mxu0 0.0
    %865 = vmatprep.subr.mxu0 0.0
    %866 = vmatpush1.xpose.msra.mxu0 0.0
    %867 = vmatprep.subr.mxu0 0.0
    %868 = vmatpush1.xpose.msra.mxu0 0.0
    %869 = vmatprep.subr.mxu0 0.0
    %870 = vmatpush1.xpose.msra.mxu0 0.0
    %871 = vmatprep.subr.mxu0 0.0
    %872 = vmatpush1.xpose.msra.mxu0 0.0
    %873 = vmatprep.subr.mxu0 0.0
    %874 = vmatpush1.xpose.msra.mxu0 0.0
    %875 = vmatprep.subr.mxu0 0.0
    %876 = vmatpush1.xpose.msra.mxu0 0.0
    %877 = vmatprep.subr.mxu0 0.0
    %878 = vmatpush1.xpose.msra.mxu0 %v847
    %879 = vmatprep.subr.mxu0 0.0
    %880 = vmatpush1.xpose.msra.mxu0 %v845
    %881 = vmatprep.subr.mxu0 0.0
    %882 = vmatpush2.xpose.msra.mxu0 0.0
    %883 = vmatprep.subr.mxu0 0.0
    %884 = vmatpush2.xpose.msra.mxu0 0.0
    %885 = vmatprep.subr.mxu0 0.0
    %886 = vmatpush2.xpose.msra.mxu0 0.0
    %887 = vmatprep.subr.mxu0 0.0
    %888 = vmatpush2.xpose.msra.mxu0 0.0
    %889 = vmatprep.subr.mxu0 0.0
    %890 = vmatpush2.xpose.msra.mxu0 0.0
    %891 = vmatprep.subr.mxu0 0.0
    %892 = vmatpush2.xpose.msra.mxu0 0.0
    %893 = vmatprep.subr.mxu0 0.0
    %894 = vmatpush2.xpose.msra.mxu0 0.0
    %895 = vmatprep.subr.mxu0 0.0
    %896 = vmatpush2.xpose.msra.mxu0 0.0
    %897 = vmatprep.subr.mxu0 0.0
    %898 = vmatpush2.xpose.msra.mxu0 0.0
    %899 = vmatprep.subr.mxu0 0.0
    %900 = vmatpush2.xpose.msra.mxu0 0.0
    %901 = vmatprep.subr.mxu0 0.0
    %902 = vmatpush2.xpose.msra.mxu0 0.0
    %903 = vmatprep.subr.mxu0 0.0
    %904 = vmatpush2.xpose.msra.mxu0 0.0
    %905 = vmatprep.subr.mxu0 0.0
    %906 = vmatpush2.xpose.msra.mxu0 0.0
    %907 = vmatprep.subr.mxu0 0.0
    %908 = vmatpush2.xpose.msra.mxu0 0.0
    %909 = vmatprep.subr.mxu0 0.0
    %910 = vmatpush2.xpose.msra.mxu0 0.0
    %911 = vmatprep.subr.mxu0 0.0
    %912 = vmatpush2.xpose.msra.mxu0 0.0
    %913 = vmatprep.mubr.f32.mxu0 0.0
    %914 = vmatmul.mubr.f32.gmra.mxu0 %v841
    %v915 = vpop.f32.mrf.mxu0
    %v916 = vadd.f32 0.0, %v915
    %v917 = vpop.f32.mrf.mxu0
    %918 = vmatprep.mubr.f32.mxu0 0.0
    %919 = vmatmul.mubr.f32.gmra.mxu0 %v843
    %v920 = vpop.f32.mrf.mxu0
    %v921 = vadd.f32 0.0, %v920
    %v922 = vpop.f32.mrf.mxu0
    %923 = vdwg.mxu0
    %v924 = vmul.f32 %v916, 0.35355338
    %v925 = vmul.f32 %v921, 0.35355338
    %v926 = vadd.f32 %v924, %v509
    %v927 = vadd.f32 %v925, %v510
    %v928 = vsel %vm721, %v926, -inf
    %929 = vmax.xlane.f32.xlu0 %v928
    %v930 = vpop.xlane.xlu0 %929
    %v931 = vsel %vm721, %v927, -inf
    %932 = vmax.xlane.f32.xlu0 %v931
    %v933 = vpop.xlane.xlu0 %932
    %v934 = vsub.f32 %v926, %v930
    %v935 = vsub.f32 %v927, %v933
    %v936 = vmul.f32 %v934, 1.442695
    %v937 = vpow.pop %v936
    %v938 = vmul.f32 %v935, 1.442695
    %v939 = vpow.pop %v938
    %v940 = vsel %vm721, %v937, 0.0
    %941 = vadd.xlane.f32.xlu0 %v940
    %v942 = vpop.xlane.xlu0 %941
    %v943 = vsel %vm721, %v939, 0.0
    %944 = vadd.xlane.f32.xlu0 %v943
    %v945 = vpop.xlane.xlu0 %944
    %v946 = vrcp.pop %v942
    %v947 = vmul.f32 %v937, %v946
    %v948 = vrcp.pop %v945
    %v949 = vmul.f32 %v939, %v948
    %950 = vrot.lane.b32.xlu0 %v619, 56
    %v951 = vpop.permute.xlu0 %950
    %952 = vrot.lane.b32.xlu0 %v624, 56
    %v953 = vpop.permute.xlu0 %952
    %v957 = vsel %vm721, %v947, 0
    %v960 = vsel %vm721, %v949, 0
    %962 = vmatprep.subr.mxu0 0.0
    %963 = vmatpush1.msra.mxu0 0.0
    %964 = vmatprep.subr.mxu0 0.0
    %965 = vmatpush1.msra.mxu0 0.0
    %966 = vmatprep.subr.mxu0 0.0
    %967 = vmatpush1.msra.mxu0 0.0
    %968 = vmatprep.subr.mxu0 0.0
    %969 = vmatpush1.msra.mxu0 0.0
    %970 = vmatprep.subr.mxu0 0.0
    %971 = vmatpush1.msra.mxu0 0.0
    %972 = vmatprep.subr.mxu0 0.0
    %973 = vmatpush1.msra.mxu0 0.0
    %974 = vmatprep.subr.mxu0 0.0
    %975 = vmatpush1.msra.mxu0 0.0
    %976 = vmatprep.subr.mxu0 0.0
    %977 = vmatpush1.msra.mxu0 0.0
    %978 = vmatprep.subr.mxu0 0.0
    %979 = vmatpush1.msra.mxu0 0.0
    %980 = vmatprep.subr.mxu0 0.0
    %981 = vmatpush1.msra.mxu0 0.0
    %982 = vmatprep.subr.mxu0 0.0
    %983 = vmatpush1.msra.mxu0 0.0
    %984 = vmatprep.subr.mxu0 0.0
    %985 = vmatpush1.msra.mxu0 0.0
    %986 = vmatprep.subr.mxu0 0.0
    %987 = vmatpush1.msra.mxu0 0.0
    %988 = vmatprep.subr.mxu0 0.0
    %989 = vmatpush1.msra.mxu0 0.0
    %990 = vmatprep.subr.mxu0 0.0
    %991 = vmatpush1.msra.mxu0 %v953
    %992 = vmatprep.subr.mxu0 0.0
    %993 = vmatpush1.msra.mxu0 %v951
    %994 = vmatprep.subr.mxu0 0.0
    %995 = vmatpush2.msra.mxu0 0.0
    %996 = vmatprep.subr.mxu0 0.0
    %997 = vmatpush2.msra.mxu0 0.0
    %998 = vmatprep.subr.mxu0 0.0
    %999 = vmatpush2.msra.mxu0 0.0
    %1000 = vmatprep.subr.mxu0 0.0
    %1001 = vmatpush2.msra.mxu0 0.0
    %1002 = vmatprep.subr.mxu0 0.0
    %1003 = vmatpush2.msra.mxu0 0.0
    %1004 = vmatprep.subr.mxu0 0.0
    %1005 = vmatpush2.msra.mxu0 0.0
    %1006 = vmatprep.subr.mxu0 0.0
    %1007 = vmatpush2.msra.mxu0 0.0
    %1008 = vmatprep.subr.mxu0 0.0
    %1009 = vmatpush2.msra.mxu0 0.0
    %1010 = vmatprep.subr.mxu0 0.0
    %1011 = vmatpush2.msra.mxu0 0.0
    %1012 = vmatprep.subr.mxu0 0.0
    %1013 = vmatpush2.msra.mxu0 0.0
    %1014 = vmatprep.subr.mxu0 0.0
    %1015 = vmatpush2.msra.mxu0 0.0
    %1016 = vmatprep.subr.mxu0 0.0
    %1017 = vmatpush2.msra.mxu0 0.0
    %1018 = vmatprep.subr.mxu0 0.0
    %1019 = vmatpush2.msra.mxu0 0.0
    %1020 = vmatprep.subr.mxu0 0.0
    %1021 = vmatpush2.msra.mxu0 0.0
    %1022 = vmatprep.subr.mxu0 0.0
    %1023 = vmatpush2.msra.mxu0 0.0
    %1024 = vmatprep.subr.mxu0 0.0
    %1025 = vmatpush2.msra.mxu0 0.0
    %1026 = vmatprep.mubr.f32.mxu0 0.0
    %1027 = vmatmul.mubr.f32.gmra.mxu0 %v957
    %v1028 = vpop.f32.mrf.mxu0
    %v1029 = vadd.f32 0.0, %v1028
    %v1030 = vpop.f32.mrf.mxu0
    %1031 = vmatprep.mubr.f32.mxu0 0.0
    %1032 = vmatmul.mubr.f32.gmra.mxu0 %v960
    %v1033 = vpop.f32.mrf.mxu0
    %v1034 = vadd.f32 0.0, %v1033
    %v1035 = vpop.f32.mrf.mxu0
    %1036 = vdwg.mxu0
    %1039 = vrot.lane.b32.xlu0 %v1029, 8
    %v1040 = vpop.permute.xlu0 %1039
    %1041 = vrot.lane.b32.xlu0 %v1034, 8
    %v1042 = vpop.permute.xlu0 %1041
    %vm1045 = vcmask 130112
    %1046 = vst.msk [vmem:[#allocation2] sm:$0xff] %vm1045, %v1040
    %1047 = vst.msk [vmem:[#allocation2 + $0x8] sm:$0xff] %vm1045, %v1042
    %1048 = vrot.lane.b32.xlu0 %v619, 112
    %v1049 = vpop.permute.xlu0 %1048
    %1050 = vrot.lane.b32.xlu0 %v624, 112
    %v1051 = vpop.permute.xlu0 %1050
    %1052 = vrot.lane.b32.xlu0 %v619, 80
    %v1053 = vpop.permute.xlu0 %1052
    %1054 = vrot.lane.b32.xlu0 %v624, 80
    %v1055 = vpop.permute.xlu0 %1054
    %v1056 = vsel %vm633, %v1049, 0
    %v1058 = vsel %vm633, %v1051, 0
    %v1060 = vsel %vm633, %v1053, 0
    %v1062 = vsel %vm633, %v1055, 0
    %1064 = vmatprep.subr.mxu0 0.0
    %1065 = vmatpush1.xpose.msra.mxu0 0.0
    %1066 = vmatprep.subr.mxu0 0.0
    %1067 = vmatpush1.xpose.msra.mxu0 0.0
    %1068 = vmatprep.subr.mxu0 0.0
    %1069 = vmatpush1.xpose.msra.mxu0 0.0
    %1070 = vmatprep.subr.mxu0 0.0
    %1071 = vmatpush1.xpose.msra.mxu0 0.0
    %1072 = vmatprep.subr.mxu0 0.0
    %1073 = vmatpush1.xpose.msra.mxu0 0.0
    %1074 = vmatprep.subr.mxu0 0.0
    %1075 = vmatpush1.xpose.msra.mxu0 0.0
    %1076 = vmatprep.subr.mxu0 0.0
    %1077 = vmatpush1.xpose.msra.mxu0 0.0
    %1078 = vmatprep.subr.mxu0 0.0
    %1079 = vmatpush1.xpose.msra.mxu0 0.0
    %1080 = vmatprep.subr.mxu0 0.0
    %1081 = vmatpush1.xpose.msra.mxu0 0.0
    %1082 = vmatprep.subr.mxu0 0.0
    %1083 = vmatpush1.xpose.msra.mxu0 0.0
    %1084 = vmatprep.subr.mxu0 0.0
    %1085 = vmatpush1.xpose.msra.mxu0 0.0
    %1086 = vmatprep.subr.mxu0 0.0
    %1087 = vmatpush1.xpose.msra.mxu0 0.0
    %1088 = vmatprep.subr.mxu0 0.0
    %1089 = vmatpush1.xpose.msra.mxu0 0.0
    %1090 = vmatprep.subr.mxu0 0.0
    %1091 = vmatpush1.xpose.msra.mxu0 0.0
    %1092 = vmatprep.subr.mxu0 0.0
    %1093 = vmatpush1.xpose.msra.mxu0 %v1062
    %1094 = vmatprep.subr.mxu0 0.0
    %1095 = vmatpush1.xpose.msra.mxu0 %v1060
    %1096 = vmatprep.subr.mxu0 0.0
    %1097 = vmatpush2.xpose.msra.mxu0 0.0
    %1098 = vmatprep.subr.mxu0 0.0
    %1099 = vmatpush2.xpose.msra.mxu0 0.0
    %1100 = vmatprep.subr.mxu0 0.0
    %1101 = vmatpush2.xpose.msra.mxu0 0.0
    %1102 = vmatprep.subr.mxu0 0.0
    %1103 = vmatpush2.xpose.msra.mxu0 0.0
    %1104 = vmatprep.subr.mxu0 0.0
    %1105 = vmatpush2.xpose.msra.mxu0 0.0
    %1106 = vmatprep.subr.mxu0 0.0
    %1107 = vmatpush2.xpose.msra.mxu0 0.0
    %1108 = vmatprep.subr.mxu0 0.0
    %1109 = vmatpush2.xpose.msra.mxu0 0.0
    %1110 = vmatprep.subr.mxu0 0.0
    %1111 = vmatpush2.xpose.msra.mxu0 0.0
    %1112 = vmatprep.subr.mxu0 0.0
    %1113 = vmatpush2.xpose.msra.mxu0 0.0
    %1114 = vmatprep.subr.mxu0 0.0
    %1115 = vmatpush2.xpose.msra.mxu0 0.0
    %1116 = vmatprep.subr.mxu0 0.0
    %1117 = vmatpush2.xpose.msra.mxu0 0.0
    %1118 = vmatprep.subr.mxu0 0.0
    %1119 = vmatpush2.xpose.msra.mxu0 0.0
    %1120 = vmatprep.subr.mxu0 0.0
    %1121 = vmatpush2.xpose.msra.mxu0 0.0
    %1122 = vmatprep.subr.mxu0 0.0
    %1123 = vmatpush2.xpose.msra.mxu0 0.0
    %1124 = vmatprep.subr.mxu0 0.0
    %1125 = vmatpush2.xpose.msra.mxu0 0.0
    %1126 = vmatprep.subr.mxu0 0.0
    %1127 = vmatpush2.xpose.msra.mxu0 0.0
    %1128 = vmatprep.mubr.f32.mxu0 0.0
    %1129 = vmatmul.mubr.f32.gmra.mxu0 %v1056
    %v1130 = vpop.f32.mrf.mxu0
    %v1131 = vadd.f32 0.0, %v1130
    %v1132 = vpop.f32.mrf.mxu0
    %1133 = vmatprep.mubr.f32.mxu0 0.0
    %1134 = vmatmul.mubr.f32.gmra.mxu0 %v1058
    %v1135 = vpop.f32.mrf.mxu0
    %v1136 = vadd.f32 0.0, %v1135
    %v1137 = vpop.f32.mrf.mxu0
    %1138 = vdwg.mxu0
    %v1139 = vmul.f32 %v1131, 0.35355338
    %v1140 = vmul.f32 %v1136, 0.35355338
    %v1141 = vadd.f32 %v1139, %v509
    %v1142 = vadd.f32 %v1140, %v510
    %v1143 = vsel %vm721, %v1141, -inf
    %1144 = vmax.xlane.f32.xlu0 %v1143
    %v1145 = vpop.xlane.xlu0 %1144
    %v1146 = vsel %vm721, %v1142, -inf
    %1147 = vmax.xlane.f32.xlu0 %v1146
    %v1148 = vpop.xlane.xlu0 %1147
    %v1149 = vsub.f32 %v1141, %v1145
    %v1150 = vsub.f32 %v1142, %v1148
    %v1151 = vmul.f32 %v1149, 1.442695
    %v1152 = vpow.pop %v1151
    %v1153 = vmul.f32 %v1150, 1.442695
    %v1154 = vpow.pop %v1153
    %v1155 = vsel %vm721, %v1152, 0.0
    %1156 = vadd.xlane.f32.xlu0 %v1155
    %v1157 = vpop.xlane.xlu0 %1156
    %v1158 = vsel %vm721, %v1154, 0.0
    %1159 = vadd.xlane.f32.xlu0 %v1158
    %v1160 = vpop.xlane.xlu0 %1159
    %v1161 = vrcp.pop %v1157
    %v1162 = vmul.f32 %v1152, %v1161
    %v1163 = vrcp.pop %v1160
    %v1164 = vmul.f32 %v1154, %v1163
    %1165 = vrot.lane.b32.xlu0 %v619, 48
    %v1166 = vpop.permute.xlu0 %1165
    %1167 = vrot.lane.b32.xlu0 %v624, 48
    %v1168 = vpop.permute.xlu0 %1167
    %v1172 = vsel %vm721, %v1162, 0
    %v1175 = vsel %vm721, %v1164, 0
    %1177 = vmatprep.subr.mxu0 0.0
    %1178 = vmatpush1.msra.mxu0 0.0
    %1179 = vmatprep.subr.mxu0 0.0
    %1180 = vmatpush1.msra.mxu0 0.0
    %1181 = vmatprep.subr.mxu0 0.0
    %1182 = vmatpush1.msra.mxu0 0.0
    %1183 = vmatprep.subr.mxu0 0.0
    %1184 = vmatpush1.msra.mxu0 0.0
    %1185 = vmatprep.subr.mxu0 0.0
    %1186 = vmatpush1.msra.mxu0 0.0
    %1187 = vmatprep.subr.mxu0 0.0
    %1188 = vmatpush1.msra.mxu0 0.0
    %1189 = vmatprep.subr.mxu0 0.0
    %1190 = vmatpush1.msra.mxu0 0.0
    %1191 = vmatprep.subr.mxu0 0.0
    %1192 = vmatpush1.msra.mxu0 0.0
    %1193 = vmatprep.subr.mxu0 0.0
    %1194 = vmatpush1.msra.mxu0 0.0
    %1195 = vmatprep.subr.mxu0 0.0
    %1196 = vmatpush1.msra.mxu0 0.0
    %1197 = vmatprep.subr.mxu0 0.0
    %1198 = vmatpush1.msra.mxu0 0.0
    %1199 = vmatprep.subr.mxu0 0.0
    %1200 = vmatpush1.msra.mxu0 0.0
    %1201 = vmatprep.subr.mxu0 0.0
    %1202 = vmatpush1.msra.mxu0 0.0
    %1203 = vmatprep.subr.mxu0 0.0
    %1204 = vmatpush1.msra.mxu0 0.0
    %1205 = vmatprep.subr.mxu0 0.0
    %1206 = vmatpush1.msra.mxu0 %v1168
    %1207 = vmatprep.subr.mxu0 0.0
    %1208 = vmatpush1.msra.mxu0 %v1166
    %1209 = vmatprep.subr.mxu0 0.0
    %1210 = vmatpush2.msra.mxu0 0.0
    %1211 = vmatprep.subr.mxu0 0.0
    %1212 = vmatpush2.msra.mxu0 0.0
    %1213 = vmatprep.subr.mxu0 0.0
    %1214 = vmatpush2.msra.mxu0 0.0
    %1215 = vmatprep.subr.mxu0 0.0
    %1216 = vmatpush2.msra.mxu0 0.0
    %1217 = vmatprep.subr.mxu0 0.0
    %1218 = vmatpush2.msra.mxu0 0.0
    %1219 = vmatprep.subr.mxu0 0.0
    %1220 = vmatpush2.msra.mxu0 0.0
    %1221 = vmatprep.subr.mxu0 0.0
    %1222 = vmatpush2.msra.mxu0 0.0
    %1223 = vmatprep.subr.mxu0 0.0
    %1224 = vmatpush2.msra.mxu0 0.0
    %1225 = vmatprep.subr.mxu0 0.0
    %1226 = vmatpush2.msra.mxu0 0.0
    %1227 = vmatprep.subr.mxu0 0.0
    %1228 = vmatpush2.msra.mxu0 0.0
    %1229 = vmatprep.subr.mxu0 0.0
    %1230 = vmatpush2.msra.mxu0 0.0
    %1231 = vmatprep.subr.mxu0 0.0
    %1232 = vmatpush2.msra.mxu0 0.0
    %1233 = vmatprep.subr.mxu0 0.0
    %1234 = vmatpush2.msra.mxu0 0.0
    %1235 = vmatprep.subr.mxu0 0.0
    %1236 = vmatpush2.msra.mxu0 0.0
    %1237 = vmatprep.subr.mxu0 0.0
    %1238 = vmatpush2.msra.mxu0 0.0
    %1239 = vmatprep.subr.mxu0 0.0
    %1240 = vmatpush2.msra.mxu0 0.0
    %1241 = vmatprep.mubr.f32.mxu0 0.0
    %1242 = vmatmul.mubr.f32.gmra.mxu0 %v1172
    %v1243 = vpop.f32.mrf.mxu0
    %v1244 = vadd.f32 0.0, %v1243
    %v1245 = vpop.f32.mrf.mxu0
    %1246 = vmatprep.mubr.f32.mxu0 0.0
    %1247 = vmatmul.mubr.f32.gmra.mxu0 %v1175
    %v1248 = vpop.f32.mrf.mxu0
    %v1249 = vadd.f32 0.0, %v1248
    %v1250 = vpop.f32.mrf.mxu0
    %1251 = vdwg.mxu0
    %1254 = vrot.lane.b32.xlu0 %v1244, 16
    %v1255 = vpop.permute.xlu0 %1254
    %1256 = vrot.lane.b32.xlu0 %v1249, 16
    %v1257 = vpop.permute.xlu0 %1256
    %vm1260 = vcmask 195712
    %1261 = vst.msk [vmem:[#allocation2] sm:$0xff] %vm1260, %v1255
    %1262 = vst.msk [vmem:[#allocation2 + $0x8] sm:$0xff] %vm1260, %v1257
    %1263 = vrot.lane.b32.xlu0 %v619, 104
    %v1264 = vpop.permute.xlu0 %1263
    %1265 = vrot.lane.b32.xlu0 %v624, 104
    %v1266 = vpop.permute.xlu0 %1265
    %1267 = vrot.lane.b32.xlu0 %v619, 72
    %v1268 = vpop.permute.xlu0 %1267
    %1269 = vrot.lane.b32.xlu0 %v624, 72
    %v1270 = vpop.permute.xlu0 %1269
    %v1271 = vsel %vm633, %v1264, 0
    %v1273 = vsel %vm633, %v1266, 0
    %v1275 = vsel %vm633, %v1268, 0
    %v1277 = vsel %vm633, %v1270, 0
    %1279 = vmatprep.subr.mxu0 0.0
    %1280 = vmatpush1.xpose.msra.mxu0 0.0
    %1281 = vmatprep.subr.mxu0 0.0
    %1282 = vmatpush1.xpose.msra.mxu0 0.0
    %1283 = vmatprep.subr.mxu0 0.0
    %1284 = vmatpush1.xpose.msra.mxu0 0.0
    %1285 = vmatprep.subr.mxu0 0.0
    %1286 = vmatpush1.xpose.msra.mxu0 0.0
    %1287 = vmatprep.subr.mxu0 0.0
    %1288 = vmatpush1.xpose.msra.mxu0 0.0
    %1289 = vmatprep.subr.mxu0 0.0
    %1290 = vmatpush1.xpose.msra.mxu0 0.0
    %1291 = vmatprep.subr.mxu0 0.0
    %1292 = vmatpush1.xpose.msra.mxu0 0.0
    %1293 = vmatprep.subr.mxu0 0.0
    %1294 = vmatpush1.xpose.msra.mxu0 0.0
    %1295 = vmatprep.subr.mxu0 0.0
    %1296 = vmatpush1.xpose.msra.mxu0 0.0
    %1297 = vmatprep.subr.mxu0 0.0
    %1298 = vmatpush1.xpose.msra.mxu0 0.0
    %1299 = vmatprep.subr.mxu0 0.0
    %1300 = vmatpush1.xpose.msra.mxu0 0.0
    %1301 = vmatprep.subr.mxu0 0.0
    %1302 = vmatpush1.xpose.msra.mxu0 0.0
    %1303 = vmatprep.subr.mxu0 0.0
    %1304 = vmatpush1.xpose.msra.mxu0 0.0
    %1305 = vmatprep.subr.mxu0 0.0
    %1306 = vmatpush1.xpose.msra.mxu0 0.0
    %1307 = vmatprep.subr.mxu0 0.0
    %1308 = vmatpush1.xpose.msra.mxu0 %v1277
    %1309 = vmatprep.subr.mxu0 0.0
    %1310 = vmatpush1.xpose.msra.mxu0 %v1275
    %1311 = vmatprep.subr.mxu0 0.0
    %1312 = vmatpush2.xpose.msra.mxu0 0.0
    %1313 = vmatprep.subr.mxu0 0.0
    %1314 = vmatpush2.xpose.msra.mxu0 0.0
    %1315 = vmatprep.subr.mxu0 0.0
    %1316 = vmatpush2.xpose.msra.mxu0 0.0
    %1317 = vmatprep.subr.mxu0 0.0
    %1318 = vmatpush2.xpose.msra.mxu0 0.0
    %1319 = vmatprep.subr.mxu0 0.0
    %1320 = vmatpush2.xpose.msra.mxu0 0.0
    %1321 = vmatprep.subr.mxu0 0.0
    %1322 = vmatpush2.xpose.msra.mxu0 0.0
    %1323 = vmatprep.subr.mxu0 0.0
    %1324 = vmatpush2.xpose.msra.mxu0 0.0
    %1325 = vmatprep.subr.mxu0 0.0
    %1326 = vmatpush2.xpose.msra.mxu0 0.0
    %1327 = vmatprep.subr.mxu0 0.0
    %1328 = vmatpush2.xpose.msra.mxu0 0.0
    %1329 = vmatprep.subr.mxu0 0.0
    %1330 = vmatpush2.xpose.msra.mxu0 0.0
    %1331 = vmatprep.subr.mxu0 0.0
    %1332 = vmatpush2.xpose.msra.mxu0 0.0
    %1333 = vmatprep.subr.mxu0 0.0
    %1334 = vmatpush2.xpose.msra.mxu0 0.0
    %1335 = vmatprep.subr.mxu0 0.0
    %1336 = vmatpush2.xpose.msra.mxu0 0.0
    %1337 = vmatprep.subr.mxu0 0.0
    %1338 = vmatpush2.xpose.msra.mxu0 0.0
    %1339 = vmatprep.subr.mxu0 0.0
    %1340 = vmatpush2.xpose.msra.mxu0 0.0
    %1341 = vmatprep.subr.mxu0 0.0
    %1342 = vmatpush2.xpose.msra.mxu0 0.0
    %1343 = vmatprep.mubr.f32.mxu0 0.0
    %1344 = vmatmul.mubr.f32.gmra.mxu0 %v1271
    %v1345 = vpop.f32.mrf.mxu0
    %v1346 = vadd.f32 0.0, %v1345
    %v1347 = vpop.f32.mrf.mxu0
    %1348 = vmatprep.mubr.f32.mxu0 0.0
    %1349 = vmatmul.mubr.f32.gmra.mxu0 %v1273
    %v1350 = vpop.f32.mrf.mxu0
    %v1351 = vadd.f32 0.0, %v1350
    %v1352 = vpop.f32.mrf.mxu0
    %1353 = vdwg.mxu0
    %v1354 = vmul.f32 %v1346, 0.35355338
    %v1355 = vmul.f32 %v1351, 0.35355338
    %v1356 = vadd.f32 %v1354, %v509
    %v1357 = vadd.f32 %v1355, %v510
    %v1358 = vsel %vm721, %v1356, -inf
    %1359 = vmax.xlane.f32.xlu0 %v1358
    %v1360 = vpop.xlane.xlu0 %1359
    %v1361 = vsel %vm721, %v1357, -inf
    %1362 = vmax.xlane.f32.xlu0 %v1361
    %v1363 = vpop.xlane.xlu0 %1362
    %v1364 = vsub.f32 %v1356, %v1360
    %v1365 = vsub.f32 %v1357, %v1363
    %v1366 = vmul.f32 %v1364, 1.442695
    %v1367 = vpow.pop %v1366
    %v1368 = vmul.f32 %v1365, 1.442695
    %v1369 = vpow.pop %v1368
    %v1370 = vsel %vm721, %v1367, 0.0
    %1371 = vadd.xlane.f32.xlu0 %v1370
    %v1372 = vpop.xlane.xlu0 %1371
    %v1373 = vsel %vm721, %v1369, 0.0
    %1374 = vadd.xlane.f32.xlu0 %v1373
    %v1375 = vpop.xlane.xlu0 %1374
    %v1376 = vrcp.pop %v1372
    %v1377 = vmul.f32 %v1367, %v1376
    %v1378 = vrcp.pop %v1375
    %v1379 = vmul.f32 %v1369, %v1378
    %1380 = vrot.lane.b32.xlu0 %v619, 40
    %v1381 = vpop.permute.xlu0 %1380
    %1382 = vrot.lane.b32.xlu0 %v624, 40
    %v1383 = vpop.permute.xlu0 %1382
    %v1387 = vsel %vm721, %v1377, 0
    %v1390 = vsel %vm721, %v1379, 0
    %1392 = vmatprep.subr.mxu0 0.0
    %1393 = vmatpush1.msra.mxu0 0.0
    %1394 = vmatprep.subr.mxu0 0.0
    %1395 = vmatpush1.msra.mxu0 0.0
    %1396 = vmatprep.subr.mxu0 0.0
    %1397 = vmatpush1.msra.mxu0 0.0
    %1398 = vmatprep.subr.mxu0 0.0
    %1399 = vmatpush1.msra.mxu0 0.0
    %1400 = vmatprep.subr.mxu0 0.0
    %1401 = vmatpush1.msra.mxu0 0.0
    %1402 = vmatprep.subr.mxu0 0.0
    %1403 = vmatpush1.msra.mxu0 0.0
    %1404 = vmatprep.subr.mxu0 0.0
    %1405 = vmatpush1.msra.mxu0 0.0
    %1406 = vmatprep.subr.mxu0 0.0
    %1407 = vmatpush1.msra.mxu0 0.0
    %1408 = vmatprep.subr.mxu0 0.0
    %1409 = vmatpush1.msra.mxu0 0.0
    %1410 = vmatprep.subr.mxu0 0.0
    %1411 = vmatpush1.msra.mxu0 0.0
    %1412 = vmatprep.subr.mxu0 0.0
    %1413 = vmatpush1.msra.mxu0 0.0
    %1414 = vmatprep.subr.mxu0 0.0
    %1415 = vmatpush1.msra.mxu0 0.0
    %1416 = vmatprep.subr.mxu0 0.0
    %1417 = vmatpush1.msra.mxu0 0.0
    %1418 = vmatprep.subr.mxu0 0.0
    %1419 = vmatpush1.msra.mxu0 0.0
    %1420 = vmatprep.subr.mxu0 0.0
    %1421 = vmatpush1.msra.mxu0 %v1383
    %1422 = vmatprep.subr.mxu0 0.0
    %1423 = vmatpush1.msra.mxu0 %v1381
    %1424 = vmatprep.subr.mxu0 0.0
    %1425 = vmatpush2.msra.mxu0 0.0
    %1426 = vmatprep.subr.mxu0 0.0
    %1427 = vmatpush2.msra.mxu0 0.0
    %1428 = vmatprep.subr.mxu0 0.0
    %1429 = vmatpush2.msra.mxu0 0.0
    %1430 = vmatprep.subr.mxu0 0.0
    %1431 = vmatpush2.msra.mxu0 0.0
    %1432 = vmatprep.subr.mxu0 0.0
    %1433 = vmatpush2.msra.mxu0 0.0
    %1434 = vmatprep.subr.mxu0 0.0
    %1435 = vmatpush2.msra.mxu0 0.0
    %1436 = vmatprep.subr.mxu0 0.0
    %1437 = vmatpush2.msra.mxu0 0.0
    %1438 = vmatprep.subr.mxu0 0.0
    %1439 = vmatpush2.msra.mxu0 0.0
    %1440 = vmatprep.subr.mxu0 0.0
    %1441 = vmatpush2.msra.mxu0 0.0
    %1442 = vmatprep.subr.mxu0 0.0
    %1443 = vmatpush2.msra.mxu0 0.0
    %1444 = vmatprep.subr.mxu0 0.0
    %1445 = vmatpush2.msra.mxu0 0.0
    %1446 = vmatprep.subr.mxu0 0.0
    %1447 = vmatpush2.msra.mxu0 0.0
    %1448 = vmatprep.subr.mxu0 0.0
    %1449 = vmatpush2.msra.mxu0 0.0
    %1450 = vmatprep.subr.mxu0 0.0
    %1451 = vmatpush2.msra.mxu0 0.0
    %1452 = vmatprep.subr.mxu0 0.0
    %1453 = vmatpush2.msra.mxu0 0.0
    %1454 = vmatprep.subr.mxu0 0.0
    %1455 = vmatpush2.msra.mxu0 0.0
    %1456 = vmatprep.mubr.f32.mxu0 0.0
    %1457 = vmatmul.mubr.f32.gmra.mxu0 %v1387
    %v1458 = vpop.f32.mrf.mxu0
    %v1459 = vadd.f32 0.0, %v1458
    %v1460 = vpop.f32.mrf.mxu0
    %1461 = vmatprep.mubr.f32.mxu0 0.0
    %1462 = vmatmul.mubr.f32.gmra.mxu0 %v1390
    %v1463 = vpop.f32.mrf.mxu0
    %v1464 = vadd.f32 0.0, %v1463
    %v1465 = vpop.f32.mrf.mxu0
    %1466 = vdwg.mxu0
    %1469 = vrot.lane.b32.xlu0 %v1459, 24
    %v1470 = vpop.permute.xlu0 %1469
    %1471 = vrot.lane.b32.xlu0 %v1464, 24
    %v1472 = vpop.permute.xlu0 %1471
    %vm1475 = vcmask 261312
    %1476 = vst.msk [vmem:[#allocation2] sm:$0xff] %vm1475, %v1470
    %1477 = vst.msk [vmem:[#allocation2 + $0x8] sm:$0xff] %vm1475, %v1472
    %v1478 = vld [vmem:[#allocation2] sm:$0xff]
    %v1479 = vld [vmem:[#allocation2 + $0x8] sm:$0xff]
    %v1481 = vlaneseq
    %v1482 = vshrl.u32 %v1481, 7
    %v1483 = vsub.s32 0, %v1482
    %v1484 = vrot.slane %v520, %v1483
    %v1487 = vsel %vm545, %v1478, 0
    %v1490 = vsel %vm545, %v1479, 0
    %1492 = vmatprep.subr.mxu0 0.0
    %1493 = vmatpush1.msra.mxu0 0.0
    %1494 = vmatprep.subr.mxu0 0.0
    %1495 = vmatpush1.msra.mxu0 0.0
    %1496 = vmatprep.subr.mxu0 0.0
    %1497 = vmatpush1.msra.mxu0 0.0
    %1498 = vmatprep.subr.mxu0 0.0
    %1499 = vmatpush1.msra.mxu0 0.0
    %1500 = vmatprep.subr.mxu0 0.0
    %1501 = vmatpush1.msra.mxu0 0.0
    %1502 = vmatprep.subr.mxu0 0.0
    %1503 = vmatpush1.msra.mxu0 0.0
    %1504 = vmatprep.subr.mxu0 0.0
    %1505 = vmatpush1.msra.mxu0 0.0
    %1506 = vmatprep.subr.mxu0 0.0
    %1507 = vmatpush1.msra.mxu0 0.0
    %1508 = vmatprep.subr.mxu0 0.0
    %1509 = vmatpush1.msra.mxu0 0.0
    %1510 = vmatprep.subr.mxu0 0.0
    %1511 = vmatpush1.msra.mxu0 0.0
    %1512 = vmatprep.subr.mxu0 0.0
    %1513 = vmatpush1.msra.mxu0 0.0
    %1514 = vmatprep.subr.mxu0 0.0
    %1515 = vmatpush1.msra.mxu0 0.0
    %1516 = vmatprep.subr.mxu0 0.0
    %1517 = vmatpush1.msra.mxu0 %v519
    %1518 = vmatprep.subr.mxu0 0.0
    %1519 = vmatpush1.msra.mxu0 %v518
    %1520 = vmatprep.subr.mxu0 0.0
    %1521 = vmatpush1.msra.mxu0 %v517
    %1522 = vmatprep.subr.mxu0 0.0
    %1523 = vmatpush1.msra.mxu0 %v516
    %1524 = vmatprep.subr.mxu0 0.0
    %1525 = vmatpush2.msra.mxu0 0.0
    %1526 = vmatprep.subr.mxu0 0.0
    %1527 = vmatpush2.msra.mxu0 0.0
    %1528 = vmatprep.subr.mxu0 0.0
    %1529 = vmatpush2.msra.mxu0 0.0
    %1530 = vmatprep.subr.mxu0 0.0
    %1531 = vmatpush2.msra.mxu0 0.0
    %1532 = vmatprep.subr.mxu0 0.0
    %1533 = vmatpush2.msra.mxu0 0.0
    %1534 = vmatprep.subr.mxu0 0.0
    %1535 = vmatpush2.msra.mxu0 0.0
    %1536 = vmatprep.subr.mxu0 0.0
    %1537 = vmatpush2.msra.mxu0 0.0
    %1538 = vmatprep.subr.mxu0 0.0
    %1539 = vmatpush2.msra.mxu0 0.0
    %1540 = vmatprep.subr.mxu0 0.0
    %1541 = vmatpush2.msra.mxu0 0.0
    %1542 = vmatprep.subr.mxu0 0.0
    %1543 = vmatpush2.msra.mxu0 0.0
    %1544 = vmatprep.subr.mxu0 0.0
    %1545 = vmatpush2.msra.mxu0 0.0
    %1546 = vmatprep.subr.mxu0 0.0
    %1547 = vmatpush2.msra.mxu0 0.0
    %1548 = vmatprep.subr.mxu0 0.0
    %1549 = vmatpush2.msra.mxu0 0.0
    %1550 = vmatprep.subr.mxu0 0.0
    %1551 = vmatpush2.msra.mxu0 0.0
    %1552 = vmatprep.subr.mxu0 0.0
    %1553 = vmatpush2.msra.mxu0 0.0
    %1554 = vmatprep.subr.mxu0 0.0
    %1555 = vmatpush2.msra.mxu0 0.0
    %1556 = vmatprep.mubr.f32.mxu0 0.0
    %1557 = vmatmul.mubr.f32.gmra.mxu0 %v1487
    %v1558 = vpop.f32.mrf.mxu0
    %v1559 = vadd.f32 %v1484, %v1558
    %v1560 = vpop.f32.mrf.mxu0
    %1561 = vmatprep.mubr.f32.mxu0 0.0
    %1562 = vmatmul.mubr.f32.gmra.mxu0 %v1490
    %v1563 = vpop.f32.mrf.mxu0
    %v1564 = vadd.f32 %v1484, %v1563
    %v1565 = vpop.f32.mrf.mxu0
    %1566 = vdwg.mxu0
    %v1567 = vadd.f32 %v507, %v1559
    %v1568 = vadd.f32 %v508, %v1564
    %v1569 = vsel %vm545, %v1567, 0.0
    %1570 = vadd.xlane.f32.xlu0 %v1569
    %v1571 = vpop.xlane.xlu0 %1570
    %v1572 = vsel %vm545, %v1568, 0.0
    %1573 = vadd.xlane.f32.xlu0 %v1572
    %v1574 = vpop.xlane.xlu0 %1573
    %v1575 = vrcp.pop 32.0
    %v1576 = vmul.f32 %v1571, %v1575
    %v1577 = vmul.f32 %v1574, %v1575
    %v1578 = vsub.f32 %v1567, %v1576
    %v1579 = vsub.f32 %v1568, %v1577
    %v1580 = vmul.f32 %v1578, %v1578
    %v1581 = vmul.f32 %v1579, %v1579
    %v1582 = vsel %vm545, %v1580, 0.0
    %1583 = vadd.xlane.f32.xlu0 %v1582
    %v1584 = vpop.xlane.xlu0 %1583
    %v1585 = vsel %vm545, %v1581, 0.0
    %1586 = vadd.xlane.f32.xlu0 %v1585
    %v1587 = vpop.xlane.xlu0 %1586
    %v1588 = vmul.f32 %v1584, %v1575
    %v1589 = vmul.f32 %v1587, %v1575
    %v1590 = vadd.f32 %v1588, 1e-05
    %v1591 = vadd.f32 %v1589, 1e-05
    %v1592 = vrsqrt.pop %v1590
    %v1593 = vrsqrt.pop %v1591
    %v1594 = vmul.f32 %v1578, %v1592
    %v1595 = vmul.f32 %v1579, %v1593
    %v1597 = vlaneseq
    %v1598 = vshrl.u32 %v1597, 7
    %v1599 = vsub.s32 0, %v1598
    %v1600 = vrot.slane %v521, %v1599
    %v1602 = vmul.f32 %v1594, %v1600
    %v1603 = vmul.f32 %v1595, %v1600
    %v1605 = vlaneseq
    %v1606 = vshrl.u32 %v1605, 7
    %v1607 = vsub.s32 0, %v1606
    %v1608 = vrot.slane %v522, %v1607
    %v1610 = vadd.f32 %v1602, %v1608
    %v1611 = vadd.f32 %v1603, %v1608
    %v1613 = vlaneseq
    %v1614 = vshrl.u32 %v1613, 7
    %v1615 = vsub.s32 0, %v1614
    %v1616 = vrot.slane %v527, %v1615
    %v1619 = vsel %vm545, %v1610, 0
    %v1622 = vsel %vm545, %v1611, 0
    %1624 = vmatprep.subr.mxu0 0.0
    %1625 = vmatpush1.msra.mxu0 0.0
    %1626 = vmatprep.subr.mxu0 0.0
    %1627 = vmatpush1.msra.mxu0 0.0
    %1628 = vmatprep.subr.mxu0 0.0
    %1629 = vmatpush1.msra.mxu0 0.0
    %1630 = vmatprep.subr.mxu0 0.0
    %1631 = vmatpush1.msra.mxu0 0.0
    %1632 = vmatprep.subr.mxu0 0.0
    %1633 = vmatpush1.msra.mxu0 0.0
    %1634 = vmatprep.subr.mxu0 0.0
    %1635 = vmatpush1.msra.mxu0 0.0
    %1636 = vmatprep.subr.mxu0 0.0
    %1637 = vmatpush1.msra.mxu0 0.0
    %1638 = vmatprep.subr.mxu0 0.0
    %1639 = vmatpush1.msra.mxu0 0.0
    %1640 = vmatprep.subr.mxu0 0.0
    %1641 = vmatpush1.msra.mxu0 0.0
    %1642 = vmatprep.subr.mxu0 0.0
    %1643 = vmatpush1.msra.mxu0 0.0
    %1644 = vmatprep.subr.mxu0 0.0
    %1645 = vmatpush1.msra.mxu0 0.0
    %1646 = vmatprep.subr.mxu0 0.0
    %1647 = vmatpush1.msra.mxu0 0.0
    %1648 = vmatprep.subr.mxu0 0.0
    %1649 = vmatpush1.msra.mxu0 %v526
    %1650 = vmatprep.subr.mxu0 0.0
    %1651 = vmatpush1.msra.mxu0 %v525
    %1652 = vmatprep.subr.mxu0 0.0
    %1653 = vmatpush1.msra.mxu0 %v524
    %1654 = vmatprep.subr.mxu0 0.0
    %1655 = vmatpush1.msra.mxu0 %v523
    %1656 = vmatprep.subr.mxu0 0.0
    %1657 = vmatpush2.msra.mxu0 0.0
    %1658 = vmatprep.subr.mxu0 0.0
    %1659 = vmatpush2.msra.mxu0 0.0
    %1660 = vmatprep.subr.mxu0 0.0
    %1661 = vmatpush2.msra.mxu0 0.0
    %1662 = vmatprep.subr.mxu0 0.0
    %1663 = vmatpush2.msra.mxu0 0.0
    %1664 = vmatprep.subr.mxu0 0.0
    %1665 = vmatpush2.msra.mxu0 0.0
    %1666 = vmatprep.subr.mxu0 0.0
    %1667 = vmatpush2.msra.mxu0 0.0
    %1668 = vmatprep.subr.mxu0 0.0
    %1669 = vmatpush2.msra.mxu0 0.0
    %1670 = vmatprep.subr.mxu0 0.0
    %1671 = vmatpush2.msra.mxu0 0.0
    %1672 = vmatprep.subr.mxu0 0.0
    %1673 = vmatpush2.msra.mxu0 0.0
    %1674 = vmatprep.subr.mxu0 0.0
    %1675 = vmatpush2.msra.mxu0 0.0
    %1676 = vmatprep.subr.mxu0 0.0
    %1677 = vmatpush2.msra.mxu0 0.0
    %1678 = vmatprep.subr.mxu0 0.0
    %1679 = vmatpush2.msra.mxu0 0.0
    %1680 = vmatprep.subr.mxu0 0.0
    %1681 = vmatpush2.msra.mxu0 0.0
    %1682 = vmatprep.subr.mxu0 0.0
    %1683 = vmatpush2.msra.mxu0 0.0
    %1684 = vmatprep.subr.mxu0 0.0
    %1685 = vmatpush2.msra.mxu0 0.0
    %1686 = vmatprep.subr.mxu0 0.0
    %1687 = vmatpush2.msra.mxu0 0.0
    %1688 = vmatprep.mubr.f32.mxu0 0.0
    %1689 = vmatmul.mubr.f32.gmra.mxu0 %v1619
    %v1690 = vpop.f32.mrf.mxu0
    %v1691 = vadd.f32 %v1616, %v1690
    %v1692 = vpop.f32.mrf.mxu0
    %1693 = vmatprep.mubr.f32.mxu0 0.0
    %1694 = vmatmul.mubr.f32.gmra.mxu0 %v1622
    %v1695 = vpop.f32.mrf.mxu0
    %v1696 = vadd.f32 %v1616, %v1695
    %v1697 = vpop.f32.mrf.mxu0
    %1698 = vdwg.mxu0
    %v1699 = vmax.f32 %v1691, 0.0
    %v1700 = vmax.f32 %v1696, 0.0
    %v1702 = vlaneseq
    %v1703 = vshrl.u32 %v1702, 7
    %v1704 = vsub.s32 0, %v1703
    %v1705 = vrot.slane %v536, %v1704
    %vm1707 = vcmask 523264
    %v1709 = vsel %vm1707, %v1699, 0
    %v1712 = vsel %vm1707, %v1700, 0
    %1714 = vmatprep.subr.mxu0 0.0
    %1715 = vmatpush1.msra.mxu0 0.0
    %1716 = vmatprep.subr.mxu0 0.0
    %1717 = vmatpush1.msra.mxu0 0.0
    %1718 = vmatprep.subr.mxu0 0.0
    %1719 = vmatpush1.msra.mxu0 0.0
    %1720 = vmatprep.subr.mxu0 0.0
    %1721 = vmatpush1.msra.mxu0 0.0
    %1722 = vmatprep.subr.mxu0 0.0
    %1723 = vmatpush1.msra.mxu0 0.0
    %1724 = vmatprep.subr.mxu0 0.0
    %1725 = vmatpush1.msra.mxu0 0.0
    %1726 = vmatprep.subr.mxu0 0.0
    %1727 = vmatpush1.msra.mxu0 0.0
    %1728 = vmatprep.subr.mxu0 0.0
    %1729 = vmatpush1.msra.mxu0 0.0
    %1730 = vmatprep.subr.mxu0 0.0
    %1731 = vmatpush1.msra.mxu0 %v535
    %1732 = vmatprep.subr.mxu0 0.0
    %1733 = vmatpush1.msra.mxu0 %v534
    %1734 = vmatprep.subr.mxu0 0.0
    %1735 = vmatpush1.msra.mxu0 %v533
    %1736 = vmatprep.subr.mxu0 0.0
    %1737 = vmatpush1.msra.mxu0 %v532
    %1738 = vmatprep.subr.mxu0 0.0
    %1739 = vmatpush1.msra.mxu0 %v531
    %1740 = vmatprep.subr.mxu0 0.0
    %1741 = vmatpush1.msra.mxu0 %v530
    %1742 = vmatprep.subr.mxu0 0.0
    %1743 = vmatpush1.msra.mxu0 %v529
    %1744 = vmatprep.subr.mxu0 0.0
    %1745 = vmatpush1.msra.mxu0 %v528
    %1746 = vmatprep.subr.mxu0 0.0
    %1747 = vmatpush2.msra.mxu0 0.0
    %1748 = vmatprep.subr.mxu0 0.0
    %1749 = vmatpush2.msra.mxu0 0.0
    %1750 = vmatprep.subr.mxu0 0.0
    %1751 = vmatpush2.msra.mxu0 0.0
    %1752 = vmatprep.subr.mxu0 0.0
    %1753 = vmatpush2.msra.mxu0 0.0
    %1754 = vmatprep.subr.mxu0 0.0
    %1755 = vmatpush2.msra.mxu0 0.0
    %1756 = vmatprep.subr.mxu0 0.0
    %1757 = vmatpush2.msra.mxu0 0.0
    %1758 = vmatprep.subr.mxu0 0.0
    %1759 = vmatpush2.msra.mxu0 0.0
    %1760 = vmatprep.subr.mxu0 0.0
    %1761 = vmatpush2.msra.mxu0 0.0
    %1762 = vmatprep.subr.mxu0 0.0
    %1763 = vmatpush2.msra.mxu0 0.0
    %1764 = vmatprep.subr.mxu0 0.0
    %1765 = vmatpush2.msra.mxu0 0.0
    %1766 = vmatprep.subr.mxu0 0.0
    %1767 = vmatpush2.msra.mxu0 0.0
    %1768 = vmatprep.subr.mxu0 0.0
    %1769 = vmatpush2.msra.mxu0 0.0
    %1770 = vmatprep.subr.mxu0 0.0
    %1771 = vmatpush2.msra.mxu0 0.0
    %1772 = vmatprep.subr.mxu0 0.0
    %1773 = vmatpush2.msra.mxu0 0.0
    %1774 = vmatprep.subr.mxu0 0.0
    %1775 = vmatpush2.msra.mxu0 0.0
    %1776 = vmatprep.subr.mxu0 0.0
    %1777 = vmatpush2.msra.mxu0 0.0
    %1778 = vmatprep.mubr.f32.mxu0 0.0
    %1779 = vmatmul.mubr.f32.gmra.mxu0 %v1709
    %v1780 = vpop.f32.mrf.mxu0
    %v1781 = vadd.f32 %v1705, %v1780
    %v1782 = vpop.f32.mrf.mxu0
    %1783 = vmatprep.mubr.f32.mxu0 0.0
    %1784 = vmatmul.mubr.f32.gmra.mxu0 %v1712
    %v1785 = vpop.f32.mrf.mxu0
    %v1786 = vadd.f32 %v1705, %v1785
    %v1787 = vpop.f32.mrf.mxu0
    %1788 = vdwg.mxu0
    %v1789 = vadd.f32 %v1610, %v1781
    %v1790 = vadd.f32 %v1611, %v1786
    %v1791 = vsel %vm545, %v1789, 0.0
    %1792 = vadd.xlane.f32.xlu0 %v1791
    %v1793 = vpop.xlane.xlu0 %1792
    %v1794 = vsel %vm545, %v1790, 0.0
    %1795 = vadd.xlane.f32.xlu0 %v1794
    %v1796 = vpop.xlane.xlu0 %1795
    %v1797 = vmul.f32 %v1793, %v1575
    %v1798 = vmul.f32 %v1796, %v1575
    %v1799 = vsub.f32 %v1789, %v1797
    %v1800 = vsub.f32 %v1790, %v1798
    %v1801 = vmul.f32 %v1799, %v1799
    %v1802 = vmul.f32 %v1800, %v1800
    %v1803 = vsel %vm545, %v1801, 0.0
    %1804 = vadd.xlane.f32.xlu0 %v1803
    %v1805 = vpop.xlane.xlu0 %1804
    %v1806 = vsel %vm545, %v1802, 0.0
    %1807 = vadd.xlane.f32.xlu0 %v1806
    %v1808 = vpop.xlane.xlu0 %1807
    %v1809 = vmul.f32 %v1805, %v1575
    %v1810 = vmul.f32 %v1808, %v1575
    %v1811 = vadd.f32 %v1809, 1e-05
    %v1812 = vadd.f32 %v1810, 1e-05
    %v1813 = vrsqrt.pop %v1811
    %v1814 = vrsqrt.pop %v1812
    %v1815 = vmul.f32 %v1799, %v1813
    %v1816 = vmul.f32 %v1800, %v1814
    %v1818 = vlaneseq
    %v1819 = vshrl.u32 %v1818, 7
    %v1820 = vsub.s32 0, %v1819
    %v1821 = vrot.slane %v537, %v1820
    %v1823 = vmul.f32 %v1815, %v1821
    %v1824 = vmul.f32 %v1816, %v1821
    %v1826 = vlaneseq
    %v1827 = vshrl.u32 %v1826, 7
    %v1828 = vsub.s32 0, %v1827
    %v1829 = vrot.slane %v538, %v1828
    %v1831 = vadd.f32 %v1823, %v1829
    %v1832 = vadd.f32 %v1824, %v1829
    %v1833 = vld [vmem:[%s43] sm:$0xff]
    %v1834 = vld [vmem:[%s43 + $0x8] sm:$0xff]
    %v1835 = vld [vmem:[%s43 + $0x10] sm:$0xff]
    %v1836 = vld [vmem:[%s43 + $0x18] sm:$0xff]
    %v1837 = vld [vmem:[%s45] sm:$0x1]
    %v1838 = vld [vmem:[%s47] sm:$0xff]
    %v1839 = vld [vmem:[%s47 + $0x8] sm:$0xff]
    %v1840 = vld [vmem:[%s47 + $0x10] sm:$0xff]
    %v1841 = vld [vmem:[%s47 + $0x18] sm:$0xff]
    %v1842 = vld [vmem:[%s49] sm:$0x1]
    %v1843 = vld [vmem:[%s51] sm:$0x1]
    %v1844 = vld [vmem:[%s53] sm:$0x1]
    %v1845 = vld [vmem:[%s55] sm:$0xff]
    %v1846 = vld [vmem:[%s55 + $0x8] sm:$0xff]
    %v1847 = vld [vmem:[%s55 + $0x10] sm:$0xff]
    %v1848 = vld [vmem:[%s55 + $0x18] sm:$0xff]
    %v1849 = vld [vmem:[%s57] sm:$0x1]
    %v1850 = vld [vmem:[%s59] sm:$0xff]
    %v1851 = vld [vmem:[%s59 + $0x8] sm:$0xff]
    %v1852 = vld [vmem:[%s59 + $0x10] sm:$0xff]
    %v1853 = vld [vmem:[%s59 + $0x18] sm:$0xff]
    %v1854 = vld [vmem:[%s59 + $0x20] sm:$0xff]
    %v1855 = vld [vmem:[%s59 + $0x28] sm:$0xff]
    %v1856 = vld [vmem:[%s59 + $0x30] sm:$0xff]
    %v1857 = vld [vmem:[%s59 + $0x38] sm:$0xff]
    %v1858 = vld [vmem:[%s61] sm:$0x1]
    %v1859 = vld [vmem:[%s63] sm:$0x1]
    %v1860 = vld [vmem:[%s65] sm:$0x1]
    %v1862 = vlaneseq
    %v1863 = vshrl.u32 %v1862, 7
    %v1864 = vsub.s32 0, %v1863
    %v1865 = vrot.slane %v1837, %v1864
    %v1868 = vsel %vm545, %v1831, 0
    %v1871 = vsel %vm545, %v1832, 0
    %1873 = vmatprep.subr.mxu0 0.0
    %1874 = vmatpush1.msra.mxu0 0.0
    %1875 = vmatprep.subr.mxu0 0.0
    %1876 = vmatpush1.msra.mxu0 0.0
    %1877 = vmatprep.subr.mxu0 0.0
    %1878 = vmatpush1.msra.mxu0 0.0
    %1879 = vmatprep.subr.mxu0 0.0
    %1880 = vmatpush1.msra.mxu0 0.0
    %1881 = vmatprep.subr.mxu0 0.0
    %1882 = vmatpush1.msra.mxu0 0.0
    %1883 = vmatprep.subr.mxu0 0.0
    %1884 = vmatpush1.msra.mxu0 0.0
    %1885 = vmatprep.subr.mxu0 0.0
    %1886 = vmatpush1.msra.mxu0 0.0
    %1887 = vmatprep.subr.mxu0 0.0
    %1888 = vmatpush1.msra.mxu0 0.0
    %1889 = vmatprep.subr.mxu0 0.0
    %1890 = vmatpush1.msra.mxu0 0.0
    %1891 = vmatprep.subr.mxu0 0.0
    %1892 = vmatpush1.msra.mxu0 0.0
    %1893 = vmatprep.subr.mxu0 0.0
    %1894 = vmatpush1.msra.mxu0 0.0
    %1895 = vmatprep.subr.mxu0 0.0
    %1896 = vmatpush1.msra.mxu0 0.0
    %1897 = vmatprep.subr.mxu0 0.0
    %1898 = vmatpush1.msra.mxu0 %v1836
    %1899 = vmatprep.subr.mxu0 0.0
    %1900 = vmatpush1.msra.mxu0 %v1835
    %1901 = vmatprep.subr.mxu0 0.0
    %1902 = vmatpush1.msra.mxu0 %v1834
    %1903 = vmatprep.subr.mxu0 0.0
    %1904 = vmatpush1.msra.mxu0 %v1833
    %1905 = vmatprep.subr.mxu0 0.0
    %1906 = vmatpush2.msra.mxu0 0.0
    %1907 = vmatprep.subr.mxu0 0.0
    %1908 = vmatpush2.msra.mxu0 0.0
    %1909 = vmatprep.subr.mxu0 0.0
    %1910 = vmatpush2.msra.mxu0 0.0
    %1911 = vmatprep.subr.mxu0 0.0
    %1912 = vmatpush2.msra.mxu0 0.0
    %1913 = vmatprep.subr.mxu0 0.0
    %1914 = vmatpush2.msra.mxu0 0.0
    %1915 = vmatprep.subr.mxu0 0.0
    %1916 = vmatpush2.msra.mxu0 0.0
    %1917 = vmatprep.subr.mxu0 0.0
    %1918 = vmatpush2.msra.mxu0 0.0
    %1919 = vmatprep.subr.mxu0 0.0
    %1920 = vmatpush2.msra.mxu0 0.0
    %1921 = vmatprep.subr.mxu0 0.0
    %1922 = vmatpush2.msra.mxu0 0.0
    %1923 = vmatprep.subr.mxu0 0.0
    %1924 = vmatpush2.msra.mxu0 0.0
    %1925 = vmatprep.subr.mxu0 0.0
    %1926 = vmatpush2.msra.mxu0 0.0
    %1927 = vmatprep.subr.mxu0 0.0
    %1928 = vmatpush2.msra.mxu0 0.0
    %1929 = vmatprep.subr.mxu0 0.0
    %1930 = vmatpush2.msra.mxu0 0.0
    %1931 = vmatprep.subr.mxu0 0.0
    %1932 = vmatpush2.msra.mxu0 0.0
    %1933 = vmatprep.subr.mxu0 0.0
    %1934 = vmatpush2.msra.mxu0 0.0
    %1935 = vmatprep.subr.mxu0 0.0
    %1936 = vmatpush2.msra.mxu0 0.0
    %1937 = vmatprep.mubr.f32.mxu0 0.0
    %1938 = vmatmul.mubr.f32.gmra.mxu0 %v1868
    %v1939 = vpop.f32.mrf.mxu0
    %v1940 = vadd.f32 %v1865, %v1939
    %v1941 = vpop.f32.mrf.mxu0
    %1942 = vmatprep.mubr.f32.mxu0 0.0
    %1943 = vmatmul.mubr.f32.gmra.mxu0 %v1871
    %v1944 = vpop.f32.mrf.mxu0
    %v1945 = vadd.f32 %v1865, %v1944
    %v1946 = vpop.f32.mrf.mxu0
    %1947 = vdwg.mxu0
    %1950 = vrot.lane.b32.xlu0 %v1940, 96
    %v1951 = vpop.permute.xlu0 %1950
    %1952 = vrot.lane.b32.xlu0 %v1945, 96
    %v1953 = vpop.permute.xlu0 %1952
    %v1954 = vsel %vm633, %v1940, 0
    %v1956 = vsel %vm633, %v1945, 0
    %v1958 = vsel %vm633, %v1951, 0
    %v1960 = vsel %vm633, %v1953, 0
    %1962 = vmatprep.subr.mxu0 0.0
    %1963 = vmatpush1.xpose.msra.mxu0 0.0
    %1964 = vmatprep.subr.mxu0 0.0
    %1965 = vmatpush1.xpose.msra.mxu0 0.0
    %1966 = vmatprep.subr.mxu0 0.0
    %1967 = vmatpush1.xpose.msra.mxu0 0.0
    %1968 = vmatprep.subr.mxu0 0.0
    %1969 = vmatpush1.xpose.msra.mxu0 0.0
    %1970 = vmatprep.subr.mxu0 0.0
    %1971 = vmatpush1.xpose.msra.mxu0 0.0
    %1972 = vmatprep.subr.mxu0 0.0
    %1973 = vmatpush1.xpose.msra.mxu0 0.0
    %1974 = vmatprep.subr.mxu0 0.0
    %1975 = vmatpush1.xpose.msra.mxu0 0.0
    %1976 = vmatprep.subr.mxu0 0.0
    %1977 = vmatpush1.xpose.msra.mxu0 0.0
    %1978 = vmatprep.subr.mxu0 0.0
    %1979 = vmatpush1.xpose.msra.mxu0 0.0
    %1980 = vmatprep.subr.mxu0 0.0
    %1981 = vmatpush1.xpose.msra.mxu0 0.0
    %1982 = vmatprep.subr.mxu0 0.0
    %1983 = vmatpush1.xpose.msra.mxu0 0.0
    %1984 = vmatprep.subr.mxu0 0.0
    %1985 = vmatpush1.xpose.msra.mxu0 0.0
    %1986 = vmatprep.subr.mxu0 0.0
    %1987 = vmatpush1.xpose.msra.mxu0 0.0
    %1988 = vmatprep.subr.mxu0 0.0
    %1989 = vmatpush1.xpose.msra.mxu0 0.0
    %1990 = vmatprep.subr.mxu0 0.0
    %1991 = vmatpush1.xpose.msra.mxu0 %v1960
    %1992 = vmatprep.subr.mxu0 0.0
    %1993 = vmatpush1.xpose.msra.mxu0 %v1958
    %1994 = vmatprep.subr.mxu0 0.0
    %1995 = vmatpush2.xpose.msra.mxu0 0.0
    %1996 = vmatprep.subr.mxu0 0.0
    %1997 = vmatpush2.xpose.msra.mxu0 0.0
    %1998 = vmatprep.subr.mxu0 0.0
    %1999 = vmatpush2.xpose.msra.mxu0 0.0
    %2000 = vmatprep.subr.mxu0 0.0
    %2001 = vmatpush2.xpose.msra.mxu0 0.0
    %2002 = vmatprep.subr.mxu0 0.0
    %2003 = vmatpush2.xpose.msra.mxu0 0.0
    %2004 = vmatprep.subr.mxu0 0.0
    %2005 = vmatpush2.xpose.msra.mxu0 0.0
    %2006 = vmatprep.subr.mxu0 0.0
    %2007 = vmatpush2.xpose.msra.mxu0 0.0
    %2008 = vmatprep.subr.mxu0 0.0
    %2009 = vmatpush2.xpose.msra.mxu0 0.0
    %2010 = vmatprep.subr.mxu0 0.0
    %2011 = vmatpush2.xpose.msra.mxu0 0.0
    %2012 = vmatprep.subr.mxu0 0.0
    %2013 = vmatpush2.xpose.msra.mxu0 0.0
    %2014 = vmatprep.subr.mxu0 0.0
    %2015 = vmatpush2.xpose.msra.mxu0 0.0
    %2016 = vmatprep.subr.mxu0 0.0
    %2017 = vmatpush2.xpose.msra.mxu0 0.0
    %2018 = vmatprep.subr.mxu0 0.0
    %2019 = vmatpush2.xpose.msra.mxu0 0.0
    %2020 = vmatprep.subr.mxu0 0.0
    %2021 = vmatpush2.xpose.msra.mxu0 0.0
    %2022 = vmatprep.subr.mxu0 0.0
    %2023 = vmatpush2.xpose.msra.mxu0 0.0
    %2024 = vmatprep.subr.mxu0 0.0
    %2025 = vmatpush2.xpose.msra.mxu0 0.0
    %2026 = vmatprep.mubr.f32.mxu0 0.0
    %2027 = vmatmul.mubr.f32.gmra.mxu0 %v1954
    %v2028 = vpop.f32.mrf.mxu0
    %v2029 = vadd.f32 0.0, %v2028
    %v2030 = vpop.f32.mrf.mxu0
    %2031 = vmatprep.mubr.f32.mxu0 0.0
    %2032 = vmatmul.mubr.f32.gmra.mxu0 %v1956
    %v2033 = vpop.f32.mrf.mxu0
    %v2034 = vadd.f32 0.0, %v2033
    %v2035 = vpop.f32.mrf.mxu0
    %2036 = vdwg.mxu0
    %v2037 = vmul.f32 %v2029, 0.35355338
    %v2038 = vmul.f32 %v2034, 0.35355338
    %v2039 = vadd.f32 %v2037, %v509
    %v2040 = vadd.f32 %v2038, %v510
    %v2041 = vsel %vm721, %v2039, -inf
    %2042 = vmax.xlane.f32.xlu0 %v2041
    %v2043 = vpop.xlane.xlu0 %2042
    %v2044 = vsel %vm721, %v2040, -inf
    %2045 = vmax.xlane.f32.xlu0 %v2044
    %v2046 = vpop.xlane.xlu0 %2045
    %v2047 = vsub.f32 %v2039, %v2043
    %v2048 = vsub.f32 %v2040, %v2046
    %v2049 = vmul.f32 %v2047, 1.442695
    %v2050 = vpow.pop %v2049
    %v2051 = vmul.f32 %v2048, 1.442695
    %v2052 = vpow.pop %v2051
    %v2053 = vsel %vm721, %v2050, 0.0
    %2054 = vadd.xlane.f32.xlu0 %v2053
    %v2055 = vpop.xlane.xlu0 %2054
    %v2056 = vsel %vm721, %v2052, 0.0
    %2057 = vadd.xlane.f32.xlu0 %v2056
    %v2058 = vpop.xlane.xlu0 %2057
    %v2059 = vrcp.pop %v2055
    %v2060 = vmul.f32 %v2050, %v2059
    %v2061 = vrcp.pop %v2058
    %v2062 = vmul.f32 %v2052, %v2061
    %2063 = vrot.lane.b32.xlu0 %v1940, 64
    %v2064 = vpop.permute.xlu0 %2063
    %2065 = vrot.lane.b32.xlu0 %v1945, 64
    %v2066 = vpop.permute.xlu0 %2065
    %v2070 = vsel %vm721, %v2060, 0
    %v2073 = vsel %vm721, %v2062, 0
    %2075 = vmatprep.subr.mxu0 0.0
    %2076 = vmatpush1.msra.mxu0 0.0
    %2077 = vmatprep.subr.mxu0 0.0
    %2078 = vmatpush1.msra.mxu0 0.0
    %2079 = vmatprep.subr.mxu0 0.0
    %2080 = vmatpush1.msra.mxu0 0.0
    %2081 = vmatprep.subr.mxu0 0.0
    %2082 = vmatpush1.msra.mxu0 0.0
    %2083 = vmatprep.subr.mxu0 0.0
    %2084 = vmatpush1.msra.mxu0 0.0
    %2085 = vmatprep.subr.mxu0 0.0
    %2086 = vmatpush1.msra.mxu0 0.0
    %2087 = vmatprep.subr.mxu0 0.0
    %2088 = vmatpush1.msra.mxu0 0.0
    %2089 = vmatprep.subr.mxu0 0.0
    %2090 = vmatpush1.msra.mxu0 0.0
    %2091 = vmatprep.subr.mxu0 0.0
    %2092 = vmatpush1.msra.mxu0 0.0
    %2093 = vmatprep.subr.mxu0 0.0
    %2094 = vmatpush1.msra.mxu0 0.0
    %2095 = vmatprep.subr.mxu0 0.0
    %2096 = vmatpush1.msra.mxu0 0.0
    %2097 = vmatprep.subr.mxu0 0.0
    %2098 = vmatpush1.msra.mxu0 0.0
    %2099 = vmatprep.subr.mxu0 0.0
    %2100 = vmatpush1.msra.mxu0 0.0
    %2101 = vmatprep.subr.mxu0 0.0
    %2102 = vmatpush1.msra.mxu0 0.0
    %2103 = vmatprep.subr.mxu0 0.0
    %2104 = vmatpush1.msra.mxu0 %v2066
    %2105 = vmatprep.subr.mxu0 0.0
    %2106 = vmatpush1.msra.mxu0 %v2064
    %2107 = vmatprep.subr.mxu0 0.0
    %2108 = vmatpush2.msra.mxu0 0.0
    %2109 = vmatprep.subr.mxu0 0.0
    %2110 = vmatpush2.msra.mxu0 0.0
    %2111 = vmatprep.subr.mxu0 0.0
    %2112 = vmatpush2.msra.mxu0 0.0
    %2113 = vmatprep.subr.mxu0 0.0
    %2114 = vmatpush2.msra.mxu0 0.0
    %2115 = vmatprep.subr.mxu0 0.0
    %2116 = vmatpush2.msra.mxu0 0.0
    %2117 = vmatprep.subr.mxu0 0.0
    %2118 = vmatpush2.msra.mxu0 0.0
    %2119 = vmatprep.subr.mxu0 0.0
    %2120 = vmatpush2.msra.mxu0 0.0
    %2121 = vmatprep.subr.mxu0 0.0
    %2122 = vmatpush2.msra.mxu0 0.0
    %2123 = vmatprep.subr.mxu0 0.0
    %2124 = vmatpush2.msra.mxu0 0.0
    %2125 = vmatprep.subr.mxu0 0.0
    %2126 = vmatpush2.msra.mxu0 0.0
    %2127 = vmatprep.subr.mxu0 0.0
    %2128 = vmatpush2.msra.mxu0 0.0
    %2129 = vmatprep.subr.mxu0 0.0
    %2130 = vmatpush2.msra.mxu0 0.0
    %2131 = vmatprep.subr.mxu0 0.0
    %2132 = vmatpush2.msra.mxu0 0.0
    %2133 = vmatprep.subr.mxu0 0.0
    %2134 = vmatpush2.msra.mxu0 0.0
    %2135 = vmatprep.subr.mxu0 0.0
    %2136 = vmatpush2.msra.mxu0 0.0
    %2137 = vmatprep.subr.mxu0 0.0
    %2138 = vmatpush2.msra.mxu0 0.0
    %2139 = vmatprep.mubr.f32.mxu0 0.0
    %2140 = vmatmul.mubr.f32.gmra.mxu0 %v2070
    %v2141 = vpop.f32.mrf.mxu0
    %v2142 = vadd.f32 0.0, %v2141
    %v2143 = vpop.f32.mrf.mxu0
    %2144 = vmatprep.mubr.f32.mxu0 0.0
    %2145 = vmatmul.mubr.f32.gmra.mxu0 %v2073
    %v2146 = vpop.f32.mrf.mxu0
    %v2147 = vadd.f32 0.0, %v2146
    %v2148 = vpop.f32.mrf.mxu0
    %2149 = vdwg.mxu0
    %2150 = vst.msk [vmem:[#allocation2] sm:$0xff] %vm633, %v2142
    %2151 = vst.msk [vmem:[#allocation2 + $0x8] sm:$0xff] %vm633, %v2147
    %2152 = vrot.lane.b32.xlu0 %v1940, 120
    %v2153 = vpop.permute.xlu0 %2152
    %2154 = vrot.lane.b32.xlu0 %v1945, 120
    %v2155 = vpop.permute.xlu0 %2154
    %2156 = vrot.lane.b32.xlu0 %v1940, 88
    %v2157 = vpop.permute.xlu0 %2156
    %2158 = vrot.lane.b32.xlu0 %v1945, 88
    %v2159 = vpop.permute.xlu0 %2158
    %v2160 = vsel %vm633, %v2153, 0
    %v2162 = vsel %vm633, %v2155, 0
    %v2164 = vsel %vm633, %v2157, 0
    %v2166 = vsel %vm633, %v2159, 0
    %2168 = vmatprep.subr.mxu0 0.0
    %2169 = vmatpush1.xpose.msra.mxu0 0.0
    %2170 = vmatprep.subr.mxu0 0.0
    %2171 = vmatpush1.xpose.msra.mxu0 0.0
    %2172 = vmatprep.subr.mxu0 0.0
    %2173 = vmatpush1.xpose.msra.mxu0 0.0
    %2174 = vmatprep.subr.mxu0 0.0
    %2175 = vmatpush1.xpose.msra.mxu0 0.0
    %2176 = vmatprep.subr.mxu0 0.0
    %2177 = vmatpush1.xpose.msra.mxu0 0.0
    %2178 = vmatprep.subr.mxu0 0.0
    %2179 = vmatpush1.xpose.msra.mxu0 0.0
    %2180 = vmatprep.subr.mxu0 0.0
    %2181 = vmatpush1.xpose.msra.mxu0 0.0
    %2182 = vmatprep.subr.mxu0 0.0
    %2183 = vmatpush1.xpose.msra.mxu0 0.0
    %2184 = vmatprep.subr.mxu0 0.0
    %2185 = vmatpush1.xpose.msra.mxu0 0.0
    %2186 = vmatprep.subr.mxu0 0.0
    %2187 = vmatpush1.xpose.msra.mxu0 0.0
    %2188 = vmatprep.subr.mxu0 0.0
    %2189 = vmatpush1.xpose.msra.mxu0 0.0
    %2190 = vmatprep.subr.mxu0 0.0
    %2191 = vmatpush1.xpose.msra.mxu0 0.0
    %2192 = vmatprep.subr.mxu0 0.0
    %2193 = vmatpush1.xpose.msra.mxu0 0.0
    %2194 = vmatprep.subr.mxu0 0.0
    %2195 = vmatpush1.xpose.msra.mxu0 0.0
    %2196 = vmatprep.subr.mxu0 0.0
    %2197 = vmatpush1.xpose.msra.mxu0 %v2166
    %2198 = vmatprep.subr.mxu0 0.0
    %2199 = vmatpush1.xpose.msra.mxu0 %v2164
    %2200 = vmatprep.subr.mxu0 0.0
    %2201 = vmatpush2.xpose.msra.mxu0 0.0
    %2202 = vmatprep.subr.mxu0 0.0
    %2203 = vmatpush2.xpose.msra.mxu0 0.0
    %2204 = vmatprep.subr.mxu0 0.0
    %2205 = vmatpush2.xpose.msra.mxu0 0.0
    %2206 = vmatprep.subr.mxu0 0.0
    %2207 = vmatpush2.xpose.msra.mxu0 0.0
    %2208 = vmatprep.subr.mxu0 0.0
    %2209 = vmatpush2.xpose.msra.mxu0 0.0
    %2210 = vmatprep.subr.mxu0 0.0
    %2211 = vmatpush2.xpose.msra.mxu0 0.0
    %2212 = vmatprep.subr.mxu0 0.0
    %2213 = vmatpush2.xpose.msra.mxu0 0.0
    %2214 = vmatprep.subr.mxu0 0.0
    %2215 = vmatpush2.xpose.msra.mxu0 0.0
    %2216 = vmatprep.subr.mxu0 0.0
    %2217 = vmatpush2.xpose.msra.mxu0 0.0
    %2218 = vmatprep.subr.mxu0 0.0
    %2219 = vmatpush2.xpose.msra.mxu0 0.0
    %2220 = vmatprep.subr.mxu0 0.0
    %2221 = vmatpush2.xpose.msra.mxu0 0.0
    %2222 = vmatprep.subr.mxu0 0.0
    %2223 = vmatpush2.xpose.msra.mxu0 0.0
    %2224 = vmatprep.subr.mxu0 0.0
    %2225 = vmatpush2.xpose.msra.mxu0 0.0
    %2226 = vmatprep.subr.mxu0 0.0
    %2227 = vmatpush2.xpose.msra.mxu0 0.0
    %2228 = vmatprep.subr.mxu0 0.0
    %2229 = vmatpush2.xpose.msra.mxu0 0.0
    %2230 = vmatprep.subr.mxu0 0.0
    %2231 = vmatpush2.xpose.msra.mxu0 0.0
    %2232 = vmatprep.mubr.f32.mxu0 0.0
    %2233 = vmatmul.mubr.f32.gmra.mxu0 %v2160
    %v2234 = vpop.f32.mrf.mxu0
    %v2235 = vadd.f32 0.0, %v2234
    %v2236 = vpop.f32.mrf.mxu0
    %2237 = vmatprep.mubr.f32.mxu0 0.0
    %2238 = vmatmul.mubr.f32.gmra.mxu0 %v2162
    %v2239 = vpop.f32.mrf.mxu0
    %v2240 = vadd.f32 0.0, %v2239
    %v2241 = vpop.f32.mrf.mxu0
    %2242 = vdwg.mxu0
    %v2243 = vmul.f32 %v2235, 0.35355338
    %v2244 = vmul.f32 %v2240, 0.35355338
    %v2245 = vadd.f32 %v2243, %v509
    %v2246 = vadd.f32 %v2244, %v510
    %v2247 = vsel %vm721, %v2245, -inf
    %2248 = vmax.xlane.f32.xlu0 %v2247
    %v2249 = vpop.xlane.xlu0 %2248
    %v2250 = vsel %vm721, %v2246, -inf
    %2251 = vmax.xlane.f32.xlu0 %v2250
    %v2252 = vpop.xlane.xlu0 %2251
    %v2253 = vsub.f32 %v2245, %v2249
    %v2254 = vsub.f32 %v2246, %v2252
    %v2255 = vmul.f32 %v2253, 1.442695
    %v2256 = vpow.pop %v2255
    %v2257 = vmul.f32 %v2254, 1.442695
    %v2258 = vpow.pop %v2257
    %v2259 = vsel %vm721, %v2256, 0.0
    %2260 = vadd.xlane.f32.xlu0 %v2259
    %v2261 = vpop.xlane.xlu0 %2260
    %v2262 = vsel %vm721, %v2258, 0.0
    %2263 = vadd.xlane.f32.xlu0 %v2262
    %v2264 = vpop.xlane.xlu0 %2263
    %v2265 = vrcp.pop %v2261
    %v2266 = vmul.f32 %v2256, %v2265
    %v2267 = vrcp.pop %v2264
    %v2268 = vmul.f32 %v2258, %v2267
    %2269 = vrot.lane.b32.xlu0 %v1940, 56
    %v2270 = vpop.permute.xlu0 %2269
    %2271 = vrot.lane.b32.xlu0 %v1945, 56
    %v2272 = vpop.permute.xlu0 %2271
    %v2276 = vsel %vm721, %v2266, 0
    %v2279 = vsel %vm721, %v2268, 0
    %2281 = vmatprep.subr.mxu0 0.0
    %2282 = vmatpush1.msra.mxu0 0.0
    %2283 = vmatprep.subr.mxu0 0.0
    %2284 = vmatpush1.msra.mxu0 0.0
    %2285 = vmatprep.subr.mxu0 0.0
    %2286 = vmatpush1.msra.mxu0 0.0
    %2287 = vmatprep.subr.mxu0 0.0
    %2288 = vmatpush1.msra.mxu0 0.0
    %2289 = vmatprep.subr.mxu0 0.0
    %2290 = vmatpush1.msra.mxu0 0.0
    %2291 = vmatprep.subr.mxu0 0.0
    %2292 = vmatpush1.msra.mxu0 0.0
    %2293 = vmatprep.subr.mxu0 0.0
    %2294 = vmatpush1.msra.mxu0 0.0
    %2295 = vmatprep.subr.mxu0 0.0
    %2296 = vmatpush1.msra.mxu0 0.0
    %2297 = vmatprep.subr.mxu0 0.0
    %2298 = vmatpush1.msra.mxu0 0.0
    %2299 = vmatprep.subr.mxu0 0.0
    %2300 = vmatpush1.msra.mxu0 0.0
    %2301 = vmatprep.subr.mxu0 0.0
    %2302 = vmatpush1.msra.mxu0 0.0
    %2303 = vmatprep.subr.mxu0 0.0
    %2304 = vmatpush1.msra.mxu0 0.0
    %2305 = vmatprep.subr.mxu0 0.0
    %2306 = vmatpush1.msra.mxu0 0.0
    %2307 = vmatprep.subr.mxu0 0.0
    %2308 = vmatpush1.msra.mxu0 0.0
    %2309 = vmatprep.subr.mxu0 0.0
    %2310 = vmatpush1.msra.mxu0 %v2272
    %2311 = vmatprep.subr.mxu0 0.0
    %2312 = vmatpush1.msra.mxu0 %v2270
    %2313 = vmatprep.subr.mxu0 0.0
    %2314 = vmatpush2.msra.mxu0 0.0
    %2315 = vmatprep.subr.mxu0 0.0
    %2316 = vmatpush2.msra.mxu0 0.0
    %2317 = vmatprep.subr.mxu0 0.0
    %2318 = vmatpush2.msra.mxu0 0.0
    %2319 = vmatprep.subr.mxu0 0.0
    %2320 = vmatpush2.msra.mxu0 0.0
    %2321 = vmatprep.subr.mxu0 0.0
    %2322 = vmatpush2.msra.mxu0 0.0
    %2323 = vmatprep.subr.mxu0 0.0
    %2324 = vmatpush2.msra.mxu0 0.0
    %2325 = vmatprep.subr.mxu0 0.0
    %2326 = vmatpush2.msra.mxu0 0.0
    %2327 = vmatprep.subr.mxu0 0.0
    %2328 = vmatpush2.msra.mxu0 0.0
    %2329 = vmatprep.subr.mxu0 0.0
    %2330 = vmatpush2.msra.mxu0 0.0
    %2331 = vmatprep.subr.mxu0 0.0
    %2332 = vmatpush2.msra.mxu0 0.0
    %2333 = vmatprep.subr.mxu0 0.0
    %2334 = vmatpush2.msra.mxu0 0.0
    %2335 = vmatprep.subr.mxu0 0.0
    %2336 = vmatpush2.msra.mxu0 0.0
    %2337 = vmatprep.subr.mxu0 0.0
    %2338 = vmatpush2.msra.mxu0 0.0
    %2339 = vmatprep.subr.mxu0 0.0
    %2340 = vmatpush2.msra.mxu0 0.0
    %2341 = vmatprep.subr.mxu0 0.0
    %2342 = vmatpush2.msra.mxu0 0.0
    %2343 = vmatprep.subr.mxu0 0.0
    %2344 = vmatpush2.msra.mxu0 0.0
    %2345 = vmatprep.mubr.f32.mxu0 0.0
    %2346 = vmatmul.mubr.f32.gmra.mxu0 %v2276
    %v2347 = vpop.f32.mrf.mxu0
    %v2348 = vadd.f32 0.0, %v2347
    %v2349 = vpop.f32.mrf.mxu0
    %2350 = vmatprep.mubr.f32.mxu0 0.0
    %2351 = vmatmul.mubr.f32.gmra.mxu0 %v2279
    %v2352 = vpop.f32.mrf.mxu0
    %v2353 = vadd.f32 0.0, %v2352
    %v2354 = vpop.f32.mrf.mxu0
    %2355 = vdwg.mxu0
    %2358 = vrot.lane.b32.xlu0 %v2348, 8
    %v2359 = vpop.permute.xlu0 %2358
    %2360 = vrot.lane.b32.xlu0 %v2353, 8
    %v2361 = vpop.permute.xlu0 %2360
    %2364 = vst.msk [vmem:[#allocation2] sm:$0xff] %vm1045, %v2359
    %2365 = vst.msk [vmem:[#allocation2 + $0x8] sm:$0xff] %vm1045, %v2361
    %2366 = vrot.lane.b32.xlu0 %v1940, 112
    %v2367 = vpop.permute.xlu0 %2366
    %2368 = vrot.lane.b32.xlu0 %v1945, 112
    %v2369 = vpop.permute.xlu0 %2368
    %2370 = vrot.lane.b32.xlu0 %v1940, 80
    %v2371 = vpop.permute.xlu0 %2370
    %2372 = vrot.lane.b32.xlu0 %v1945, 80
    %v2373 = vpop.permute.xlu0 %2372
    %v2374 = vsel %vm633, %v2367, 0
    %v2376 = vsel %vm633, %v2369, 0
    %v2378 = vsel %vm633, %v2371, 0
    %v2380 = vsel %vm633, %v2373, 0
    %2382 = vmatprep.subr.mxu0 0.0
    %2383 = vmatpush1.xpose.msra.mxu0 0.0
    %2384 = vmatprep.subr.mxu0 0.0
    %2385 = vmatpush1.xpose.msra.mxu0 0.0
    %2386 = vmatprep.subr.mxu0 0.0
    %2387 = vmatpush1.xpose.msra.mxu0 0.0
    %2388 = vmatprep.subr.mxu0 0.0
    %2389 = vmatpush1.xpose.msra.mxu0 0.0
    %2390 = vmatprep.subr.mxu0 0.0
    %2391 = vmatpush1.xpose.msra.mxu0 0.0
    %2392 = vmatprep.subr.mxu0 0.0
    %2393 = vmatpush1.xpose.msra.mxu0 0.0
    %2394 = vmatprep.subr.mxu0 0.0
    %2395 = vmatpush1.xpose.msra.mxu0 0.0
    %2396 = vmatprep.subr.mxu0 0.0
    %2397 = vmatpush1.xpose.msra.mxu0 0.0
    %2398 = vmatprep.subr.mxu0 0.0
    %2399 = vmatpush1.xpose.msra.mxu0 0.0
    %2400 = vmatprep.subr.mxu0 0.0
    %2401 = vmatpush1.xpose.msra.mxu0 0.0
    %2402 = vmatprep.subr.mxu0 0.0
    %2403 = vmatpush1.xpose.msra.mxu0 0.0
    %2404 = vmatprep.subr.mxu0 0.0
    %2405 = vmatpush1.xpose.msra.mxu0 0.0
    %2406 = vmatprep.subr.mxu0 0.0
    %2407 = vmatpush1.xpose.msra.mxu0 0.0
    %2408 = vmatprep.subr.mxu0 0.0
    %2409 = vmatpush1.xpose.msra.mxu0 0.0
    %2410 = vmatprep.subr.mxu0 0.0
    %2411 = vmatpush1.xpose.msra.mxu0 %v2380
    %2412 = vmatprep.subr.mxu0 0.0
    %2413 = vmatpush1.xpose.msra.mxu0 %v2378
    %2414 = vmatprep.subr.mxu0 0.0
    %2415 = vmatpush2.xpose.msra.mxu0 0.0
    %2416 = vmatprep.subr.mxu0 0.0
    %2417 = vmatpush2.xpose.msra.mxu0 0.0
    %2418 = vmatprep.subr.mxu0 0.0
    %2419 = vmatpush2.xpose.msra.mxu0 0.0
    %2420 = vmatprep.subr.mxu0 0.0
    %2421 = vmatpush2.xpose.msra.mxu0 0.0
    %2422 = vmatprep.subr.mxu0 0.0
    %2423 = vmatpush2.xpose.msra.mxu0 0.0
    %2424 = vmatprep.subr.mxu0 0.0
    %2425 = vmatpush2.xpose.msra.mxu0 0.0
    %2426 = vmatprep.subr.mxu0 0.0
    %2427 = vmatpush2.xpose.msra.mxu0 0.0
    %2428 = vmatprep.subr.mxu0 0.0
    %2429 = vmatpush2.xpose.msra.mxu0 0.0
    %2430 = vmatprep.subr.mxu0 0.0
    %2431 = vmatpush2.xpose.msra.mxu0 0.0
    %2432 = vmatprep.subr.mxu0 0.0
    %2433 = vmatpush2.xpose.msra.mxu0 0.0
    %2434 = vmatprep.subr.mxu0 0.0
    %2435 = vmatpush2.xpose.msra.mxu0 0.0
    %2436 = vmatprep.subr.mxu0 0.0
    %2437 = vmatpush2.xpose.msra.mxu0 0.0
    %2438 = vmatprep.subr.mxu0 0.0
    %2439 = vmatpush2.xpose.msra.mxu0 0.0
    %2440 = vmatprep.subr.mxu0 0.0
    %2441 = vmatpush2.xpose.msra.mxu0 0.0
    %2442 = vmatprep.subr.mxu0 0.0
    %2443 = vmatpush2.xpose.msra.mxu0 0.0
    %2444 = vmatprep.subr.mxu0 0.0
    %2445 = vmatpush2.xpose.msra.mxu0 0.0
    %2446 = vmatprep.mubr.f32.mxu0 0.0
    %2447 = vmatmul.mubr.f32.gmra.mxu0 %v2374
    %v2448 = vpop.f32.mrf.mxu0
    %v2449 = vadd.f32 0.0, %v2448
    %v2450 = vpop.f32.mrf.mxu0
    %2451 = vmatprep.mubr.f32.mxu0 0.0
    %2452 = vmatmul.mubr.f32.gmra.mxu0 %v2376
    %v2453 = vpop.f32.mrf.mxu0
    %v2454 = vadd.f32 0.0, %v2453
    %v2455 = vpop.f32.mrf.mxu0
    %2456 = vdwg.mxu0
    %v2457 = vmul.f32 %v2449, 0.35355338
    %v2458 = vmul.f32 %v2454, 0.35355338
    %v2459 = vadd.f32 %v2457, %v509
    %v2460 = vadd.f32 %v2458, %v510
    %v2461 = vsel %vm721, %v2459, -inf
    %2462 = vmax.xlane.f32.xlu0 %v2461
    %v2463 = vpop.xlane.xlu0 %2462
    %v2464 = vsel %vm721, %v2460, -inf
    %2465 = vmax.xlane.f32.xlu0 %v2464
    %v2466 = vpop.xlane.xlu0 %2465
    %v2467 = vsub.f32 %v2459, %v2463
    %v2468 = vsub.f32 %v2460, %v2466
    %v2469 = vmul.f32 %v2467, 1.442695
    %v2470 = vpow.pop %v2469
    %v2471 = vmul.f32 %v2468, 1.442695
    %v2472 = vpow.pop %v2471
    %v2473 = vsel %vm721, %v2470, 0.0
    %2474 = vadd.xlane.f32.xlu0 %v2473
    %v2475 = vpop.xlane.xlu0 %2474
    %v2476 = vsel %vm721, %v2472, 0.0
    %2477 = vadd.xlane.f32.xlu0 %v2476
    %v2478 = vpop.xlane.xlu0 %2477
    %v2479 = vrcp.pop %v2475
    %v2480 = vmul.f32 %v2470, %v2479
    %v2481 = vrcp.pop %v2478
    %v2482 = vmul.f32 %v2472, %v2481
    %2483 = vrot.lane.b32.xlu0 %v1940, 48
    %v2484 = vpop.permute.xlu0 %2483
    %2485 = vrot.lane.b32.xlu0 %v1945, 48
    %v2486 = vpop.permute.xlu0 %2485
    %v2490 = vsel %vm721, %v2480, 0
    %v2493 = vsel %vm721, %v2482, 0
    %2495 = vmatprep.subr.mxu0 0.0
    %2496 = vmatpush1.msra.mxu0 0.0
    %2497 = vmatprep.subr.mxu0 0.0
    %2498 = vmatpush1.msra.mxu0 0.0
    %2499 = vmatprep.subr.mxu0 0.0
    %2500 = vmatpush1.msra.mxu0 0.0
    %2501 = vmatprep.subr.mxu0 0.0
    %2502 = vmatpush1.msra.mxu0 0.0
    %2503 = vmatprep.subr.mxu0 0.0
    %2504 = vmatpush1.msra.mxu0 0.0
    %2505 = vmatprep.subr.mxu0 0.0
    %2506 = vmatpush1.msra.mxu0 0.0
    %2507 = vmatprep.subr.mxu0 0.0
    %2508 = vmatpush1.msra.mxu0 0.0
    %2509 = vmatprep.subr.mxu0 0.0
    %2510 = vmatpush1.msra.mxu0 0.0
    %2511 = vmatprep.subr.mxu0 0.0
    %2512 = vmatpush1.msra.mxu0 0.0
    %2513 = vmatprep.subr.mxu0 0.0
    %2514 = vmatpush1.msra.mxu0 0.0
    %2515 = vmatprep.subr.mxu0 0.0
    %2516 = vmatpush1.msra.mxu0 0.0
    %2517 = vmatprep.subr.mxu0 0.0
    %2518 = vmatpush1.msra.mxu0 0.0
    %2519 = vmatprep.subr.mxu0 0.0
    %2520 = vmatpush1.msra.mxu0 0.0
    %2521 = vmatprep.subr.mxu0 0.0
    %2522 = vmatpush1.msra.mxu0 0.0
    %2523 = vmatprep.subr.mxu0 0.0
    %2524 = vmatpush1.msra.mxu0 %v2486
    %2525 = vmatprep.subr.mxu0 0.0
    %2526 = vmatpush1.msra.mxu0 %v2484
    %2527 = vmatprep.subr.mxu0 0.0
    %2528 = vmatpush2.msra.mxu0 0.0
    %2529 = vmatprep.subr.mxu0 0.0
    %2530 = vmatpush2.msra.mxu0 0.0
    %2531 = vmatprep.subr.mxu0 0.0
    %2532 = vmatpush2.msra.mxu0 0.0
    %2533 = vmatprep.subr.mxu0 0.0
    %2534 = vmatpush2.msra.mxu0 0.0
    %2535 = vmatprep.subr.mxu0 0.0
    %2536 = vmatpush2.msra.mxu0 0.0
    %2537 = vmatprep.subr.mxu0 0.0
    %2538 = vmatpush2.msra.mxu0 0.0
    %2539 = vmatprep.subr.mxu0 0.0
    %2540 = vmatpush2.msra.mxu0 0.0
    %2541 = vmatprep.subr.mxu0 0.0
    %2542 = vmatpush2.msra.mxu0 0.0
    %2543 = vmatprep.subr.mxu0 0.0
    %2544 = vmatpush2.msra.mxu0 0.0
    %2545 = vmatprep.subr.mxu0 0.0
    %2546 = vmatpush2.msra.mxu0 0.0
    %2547 = vmatprep.subr.mxu0 0.0
    %2548 = vmatpush2.msra.mxu0 0.0
    %2549 = vmatprep.subr.mxu0 0.0
    %2550 = vmatpush2.msra.mxu0 0.0
    %2551 = vmatprep.subr.mxu0 0.0
    %2552 = vmatpush2.msra.mxu0 0.0
    %2553 = vmatprep.subr.mxu0 0.0
    %2554 = vmatpush2.msra.mxu0 0.0
    %2555 = vmatprep.subr.mxu0 0.0
    %2556 = vmatpush2.msra.mxu0 0.0
    %2557 = vmatprep.subr.mxu0 0.0
    %2558 = vmatpush2.msra.mxu0 0.0
    %2559 = vmatprep.mubr.f32.mxu0 0.0
    %2560 = vmatmul.mubr.f32.gmra.mxu0 %v2490
    %v2561 = vpop.f32.mrf.mxu0
    %v2562 = vadd.f32 0.0, %v2561
    %v2563 = vpop.f32.mrf.mxu0
    %2564 = vmatprep.mubr.f32.mxu0 0.0
    %2565 = vmatmul.mubr.f32.gmra.mxu0 %v2493
    %v2566 = vpop.f32.mrf.mxu0
    %v2567 = vadd.f32 0.0, %v2566
    %v2568 = vpop.f32.mrf.mxu0
    %2569 = vdwg.mxu0
    %2572 = vrot.lane.b32.xlu0 %v2562, 16
    %v2573 = vpop.permute.xlu0 %2572
    %2574 = vrot.lane.b32.xlu0 %v2567, 16
    %v2575 = vpop.permute.xlu0 %2574
    %2578 = vst.msk [vmem:[#allocation2] sm:$0xff] %vm1260, %v2573
    %2579 = vst.msk [vmem:[#allocation2 + $0x8] sm:$0xff] %vm1260, %v2575
    %2580 = vrot.lane.b32.xlu0 %v1940, 104
    %v2581 = vpop.permute.xlu0 %2580
    %2582 = vrot.lane.b32.xlu0 %v1945, 104
    %v2583 = vpop.permute.xlu0 %2582
    %2584 = vrot.lane.b32.xlu0 %v1940, 72
    %v2585 = vpop.permute.xlu0 %2584
    %2586 = vrot.lane.b32.xlu0 %v1945, 72
    %v2587 = vpop.permute.xlu0 %2586
    %v2588 = vsel %vm633, %v2581, 0
    %v2590 = vsel %vm633, %v2583, 0
    %v2592 = vsel %vm633, %v2585, 0
    %v2594 = vsel %vm633, %v2587, 0
    %2596 = vmatprep.subr.mxu0 0.0
    %2597 = vmatpush1.xpose.msra.mxu0 0.0
    %2598 = vmatprep.subr.mxu0 0.0
    %2599 = vmatpush1.xpose.msra.mxu0 0.0
    %2600 = vmatprep.subr.mxu0 0.0
    %2601 = vmatpush1.xpose.msra.mxu0 0.0
    %2602 = vmatprep.subr.mxu0 0.0
    %2603 = vmatpush1.xpose.msra.mxu0 0.0
    %2604 = vmatprep.subr.mxu0 0.0
    %2605 = vmatpush1.xpose.msra.mxu0 0.0
    %2606 = vmatprep.subr.mxu0 0.0
    %2607 = vmatpush1.xpose.msra.mxu0 0.0
    %2608 = vmatprep.subr.mxu0 0.0
    %2609 = vmatpush1.xpose.msra.mxu0 0.0
    %2610 = vmatprep.subr.mxu0 0.0
    %2611 = vmatpush1.xpose.msra.mxu0 0.0
    %2612 = vmatprep.subr.mxu0 0.0
    %2613 = vmatpush1.xpose.msra.mxu0 0.0
    %2614 = vmatprep.subr.mxu0 0.0
    %2615 = vmatpush1.xpose.msra.mxu0 0.0
    %2616 = vmatprep.subr.mxu0 0.0
    %2617 = vmatpush1.xpose.msra.mxu0 0.0
    %2618 = vmatprep.subr.mxu0 0.0
    %2619 = vmatpush1.xpose.msra.mxu0 0.0
    %2620 = vmatprep.subr.mxu0 0.0
    %2621 = vmatpush1.xpose.msra.mxu0 0.0
    %2622 = vmatprep.subr.mxu0 0.0
    %2623 = vmatpush1.xpose.msra.mxu0 0.0
    %2624 = vmatprep.subr.mxu0 0.0
    %2625 = vmatpush1.xpose.msra.mxu0 %v2594
    %2626 = vmatprep.subr.mxu0 0.0
    %2627 = vmatpush1.xpose.msra.mxu0 %v2592
    %2628 = vmatprep.subr.mxu0 0.0
    %2629 = vmatpush2.xpose.msra.mxu0 0.0
    %2630 = vmatprep.subr.mxu0 0.0
    %2631 = vmatpush2.xpose.msra.mxu0 0.0
    %2632 = vmatprep.subr.mxu0 0.0
    %2633 = vmatpush2.xpose.msra.mxu0 0.0
    %2634 = vmatprep.subr.mxu0 0.0
    %2635 = vmatpush2.xpose.msra.mxu0 0.0
    %2636 = vmatprep.subr.mxu0 0.0
    %2637 = vmatpush2.xpose.msra.mxu0 0.0
    %2638 = vmatprep.subr.mxu0 0.0
    %2639 = vmatpush2.xpose.msra.mxu0 0.0
    %2640 = vmatprep.subr.mxu0 0.0
    %2641 = vmatpush2.xpose.msra.mxu0 0.0
    %2642 = vmatprep.subr.mxu0 0.0
    %2643 = vmatpush2.xpose.msra.mxu0 0.0
    %2644 = vmatprep.subr.mxu0 0.0
    %2645 = vmatpush2.xpose.msra.mxu0 0.0
    %2646 = vmatprep.subr.mxu0 0.0
    %2647 = vmatpush2.xpose.msra.mxu0 0.0
    %2648 = vmatprep.subr.mxu0 0.0
    %2649 = vmatpush2.xpose.msra.mxu0 0.0
    %2650 = vmatprep.subr.mxu0 0.0
    %2651 = vmatpush2.xpose.msra.mxu0 0.0
    %2652 = vmatprep.subr.mxu0 0.0
    %2653 = vmatpush2.xpose.msra.mxu0 0.0
    %2654 = vmatprep.subr.mxu0 0.0
    %2655 = vmatpush2.xpose.msra.mxu0 0.0
    %2656 = vmatprep.subr.mxu0 0.0
    %2657 = vmatpush2.xpose.msra.mxu0 0.0
    %2658 = vmatprep.subr.mxu0 0.0
    %2659 = vmatpush2.xpose.msra.mxu0 0.0
    %2660 = vmatprep.mubr.f32.mxu0 0.0
    %2661 = vmatmul.mubr.f32.gmra.mxu0 %v2588
    %v2662 = vpop.f32.mrf.mxu0
    %v2663 = vadd.f32 0.0, %v2662
    %v2664 = vpop.f32.mrf.mxu0
    %2665 = vmatprep.mubr.f32.mxu0 0.0
    %2666 = vmatmul.mubr.f32.gmra.mxu0 %v2590
    %v2667 = vpop.f32.mrf.mxu0
    %v2668 = vadd.f32 0.0, %v2667
    %v2669 = vpop.f32.mrf.mxu0
    %2670 = vdwg.mxu0
    %v2671 = vmul.f32 %v2663, 0.35355338
    %v2672 = vmul.f32 %v2668, 0.35355338
    %v2673 = vadd.f32 %v2671, %v509
    %v2674 = vadd.f32 %v2672, %v510
    %v2675 = vsel %vm721, %v2673, -inf
    %2676 = vmax.xlane.f32.xlu0 %v2675
    %v2677 = vpop.xlane.xlu0 %2676
    %v2678 = vsel %vm721, %v2674, -inf
    %2679 = vmax.xlane.f32.xlu0 %v2678
    %v2680 = vpop.xlane.xlu0 %2679
    %v2681 = vsub.f32 %v2673, %v2677
    %v2682 = vsub.f32 %v2674, %v2680
    %v2683 = vmul.f32 %v2681, 1.442695
    %v2684 = vpow.pop %v2683
    %v2685 = vmul.f32 %v2682, 1.442695
    %v2686 = vpow.pop %v2685
    %v2687 = vsel %vm721, %v2684, 0.0
    %2688 = vadd.xlane.f32.xlu0 %v2687
    %v2689 = vpop.xlane.xlu0 %2688
    %v2690 = vsel %vm721, %v2686, 0.0
    %2691 = vadd.xlane.f32.xlu0 %v2690
    %v2692 = vpop.xlane.xlu0 %2691
    %v2693 = vrcp.pop %v2689
    %v2694 = vmul.f32 %v2684, %v2693
    %v2695 = vrcp.pop %v2692
    %v2696 = vmul.f32 %v2686, %v2695
    %2697 = vrot.lane.b32.xlu0 %v1940, 40
    %v2698 = vpop.permute.xlu0 %2697
    %2699 = vrot.lane.b32.xlu0 %v1945, 40
    %v2700 = vpop.permute.xlu0 %2699
    %v2704 = vsel %vm721, %v2694, 0
    %v2707 = vsel %vm721, %v2696, 0
    %2709 = vmatprep.subr.mxu0 0.0
    %2710 = vmatpush1.msra.mxu0 0.0
    %2711 = vmatprep.subr.mxu0 0.0
    %2712 = vmatpush1.msra.mxu0 0.0
    %2713 = vmatprep.subr.mxu0 0.0
    %2714 = vmatpush1.msra.mxu0 0.0
    %2715 = vmatprep.subr.mxu0 0.0
    %2716 = vmatpush1.msra.mxu0 0.0
    %2717 = vmatprep.subr.mxu0 0.0
    %2718 = vmatpush1.msra.mxu0 0.0
    %2719 = vmatprep.subr.mxu0 0.0
    %2720 = vmatpush1.msra.mxu0 0.0
    %2721 = vmatprep.subr.mxu0 0.0
    %2722 = vmatpush1.msra.mxu0 0.0
    %2723 = vmatprep.subr.mxu0 0.0
    %2724 = vmatpush1.msra.mxu0 0.0
    %2725 = vmatprep.subr.mxu0 0.0
    %2726 = vmatpush1.msra.mxu0 0.0
    %2727 = vmatprep.subr.mxu0 0.0
    %2728 = vmatpush1.msra.mxu0 0.0
    %2729 = vmatprep.subr.mxu0 0.0
    %2730 = vmatpush1.msra.mxu0 0.0
    %2731 = vmatprep.subr.mxu0 0.0
    %2732 = vmatpush1.msra.mxu0 0.0
    %2733 = vmatprep.subr.mxu0 0.0
    %2734 = vmatpush1.msra.mxu0 0.0
    %2735 = vmatprep.subr.mxu0 0.0
    %2736 = vmatpush1.msra.mxu0 0.0
    %2737 = vmatprep.subr.mxu0 0.0
    %2738 = vmatpush1.msra.mxu0 %v2700
    %2739 = vmatprep.subr.mxu0 0.0
    %2740 = vmatpush1.msra.mxu0 %v2698
    %2741 = vmatprep.subr.mxu0 0.0
    %2742 = vmatpush2.msra.mxu0 0.0
    %2743 = vmatprep.subr.mxu0 0.0
    %2744 = vmatpush2.msra.mxu0 0.0
    %2745 = vmatprep.subr.mxu0 0.0
    %2746 = vmatpush2.msra.mxu0 0.0
    %2747 = vmatprep.subr.mxu0 0.0
    %2748 = vmatpush2.msra.mxu0 0.0
    %2749 = vmatprep.subr.mxu0 0.0
    %2750 = vmatpush2.msra.mxu0 0.0
    %2751 = vmatprep.subr.mxu0 0.0
    %2752 = vmatpush2.msra.mxu0 0.0
    %2753 = vmatprep.subr.mxu0 0.0
    %2754 = vmatpush2.msra.mxu0 0.0
    %2755 = vmatprep.subr.mxu0 0.0
    %2756 = vmatpush2.msra.mxu0 0.0
    %2757 = vmatprep.subr.mxu0 0.0
    %2758 = vmatpush2.msra.mxu0 0.0
    %2759 = vmatprep.subr.mxu0 0.0
    %2760 = vmatpush2.msra.mxu0 0.0
    %2761 = vmatprep.subr.mxu0 0.0
    %2762 = vmatpush2.msra.mxu0 0.0
    %2763 = vmatprep.subr.mxu0 0.0
    %2764 = vmatpush2.msra.mxu0 0.0
    %2765 = vmatprep.subr.mxu0 0.0
    %2766 = vmatpush2.msra.mxu0 0.0
    %2767 = vmatprep.subr.mxu0 0.0
    %2768 = vmatpush2.msra.mxu0 0.0
    %2769 = vmatprep.subr.mxu0 0.0
    %2770 = vmatpush2.msra.mxu0 0.0
    %2771 = vmatprep.subr.mxu0 0.0
    %2772 = vmatpush2.msra.mxu0 0.0
    %2773 = vmatprep.mubr.f32.mxu0 0.0
    %2774 = vmatmul.mubr.f32.gmra.mxu0 %v2704
    %v2775 = vpop.f32.mrf.mxu0
    %v2776 = vadd.f32 0.0, %v2775
    %v2777 = vpop.f32.mrf.mxu0
    %2778 = vmatprep.mubr.f32.mxu0 0.0
    %2779 = vmatmul.mubr.f32.gmra.mxu0 %v2707
    %v2780 = vpop.f32.mrf.mxu0
    %v2781 = vadd.f32 0.0, %v2780
    %v2782 = vpop.f32.mrf.mxu0
    %2783 = vdwg.mxu0
    %2786 = vrot.lane.b32.xlu0 %v2776, 24
    %v2787 = vpop.permute.xlu0 %2786
    %2788 = vrot.lane.b32.xlu0 %v2781, 24
    %v2789 = vpop.permute.xlu0 %2788
    %2792 = vst.msk [vmem:[#allocation2] sm:$0xff] %vm1475, %v2787
    %2793 = vst.msk [vmem:[#allocation2 + $0x8] sm:$0xff] %vm1475, %v2789
    %v2794 = vld [vmem:[#allocation2] sm:$0xff]
    %v2795 = vld [vmem:[#allocation2 + $0x8] sm:$0xff]
    %v2797 = vlaneseq
    %v2798 = vshrl.u32 %v2797, 7
    %v2799 = vsub.s32 0, %v2798
    %v2800 = vrot.slane %v1842, %v2799
    %v2803 = vsel %vm545, %v2794, 0
    %v2806 = vsel %vm545, %v2795, 0
    %2808 = vmatprep.subr.mxu0 0.0
    %2809 = vmatpush1.msra.mxu0 0.0
    %2810 = vmatprep.subr.mxu0 0.0
    %2811 = vmatpush1.msra.mxu0 0.0
    %2812 = vmatprep.subr.mxu0 0.0
    %2813 = vmatpush1.msra.mxu0 0.0
    %2814 = vmatprep.subr.mxu0 0.0
    %2815 = vmatpush1.msra.mxu0 0.0
    %2816 = vmatprep.subr.mxu0 0.0
    %2817 = vmatpush1.msra.mxu0 0.0
    %2818 = vmatprep.subr.mxu0 0.0
    %2819 = vmatpush1.msra.mxu0 0.0
    %2820 = vmatprep.subr.mxu0 0.0
    %2821 = vmatpush1.msra.mxu0 0.0
    %2822 = vmatprep.subr.mxu0 0.0
    %2823 = vmatpush1.msra.mxu0 0.0
    %2824 = vmatprep.subr.mxu0 0.0
    %2825 = vmatpush1.msra.mxu0 0.0
    %2826 = vmatprep.subr.mxu0 0.0
    %2827 = vmatpush1.msra.mxu0 0.0
    %2828 = vmatprep.subr.mxu0 0.0
    %2829 = vmatpush1.msra.mxu0 0.0
    %2830 = vmatprep.subr.mxu0 0.0
    %2831 = vmatpush1.msra.mxu0 0.0
    %2832 = vmatprep.subr.mxu0 0.0
    %2833 = vmatpush1.msra.mxu0 %v1841
    %2834 = vmatprep.subr.mxu0 0.0
    %2835 = vmatpush1.msra.mxu0 %v1840
    %2836 = vmatprep.subr.mxu0 0.0
    %2837 = vmatpush1.msra.mxu0 %v1839
    %2838 = vmatprep.subr.mxu0 0.0
    %2839 = vmatpush1.msra.mxu0 %v1838
    %2840 = vmatprep.subr.mxu0 0.0
    %2841 = vmatpush2.msra.mxu0 0.0
    %2842 = vmatprep.subr.mxu0 0.0
    %2843 = vmatpush2.msra.mxu0 0.0
    %2844 = vmatprep.subr.mxu0 0.0
    %2845 = vmatpush2.msra.mxu0 0.0
    %2846 = vmatprep.subr.mxu0 0.0
    %2847 = vmatpush2.msra.mxu0 0.0
    %2848 = vmatprep.subr.mxu0 0.0
    %2849 = vmatpush2.msra.mxu0 0.0
    %2850 = vmatprep.subr.mxu0 0.0
    %2851 = vmatpush2.msra.mxu0 0.0
    %2852 = vmatprep.subr.mxu0 0.0
    %2853 = vmatpush2.msra.mxu0 0.0
    %2854 = vmatprep.subr.mxu0 0.0
    %2855 = vmatpush2.msra.mxu0 0.0
    %2856 = vmatprep.subr.mxu0 0.0
    %2857 = vmatpush2.msra.mxu0 0.0
    %2858 = vmatprep.subr.mxu0 0.0
    %2859 = vmatpush2.msra.mxu0 0.0
    %2860 = vmatprep.subr.mxu0 0.0
    %2861 = vmatpush2.msra.mxu0 0.0
    %2862 = vmatprep.subr.mxu0 0.0
    %2863 = vmatpush2.msra.mxu0 0.0
    %2864 = vmatprep.subr.mxu0 0.0
    %2865 = vmatpush2.msra.mxu0 0.0
    %2866 = vmatprep.subr.mxu0 0.0
    %2867 = vmatpush2.msra.mxu0 0.0
    %2868 = vmatprep.subr.mxu0 0.0
    %2869 = vmatpush2.msra.mxu0 0.0
    %2870 = vmatprep.subr.mxu0 0.0
    %2871 = vmatpush2.msra.mxu0 0.0
    %2872 = vmatprep.mubr.f32.mxu0 0.0
    %2873 = vmatmul.mubr.f32.gmra.mxu0 %v2803
    %v2874 = vpop.f32.mrf.mxu0
    %v2875 = vadd.f32 %v2800, %v2874
    %v2876 = vpop.f32.mrf.mxu0
    %2877 = vmatprep.mubr.f32.mxu0 0.0
    %2878 = vmatmul.mubr.f32.gmra.mxu0 %v2806
    %v2879 = vpop.f32.mrf.mxu0
    %v2880 = vadd.f32 %v2800, %v2879
    %v2881 = vpop.f32.mrf.mxu0
    %2882 = vdwg.mxu0
    %v2883 = vadd.f32 %v1831, %v2875
    %v2884 = vadd.f32 %v1832, %v2880
    %v2885 = vsel %vm545, %v2883, 0.0
    %2886 = vadd.xlane.f32.xlu0 %v2885
    %v2887 = vpop.xlane.xlu0 %2886
    %v2888 = vsel %vm545, %v2884, 0.0
    %2889 = vadd.xlane.f32.xlu0 %v2888
    %v2890 = vpop.xlane.xlu0 %2889
    %v2891 = vmul.f32 %v2887, %v1575
    %v2892 = vmul.f32 %v2890, %v1575
    %v2893 = vsub.f32 %v2883, %v2891
    %v2894 = vsub.f32 %v2884, %v2892
    %v2895 = vmul.f32 %v2893, %v2893
    %v2896 = vmul.f32 %v2894, %v2894
    %v2897 = vsel %vm545, %v2895, 0.0
    %2898 = vadd.xlane.f32.xlu0 %v2897
    %v2899 = vpop.xlane.xlu0 %2898
    %v2900 = vsel %vm545, %v2896, 0.0
    %2901 = vadd.xlane.f32.xlu0 %v2900
    %v2902 = vpop.xlane.xlu0 %2901
    %v2903 = vmul.f32 %v2899, %v1575
    %v2904 = vmul.f32 %v2902, %v1575
    %v2905 = vadd.f32 %v2903, 1e-05
    %v2906 = vadd.f32 %v2904, 1e-05
    %v2907 = vrsqrt.pop %v2905
    %v2908 = vrsqrt.pop %v2906
    %v2909 = vmul.f32 %v2893, %v2907
    %v2910 = vmul.f32 %v2894, %v2908
    %v2912 = vlaneseq
    %v2913 = vshrl.u32 %v2912, 7
    %v2914 = vsub.s32 0, %v2913
    %v2915 = vrot.slane %v1843, %v2914
    %v2917 = vmul.f32 %v2909, %v2915
    %v2918 = vmul.f32 %v2910, %v2915
    %v2920 = vlaneseq
    %v2921 = vshrl.u32 %v2920, 7
    %v2922 = vsub.s32 0, %v2921
    %v2923 = vrot.slane %v1844, %v2922
    %v2925 = vadd.f32 %v2917, %v2923
    %v2926 = vadd.f32 %v2918, %v2923
    %v2928 = vlaneseq
    %v2929 = vshrl.u32 %v2928, 7
    %v2930 = vsub.s32 0, %v2929
    %v2931 = vrot.slane %v1849, %v2930
    %v2934 = vsel %vm545, %v2925, 0
    %v2937 = vsel %vm545, %v2926, 0
    %2939 = vmatprep.subr.mxu0 0.0
    %2940 = vmatpush1.msra.mxu0 0.0
    %2941 = vmatprep.subr.mxu0 0.0
    %2942 = vmatpush1.msra.mxu0 0.0
    %2943 = vmatprep.subr.mxu0 0.0
    %2944 = vmatpush1.msra.mxu0 0.0
    %2945 = vmatprep.subr.mxu0 0.0
    %2946 = vmatpush1.msra.mxu0 0.0
    %2947 = vmatprep.subr.mxu0 0.0
    %2948 = vmatpush1.msra.mxu0 0.0
    %2949 = vmatprep.subr.mxu0 0.0
    %2950 = vmatpush1.msra.mxu0 0.0
    %2951 = vmatprep.subr.mxu0 0.0
    %2952 = vmatpush1.msra.mxu0 0.0
    %2953 = vmatprep.subr.mxu0 0.0
    %2954 = vmatpush1.msra.mxu0 0.0
    %2955 = vmatprep.subr.mxu0 0.0
    %2956 = vmatpush1.msra.mxu0 0.0
    %2957 = vmatprep.subr.mxu0 0.0
    %2958 = vmatpush1.msra.mxu0 0.0
    %2959 = vmatprep.subr.mxu0 0.0
    %2960 = vmatpush1.msra.mxu0 0.0
    %2961 = vmatprep.subr.mxu0 0.0
    %2962 = vmatpush1.msra.mxu0 0.0
    %2963 = vmatprep.subr.mxu0 0.0
    %2964 = vmatpush1.msra.mxu0 %v1848
    %2965 = vmatprep.subr.mxu0 0.0
    %2966 = vmatpush1.msra.mxu0 %v1847
    %2967 = vmatprep.subr.mxu0 0.0
    %2968 = vmatpush1.msra.mxu0 %v1846
    %2969 = vmatprep.subr.mxu0 0.0
    %2970 = vmatpush1.msra.mxu0 %v1845
    %2971 = vmatprep.subr.mxu0 0.0
    %2972 = vmatpush2.msra.mxu0 0.0
    %2973 = vmatprep.subr.mxu0 0.0
    %2974 = vmatpush2.msra.mxu0 0.0
    %2975 = vmatprep.subr.mxu0 0.0
    %2976 = vmatpush2.msra.mxu0 0.0
    %2977 = vmatprep.subr.mxu0 0.0
    %2978 = vmatpush2.msra.mxu0 0.0
    %2979 = vmatprep.subr.mxu0 0.0
    %2980 = vmatpush2.msra.mxu0 0.0
    %2981 = vmatprep.subr.mxu0 0.0
    %2982 = vmatpush2.msra.mxu0 0.0
    %2983 = vmatprep.subr.mxu0 0.0
    %2984 = vmatpush2.msra.mxu0 0.0
    %2985 = vmatprep.subr.mxu0 0.0
    %2986 = vmatpush2.msra.mxu0 0.0
    %2987 = vmatprep.subr.mxu0 0.0
    %2988 = vmatpush2.msra.mxu0 0.0
    %2989 = vmatprep.subr.mxu0 0.0
    %2990 = vmatpush2.msra.mxu0 0.0
    %2991 = vmatprep.subr.mxu0 0.0
    %2992 = vmatpush2.msra.mxu0 0.0
    %2993 = vmatprep.subr.mxu0 0.0
    %2994 = vmatpush2.msra.mxu0 0.0
    %2995 = vmatprep.subr.mxu0 0.0
    %2996 = vmatpush2.msra.mxu0 0.0
    %2997 = vmatprep.subr.mxu0 0.0
    %2998 = vmatpush2.msra.mxu0 0.0
    %2999 = vmatprep.subr.mxu0 0.0
    %3000 = vmatpush2.msra.mxu0 0.0
    %3001 = vmatprep.subr.mxu0 0.0
    %3002 = vmatpush2.msra.mxu0 0.0
    %3003 = vmatprep.mubr.f32.mxu0 0.0
    %3004 = vmatmul.mubr.f32.gmra.mxu0 %v2934
    %v3005 = vpop.f32.mrf.mxu0
    %v3006 = vadd.f32 %v2931, %v3005
    %v3007 = vpop.f32.mrf.mxu0
    %3008 = vmatprep.mubr.f32.mxu0 0.0
    %3009 = vmatmul.mubr.f32.gmra.mxu0 %v2937
    %v3010 = vpop.f32.mrf.mxu0
    %v3011 = vadd.f32 %v2931, %v3010
    %v3012 = vpop.f32.mrf.mxu0
    %3013 = vdwg.mxu0
    %v3014 = vmax.f32 %v3006, 0.0
    %v3015 = vmax.f32 %v3011, 0.0
    %v3017 = vlaneseq
    %v3018 = vshrl.u32 %v3017, 7
    %v3019 = vsub.s32 0, %v3018
    %v3020 = vrot.slane %v1858, %v3019
    %v3023 = vsel %vm1707, %v3014, 0
    %v3026 = vsel %vm1707, %v3015, 0
    %3028 = vmatprep.subr.mxu0 0.0
    %3029 = vmatpush1.msra.mxu0 0.0
    %3030 = vmatprep.subr.mxu0 0.0
    %3031 = vmatpush1.msra.mxu0 0.0
    %3032 = vmatprep.subr.mxu0 0.0
    %3033 = vmatpush1.msra.mxu0 0.0
    %3034 = vmatprep.subr.mxu0 0.0
    %3035 = vmatpush1.msra.mxu0 0.0
    %3036 = vmatprep.subr.mxu0 0.0
    %3037 = vmatpush1.msra.mxu0 0.0
    %3038 = vmatprep.subr.mxu0 0.0
    %3039 = vmatpush1.msra.mxu0 0.0
    %3040 = vmatprep.subr.mxu0 0.0
    %3041 = vmatpush1.msra.mxu0 0.0
    %3042 = vmatprep.subr.mxu0 0.0
    %3043 = vmatpush1.msra.mxu0 0.0
    %3044 = vmatprep.subr.mxu0 0.0
    %3045 = vmatpush1.msra.mxu0 %v1857
    %3046 = vmatprep.subr.mxu0 0.0
    %3047 = vmatpush1.msra.mxu0 %v1856
    %3048 = vmatprep.subr.mxu0 0.0
    %3049 = vmatpush1.msra.mxu0 %v1855
    %3050 = vmatprep.subr.mxu0 0.0
    %3051 = vmatpush1.msra.mxu0 %v1854
    %3052 = vmatprep.subr.mxu0 0.0
    %3053 = vmatpush1.msra.mxu0 %v1853
    %3054 = vmatprep.subr.mxu0 0.0
    %3055 = vmatpush1.msra.mxu0 %v1852
    %3056 = vmatprep.subr.mxu0 0.0
    %3057 = vmatpush1.msra.mxu0 %v1851
    %3058 = vmatprep.subr.mxu0 0.0
    %3059 = vmatpush1.msra.mxu0 %v1850
    %3060 = vmatprep.subr.mxu0 0.0
    %3061 = vmatpush2.msra.mxu0 0.0
    %3062 = vmatprep.subr.mxu0 0.0
    %3063 = vmatpush2.msra.mxu0 0.0
    %3064 = vmatprep.subr.mxu0 0.0
    %3065 = vmatpush2.msra.mxu0 0.0
    %3066 = vmatprep.subr.mxu0 0.0
    %3067 = vmatpush2.msra.mxu0 0.0
    %3068 = vmatprep.subr.mxu0 0.0
    %3069 = vmatpush2.msra.mxu0 0.0
    %3070 = vmatprep.subr.mxu0 0.0
    %3071 = vmatpush2.msra.mxu0 0.0
    %3072 = vmatprep.subr.mxu0 0.0
    %3073 = vmatpush2.msra.mxu0 0.0
    %3074 = vmatprep.subr.mxu0 0.0
    %3075 = vmatpush2.msra.mxu0 0.0
    %3076 = vmatprep.subr.mxu0 0.0
    %3077 = vmatpush2.msra.mxu0 0.0
    %3078 = vmatprep.subr.mxu0 0.0
    %3079 = vmatpush2.msra.mxu0 0.0
    %3080 = vmatprep.subr.mxu0 0.0
    %3081 = vmatpush2.msra.mxu0 0.0
    %3082 = vmatprep.subr.mxu0 0.0
    %3083 = vmatpush2.msra.mxu0 0.0
    %3084 = vmatprep.subr.mxu0 0.0
    %3085 = vmatpush2.msra.mxu0 0.0
    %3086 = vmatprep.subr.mxu0 0.0
    %3087 = vmatpush2.msra.mxu0 0.0
    %3088 = vmatprep.subr.mxu0 0.0
    %3089 = vmatpush2.msra.mxu0 0.0
    %3090 = vmatprep.subr.mxu0 0.0
    %3091 = vmatpush2.msra.mxu0 0.0
    %3092 = vmatprep.mubr.f32.mxu0 0.0
    %3093 = vmatmul.mubr.f32.gmra.mxu0 %v3023
    %v3094 = vpop.f32.mrf.mxu0
    %v3095 = vadd.f32 %v3020, %v3094
    %v3096 = vpop.f32.mrf.mxu0
    %3097 = vmatprep.mubr.f32.mxu0 0.0
    %3098 = vmatmul.mubr.f32.gmra.mxu0 %v3026
    %v3099 = vpop.f32.mrf.mxu0
    %v3100 = vadd.f32 %v3020, %v3099
    %v3101 = vpop.f32.mrf.mxu0
    %3102 = vdwg.mxu0
    %v3103 = vadd.f32 %v2925, %v3095
    %v3104 = vadd.f32 %v2926, %v3100
    %v3105 = vsel %vm545, %v3103, 0.0
    %3106 = vadd.xlane.f32.xlu0 %v3105
    %v3107 = vpop.xlane.xlu0 %3106
    %v3108 = vsel %vm545, %v3104, 0.0
    %3109 = vadd.xlane.f32.xlu0 %v3108
    %v3110 = vpop.xlane.xlu0 %3109
    %v3111 = vmul.f32 %v3107, %v1575
    %v3112 = vmul.f32 %v3110, %v1575
    %v3113 = vsub.f32 %v3103, %v3111
    %v3114 = vsub.f32 %v3104, %v3112
    %v3115 = vmul.f32 %v3113, %v3113
    %v3116 = vmul.f32 %v3114, %v3114
    %v3117 = vsel %vm545, %v3115, 0.0
    %3118 = vadd.xlane.f32.xlu0 %v3117
    %v3119 = vpop.xlane.xlu0 %3118
    %v3120 = vsel %vm545, %v3116, 0.0
    %3121 = vadd.xlane.f32.xlu0 %v3120
    %v3122 = vpop.xlane.xlu0 %3121
    %v3123 = vmul.f32 %v3119, %v1575
    %v3124 = vmul.f32 %v3122, %v1575
    %v3125 = vadd.f32 %v3123, 1e-05
    %v3126 = vadd.f32 %v3124, 1e-05
    %v3127 = vrsqrt.pop %v3125
    %v3128 = vrsqrt.pop %v3126
    %v3129 = vmul.f32 %v3113, %v3127
    %v3130 = vmul.f32 %v3114, %v3128
    %v3132 = vlaneseq
    %v3133 = vshrl.u32 %v3132, 7
    %v3134 = vsub.s32 0, %v3133
    %v3135 = vrot.slane %v1859, %v3134
    %v3137 = vmul.f32 %v3129, %v3135
    %v3138 = vmul.f32 %v3130, %v3135
    %v3140 = vlaneseq
    %v3141 = vshrl.u32 %v3140, 7
    %v3142 = vsub.s32 0, %v3141
    %v3143 = vrot.slane %v1860, %v3142
    %v3145 = vadd.f32 %v3137, %v3143
    %v3146 = vadd.f32 %v3138, %v3143
    %v3147 = vld [vmem:[%s3] sm:$0xff]
    %v3148 = vld [vmem:[%s15] sm:$0xff]
    %v3149 = vld [vmem:[%s17] sm:$0x1]
    %v3151 = vlaneseq
    %v3152 = vshrl.u32 %v3151, 7
    %v3153 = vsub.s32 0, %v3152
    %v3154 = vrot.slane %v3149, %v3153
    %v3157 = vsel %vm633, %v3147, 0
    %3159 = vmatprep.subr.mxu0 0.0
    %3160 = vmatpush1.msra.mxu0 0.0
    %3161 = vmatprep.subr.mxu0 0.0
    %3162 = vmatpush1.msra.mxu0 0.0
    %3163 = vmatprep.subr.mxu0 0.0
    %3164 = vmatpush1.msra.mxu0 0.0
    %3165 = vmatprep.subr.mxu0 0.0
    %3166 = vmatpush1.msra.mxu0 0.0
    %3167 = vmatprep.subr.mxu0 0.0
    %3168 = vmatpush1.msra.mxu0 0.0
    %3169 = vmatprep.subr.mxu0 0.0
    %3170 = vmatpush1.msra.mxu0 0.0
    %3171 = vmatprep.subr.mxu0 0.0
    %3172 = vmatpush1.msra.mxu0 0.0
    %3173 = vmatprep.subr.mxu0 0.0
    %3174 = vmatpush1.msra.mxu0 0.0
    %3175 = vmatprep.subr.mxu0 0.0
    %3176 = vmatpush1.msra.mxu0 0.0
    %3177 = vmatprep.subr.mxu0 0.0
    %3178 = vmatpush1.msra.mxu0 0.0
    %3179 = vmatprep.subr.mxu0 0.0
    %3180 = vmatpush1.msra.mxu0 0.0
    %3181 = vmatprep.subr.mxu0 0.0
    %3182 = vmatpush1.msra.mxu0 0.0
    %3183 = vmatprep.subr.mxu0 0.0
    %3184 = vmatpush1.msra.mxu0 0.0
    %3185 = vmatprep.subr.mxu0 0.0
    %3186 = vmatpush1.msra.mxu0 0.0
    %3187 = vmatprep.subr.mxu0 0.0
    %3188 = vmatpush1.msra.mxu0 0.0
    %3189 = vmatprep.subr.mxu0 0.0
    %3190 = vmatpush1.msra.mxu0 %v3148
    %3191 = vmatprep.subr.mxu0 0.0
    %3192 = vmatpush2.msra.mxu0 0.0
    %3193 = vmatprep.subr.mxu0 0.0
    %3194 = vmatpush2.msra.mxu0 0.0
    %3195 = vmatprep.subr.mxu0 0.0
    %3196 = vmatpush2.msra.mxu0 0.0
    %3197 = vmatprep.subr.mxu0 0.0
    %3198 = vmatpush2.msra.mxu0 0.0
    %3199 = vmatprep.subr.mxu0 0.0
    %3200 = vmatpush2.msra.mxu0 0.0
    %3201 = vmatprep.subr.mxu0 0.0
    %3202 = vmatpush2.msra.mxu0 0.0
    %3203 = vmatprep.subr.mxu0 0.0
    %3204 = vmatpush2.msra.mxu0 0.0
    %3205 = vmatprep.subr.mxu0 0.0
    %3206 = vmatpush2.msra.mxu0 0.0
    %3207 = vmatprep.subr.mxu0 0.0
    %3208 = vmatpush2.msra.mxu0 0.0
    %3209 = vmatprep.subr.mxu0 0.0
    %3210 = vmatpush2.msra.mxu0 0.0
    %3211 = vmatprep.subr.mxu0 0.0
    %3212 = vmatpush2.msra.mxu0 0.0
    %3213 = vmatprep.subr.mxu0 0.0
    %3214 = vmatpush2.msra.mxu0 0.0
    %3215 = vmatprep.subr.mxu0 0.0
    %3216 = vmatpush2.msra.mxu0 0.0
    %3217 = vmatprep.subr.mxu0 0.0
    %3218 = vmatpush2.msra.mxu0 0.0
    %3219 = vmatprep.subr.mxu0 0.0
    %3220 = vmatpush2.msra.mxu0 0.0
    %3221 = vmatprep.subr.mxu0 0.0
    %3222 = vmatpush2.msra.mxu0 0.0
    %3223 = vmatprep.mubr.f32.mxu0 0.0
    %3224 = vmatmul.mubr.f32.gmra.mxu0 %v3157
    %v3225 = vpop.f32.mrf.mxu0
    %v3226 = vadd.f32 %v3154, %v3225
    %v3227 = vpop.f32.mrf.mxu0
    %3228 = vdwg.mxu0
    %v3229 = vld [vmem:[%s9] sm:$0xff]
    %v3230 = vld [vmem:[%s67] sm:$0xff]
    %v3231 = vld [vmem:[%s67 + $0x8] sm:$0xff]
    %v3232 = vld [vmem:[%s67 + $0x10] sm:$0xff]
    %v3233 = vld [vmem:[%s67 + $0x18] sm:$0xff]
    %v3234 = vld [vmem:[%s69] sm:$0x1]
    %v3235 = vld [vmem:[%s71] sm:$0xff]
    %v3236 = vld [vmem:[%s71 + $0x8] sm:$0xff]
    %v3237 = vld [vmem:[%s71 + $0x10] sm:$0xff]
    %v3238 = vld [vmem:[%s71 + $0x18] sm:$0xff]
    %v3239 = vld [vmem:[%s73] sm:$0x1]
    %v3240 = vld [vmem:[%s75] sm:$0x1]
    %v3241 = vld [vmem:[#allocation5] sm:$0x1]
    %v3242 = vld [vmem:[%s79] sm:$0xff]
    %v3243 = vld [vmem:[%s79 + $0x8] sm:$0xff]
    %v3244 = vld [vmem:[%s79 + $0x10] sm:$0xff]
    %v3245 = vld [vmem:[%s79 + $0x18] sm:$0xff]
    %v3246 = vld [vmem:[#allocation8] sm:$0x1]
    %v3247 = vld [vmem:[%s83] sm:$0xff]
    %v3248 = vld [vmem:[%s83 + $0x8] sm:$0xff]
    %v3249 = vld [vmem:[%s83 + $0x10] sm:$0xff]
    %v3250 = vld [vmem:[%s83 + $0x18] sm:$0xff]
    %v3251 = vld [vmem:[%s83 + $0x20] sm:$0xff]
    %v3252 = vld [vmem:[%s83 + $0x28] sm:$0xff]
    %v3253 = vld [vmem:[%s83 + $0x30] sm:$0xff]
    %v3254 = vld [vmem:[%s83 + $0x38] sm:$0xff]
    %v3255 = vld [vmem:[#allocation10] sm:$0x1]
    %v3256 = vld [vmem:[#allocation11] sm:$0x1]
    %v3257 = vld [vmem:[#allocation13] sm:$0x1]
    %v3259 = vlaneseq
    %v3260 = vshrl.u32 %v3259, 7
    %v3261 = vsub.s32 0, %v3260
    %v3262 = vrot.slane %v3234, %v3261
    %v3265 = vsel %vm545, %v3226, 0
    %3267 = vmatprep.subr.mxu0 0.0
    %3268 = vmatpush1.msra.mxu0 0.0
    %3269 = vmatprep.subr.mxu0 0.0
    %3270 = vmatpush1.msra.mxu0 0.0
    %3271 = vmatprep.subr.mxu0 0.0
    %3272 = vmatpush1.msra.mxu0 0.0
    %3273 = vmatprep.subr.mxu0 0.0
    %3274 = vmatpush1.msra.mxu0 0.0
    %3275 = vmatprep.subr.mxu0 0.0
    %3276 = vmatpush1.msra.mxu0 0.0
    %3277 = vmatprep.subr.mxu0 0.0
    %3278 = vmatpush1.msra.mxu0 0.0
    %3279 = vmatprep.subr.mxu0 0.0
    %3280 = vmatpush1.msra.mxu0 0.0
    %3281 = vmatprep.subr.mxu0 0.0
    %3282 = vmatpush1.msra.mxu0 0.0
    %3283 = vmatprep.subr.mxu0 0.0
    %3284 = vmatpush1.msra.mxu0 0.0
    %3285 = vmatprep.subr.mxu0 0.0
    %3286 = vmatpush1.msra.mxu0 0.0
    %3287 = vmatprep.subr.mxu0 0.0
    %3288 = vmatpush1.msra.mxu0 0.0
    %3289 = vmatprep.subr.mxu0 0.0
    %3290 = vmatpush1.msra.mxu0 0.0
    %3291 = vmatprep.subr.mxu0 0.0
    %3292 = vmatpush1.msra.mxu0 %v3233
    %3293 = vmatprep.subr.mxu0 0.0
    %3294 = vmatpush1.msra.mxu0 %v3232
    %3295 = vmatprep.subr.mxu0 0.0
    %3296 = vmatpush1.msra.mxu0 %v3231
    %3297 = vmatprep.subr.mxu0 0.0
    %3298 = vmatpush1.msra.mxu0 %v3230
    %3299 = vmatprep.subr.mxu0 0.0
    %3300 = vmatpush2.msra.mxu0 0.0
    %3301 = vmatprep.subr.mxu0 0.0
    %3302 = vmatpush2.msra.mxu0 0.0
    %3303 = vmatprep.subr.mxu0 0.0
    %3304 = vmatpush2.msra.mxu0 0.0
    %3305 = vmatprep.subr.mxu0 0.0
    %3306 = vmatpush2.msra.mxu0 0.0
    %3307 = vmatprep.subr.mxu0 0.0
    %3308 = vmatpush2.msra.mxu0 0.0
    %3309 = vmatprep.subr.mxu0 0.0
    %3310 = vmatpush2.msra.mxu0 0.0
    %3311 = vmatprep.subr.mxu0 0.0
    %3312 = vmatpush2.msra.mxu0 0.0
    %3313 = vmatprep.subr.mxu0 0.0
    %3314 = vmatpush2.msra.mxu0 0.0
    %3315 = vmatprep.subr.mxu0 0.0
    %3316 = vmatpush2.msra.mxu0 0.0
    %3317 = vmatprep.subr.mxu0 0.0
    %3318 = vmatpush2.msra.mxu0 0.0
    %3319 = vmatprep.subr.mxu0 0.0
    %3320 = vmatpush2.msra.mxu0 0.0
    %3321 = vmatprep.subr.mxu0 0.0
    %3322 = vmatpush2.msra.mxu0 0.0
    %3323 = vmatprep.subr.mxu0 0.0
    %3324 = vmatpush2.msra.mxu0 0.0
    %3325 = vmatprep.subr.mxu0 0.0
    %3326 = vmatpush2.msra.mxu0 0.0
    %3327 = vmatprep.subr.mxu0 0.0
    %3328 = vmatpush2.msra.mxu0 0.0
    %3329 = vmatprep.subr.mxu0 0.0
    %3330 = vmatpush2.msra.mxu0 0.0
    %3331 = vmatprep.mubr.f32.mxu0 0.0
    %3332 = vmatmul.mubr.f32.gmra.mxu0 %v3265
    %v3333 = vpop.f32.mrf.mxu0
    %v3334 = vadd.f32 %v3262, %v3333
    %v3335 = vpop.f32.mrf.mxu0
    %3336 = vdwg.mxu0
    %3338 = vrot.lane.b32.xlu0 %v3334, 96
    %v3339 = vpop.permute.xlu0 %3338
    %v3340 = vsel %vm633, %v3334, 0
    %v3342 = vsel %vm633, %v3339, 0
    %3344 = vmatprep.subr.mxu0 0.0
    %3345 = vmatpush1.xpose.msra.mxu0 0.0
    %3346 = vmatprep.subr.mxu0 0.0
    %3347 = vmatpush1.xpose.msra.mxu0 0.0
    %3348 = vmatprep.subr.mxu0 0.0
    %3349 = vmatpush1.xpose.msra.mxu0 0.0
    %3350 = vmatprep.subr.mxu0 0.0
    %3351 = vmatpush1.xpose.msra.mxu0 0.0
    %3352 = vmatprep.subr.mxu0 0.0
    %3353 = vmatpush1.xpose.msra.mxu0 0.0
    %3354 = vmatprep.subr.mxu0 0.0
    %3355 = vmatpush1.xpose.msra.mxu0 0.0
    %3356 = vmatprep.subr.mxu0 0.0
    %3357 = vmatpush1.xpose.msra.mxu0 0.0
    %3358 = vmatprep.subr.mxu0 0.0
    %3359 = vmatpush1.xpose.msra.mxu0 0.0
    %3360 = vmatprep.subr.mxu0 0.0
    %3361 = vmatpush1.xpose.msra.mxu0 0.0
    %3362 = vmatprep.subr.mxu0 0.0
    %3363 = vmatpush1.xpose.msra.mxu0 0.0
    %3364 = vmatprep.subr.mxu0 0.0
    %3365 = vmatpush1.xpose.msra.mxu0 0.0
    %3366 = vmatprep.subr.mxu0 0.0
    %3367 = vmatpush1.xpose.msra.mxu0 0.0
    %3368 = vmatprep.subr.mxu0 0.0
    %3369 = vmatpush1.xpose.msra.mxu0 0.0
    %3370 = vmatprep.subr.mxu0 0.0
    %3371 = vmatpush1.xpose.msra.mxu0 0.0
    %3372 = vmatprep.subr.mxu0 0.0
    %3373 = vmatpush1.xpose.msra.mxu0 0.0
    %3374 = vmatprep.subr.mxu0 0.0
    %3375 = vmatpush1.xpose.msra.mxu0 %v3342
    %3376 = vmatprep.subr.mxu0 0.0
    %3377 = vmatpush2.xpose.msra.mxu0 0.0
    %3378 = vmatprep.subr.mxu0 0.0
    %3379 = vmatpush2.xpose.msra.mxu0 0.0
    %3380 = vmatprep.subr.mxu0 0.0
    %3381 = vmatpush2.xpose.msra.mxu0 0.0
    %3382 = vmatprep.subr.mxu0 0.0
    %3383 = vmatpush2.xpose.msra.mxu0 0.0
    %3384 = vmatprep.subr.mxu0 0.0
    %3385 = vmatpush2.xpose.msra.mxu0 0.0
    %3386 = vmatprep.subr.mxu0 0.0
    %3387 = vmatpush2.xpose.msra.mxu0 0.0
    %3388 = vmatprep.subr.mxu0 0.0
    %3389 = vmatpush2.xpose.msra.mxu0 0.0
    %3390 = vmatprep.subr.mxu0 0.0
    %3391 = vmatpush2.xpose.msra.mxu0 0.0
    %3392 = vmatprep.subr.mxu0 0.0
    %3393 = vmatpush2.xpose.msra.mxu0 0.0
    %3394 = vmatprep.subr.mxu0 0.0
    %3395 = vmatpush2.xpose.msra.mxu0 0.0
    %3396 = vmatprep.subr.mxu0 0.0
    %3397 = vmatpush2.xpose.msra.mxu0 0.0
    %3398 = vmatprep.subr.mxu0 0.0
    %3399 = vmatpush2.xpose.msra.mxu0 0.0
    %3400 = vmatprep.subr.mxu0 0.0
    %3401 = vmatpush2.xpose.msra.mxu0 0.0
    %3402 = vmatprep.subr.mxu0 0.0
    %3403 = vmatpush2.xpose.msra.mxu0 0.0
    %3404 = vmatprep.subr.mxu0 0.0
    %3405 = vmatpush2.xpose.msra.mxu0 0.0
    %3406 = vmatprep.subr.mxu0 0.0
    %3407 = vmatpush2.xpose.msra.mxu0 0.0
    %3408 = vmatprep.mubr.f32.mxu0 0.0
    %3409 = vmatmul.mubr.f32.gmra.mxu0 %v3340
    %v3410 = vpop.f32.mrf.mxu0
    %v3411 = vadd.f32 0.0, %v3410
    %v3412 = vpop.f32.mrf.mxu0
    %3413 = vdwg.mxu0
    %v3414 = vmul.f32 %v3411, 0.35355338
    %v3415 = vadd.f32 %v3414, %v3229
    %v3416 = vsel %vm633, %v3415, -inf
    %3417 = vmax.xlane.f32.xlu0 %v3416
    %v3418 = vpop.xlane.xlu0 %3417
    %v3419 = vsub.f32 %v3415, %v3418
    %v3420 = vmul.f32 %v3419, 1.442695
    %v3421 = vpow.pop %v3420
    %v3422 = vsel %vm633, %v3421, 0.0
    %3423 = vadd.xlane.f32.xlu0 %v3422
    %v3424 = vpop.xlane.xlu0 %3423
    %v3425 = vrcp.pop %v3424
    %v3426 = vmul.f32 %v3421, %v3425
    %3427 = vrot.lane.b32.xlu0 %v3334, 64
    %v3428 = vpop.permute.xlu0 %3427
    %v3431 = vsel %vm633, %v3426, 0
    %3433 = vmatprep.subr.mxu0 0.0
    %3434 = vmatpush1.msra.mxu0 0.0
    %3435 = vmatprep.subr.mxu0 0.0
    %3436 = vmatpush1.msra.mxu0 0.0
    %3437 = vmatprep.subr.mxu0 0.0
    %3438 = vmatpush1.msra.mxu0 0.0
    %3439 = vmatprep.subr.mxu0 0.0
    %3440 = vmatpush1.msra.mxu0 0.0
    %3441 = vmatprep.subr.mxu0 0.0
    %3442 = vmatpush1.msra.mxu0 0.0
    %3443 = vmatprep.subr.mxu0 0.0
    %3444 = vmatpush1.msra.mxu0 0.0
    %3445 = vmatprep.subr.mxu0 0.0
    %3446 = vmatpush1.msra.mxu0 0.0
    %3447 = vmatprep.subr.mxu0 0.0
    %3448 = vmatpush1.msra.mxu0 0.0
    %3449 = vmatprep.subr.mxu0 0.0
    %3450 = vmatpush1.msra.mxu0 0.0
    %3451 = vmatprep.subr.mxu0 0.0
    %3452 = vmatpush1.msra.mxu0 0.0
    %3453 = vmatprep.subr.mxu0 0.0
    %3454 = vmatpush1.msra.mxu0 0.0
    %3455 = vmatprep.subr.mxu0 0.0
    %3456 = vmatpush1.msra.mxu0 0.0
    %3457 = vmatprep.subr.mxu0 0.0
    %3458 = vmatpush1.msra.mxu0 0.0
    %3459 = vmatprep.subr.mxu0 0.0
    %3460 = vmatpush1.msra.mxu0 0.0
    %3461 = vmatprep.subr.mxu0 0.0
    %3462 = vmatpush1.msra.mxu0 0.0
    %3463 = vmatprep.subr.mxu0 0.0
    %3464 = vmatpush1.msra.mxu0 %v3428
    %3465 = vmatprep.subr.mxu0 0.0
    %3466 = vmatpush2.msra.mxu0 0.0
    %3467 = vmatprep.subr.mxu0 0.0
    %3468 = vmatpush2.msra.mxu0 0.0
    %3469 = vmatprep.subr.mxu0 0.0
    %3470 = vmatpush2.msra.mxu0 0.0
    %3471 = vmatprep.subr.mxu0 0.0
    %3472 = vmatpush2.msra.mxu0 0.0
    %3473 = vmatprep.subr.mxu0 0.0
    %3474 = vmatpush2.msra.mxu0 0.0
    %3475 = vmatprep.subr.mxu0 0.0
    %3476 = vmatpush2.msra.mxu0 0.0
    %3477 = vmatprep.subr.mxu0 0.0
    %3478 = vmatpush2.msra.mxu0 0.0
    %3479 = vmatprep.subr.mxu0 0.0
    %3480 = vmatpush2.msra.mxu0 0.0
    %3481 = vmatprep.subr.mxu0 0.0
    %3482 = vmatpush2.msra.mxu0 0.0
    %3483 = vmatprep.subr.mxu0 0.0
    %3484 = vmatpush2.msra.mxu0 0.0
    %3485 = vmatprep.subr.mxu0 0.0
    %3486 = vmatpush2.msra.mxu0 0.0
    %3487 = vmatprep.subr.mxu0 0.0
    %3488 = vmatpush2.msra.mxu0 0.0
    %3489 = vmatprep.subr.mxu0 0.0
    %3490 = vmatpush2.msra.mxu0 0.0
    %3491 = vmatprep.subr.mxu0 0.0
    %3492 = vmatpush2.msra.mxu0 0.0
    %3493 = vmatprep.subr.mxu0 0.0
    %3494 = vmatpush2.msra.mxu0 0.0
    %3495 = vmatprep.subr.mxu0 0.0
    %3496 = vmatpush2.msra.mxu0 0.0
    %3497 = vmatprep.mubr.f32.mxu0 0.0
    %3498 = vmatmul.mubr.f32.gmra.mxu0 %v3431
    %v3499 = vpop.f32.mrf.mxu0
    %v3500 = vadd.f32 0.0, %v3499
    %v3501 = vpop.f32.mrf.mxu0
    %3502 = vdwg.mxu0
    %3503 = vst.msk [vmem:[#allocation2] sm:$0xff] %vm633, %v3500
    %3504 = vrot.lane.b32.xlu0 %v3334, 120
    %v3505 = vpop.permute.xlu0 %3504
    %3506 = vrot.lane.b32.xlu0 %v3334, 88
    %v3507 = vpop.permute.xlu0 %3506
    %v3508 = vsel %vm633, %v3505, 0
    %v3510 = vsel %vm633, %v3507, 0
    %3512 = vmatprep.subr.mxu0 0.0
    %3513 = vmatpush1.xpose.msra.mxu0 0.0
    %3514 = vmatprep.subr.mxu0 0.0
    %3515 = vmatpush1.xpose.msra.mxu0 0.0
    %3516 = vmatprep.subr.mxu0 0.0
    %3517 = vmatpush1.xpose.msra.mxu0 0.0
    %3518 = vmatprep.subr.mxu0 0.0
    %3519 = vmatpush1.xpose.msra.mxu0 0.0
    %3520 = vmatprep.subr.mxu0 0.0
    %3521 = vmatpush1.xpose.msra.mxu0 0.0
    %3522 = vmatprep.subr.mxu0 0.0
    %3523 = vmatpush1.xpose.msra.mxu0 0.0
    %3524 = vmatprep.subr.mxu0 0.0
    %3525 = vmatpush1.xpose.msra.mxu0 0.0
    %3526 = vmatprep.subr.mxu0 0.0
    %3527 = vmatpush1.xpose.msra.mxu0 0.0
    %3528 = vmatprep.subr.mxu0 0.0
    %3529 = vmatpush1.xpose.msra.mxu0 0.0
    %3530 = vmatprep.subr.mxu0 0.0
    %3531 = vmatpush1.xpose.msra.mxu0 0.0
    %3532 = vmatprep.subr.mxu0 0.0
    %3533 = vmatpush1.xpose.msra.mxu0 0.0
    %3534 = vmatprep.subr.mxu0 0.0
    %3535 = vmatpush1.xpose.msra.mxu0 0.0
    %3536 = vmatprep.subr.mxu0 0.0
    %3537 = vmatpush1.xpose.msra.mxu0 0.0
    %3538 = vmatprep.subr.mxu0 0.0
    %3539 = vmatpush1.xpose.msra.mxu0 0.0
    %3540 = vmatprep.subr.mxu0 0.0
    %3541 = vmatpush1.xpose.msra.mxu0 0.0
    %3542 = vmatprep.subr.mxu0 0.0
    %3543 = vmatpush1.xpose.msra.mxu0 %v3510
    %3544 = vmatprep.subr.mxu0 0.0
    %3545 = vmatpush2.xpose.msra.mxu0 0.0
    %3546 = vmatprep.subr.mxu0 0.0
    %3547 = vmatpush2.xpose.msra.mxu0 0.0
    %3548 = vmatprep.subr.mxu0 0.0
    %3549 = vmatpush2.xpose.msra.mxu0 0.0
    %3550 = vmatprep.subr.mxu0 0.0
    %3551 = vmatpush2.xpose.msra.mxu0 0.0
    %3552 = vmatprep.subr.mxu0 0.0
    %3553 = vmatpush2.xpose.msra.mxu0 0.0
    %3554 = vmatprep.subr.mxu0 0.0
    %3555 = vmatpush2.xpose.msra.mxu0 0.0
    %3556 = vmatprep.subr.mxu0 0.0
    %3557 = vmatpush2.xpose.msra.mxu0 0.0
    %3558 = vmatprep.subr.mxu0 0.0
    %3559 = vmatpush2.xpose.msra.mxu0 0.0
    %3560 = vmatprep.subr.mxu0 0.0
    %3561 = vmatpush2.xpose.msra.mxu0 0.0
    %3562 = vmatprep.subr.mxu0 0.0
    %3563 = vmatpush2.xpose.msra.mxu0 0.0
    %3564 = vmatprep.subr.mxu0 0.0
    %3565 = vmatpush2.xpose.msra.mxu0 0.0
    %3566 = vmatprep.subr.mxu0 0.0
    %3567 = vmatpush2.xpose.msra.mxu0 0.0
    %3568 = vmatprep.subr.mxu0 0.0
    %3569 = vmatpush2.xpose.msra.mxu0 0.0
    %3570 = vmatprep.subr.mxu0 0.0
    %3571 = vmatpush2.xpose.msra.mxu0 0.0
    %3572 = vmatprep.subr.mxu0 0.0
    %3573 = vmatpush2.xpose.msra.mxu0 0.0
    %3574 = vmatprep.subr.mxu0 0.0
    %3575 = vmatpush2.xpose.msra.mxu0 0.0
    %3576 = vmatprep.mubr.f32.mxu0 0.0
    %3577 = vmatmul.mubr.f32.gmra.mxu0 %v3508
    %v3578 = vpop.f32.mrf.mxu0
    %v3579 = vadd.f32 0.0, %v3578
    %v3580 = vpop.f32.mrf.mxu0
    %3581 = vdwg.mxu0
    %v3582 = vmul.f32 %v3579, 0.35355338
    %v3583 = vadd.f32 %v3582, %v3229
    %v3584 = vsel %vm633, %v3583, -inf
    %3585 = vmax.xlane.f32.xlu0 %v3584
    %v3586 = vpop.xlane.xlu0 %3585
    %v3587 = vsub.f32 %v3583, %v3586
    %v3588 = vmul.f32 %v3587, 1.442695
    %v3589 = vpow.pop %v3588
    %v3590 = vsel %vm633, %v3589, 0.0
    %3591 = vadd.xlane.f32.xlu0 %v3590
    %v3592 = vpop.xlane.xlu0 %3591
    %v3593 = vrcp.pop %v3592
    %v3594 = vmul.f32 %v3589, %v3593
    %3595 = vrot.lane.b32.xlu0 %v3334, 56
    %v3596 = vpop.permute.xlu0 %3595
    %v3599 = vsel %vm633, %v3594, 0
    %3601 = vmatprep.subr.mxu0 0.0
    %3602 = vmatpush1.msra.mxu0 0.0
    %3603 = vmatprep.subr.mxu0 0.0
    %3604 = vmatpush1.msra.mxu0 0.0
    %3605 = vmatprep.subr.mxu0 0.0
    %3606 = vmatpush1.msra.mxu0 0.0
    %3607 = vmatprep.subr.mxu0 0.0
    %3608 = vmatpush1.msra.mxu0 0.0
    %3609 = vmatprep.subr.mxu0 0.0
    %3610 = vmatpush1.msra.mxu0 0.0
    %3611 = vmatprep.subr.mxu0 0.0
    %3612 = vmatpush1.msra.mxu0 0.0
    %3613 = vmatprep.subr.mxu0 0.0
    %3614 = vmatpush1.msra.mxu0 0.0
    %3615 = vmatprep.subr.mxu0 0.0
    %3616 = vmatpush1.msra.mxu0 0.0
    %3617 = vmatprep.subr.mxu0 0.0
    %3618 = vmatpush1.msra.mxu0 0.0
    %3619 = vmatprep.subr.mxu0 0.0
    %3620 = vmatpush1.msra.mxu0 0.0
    %3621 = vmatprep.subr.mxu0 0.0
    %3622 = vmatpush1.msra.mxu0 0.0
    %3623 = vmatprep.subr.mxu0 0.0
    %3624 = vmatpush1.msra.mxu0 0.0
    %3625 = vmatprep.subr.mxu0 0.0
    %3626 = vmatpush1.msra.mxu0 0.0
    %3627 = vmatprep.subr.mxu0 0.0
    %3628 = vmatpush1.msra.mxu0 0.0
    %3629 = vmatprep.subr.mxu0 0.0
    %3630 = vmatpush1.msra.mxu0 0.0
    %3631 = vmatprep.subr.mxu0 0.0
    %3632 = vmatpush1.msra.mxu0 %v3596
    %3633 = vmatprep.subr.mxu0 0.0
    %3634 = vmatpush2.msra.mxu0 0.0
    %3635 = vmatprep.subr.mxu0 0.0
    %3636 = vmatpush2.msra.mxu0 0.0
    %3637 = vmatprep.subr.mxu0 0.0
    %3638 = vmatpush2.msra.mxu0 0.0
    %3639 = vmatprep.subr.mxu0 0.0
    %3640 = vmatpush2.msra.mxu0 0.0
    %3641 = vmatprep.subr.mxu0 0.0
    %3642 = vmatpush2.msra.mxu0 0.0
    %3643 = vmatprep.subr.mxu0 0.0
    %3644 = vmatpush2.msra.mxu0 0.0
    %3645 = vmatprep.subr.mxu0 0.0
    %3646 = vmatpush2.msra.mxu0 0.0
    %3647 = vmatprep.subr.mxu0 0.0
    %3648 = vmatpush2.msra.mxu0 0.0
    %3649 = vmatprep.subr.mxu0 0.0
    %3650 = vmatpush2.msra.mxu0 0.0
    %3651 = vmatprep.subr.mxu0 0.0
    %3652 = vmatpush2.msra.mxu0 0.0
    %3653 = vmatprep.subr.mxu0 0.0
    %3654 = vmatpush2.msra.mxu0 0.0
    %3655 = vmatprep.subr.mxu0 0.0
    %3656 = vmatpush2.msra.mxu0 0.0
    %3657 = vmatprep.subr.mxu0 0.0
    %3658 = vmatpush2.msra.mxu0 0.0
    %3659 = vmatprep.subr.mxu0 0.0
    %3660 = vmatpush2.msra.mxu0 0.0
    %3661 = vmatprep.subr.mxu0 0.0
    %3662 = vmatpush2.msra.mxu0 0.0
    %3663 = vmatprep.subr.mxu0 0.0
    %3664 = vmatpush2.msra.mxu0 0.0
    %3665 = vmatprep.mubr.f32.mxu0 0.0
    %3666 = vmatmul.mubr.f32.gmra.mxu0 %v3599
    %v3667 = vpop.f32.mrf.mxu0
    %v3668 = vadd.f32 0.0, %v3667
    %v3669 = vpop.f32.mrf.mxu0
    %3670 = vdwg.mxu0
    %3672 = vrot.lane.b32.xlu0 %v3668, 8
    %v3673 = vpop.permute.xlu0 %3672
    %3675 = vst.msk [vmem:[#allocation2] sm:$0xff] %vm1045, %v3673
    %3676 = vrot.lane.b32.xlu0 %v3334, 112
    %v3677 = vpop.permute.xlu0 %3676
    %3678 = vrot.lane.b32.xlu0 %v3334, 80
    %v3679 = vpop.permute.xlu0 %3678
    %v3680 = vsel %vm633, %v3677, 0
    %v3682 = vsel %vm633, %v3679, 0
    %3684 = vmatprep.subr.mxu0 0.0
    %3685 = vmatpush1.xpose.msra.mxu0 0.0
    %3686 = vmatprep.subr.mxu0 0.0
    %3687 = vmatpush1.xpose.msra.mxu0 0.0
    %3688 = vmatprep.subr.mxu0 0.0
    %3689 = vmatpush1.xpose.msra.mxu0 0.0
    %3690 = vmatprep.subr.mxu0 0.0
    %3691 = vmatpush1.xpose.msra.mxu0 0.0
    %3692 = vmatprep.subr.mxu0 0.0
    %3693 = vmatpush1.xpose.msra.mxu0 0.0
    %3694 = vmatprep.subr.mxu0 0.0
    %3695 = vmatpush1.xpose.msra.mxu0 0.0
    %3696 = vmatprep.subr.mxu0 0.0
    %3697 = vmatpush1.xpose.msra.mxu0 0.0
    %3698 = vmatprep.subr.mxu0 0.0
    %3699 = vmatpush1.xpose.msra.mxu0 0.0
    %3700 = vmatprep.subr.mxu0 0.0
    %3701 = vmatpush1.xpose.msra.mxu0 0.0
    %3702 = vmatprep.subr.mxu0 0.0
    %3703 = vmatpush1.xpose.msra.mxu0 0.0
    %3704 = vmatprep.subr.mxu0 0.0
    %3705 = vmatpush1.xpose.msra.mxu0 0.0
    %3706 = vmatprep.subr.mxu0 0.0
    %3707 = vmatpush1.xpose.msra.mxu0 0.0
    %3708 = vmatprep.subr.mxu0 0.0
    %3709 = vmatpush1.xpose.msra.mxu0 0.0
    %3710 = vmatprep.subr.mxu0 0.0
    %3711 = vmatpush1.xpose.msra.mxu0 0.0
    %3712 = vmatprep.subr.mxu0 0.0
    %3713 = vmatpush1.xpose.msra.mxu0 0.0
    %3714 = vmatprep.subr.mxu0 0.0
    %3715 = vmatpush1.xpose.msra.mxu0 %v3682
    %3716 = vmatprep.subr.mxu0 0.0
    %3717 = vmatpush2.xpose.msra.mxu0 0.0
    %3718 = vmatprep.subr.mxu0 0.0
    %3719 = vmatpush2.xpose.msra.mxu0 0.0
    %3720 = vmatprep.subr.mxu0 0.0
    %3721 = vmatpush2.xpose.msra.mxu0 0.0
    %3722 = vmatprep.subr.mxu0 0.0
    %3723 = vmatpush2.xpose.msra.mxu0 0.0
    %3724 = vmatprep.subr.mxu0 0.0
    %3725 = vmatpush2.xpose.msra.mxu0 0.0
    %3726 = vmatprep.subr.mxu0 0.0
    %3727 = vmatpush2.xpose.msra.mxu0 0.0
    %3728 = vmatprep.subr.mxu0 0.0
    %3729 = vmatpush2.xpose.msra.mxu0 0.0
    %3730 = vmatprep.subr.mxu0 0.0
    %3731 = vmatpush2.xpose.msra.mxu0 0.0
    %3732 = vmatprep.subr.mxu0 0.0
    %3733 = vmatpush2.xpose.msra.mxu0 0.0
    %3734 = vmatprep.subr.mxu0 0.0
    %3735 = vmatpush2.xpose.msra.mxu0 0.0
    %3736 = vmatprep.subr.mxu0 0.0
    %3737 = vmatpush2.xpose.msra.mxu0 0.0
    %3738 = vmatprep.subr.mxu0 0.0
    %3739 = vmatpush2.xpose.msra.mxu0 0.0
    %3740 = vmatprep.subr.mxu0 0.0
    %3741 = vmatpush2.xpose.msra.mxu0 0.0
    %3742 = vmatprep.subr.mxu0 0.0
    %3743 = vmatpush2.xpose.msra.mxu0 0.0
    %3744 = vmatprep.subr.mxu0 0.0
    %3745 = vmatpush2.xpose.msra.mxu0 0.0
    %3746 = vmatprep.subr.mxu0 0.0
    %3747 = vmatpush2.xpose.msra.mxu0 0.0
    %3748 = vmatprep.mubr.f32.mxu0 0.0
    %3749 = vmatmul.mubr.f32.gmra.mxu0 %v3680
    %v3750 = vpop.f32.mrf.mxu0
    %v3751 = vadd.f32 0.0, %v3750
    %v3752 = vpop.f32.mrf.mxu0
    %3753 = vdwg.mxu0
    %v3754 = vmul.f32 %v3751, 0.35355338
    %v3755 = vadd.f32 %v3754, %v3229
    %v3756 = vsel %vm633, %v3755, -inf
    %3757 = vmax.xlane.f32.xlu0 %v3756
    %v3758 = vpop.xlane.xlu0 %3757
    %v3759 = vsub.f32 %v3755, %v3758
    %v3760 = vmul.f32 %v3759, 1.442695
    %v3761 = vpow.pop %v3760
    %v3762 = vsel %vm633, %v3761, 0.0
    %3763 = vadd.xlane.f32.xlu0 %v3762
    %v3764 = vpop.xlane.xlu0 %3763
    %v3765 = vrcp.pop %v3764
    %v3766 = vmul.f32 %v3761, %v3765
    %3767 = vrot.lane.b32.xlu0 %v3334, 48
    %v3768 = vpop.permute.xlu0 %3767
    %v3771 = vsel %vm633, %v3766, 0
    %3773 = vmatprep.subr.mxu0 0.0
    %3774 = vmatpush1.msra.mxu0 0.0
    %3775 = vmatprep.subr.mxu0 0.0
    %3776 = vmatpush1.msra.mxu0 0.0
    %3777 = vmatprep.subr.mxu0 0.0
    %3778 = vmatpush1.msra.mxu0 0.0
    %3779 = vmatprep.subr.mxu0 0.0
    %3780 = vmatpush1.msra.mxu0 0.0
    %3781 = vmatprep.subr.mxu0 0.0
    %3782 = vmatpush1.msra.mxu0 0.0
    %3783 = vmatprep.subr.mxu0 0.0
    %3784 = vmatpush1.msra.mxu0 0.0
    %3785 = vmatprep.subr.mxu0 0.0
    %3786 = vmatpush1.msra.mxu0 0.0
    %3787 = vmatprep.subr.mxu0 0.0
    %3788 = vmatpush1.msra.mxu0 0.0
    %3789 = vmatprep.subr.mxu0 0.0
    %3790 = vmatpush1.msra.mxu0 0.0
    %3791 = vmatprep.subr.mxu0 0.0
    %3792 = vmatpush1.msra.mxu0 0.0
    %3793 = vmatprep.subr.mxu0 0.0
    %3794 = vmatpush1.msra.mxu0 0.0
    %3795 = vmatprep.subr.mxu0 0.0
    %3796 = vmatpush1.msra.mxu0 0.0
    %3797 = vmatprep.subr.mxu0 0.0
    %3798 = vmatpush1.msra.mxu0 0.0
    %3799 = vmatprep.subr.mxu0 0.0
    %3800 = vmatpush1.msra.mxu0 0.0
    %3801 = vmatprep.subr.mxu0 0.0
    %3802 = vmatpush1.msra.mxu0 0.0
    %3803 = vmatprep.subr.mxu0 0.0
    %3804 = vmatpush1.msra.mxu0 %v3768
    %3805 = vmatprep.subr.mxu0 0.0
    %3806 = vmatpush2.msra.mxu0 0.0
    %3807 = vmatprep.subr.mxu0 0.0
    %3808 = vmatpush2.msra.mxu0 0.0
    %3809 = vmatprep.subr.mxu0 0.0
    %3810 = vmatpush2.msra.mxu0 0.0
    %3811 = vmatprep.subr.mxu0 0.0
    %3812 = vmatpush2.msra.mxu0 0.0
    %3813 = vmatprep.subr.mxu0 0.0
    %3814 = vmatpush2.msra.mxu0 0.0
    %3815 = vmatprep.subr.mxu0 0.0
    %3816 = vmatpush2.msra.mxu0 0.0
    %3817 = vmatprep.subr.mxu0 0.0
    %3818 = vmatpush2.msra.mxu0 0.0
    %3819 = vmatprep.subr.mxu0 0.0
    %3820 = vmatpush2.msra.mxu0 0.0
    %3821 = vmatprep.subr.mxu0 0.0
    %3822 = vmatpush2.msra.mxu0 0.0
    %3823 = vmatprep.subr.mxu0 0.0
    %3824 = vmatpush2.msra.mxu0 0.0
    %3825 = vmatprep.subr.mxu0 0.0
    %3826 = vmatpush2.msra.mxu0 0.0
    %3827 = vmatprep.subr.mxu0 0.0
    %3828 = vmatpush2.msra.mxu0 0.0
    %3829 = vmatprep.subr.mxu0 0.0
    %3830 = vmatpush2.msra.mxu0 0.0
    %3831 = vmatprep.subr.mxu0 0.0
    %3832 = vmatpush2.msra.mxu0 0.0
    %3833 = vmatprep.subr.mxu0 0.0
    %3834 = vmatpush2.msra.mxu0 0.0
    %3835 = vmatprep.subr.mxu0 0.0
    %3836 = vmatpush2.msra.mxu0 0.0
    %3837 = vmatprep.mubr.f32.mxu0 0.0
    %3838 = vmatmul.mubr.f32.gmra.mxu0 %v3771
    %v3839 = vpop.f32.mrf.mxu0
    %v3840 = vadd.f32 0.0, %v3839
    %v3841 = vpop.f32.mrf.mxu0
    %3842 = vdwg.mxu0
    %3844 = vrot.lane.b32.xlu0 %v3840, 16
    %v3845 = vpop.permute.xlu0 %3844
    %3847 = vst.msk [vmem:[#allocation2] sm:$0xff] %vm1260, %v3845
    %3848 = vrot.lane.b32.xlu0 %v3334, 104
    %v3849 = vpop.permute.xlu0 %3848
    %3850 = vrot.lane.b32.xlu0 %v3334, 72
    %v3851 = vpop.permute.xlu0 %3850
    %v3852 = vsel %vm633, %v3849, 0
    %v3854 = vsel %vm633, %v3851, 0
    %3856 = vmatprep.subr.mxu0 0.0
    %3857 = vmatpush1.xpose.msra.mxu0 0.0
    %3858 = vmatprep.subr.mxu0 0.0
    %3859 = vmatpush1.xpose.msra.mxu0 0.0
    %3860 = vmatprep.subr.mxu0 0.0
    %3861 = vmatpush1.xpose.msra.mxu0 0.0
    %3862 = vmatprep.subr.mxu0 0.0
    %3863 = vmatpush1.xpose.msra.mxu0 0.0
    %3864 = vmatprep.subr.mxu0 0.0
    %3865 = vmatpush1.xpose.msra.mxu0 0.0
    %3866 = vmatprep.subr.mxu0 0.0
    %3867 = vmatpush1.xpose.msra.mxu0 0.0
    %3868 = vmatprep.subr.mxu0 0.0
    %3869 = vmatpush1.xpose.msra.mxu0 0.0
    %3870 = vmatprep.subr.mxu0 0.0
    %3871 = vmatpush1.xpose.msra.mxu0 0.0
    %3872 = vmatprep.subr.mxu0 0.0
    %3873 = vmatpush1.xpose.msra.mxu0 0.0
    %3874 = vmatprep.subr.mxu0 0.0
    %3875 = vmatpush1.xpose.msra.mxu0 0.0
    %3876 = vmatprep.subr.mxu0 0.0
    %3877 = vmatpush1.xpose.msra.mxu0 0.0
    %3878 = vmatprep.subr.mxu0 0.0
    %3879 = vmatpush1.xpose.msra.mxu0 0.0
    %3880 = vmatprep.subr.mxu0 0.0
    %3881 = vmatpush1.xpose.msra.mxu0 0.0
    %3882 = vmatprep.subr.mxu0 0.0
    %3883 = vmatpush1.xpose.msra.mxu0 0.0
    %3884 = vmatprep.subr.mxu0 0.0
    %3885 = vmatpush1.xpose.msra.mxu0 0.0
    %3886 = vmatprep.subr.mxu0 0.0
    %3887 = vmatpush1.xpose.msra.mxu0 %v3854
    %3888 = vmatprep.subr.mxu0 0.0
    %3889 = vmatpush2.xpose.msra.mxu0 0.0
    %3890 = vmatprep.subr.mxu0 0.0
    %3891 = vmatpush2.xpose.msra.mxu0 0.0
    %3892 = vmatprep.subr.mxu0 0.0
    %3893 = vmatpush2.xpose.msra.mxu0 0.0
    %3894 = vmatprep.subr.mxu0 0.0
    %3895 = vmatpush2.xpose.msra.mxu0 0.0
    %3896 = vmatprep.subr.mxu0 0.0
    %3897 = vmatpush2.xpose.msra.mxu0 0.0
    %3898 = vmatprep.subr.mxu0 0.0
    %3899 = vmatpush2.xpose.msra.mxu0 0.0
    %3900 = vmatprep.subr.mxu0 0.0
    %3901 = vmatpush2.xpose.msra.mxu0 0.0
    %3902 = vmatprep.subr.mxu0 0.0
    %3903 = vmatpush2.xpose.msra.mxu0 0.0
    %3904 = vmatprep.subr.mxu0 0.0
    %3905 = vmatpush2.xpose.msra.mxu0 0.0
    %3906 = vmatprep.subr.mxu0 0.0
    %3907 = vmatpush2.xpose.msra.mxu0 0.0
    %3908 = vmatprep.subr.mxu0 0.0
    %3909 = vmatpush2.xpose.msra.mxu0 0.0
    %3910 = vmatprep.subr.mxu0 0.0
    %3911 = vmatpush2.xpose.msra.mxu0 0.0
    %3912 = vmatprep.subr.mxu0 0.0
    %3913 = vmatpush2.xpose.msra.mxu0 0.0
    %3914 = vmatprep.subr.mxu0 0.0
    %3915 = vmatpush2.xpose.msra.mxu0 0.0
    %3916 = vmatprep.subr.mxu0 0.0
    %3917 = vmatpush2.xpose.msra.mxu0 0.0
    %3918 = vmatprep.subr.mxu0 0.0
    %3919 = vmatpush2.xpose.msra.mxu0 0.0
    %3920 = vmatprep.mubr.f32.mxu0 0.0
    %3921 = vmatmul.mubr.f32.gmra.mxu0 %v3852
    %v3922 = vpop.f32.mrf.mxu0
    %v3923 = vadd.f32 0.0, %v3922
    %v3924 = vpop.f32.mrf.mxu0
    %3925 = vdwg.mxu0
    %v3926 = vmul.f32 %v3923, 0.35355338
    %v3927 = vadd.f32 %v3926, %v3229
    %v3928 = vsel %vm633, %v3927, -inf
    %3929 = vmax.xlane.f32.xlu0 %v3928
    %v3930 = vpop.xlane.xlu0 %3929
    %v3931 = vsub.f32 %v3927, %v3930
    %v3932 = vmul.f32 %v3931, 1.442695
    %v3933 = vpow.pop %v3932
    %v3934 = vsel %vm633, %v3933, 0.0
    %3935 = vadd.xlane.f32.xlu0 %v3934
    %v3936 = vpop.xlane.xlu0 %3935
    %v3937 = vrcp.pop %v3936
    %v3938 = vmul.f32 %v3933, %v3937
    %3939 = vrot.lane.b32.xlu0 %v3334, 40
    %v3940 = vpop.permute.xlu0 %3939
    %v3943 = vsel %vm633, %v3938, 0
    %3945 = vmatprep.subr.mxu0 0.0
    %3946 = vmatpush1.msra.mxu0 0.0
    %3947 = vmatprep.subr.mxu0 0.0
    %3948 = vmatpush1.msra.mxu0 0.0
    %3949 = vmatprep.subr.mxu0 0.0
    %3950 = vmatpush1.msra.mxu0 0.0
    %3951 = vmatprep.subr.mxu0 0.0
    %3952 = vmatpush1.msra.mxu0 0.0
    %3953 = vmatprep.subr.mxu0 0.0
    %3954 = vmatpush1.msra.mxu0 0.0
    %3955 = vmatprep.subr.mxu0 0.0
    %3956 = vmatpush1.msra.mxu0 0.0
    %3957 = vmatprep.subr.mxu0 0.0
    %3958 = vmatpush1.msra.mxu0 0.0
    %3959 = vmatprep.subr.mxu0 0.0
    %3960 = vmatpush1.msra.mxu0 0.0
    %3961 = vmatprep.subr.mxu0 0.0
    %3962 = vmatpush1.msra.mxu0 0.0
    %3963 = vmatprep.subr.mxu0 0.0
    %3964 = vmatpush1.msra.mxu0 0.0
    %3965 = vmatprep.subr.mxu0 0.0
    %3966 = vmatpush1.msra.mxu0 0.0
    %3967 = vmatprep.subr.mxu0 0.0
    %3968 = vmatpush1.msra.mxu0 0.0
    %3969 = vmatprep.subr.mxu0 0.0
    %3970 = vmatpush1.msra.mxu0 0.0
    %3971 = vmatprep.subr.mxu0 0.0
    %3972 = vmatpush1.msra.mxu0 0.0
    %3973 = vmatprep.subr.mxu0 0.0
    %3974 = vmatpush1.msra.mxu0 0.0
    %3975 = vmatprep.subr.mxu0 0.0
    %3976 = vmatpush1.msra.mxu0 %v3940
    %3977 = vmatprep.subr.mxu0 0.0
    %3978 = vmatpush2.msra.mxu0 0.0
    %3979 = vmatprep.subr.mxu0 0.0
    %3980 = vmatpush2.msra.mxu0 0.0
    %3981 = vmatprep.subr.mxu0 0.0
    %3982 = vmatpush2.msra.mxu0 0.0
    %3983 = vmatprep.subr.mxu0 0.0
    %3984 = vmatpush2.msra.mxu0 0.0
    %3985 = vmatprep.subr.mxu0 0.0
    %3986 = vmatpush2.msra.mxu0 0.0
    %3987 = vmatprep.subr.mxu0 0.0
    %3988 = vmatpush2.msra.mxu0 0.0
    %3989 = vmatprep.subr.mxu0 0.0
    %3990 = vmatpush2.msra.mxu0 0.0
    %3991 = vmatprep.subr.mxu0 0.0
    %3992 = vmatpush2.msra.mxu0 0.0
    %3993 = vmatprep.subr.mxu0 0.0
    %3994 = vmatpush2.msra.mxu0 0.0
    %3995 = vmatprep.subr.mxu0 0.0
    %3996 = vmatpush2.msra.mxu0 0.0
    %3997 = vmatprep.subr.mxu0 0.0
    %3998 = vmatpush2.msra.mxu0 0.0
    %3999 = vmatprep.subr.mxu0 0.0
    %4000 = vmatpush2.msra.mxu0 0.0
    %4001 = vmatprep.subr.mxu0 0.0
    %4002 = vmatpush2.msra.mxu0 0.0
    %4003 = vmatprep.subr.mxu0 0.0
    %4004 = vmatpush2.msra.mxu0 0.0
    %4005 = vmatprep.subr.mxu0 0.0
    %4006 = vmatpush2.msra.mxu0 0.0
    %4007 = vmatprep.subr.mxu0 0.0
    %4008 = vmatpush2.msra.mxu0 0.0
    %4009 = vmatprep.mubr.f32.mxu0 0.0
    %4010 = vmatmul.mubr.f32.gmra.mxu0 %v3943
    %v4011 = vpop.f32.mrf.mxu0
    %v4012 = vadd.f32 0.0, %v4011
    %v4013 = vpop.f32.mrf.mxu0
    %4014 = vdwg.mxu0
    %4016 = vrot.lane.b32.xlu0 %v4012, 24
    %v4017 = vpop.permute.xlu0 %4016
    %4019 = vst.msk [vmem:[#allocation2] sm:$0xff] %vm1475, %v4017
    %v4020 = vld [vmem:[#allocation2] sm:$0xff]
    %v4022 = vlaneseq
    %v4023 = vshrl.u32 %v4022, 7
    %v4024 = vsub.s32 0, %v4023
    %v4025 = vrot.slane %v3239, %v4024
    %v4028 = vsel %vm545, %v4020, 0
    %4030 = vmatprep.subr.mxu0 0.0
    %4031 = vmatpush1.msra.mxu0 0.0
    %4032 = vmatprep.subr.mxu0 0.0
    %4033 = vmatpush1.msra.mxu0 0.0
    %4034 = vmatprep.subr.mxu0 0.0
    %4035 = vmatpush1.msra.mxu0 0.0
    %4036 = vmatprep.subr.mxu0 0.0
    %4037 = vmatpush1.msra.mxu0 0.0
    %4038 = vmatprep.subr.mxu0 0.0
    %4039 = vmatpush1.msra.mxu0 0.0
    %4040 = vmatprep.subr.mxu0 0.0
    %4041 = vmatpush1.msra.mxu0 0.0
    %4042 = vmatprep.subr.mxu0 0.0
    %4043 = vmatpush1.msra.mxu0 0.0
    %4044 = vmatprep.subr.mxu0 0.0
    %4045 = vmatpush1.msra.mxu0 0.0
    %4046 = vmatprep.subr.mxu0 0.0
    %4047 = vmatpush1.msra.mxu0 0.0
    %4048 = vmatprep.subr.mxu0 0.0
    %4049 = vmatpush1.msra.mxu0 0.0
    %4050 = vmatprep.subr.mxu0 0.0
    %4051 = vmatpush1.msra.mxu0 0.0
    %4052 = vmatprep.subr.mxu0 0.0
    %4053 = vmatpush1.msra.mxu0 0.0
    %4054 = vmatprep.subr.mxu0 0.0
    %4055 = vmatpush1.msra.mxu0 %v3238
    %4056 = vmatprep.subr.mxu0 0.0
    %4057 = vmatpush1.msra.mxu0 %v3237
    %4058 = vmatprep.subr.mxu0 0.0
    %4059 = vmatpush1.msra.mxu0 %v3236
    %4060 = vmatprep.subr.mxu0 0.0
    %4061 = vmatpush1.msra.mxu0 %v3235
    %4062 = vmatprep.subr.mxu0 0.0
    %4063 = vmatpush2.msra.mxu0 0.0
    %4064 = vmatprep.subr.mxu0 0.0
    %4065 = vmatpush2.msra.mxu0 0.0
    %4066 = vmatprep.subr.mxu0 0.0
    %4067 = vmatpush2.msra.mxu0 0.0
    %4068 = vmatprep.subr.mxu0 0.0
    %4069 = vmatpush2.msra.mxu0 0.0
    %4070 = vmatprep.subr.mxu0 0.0
    %4071 = vmatpush2.msra.mxu0 0.0
    %4072 = vmatprep.subr.mxu0 0.0
    %4073 = vmatpush2.msra.mxu0 0.0
    %4074 = vmatprep.subr.mxu0 0.0
    %4075 = vmatpush2.msra.mxu0 0.0
    %4076 = vmatprep.subr.mxu0 0.0
    %4077 = vmatpush2.msra.mxu0 0.0
    %4078 = vmatprep.subr.mxu0 0.0
    %4079 = vmatpush2.msra.mxu0 0.0
    %4080 = vmatprep.subr.mxu0 0.0
    %4081 = vmatpush2.msra.mxu0 0.0
    %4082 = vmatprep.subr.mxu0 0.0
    %4083 = vmatpush2.msra.mxu0 0.0
    %4084 = vmatprep.subr.mxu0 0.0
    %4085 = vmatpush2.msra.mxu0 0.0
    %4086 = vmatprep.subr.mxu0 0.0
    %4087 = vmatpush2.msra.mxu0 0.0
    %4088 = vmatprep.subr.mxu0 0.0
    %4089 = vmatpush2.msra.mxu0 0.0
    %4090 = vmatprep.subr.mxu0 0.0
    %4091 = vmatpush2.msra.mxu0 0.0
    %4092 = vmatprep.subr.mxu0 0.0
    %4093 = vmatpush2.msra.mxu0 0.0
    %4094 = vmatprep.mubr.f32.mxu0 0.0
    %4095 = vmatmul.mubr.f32.gmra.mxu0 %v4028
    %v4096 = vpop.f32.mrf.mxu0
    %v4097 = vadd.f32 %v4025, %v4096
    %v4098 = vpop.f32.mrf.mxu0
    %4099 = vdwg.mxu0
    %v4100 = vadd.f32 %v3226, %v4097
    %v4101 = vsel %vm545, %v4100, 0.0
    %4102 = vadd.xlane.f32.xlu0 %v4101
    %v4103 = vpop.xlane.xlu0 %4102
    %v4104 = vmul.f32 %v4103, %v1575
    %v4105 = vsub.f32 %v4100, %v4104
    %v4106 = vmul.f32 %v4105, %v4105
    %v4107 = vsel %vm545, %v4106, 0.0
    %4108 = vadd.xlane.f32.xlu0 %v4107
    %v4109 = vpop.xlane.xlu0 %4108
    %v4110 = vmul.f32 %v4109, %v1575
    %v4111 = vadd.f32 %v4110, 1e-05
    %v4112 = vrsqrt.pop %v4111
    %v4113 = vmul.f32 %v4105, %v4112
    %v4115 = vlaneseq
    %v4116 = vshrl.u32 %v4115, 7
    %v4117 = vsub.s32 0, %v4116
    %v4118 = vrot.slane %v3240, %v4117
    %v4120 = vmul.f32 %v4113, %v4118
    %v4122 = vlaneseq
    %v4123 = vshrl.u32 %v4122, 7
    %v4124 = vsub.s32 0, %v4123
    %v4125 = vrot.slane %v3241, %v4124
    %v4127 = vadd.f32 %v4120, %v4125
    %v4129 = vlaneseq
    %v4130 = vshrl.u32 %v4129, 7
    %v4131 = vsub.s32 0, %v4130
    %v4132 = vrot.slane %v3246, %v4131
    %v4135 = vsel %vm545, %v4127, 0
    %4137 = vmatprep.subr.mxu0 0.0
    %4138 = vmatpush1.msra.mxu0 0.0
    %4139 = vmatprep.subr.mxu0 0.0
    %4140 = vmatpush1.msra.mxu0 0.0
    %4141 = vmatprep.subr.mxu0 0.0
    %4142 = vmatpush1.msra.mxu0 0.0
    %4143 = vmatprep.subr.mxu0 0.0
    %4144 = vmatpush1.msra.mxu0 0.0
    %4145 = vmatprep.subr.mxu0 0.0
    %4146 = vmatpush1.msra.mxu0 0.0
    %4147 = vmatprep.subr.mxu0 0.0
    %4148 = vmatpush1.msra.mxu0 0.0
    %4149 = vmatprep.subr.mxu0 0.0
    %4150 = vmatpush1.msra.mxu0 0.0
    %4151 = vmatprep.subr.mxu0 0.0
    %4152 = vmatpush1.msra.mxu0 0.0
    %4153 = vmatprep.subr.mxu0 0.0
    %4154 = vmatpush1.msra.mxu0 0.0
    %4155 = vmatprep.subr.mxu0 0.0
    %4156 = vmatpush1.msra.mxu0 0.0
    %4157 = vmatprep.subr.mxu0 0.0
    %4158 = vmatpush1.msra.mxu0 0.0
    %4159 = vmatprep.subr.mxu0 0.0
    %4160 = vmatpush1.msra.mxu0 0.0
    %4161 = vmatprep.subr.mxu0 0.0
    %4162 = vmatpush1.msra.mxu0 %v3245
    %4163 = vmatprep.subr.mxu0 0.0
    %4164 = vmatpush1.msra.mxu0 %v3244
    %4165 = vmatprep.subr.mxu0 0.0
    %4166 = vmatpush1.msra.mxu0 %v3243
    %4167 = vmatprep.subr.mxu0 0.0
    %4168 = vmatpush1.msra.mxu0 %v3242
    %4169 = vmatprep.subr.mxu0 0.0
    %4170 = vmatpush2.msra.mxu0 0.0
    %4171 = vmatprep.subr.mxu0 0.0
    %4172 = vmatpush2.msra.mxu0 0.0
    %4173 = vmatprep.subr.mxu0 0.0
    %4174 = vmatpush2.msra.mxu0 0.0
    %4175 = vmatprep.subr.mxu0 0.0
    %4176 = vmatpush2.msra.mxu0 0.0
    %4177 = vmatprep.subr.mxu0 0.0
    %4178 = vmatpush2.msra.mxu0 0.0
    %4179 = vmatprep.subr.mxu0 0.0
    %4180 = vmatpush2.msra.mxu0 0.0
    %4181 = vmatprep.subr.mxu0 0.0
    %4182 = vmatpush2.msra.mxu0 0.0
    %4183 = vmatprep.subr.mxu0 0.0
    %4184 = vmatpush2.msra.mxu0 0.0
    %4185 = vmatprep.subr.mxu0 0.0
    %4186 = vmatpush2.msra.mxu0 0.0
    %4187 = vmatprep.subr.mxu0 0.0
    %4188 = vmatpush2.msra.mxu0 0.0
    %4189 = vmatprep.subr.mxu0 0.0
    %4190 = vmatpush2.msra.mxu0 0.0
    %4191 = vmatprep.subr.mxu0 0.0
    %4192 = vmatpush2.msra.mxu0 0.0
    %4193 = vmatprep.subr.mxu0 0.0
    %4194 = vmatpush2.msra.mxu0 0.0
    %4195 = vmatprep.subr.mxu0 0.0
    %4196 = vmatpush2.msra.mxu0 0.0
    %4197 = vmatprep.subr.mxu0 0.0
    %4198 = vmatpush2.msra.mxu0 0.0
    %4199 = vmatprep.subr.mxu0 0.0
    %4200 = vmatpush2.msra.mxu0 0.0
    %4201 = vmatprep.mubr.f32.mxu0 0.0
    %4202 = vmatmul.mubr.f32.gmra.mxu0 %v4135
    %v4203 = vpop.f32.mrf.mxu0
    %v4204 = vadd.f32 %v4132, %v4203
    %v4205 = vpop.f32.mrf.mxu0
    %4206 = vdwg.mxu0
    %v4207 = vmax.f32 %v4204, 0.0
    %v4209 = vlaneseq
    %v4210 = vshrl.u32 %v4209, 7
    %v4211 = vsub.s32 0, %v4210
    %v4212 = vrot.slane %v3255, %v4211
    %v4215 = vsel %vm1707, %v4207, 0
    %4217 = vmatprep.subr.mxu0 0.0
    %4218 = vmatpush1.msra.mxu0 0.0
    %4219 = vmatprep.subr.mxu0 0.0
    %4220 = vmatpush1.msra.mxu0 0.0
    %4221 = vmatprep.subr.mxu0 0.0
    %4222 = vmatpush1.msra.mxu0 0.0
    %4223 = vmatprep.subr.mxu0 0.0
    %4224 = vmatpush1.msra.mxu0 0.0
    %4225 = vmatprep.subr.mxu0 0.0
    %4226 = vmatpush1.msra.mxu0 0.0
    %4227 = vmatprep.subr.mxu0 0.0
    %4228 = vmatpush1.msra.mxu0 0.0
    %4229 = vmatprep.subr.mxu0 0.0
    %4230 = vmatpush1.msra.mxu0 0.0
    %4231 = vmatprep.subr.mxu0 0.0
    %4232 = vmatpush1.msra.mxu0 0.0
    %4233 = vmatprep.subr.mxu0 0.0
    %4234 = vmatpush1.msra.mxu0 %v3254
    %4235 = vmatprep.subr.mxu0 0.0
    %4236 = vmatpush1.msra.mxu0 %v3253
    %4237 = vmatprep.subr.mxu0 0.0
    %4238 = vmatpush1.msra.mxu0 %v3252
    %4239 = vmatprep.subr.mxu0 0.0
    %4240 = vmatpush1.msra.mxu0 %v3251
    %4241 = vmatprep.subr.mxu0 0.0
    %4242 = vmatpush1.msra.mxu0 %v3250
    %4243 = vmatprep.subr.mxu0 0.0
    %4244 = vmatpush1.msra.mxu0 %v3249
    %4245 = vmatprep.subr.mxu0 0.0
    %4246 = vmatpush1.msra.mxu0 %v3248
    %4247 = vmatprep.subr.mxu0 0.0
    %4248 = vmatpush1.msra.mxu0 %v3247
    %4249 = vmatprep.subr.mxu0 0.0
    %4250 = vmatpush2.msra.mxu0 0.0
    %4251 = vmatprep.subr.mxu0 0.0
    %4252 = vmatpush2.msra.mxu0 0.0
    %4253 = vmatprep.subr.mxu0 0.0
    %4254 = vmatpush2.msra.mxu0 0.0
    %4255 = vmatprep.subr.mxu0 0.0
    %4256 = vmatpush2.msra.mxu0 0.0
    %4257 = vmatprep.subr.mxu0 0.0
    %4258 = vmatpush2.msra.mxu0 0.0
    %4259 = vmatprep.subr.mxu0 0.0
    %4260 = vmatpush2.msra.mxu0 0.0
    %4261 = vmatprep.subr.mxu0 0.0
    %4262 = vmatpush2.msra.mxu0 0.0
    %4263 = vmatprep.subr.mxu0 0.0
    %4264 = vmatpush2.msra.mxu0 0.0
    %4265 = vmatprep.subr.mxu0 0.0
    %4266 = vmatpush2.msra.mxu0 0.0
    %4267 = vmatprep.subr.mxu0 0.0
    %4268 = vmatpush2.msra.mxu0 0.0
    %4269 = vmatprep.subr.mxu0 0.0
    %4270 = vmatpush2.msra.mxu0 0.0
    %4271 = vmatprep.subr.mxu0 0.0
    %4272 = vmatpush2.msra.mxu0 0.0
    %4273 = vmatprep.subr.mxu0 0.0
    %4274 = vmatpush2.msra.mxu0 0.0
    %4275 = vmatprep.subr.mxu0 0.0
    %4276 = vmatpush2.msra.mxu0 0.0
    %4277 = vmatprep.subr.mxu0 0.0
    %4278 = vmatpush2.msra.mxu0 0.0
    %4279 = vmatprep.subr.mxu0 0.0
    %4280 = vmatpush2.msra.mxu0 0.0
    %4281 = vmatprep.mubr.f32.mxu0 0.0
    %4282 = vmatmul.mubr.f32.gmra.mxu0 %v4215
    %v4283 = vpop.f32.mrf.mxu0
    %v4284 = vadd.f32 %v4212, %v4283
    %v4285 = vpop.f32.mrf.mxu0
    %4286 = vdwg.mxu0
    %v4287 = vadd.f32 %v4127, %v4284
    %v4288 = vsel %vm545, %v4287, 0.0
    %4289 = vadd.xlane.f32.xlu0 %v4288
    %v4290 = vpop.xlane.xlu0 %4289
    %v4291 = vmul.f32 %v4290, %v1575
    %v4292 = vsub.f32 %v4287, %v4291
    %v4293 = vmul.f32 %v4292, %v4292
    %v4294 = vsel %vm545, %v4293, 0.0
    %4295 = vadd.xlane.f32.xlu0 %v4294
    %v4296 = vpop.xlane.xlu0 %4295
    %v4297 = vmul.f32 %v4296, %v1575
    %v4298 = vadd.f32 %v4297, 1e-05
    %v4299 = vrsqrt.pop %v4298
    %v4300 = vmul.f32 %v4292, %v4299
    %v4302 = vlaneseq
    %v4303 = vshrl.u32 %v4302, 7
    %v4304 = vsub.s32 0, %v4303
    %v4305 = vrot.slane %v3256, %v4304
    %v4307 = vmul.f32 %v4300, %v4305
    %v4309 = vlaneseq
    %v4310 = vshrl.u32 %v4309, 7
    %v4311 = vsub.s32 0, %v4310
    %v4312 = vrot.slane %v3257, %v4311
    %v4314 = vadd.f32 %v4307, %v4312
    %v4315 = vld [vmem:[%s91] sm:$0xff]
    %v4316 = vld [vmem:[%s91 + $0x8] sm:$0xff]
    %v4317 = vld [vmem:[%s91 + $0x10] sm:$0xff]
    %v4318 = vld [vmem:[%s91 + $0x18] sm:$0xff]
    %v4319 = vld [vmem:[#allocation14] sm:$0x1]
    %v4320 = vld [vmem:[%s95] sm:$0xff]
    %v4321 = vld [vmem:[%s95 + $0x8] sm:$0xff]
    %v4322 = vld [vmem:[%s95 + $0x10] sm:$0xff]
    %v4323 = vld [vmem:[%s95 + $0x18] sm:$0xff]
    %v4324 = vld [vmem:[#allocation16] sm:$0x1]
    %v4325 = vld [vmem:[#allocation17] sm:$0x1]
    %v4326 = vld [vmem:[#allocation19] sm:$0x1]
    %v4327 = vld [vmem:[%s103] sm:$0xff]
    %v4328 = vld [vmem:[%s103 + $0x8] sm:$0xff]
    %v4329 = vld [vmem:[%s103 + $0x10] sm:$0xff]
    %v4330 = vld [vmem:[%s103 + $0x18] sm:$0xff]
    %v4331 = vld [vmem:[#allocation20] sm:$0x1]
    %v4332 = vld [vmem:[%s107] sm:$0xff]
    %v4333 = vld [vmem:[%s107 + $0x8] sm:$0xff]
    %v4334 = vld [vmem:[%s107 + $0x10] sm:$0xff]
    %v4335 = vld [vmem:[%s107 + $0x18] sm:$0xff]
    %v4336 = vld [vmem:[%s107 + $0x20] sm:$0xff]
    %v4337 = vld [vmem:[%s107 + $0x28] sm:$0xff]
    %v4338 = vld [vmem:[%s107 + $0x30] sm:$0xff]
    %v4339 = vld [vmem:[%s107 + $0x38] sm:$0xff]
    %v4340 = vld [vmem:[#allocation22] sm:$0x1]
    %v4341 = vld [vmem:[#allocation23] sm:$0x1]
    %v4342 = vld [vmem:[#allocation25] sm:$0x1]
    %v4344 = vlaneseq
    %v4345 = vshrl.u32 %v4344, 7
    %v4346 = vsub.s32 0, %v4345
    %v4347 = vrot.slane %v4319, %v4346
    %v4350 = vsel %vm545, %v4314, 0
    %4352 = vmatprep.subr.mxu0 0.0
    %4353 = vmatpush1.msra.mxu0 0.0
    %4354 = vmatprep.subr.mxu0 0.0
    %4355 = vmatpush1.msra.mxu0 0.0
    %4356 = vmatprep.subr.mxu0 0.0
    %4357 = vmatpush1.msra.mxu0 0.0
    %4358 = vmatprep.subr.mxu0 0.0
    %4359 = vmatpush1.msra.mxu0 0.0
    %4360 = vmatprep.subr.mxu0 0.0
    %4361 = vmatpush1.msra.mxu0 0.0
    %4362 = vmatprep.subr.mxu0 0.0
    %4363 = vmatpush1.msra.mxu0 0.0
    %4364 = vmatprep.subr.mxu0 0.0
    %4365 = vmatpush1.msra.mxu0 0.0
    %4366 = vmatprep.subr.mxu0 0.0
    %4367 = vmatpush1.msra.mxu0 0.0
    %4368 = vmatprep.subr.mxu0 0.0
    %4369 = vmatpush1.msra.mxu0 0.0
    %4370 = vmatprep.subr.mxu0 0.0
    %4371 = vmatpush1.msra.mxu0 0.0
    %4372 = vmatprep.subr.mxu0 0.0
    %4373 = vmatpush1.msra.mxu0 0.0
    %4374 = vmatprep.subr.mxu0 0.0
    %4375 = vmatpush1.msra.mxu0 0.0
    %4376 = vmatprep.subr.mxu0 0.0
    %4377 = vmatpush1.msra.mxu0 %v4318
    %4378 = vmatprep.subr.mxu0 0.0
    %4379 = vmatpush1.msra.mxu0 %v4317
    %4380 = vmatprep.subr.mxu0 0.0
    %4381 = vmatpush1.msra.mxu0 %v4316
    %4382 = vmatprep.subr.mxu0 0.0
    %4383 = vmatpush1.msra.mxu0 %v4315
    %4384 = vmatprep.subr.mxu0 0.0
    %4385 = vmatpush2.msra.mxu0 0.0
    %4386 = vmatprep.subr.mxu0 0.0
    %4387 = vmatpush2.msra.mxu0 0.0
    %4388 = vmatprep.subr.mxu0 0.0
    %4389 = vmatpush2.msra.mxu0 0.0
    %4390 = vmatprep.subr.mxu0 0.0
    %4391 = vmatpush2.msra.mxu0 0.0
    %4392 = vmatprep.subr.mxu0 0.0
    %4393 = vmatpush2.msra.mxu0 0.0
    %4394 = vmatprep.subr.mxu0 0.0
    %4395 = vmatpush2.msra.mxu0 0.0
    %4396 = vmatprep.subr.mxu0 0.0
    %4397 = vmatpush2.msra.mxu0 0.0
    %4398 = vmatprep.subr.mxu0 0.0
    %4399 = vmatpush2.msra.mxu0 0.0
    %4400 = vmatprep.subr.mxu0 0.0
    %4401 = vmatpush2.msra.mxu0 0.0
    %4402 = vmatprep.subr.mxu0 0.0
    %4403 = vmatpush2.msra.mxu0 0.0
    %4404 = vmatprep.subr.mxu0 0.0
    %4405 = vmatpush2.msra.mxu0 0.0
    %4406 = vmatprep.subr.mxu0 0.0
    %4407 = vmatpush2.msra.mxu0 0.0
    %4408 = vmatprep.subr.mxu0 0.0
    %4409 = vmatpush2.msra.mxu0 0.0
    %4410 = vmatprep.subr.mxu0 0.0
    %4411 = vmatpush2.msra.mxu0 0.0
    %4412 = vmatprep.subr.mxu0 0.0
    %4413 = vmatpush2.msra.mxu0 0.0
    %4414 = vmatprep.subr.mxu0 0.0
    %4415 = vmatpush2.msra.mxu0 0.0
    %4416 = vmatprep.mubr.f32.mxu0 0.0
    %4417 = vmatmul.mubr.f32.gmra.mxu0 %v4350
    %v4418 = vpop.f32.mrf.mxu0
    %v4419 = vadd.f32 %v4347, %v4418
    %v4420 = vpop.f32.mrf.mxu0
    %4421 = vdwg.mxu0
    %4423 = vrot.lane.b32.xlu0 %v4419, 96
    %v4424 = vpop.permute.xlu0 %4423
    %v4425 = vsel %vm633, %v4419, 0
    %v4427 = vsel %vm633, %v4424, 0
    %4429 = vmatprep.subr.mxu0 0.0
    %4430 = vmatpush1.xpose.msra.mxu0 0.0
    %4431 = vmatprep.subr.mxu0 0.0
    %4432 = vmatpush1.xpose.msra.mxu0 0.0
    %4433 = vmatprep.subr.mxu0 0.0
    %4434 = vmatpush1.xpose.msra.mxu0 0.0
    %4435 = vmatprep.subr.mxu0 0.0
    %4436 = vmatpush1.xpose.msra.mxu0 0.0
    %4437 = vmatprep.subr.mxu0 0.0
    %4438 = vmatpush1.xpose.msra.mxu0 0.0
    %4439 = vmatprep.subr.mxu0 0.0
    %4440 = vmatpush1.xpose.msra.mxu0 0.0
    %4441 = vmatprep.subr.mxu0 0.0
    %4442 = vmatpush1.xpose.msra.mxu0 0.0
    %4443 = vmatprep.subr.mxu0 0.0
    %4444 = vmatpush1.xpose.msra.mxu0 0.0
    %4445 = vmatprep.subr.mxu0 0.0
    %4446 = vmatpush1.xpose.msra.mxu0 0.0
    %4447 = vmatprep.subr.mxu0 0.0
    %4448 = vmatpush1.xpose.msra.mxu0 0.0
    %4449 = vmatprep.subr.mxu0 0.0
    %4450 = vmatpush1.xpose.msra.mxu0 0.0
    %4451 = vmatprep.subr.mxu0 0.0
    %4452 = vmatpush1.xpose.msra.mxu0 0.0
    %4453 = vmatprep.subr.mxu0 0.0
    %4454 = vmatpush1.xpose.msra.mxu0 0.0
    %4455 = vmatprep.subr.mxu0 0.0
    %4456 = vmatpush1.xpose.msra.mxu0 0.0
    %4457 = vmatprep.subr.mxu0 0.0
    %4458 = vmatpush1.xpose.msra.mxu0 0.0
    %4459 = vmatprep.subr.mxu0 0.0
    %4460 = vmatpush1.xpose.msra.mxu0 %v4427
    %4461 = vmatprep.subr.mxu0 0.0
    %4462 = vmatpush2.xpose.msra.mxu0 0.0
    %4463 = vmatprep.subr.mxu0 0.0
    %4464 = vmatpush2.xpose.msra.mxu0 0.0
    %4465 = vmatprep.subr.mxu0 0.0
    %4466 = vmatpush2.xpose.msra.mxu0 0.0
    %4467 = vmatprep.subr.mxu0 0.0
    %4468 = vmatpush2.xpose.msra.mxu0 0.0
    %4469 = vmatprep.subr.mxu0 0.0
    %4470 = vmatpush2.xpose.msra.mxu0 0.0
    %4471 = vmatprep.subr.mxu0 0.0
    %4472 = vmatpush2.xpose.msra.mxu0 0.0
    %4473 = vmatprep.subr.mxu0 0.0
    %4474 = vmatpush2.xpose.msra.mxu0 0.0
    %4475 = vmatprep.subr.mxu0 0.0
    %4476 = vmatpush2.xpose.msra.mxu0 0.0
    %4477 = vmatprep.subr.mxu0 0.0
    %4478 = vmatpush2.xpose.msra.mxu0 0.0
    %4479 = vmatprep.subr.mxu0 0.0
    %4480 = vmatpush2.xpose.msra.mxu0 0.0
    %4481 = vmatprep.subr.mxu0 0.0
    %4482 = vmatpush2.xpose.msra.mxu0 0.0
    %4483 = vmatprep.subr.mxu0 0.0
    %4484 = vmatpush2.xpose.msra.mxu0 0.0
    %4485 = vmatprep.subr.mxu0 0.0
    %4486 = vmatpush2.xpose.msra.mxu0 0.0
    %4487 = vmatprep.subr.mxu0 0.0
    %4488 = vmatpush2.xpose.msra.mxu0 0.0
    %4489 = vmatprep.subr.mxu0 0.0
    %4490 = vmatpush2.xpose.msra.mxu0 0.0
    %4491 = vmatprep.subr.mxu0 0.0
    %4492 = vmatpush2.xpose.msra.mxu0 0.0
    %4493 = vmatprep.mubr.f32.mxu0 0.0
    %4494 = vmatmul.mubr.f32.gmra.mxu0 %v4425
    %v4495 = vpop.f32.mrf.mxu0
    %v4496 = vadd.f32 0.0, %v4495
    %v4497 = vpop.f32.mrf.mxu0
    %4498 = vdwg.mxu0
    %v4499 = vmul.f32 %v4496, 0.35355338
    %v4500 = vadd.f32 %v4499, %v3229
    %v4501 = vsel %vm633, %v4500, -inf
    %4502 = vmax.xlane.f32.xlu0 %v4501
    %v4503 = vpop.xlane.xlu0 %4502
    %v4504 = vsub.f32 %v4500, %v4503
    %v4505 = vmul.f32 %v4504, 1.442695
    %v4506 = vpow.pop %v4505
    %v4507 = vsel %vm633, %v4506, 0.0
    %4508 = vadd.xlane.f32.xlu0 %v4507
    %v4509 = vpop.xlane.xlu0 %4508
    %v4510 = vrcp.pop %v4509
    %v4511 = vmul.f32 %v4506, %v4510
    %4512 = vrot.lane.b32.xlu0 %v4419, 64
    %v4513 = vpop.permute.xlu0 %4512
    %v4516 = vsel %vm633, %v4511, 0
    %4518 = vmatprep.subr.mxu0 0.0
    %4519 = vmatpush1.msra.mxu0 0.0
    %4520 = vmatprep.subr.mxu0 0.0
    %4521 = vmatpush1.msra.mxu0 0.0
    %4522 = vmatprep.subr.mxu0 0.0
    %4523 = vmatpush1.msra.mxu0 0.0
    %4524 = vmatprep.subr.mxu0 0.0
    %4525 = vmatpush1.msra.mxu0 0.0
    %4526 = vmatprep.subr.mxu0 0.0
    %4527 = vmatpush1.msra.mxu0 0.0
    %4528 = vmatprep.subr.mxu0 0.0
    %4529 = vmatpush1.msra.mxu0 0.0
    %4530 = vmatprep.subr.mxu0 0.0
    %4531 = vmatpush1.msra.mxu0 0.0
    %4532 = vmatprep.subr.mxu0 0.0
    %4533 = vmatpush1.msra.mxu0 0.0
    %4534 = vmatprep.subr.mxu0 0.0
    %4535 = vmatpush1.msra.mxu0 0.0
    %4536 = vmatprep.subr.mxu0 0.0
    %4537 = vmatpush1.msra.mxu0 0.0
    %4538 = vmatprep.subr.mxu0 0.0
    %4539 = vmatpush1.msra.mxu0 0.0
    %4540 = vmatprep.subr.mxu0 0.0
    %4541 = vmatpush1.msra.mxu0 0.0
    %4542 = vmatprep.subr.mxu0 0.0
    %4543 = vmatpush1.msra.mxu0 0.0
    %4544 = vmatprep.subr.mxu0 0.0
    %4545 = vmatpush1.msra.mxu0 0.0
    %4546 = vmatprep.subr.mxu0 0.0
    %4547 = vmatpush1.msra.mxu0 0.0
    %4548 = vmatprep.subr.mxu0 0.0
    %4549 = vmatpush1.msra.mxu0 %v4513
    %4550 = vmatprep.subr.mxu0 0.0
    %4551 = vmatpush2.msra.mxu0 0.0
    %4552 = vmatprep.subr.mxu0 0.0
    %4553 = vmatpush2.msra.mxu0 0.0
    %4554 = vmatprep.subr.mxu0 0.0
    %4555 = vmatpush2.msra.mxu0 0.0
    %4556 = vmatprep.subr.mxu0 0.0
    %4557 = vmatpush2.msra.mxu0 0.0
    %4558 = vmatprep.subr.mxu0 0.0
    %4559 = vmatpush2.msra.mxu0 0.0
    %4560 = vmatprep.subr.mxu0 0.0
    %4561 = vmatpush2.msra.mxu0 0.0
    %4562 = vmatprep.subr.mxu0 0.0
    %4563 = vmatpush2.msra.mxu0 0.0
    %4564 = vmatprep.subr.mxu0 0.0
    %4565 = vmatpush2.msra.mxu0 0.0
    %4566 = vmatprep.subr.mxu0 0.0
    %4567 = vmatpush2.msra.mxu0 0.0
    %4568 = vmatprep.subr.mxu0 0.0
    %4569 = vmatpush2.msra.mxu0 0.0
    %4570 = vmatprep.subr.mxu0 0.0
    %4571 = vmatpush2.msra.mxu0 0.0
    %4572 = vmatprep.subr.mxu0 0.0
    %4573 = vmatpush2.msra.mxu0 0.0
    %4574 = vmatprep.subr.mxu0 0.0
    %4575 = vmatpush2.msra.mxu0 0.0
    %4576 = vmatprep.subr.mxu0 0.0
    %4577 = vmatpush2.msra.mxu0 0.0
    %4578 = vmatprep.subr.mxu0 0.0
    %4579 = vmatpush2.msra.mxu0 0.0
    %4580 = vmatprep.subr.mxu0 0.0
    %4581 = vmatpush2.msra.mxu0 0.0
    %4582 = vmatprep.mubr.f32.mxu0 0.0
    %4583 = vmatmul.mubr.f32.gmra.mxu0 %v4516
    %v4584 = vpop.f32.mrf.mxu0
    %v4585 = vadd.f32 0.0, %v4584
    %v4586 = vpop.f32.mrf.mxu0
    %4587 = vdwg.mxu0
    %4588 = vst.msk [vmem:[#allocation2] sm:$0xff] %vm633, %v4585
    %4589 = vrot.lane.b32.xlu0 %v4419, 120
    %v4590 = vpop.permute.xlu0 %4589
    %4591 = vrot.lane.b32.xlu0 %v4419, 88
    %v4592 = vpop.permute.xlu0 %4591
    %v4593 = vsel %vm633, %v4590, 0
    %v4595 = vsel %vm633, %v4592, 0
    %4597 = vmatprep.subr.mxu0 0.0
    %4598 = vmatpush1.xpose.msra.mxu0 0.0
    %4599 = vmatprep.subr.mxu0 0.0
    %4600 = vmatpush1.xpose.msra.mxu0 0.0
    %4601 = vmatprep.subr.mxu0 0.0
    %4602 = vmatpush1.xpose.msra.mxu0 0.0
    %4603 = vmatprep.subr.mxu0 0.0
    %4604 = vmatpush1.xpose.msra.mxu0 0.0
    %4605 = vmatprep.subr.mxu0 0.0
    %4606 = vmatpush1.xpose.msra.mxu0 0.0
    %4607 = vmatprep.subr.mxu0 0.0
    %4608 = vmatpush1.xpose.msra.mxu0 0.0
    %4609 = vmatprep.subr.mxu0 0.0
    %4610 = vmatpush1.xpose.msra.mxu0 0.0
    %4611 = vmatprep.subr.mxu0 0.0
    %4612 = vmatpush1.xpose.msra.mxu0 0.0
    %4613 = vmatprep.subr.mxu0 0.0
    %4614 = vmatpush1.xpose.msra.mxu0 0.0
    %4615 = vmatprep.subr.mxu0 0.0
    %4616 = vmatpush1.xpose.msra.mxu0 0.0
    %4617 = vmatprep.subr.mxu0 0.0
    %4618 = vmatpush1.xpose.msra.mxu0 0.0
    %4619 = vmatprep.subr.mxu0 0.0
    %4620 = vmatpush1.xpose.msra.mxu0 0.0
    %4621 = vmatprep.subr.mxu0 0.0
    %4622 = vmatpush1.xpose.msra.mxu0 0.0
    %4623 = vmatprep.subr.mxu0 0.0
    %4624 = vmatpush1.xpose.msra.mxu0 0.0
    %4625 = vmatprep.subr.mxu0 0.0
    %4626 = vmatpush1.xpose.msra.mxu0 0.0
    %4627 = vmatprep.subr.mxu0 0.0
    %4628 = vmatpush1.xpose.msra.mxu0 %v4595
    %4629 = vmatprep.subr.mxu0 0.0
    %4630 = vmatpush2.xpose.msra.mxu0 0.0
    %4631 = vmatprep.subr.mxu0 0.0
    %4632 = vmatpush2.xpose.msra.mxu0 0.0
    %4633 = vmatprep.subr.mxu0 0.0
    %4634 = vmatpush2.xpose.msra.mxu0 0.0
    %4635 = vmatprep.subr.mxu0 0.0
    %4636 = vmatpush2.xpose.msra.mxu0 0.0
    %4637 = vmatprep.subr.mxu0 0.0
    %4638 = vmatpush2.xpose.msra.mxu0 0.0
    %4639 = vmatprep.subr.mxu0 0.0
    %4640 = vmatpush2.xpose.msra.mxu0 0.0
    %4641 = vmatprep.subr.mxu0 0.0
    %4642 = vmatpush2.xpose.msra.mxu0 0.0
    %4643 = vmatprep.subr.mxu0 0.0
    %4644 = vmatpush2.xpose.msra.mxu0 0.0
    %4645 = vmatprep.subr.mxu0 0.0
    %4646 = vmatpush2.xpose.msra.mxu0 0.0
    %4647 = vmatprep.subr.mxu0 0.0
    %4648 = vmatpush2.xpose.msra.mxu0 0.0
    %4649 = vmatprep.subr.mxu0 0.0
    %4650 = vmatpush2.xpose.msra.mxu0 0.0
    %4651 = vmatprep.subr.mxu0 0.0
    %4652 = vmatpush2.xpose.msra.mxu0 0.0
    %4653 = vmatprep.subr.mxu0 0.0
    %4654 = vmatpush2.xpose.msra.mxu0 0.0
    %4655 = vmatprep.subr.mxu0 0.0
    %4656 = vmatpush2.xpose.msra.mxu0 0.0
    %4657 = vmatprep.subr.mxu0 0.0
    %4658 = vmatpush2.xpose.msra.mxu0 0.0
    %4659 = vmatprep.subr.mxu0 0.0
    %4660 = vmatpush2.xpose.msra.mxu0 0.0
    %4661 = vmatprep.mubr.f32.mxu0 0.0
    %4662 = vmatmul.mubr.f32.gmra.mxu0 %v4593
    %v4663 = vpop.f32.mrf.mxu0
    %v4664 = vadd.f32 0.0, %v4663
    %v4665 = vpop.f32.mrf.mxu0
    %4666 = vdwg.mxu0
    %v4667 = vmul.f32 %v4664, 0.35355338
    %v4668 = vadd.f32 %v4667, %v3229
    %v4669 = vsel %vm633, %v4668, -inf
    %4670 = vmax.xlane.f32.xlu0 %v4669
    %v4671 = vpop.xlane.xlu0 %4670
    %v4672 = vsub.f32 %v4668, %v4671
    %v4673 = vmul.f32 %v4672, 1.442695
    %v4674 = vpow.pop %v4673
    %v4675 = vsel %vm633, %v4674, 0.0
    %4676 = vadd.xlane.f32.xlu0 %v4675
    %v4677 = vpop.xlane.xlu0 %4676
    %v4678 = vrcp.pop %v4677
    %v4679 = vmul.f32 %v4674, %v4678
    %4680 = vrot.lane.b32.xlu0 %v4419, 56
    %v4681 = vpop.permute.xlu0 %4680
    %v4684 = vsel %vm633, %v4679, 0
    %4686 = vmatprep.subr.mxu0 0.0
    %4687 = vmatpush1.msra.mxu0 0.0
    %4688 = vmatprep.subr.mxu0 0.0
    %4689 = vmatpush1.msra.mxu0 0.0
    %4690 = vmatprep.subr.mxu0 0.0
    %4691 = vmatpush1.msra.mxu0 0.0
    %4692 = vmatprep.subr.mxu0 0.0
    %4693 = vmatpush1.msra.mxu0 0.0
    %4694 = vmatprep.subr.mxu0 0.0
    %4695 = vmatpush1.msra.mxu0 0.0
    %4696 = vmatprep.subr.mxu0 0.0
    %4697 = vmatpush1.msra.mxu0 0.0
    %4698 = vmatprep.subr.mxu0 0.0
    %4699 = vmatpush1.msra.mxu0 0.0
    %4700 = vmatprep.subr.mxu0 0.0
    %4701 = vmatpush1.msra.mxu0 0.0
    %4702 = vmatprep.subr.mxu0 0.0
    %4703 = vmatpush1.msra.mxu0 0.0
    %4704 = vmatprep.subr.mxu0 0.0
    %4705 = vmatpush1.msra.mxu0 0.0
    %4706 = vmatprep.subr.mxu0 0.0
    %4707 = vmatpush1.msra.mxu0 0.0
    %4708 = vmatprep.subr.mxu0 0.0
    %4709 = vmatpush1.msra.mxu0 0.0
    %4710 = vmatprep.subr.mxu0 0.0
    %4711 = vmatpush1.msra.mxu0 0.0
    %4712 = vmatprep.subr.mxu0 0.0
    %4713 = vmatpush1.msra.mxu0 0.0
    %4714 = vmatprep.subr.mxu0 0.0
    %4715 = vmatpush1.msra.mxu0 0.0
    %4716 = vmatprep.subr.mxu0 0.0
    %4717 = vmatpush1.msra.mxu0 %v4681
    %4718 = vmatprep.subr.mxu0 0.0
    %4719 = vmatpush2.msra.mxu0 0.0
    %4720 = vmatprep.subr.mxu0 0.0
    %4721 = vmatpush2.msra.mxu0 0.0
    %4722 = vmatprep.subr.mxu0 0.0
    %4723 = vmatpush2.msra.mxu0 0.0
    %4724 = vmatprep.subr.mxu0 0.0
    %4725 = vmatpush2.msra.mxu0 0.0
    %4726 = vmatprep.subr.mxu0 0.0
    %4727 = vmatpush2.msra.mxu0 0.0
    %4728 = vmatprep.subr.mxu0 0.0
    %4729 = vmatpush2.msra.mxu0 0.0
    %4730 = vmatprep.subr.mxu0 0.0
    %4731 = vmatpush2.msra.mxu0 0.0
    %4732 = vmatprep.subr.mxu0 0.0
    %4733 = vmatpush2.msra.mxu0 0.0
    %4734 = vmatprep.subr.mxu0 0.0
    %4735 = vmatpush2.msra.mxu0 0.0
    %4736 = vmatprep.subr.mxu0 0.0
    %4737 = vmatpush2.msra.mxu0 0.0
    %4738 = vmatprep.subr.mxu0 0.0
    %4739 = vmatpush2.msra.mxu0 0.0
    %4740 = vmatprep.subr.mxu0 0.0
    %4741 = vmatpush2.msra.mxu0 0.0
    %4742 = vmatprep.subr.mxu0 0.0
    %4743 = vmatpush2.msra.mxu0 0.0
    %4744 = vmatprep.subr.mxu0 0.0
    %4745 = vmatpush2.msra.mxu0 0.0
    %4746 = vmatprep.subr.mxu0 0.0
    %4747 = vmatpush2.msra.mxu0 0.0
    %4748 = vmatprep.subr.mxu0 0.0
    %4749 = vmatpush2.msra.mxu0 0.0
    %4750 = vmatprep.mubr.f32.mxu0 0.0
    %4751 = vmatmul.mubr.f32.gmra.mxu0 %v4684
    %v4752 = vpop.f32.mrf.mxu0
    %v4753 = vadd.f32 0.0, %v4752
    %v4754 = vpop.f32.mrf.mxu0
    %4755 = vdwg.mxu0
    %4757 = vrot.lane.b32.xlu0 %v4753, 8
    %v4758 = vpop.permute.xlu0 %4757
    %4760 = vst.msk [vmem:[#allocation2] sm:$0xff] %vm1045, %v4758
    %4761 = vrot.lane.b32.xlu0 %v4419, 112
    %v4762 = vpop.permute.xlu0 %4761
    %4763 = vrot.lane.b32.xlu0 %v4419, 80
    %v4764 = vpop.permute.xlu0 %4763
    %v4765 = vsel %vm633, %v4762, 0
    %v4767 = vsel %vm633, %v4764, 0
    %4769 = vmatprep.subr.mxu0 0.0
    %4770 = vmatpush1.xpose.msra.mxu0 0.0
    %4771 = vmatprep.subr.mxu0 0.0
    %4772 = vmatpush1.xpose.msra.mxu0 0.0
    %4773 = vmatprep.subr.mxu0 0.0
    %4774 = vmatpush1.xpose.msra.mxu0 0.0
    %4775 = vmatprep.subr.mxu0 0.0
    %4776 = vmatpush1.xpose.msra.mxu0 0.0
    %4777 = vmatprep.subr.mxu0 0.0
    %4778 = vmatpush1.xpose.msra.mxu0 0.0
    %4779 = vmatprep.subr.mxu0 0.0
    %4780 = vmatpush1.xpose.msra.mxu0 0.0
    %4781 = vmatprep.subr.mxu0 0.0
    %4782 = vmatpush1.xpose.msra.mxu0 0.0
    %4783 = vmatprep.subr.mxu0 0.0
    %4784 = vmatpush1.xpose.msra.mxu0 0.0
    %4785 = vmatprep.subr.mxu0 0.0
    %4786 = vmatpush1.xpose.msra.mxu0 0.0
    %4787 = vmatprep.subr.mxu0 0.0
    %4788 = vmatpush1.xpose.msra.mxu0 0.0
    %4789 = vmatprep.subr.mxu0 0.0
    %4790 = vmatpush1.xpose.msra.mxu0 0.0
    %4791 = vmatprep.subr.mxu0 0.0
    %4792 = vmatpush1.xpose.msra.mxu0 0.0
    %4793 = vmatprep.subr.mxu0 0.0
    %4794 = vmatpush1.xpose.msra.mxu0 0.0
    %4795 = vmatprep.subr.mxu0 0.0
    %4796 = vmatpush1.xpose.msra.mxu0 0.0
    %4797 = vmatprep.subr.mxu0 0.0
    %4798 = vmatpush1.xpose.msra.mxu0 0.0
    %4799 = vmatprep.subr.mxu0 0.0
    %4800 = vmatpush1.xpose.msra.mxu0 %v4767
    %4801 = vmatprep.subr.mxu0 0.0
    %4802 = vmatpush2.xpose.msra.mxu0 0.0
    %4803 = vmatprep.subr.mxu0 0.0
    %4804 = vmatpush2.xpose.msra.mxu0 0.0
    %4805 = vmatprep.subr.mxu0 0.0
    %4806 = vmatpush2.xpose.msra.mxu0 0.0
    %4807 = vmatprep.subr.mxu0 0.0
    %4808 = vmatpush2.xpose.msra.mxu0 0.0
    %4809 = vmatprep.subr.mxu0 0.0
    %4810 = vmatpush2.xpose.msra.mxu0 0.0
    %4811 = vmatprep.subr.mxu0 0.0
    %4812 = vmatpush2.xpose.msra.mxu0 0.0
    %4813 = vmatprep.subr.mxu0 0.0
    %4814 = vmatpush2.xpose.msra.mxu0 0.0
    %4815 = vmatprep.subr.mxu0 0.0
    %4816 = vmatpush2.xpose.msra.mxu0 0.0
    %4817 = vmatprep.subr.mxu0 0.0
    %4818 = vmatpush2.xpose.msra.mxu0 0.0
    %4819 = vmatprep.subr.mxu0 0.0
    %4820 = vmatpush2.xpose.msra.mxu0 0.0
    %4821 = vmatprep.subr.mxu0 0.0
    %4822 = vmatpush2.xpose.msra.mxu0 0.0
    %4823 = vmatprep.subr.mxu0 0.0
    %4824 = vmatpush2.xpose.msra.mxu0 0.0
    %4825 = vmatprep.subr.mxu0 0.0
    %4826 = vmatpush2.xpose.msra.mxu0 0.0
    %4827 = vmatprep.subr.mxu0 0.0
    %4828 = vmatpush2.xpose.msra.mxu0 0.0
    %4829 = vmatprep.subr.mxu0 0.0
    %4830 = vmatpush2.xpose.msra.mxu0 0.0
    %4831 = vmatprep.subr.mxu0 0.0
    %4832 = vmatpush2.xpose.msra.mxu0 0.0
    %4833 = vmatprep.mubr.f32.mxu0 0.0
    %4834 = vmatmul.mubr.f32.gmra.mxu0 %v4765
    %v4835 = vpop.f32.mrf.mxu0
    %v4836 = vadd.f32 0.0, %v4835
    %v4837 = vpop.f32.mrf.mxu0
    %4838 = vdwg.mxu0
    %v4839 = vmul.f32 %v4836, 0.35355338
    %v4840 = vadd.f32 %v4839, %v3229
    %v4841 = vsel %vm633, %v4840, -inf
    %4842 = vmax.xlane.f32.xlu0 %v4841
    %v4843 = vpop.xlane.xlu0 %4842
    %v4844 = vsub.f32 %v4840, %v4843
    %v4845 = vmul.f32 %v4844, 1.442695
    %v4846 = vpow.pop %v4845
    %v4847 = vsel %vm633, %v4846, 0.0
    %4848 = vadd.xlane.f32.xlu0 %v4847
    %v4849 = vpop.xlane.xlu0 %4848
    %v4850 = vrcp.pop %v4849
    %v4851 = vmul.f32 %v4846, %v4850
    %4852 = vrot.lane.b32.xlu0 %v4419, 48
    %v4853 = vpop.permute.xlu0 %4852
    %v4856 = vsel %vm633, %v4851, 0
    %4858 = vmatprep.subr.mxu0 0.0
    %4859 = vmatpush1.msra.mxu0 0.0
    %4860 = vmatprep.subr.mxu0 0.0
    %4861 = vmatpush1.msra.mxu0 0.0
    %4862 = vmatprep.subr.mxu0 0.0
    %4863 = vmatpush1.msra.mxu0 0.0
    %4864 = vmatprep.subr.mxu0 0.0
    %4865 = vmatpush1.msra.mxu0 0.0
    %4866 = vmatprep.subr.mxu0 0.0
    %4867 = vmatpush1.msra.mxu0 0.0
    %4868 = vmatprep.subr.mxu0 0.0
    %4869 = vmatpush1.msra.mxu0 0.0
    %4870 = vmatprep.subr.mxu0 0.0
    %4871 = vmatpush1.msra.mxu0 0.0
    %4872 = vmatprep.subr.mxu0 0.0
    %4873 = vmatpush1.msra.mxu0 0.0
    %4874 = vmatprep.subr.mxu0 0.0
    %4875 = vmatpush1.msra.mxu0 0.0
    %4876 = vmatprep.subr.mxu0 0.0
    %4877 = vmatpush1.msra.mxu0 0.0
    %4878 = vmatprep.subr.mxu0 0.0
    %4879 = vmatpush1.msra.mxu0 0.0
    %4880 = vmatprep.subr.mxu0 0.0
    %4881 = vmatpush1.msra.mxu0 0.0
    %4882 = vmatprep.subr.mxu0 0.0
    %4883 = vmatpush1.msra.mxu0 0.0
    %4884 = vmatprep.subr.mxu0 0.0
    %4885 = vmatpush1.msra.mxu0 0.0
    %4886 = vmatprep.subr.mxu0 0.0
    %4887 = vmatpush1.msra.mxu0 0.0
    %4888 = vmatprep.subr.mxu0 0.0
    %4889 = vmatpush1.msra.mxu0 %v4853
    %4890 = vmatprep.subr.mxu0 0.0
    %4891 = vmatpush2.msra.mxu0 0.0
    %4892 = vmatprep.subr.mxu0 0.0
    %4893 = vmatpush2.msra.mxu0 0.0
    %4894 = vmatprep.subr.mxu0 0.0
    %4895 = vmatpush2.msra.mxu0 0.0
    %4896 = vmatprep.subr.mxu0 0.0
    %4897 = vmatpush2.msra.mxu0 0.0
    %4898 = vmatprep.subr.mxu0 0.0
    %4899 = vmatpush2.msra.mxu0 0.0
    %4900 = vmatprep.subr.mxu0 0.0
    %4901 = vmatpush2.msra.mxu0 0.0
    %4902 = vmatprep.subr.mxu0 0.0
    %4903 = vmatpush2.msra.mxu0 0.0
    %4904 = vmatprep.subr.mxu0 0.0
    %4905 = vmatpush2.msra.mxu0 0.0
    %4906 = vmatprep.subr.mxu0 0.0
    %4907 = vmatpush2.msra.mxu0 0.0
    %4908 = vmatprep.subr.mxu0 0.0
    %4909 = vmatpush2.msra.mxu0 0.0
    %4910 = vmatprep.subr.mxu0 0.0
    %4911 = vmatpush2.msra.mxu0 0.0
    %4912 = vmatprep.subr.mxu0 0.0
    %4913 = vmatpush2.msra.mxu0 0.0
    %4914 = vmatprep.subr.mxu0 0.0
    %4915 = vmatpush2.msra.mxu0 0.0
    %4916 = vmatprep.subr.mxu0 0.0
    %4917 = vmatpush2.msra.mxu0 0.0
    %4918 = vmatprep.subr.mxu0 0.0
    %4919 = vmatpush2.msra.mxu0 0.0
    %4920 = vmatprep.subr.mxu0 0.0
    %4921 = vmatpush2.msra.mxu0 0.0
    %4922 = vmatprep.mubr.f32.mxu0 0.0
    %4923 = vmatmul.mubr.f32.gmra.mxu0 %v4856
    %v4924 = vpop.f32.mrf.mxu0
    %v4925 = vadd.f32 0.0, %v4924
    %v4926 = vpop.f32.mrf.mxu0
    %4927 = vdwg.mxu0
    %4929 = vrot.lane.b32.xlu0 %v4925, 16
    %v4930 = vpop.permute.xlu0 %4929
    %4932 = vst.msk [vmem:[#allocation2] sm:$0xff] %vm1260, %v4930
    %4933 = vrot.lane.b32.xlu0 %v4419, 104
    %v4934 = vpop.permute.xlu0 %4933
    %4935 = vrot.lane.b32.xlu0 %v4419, 72
    %v4936 = vpop.permute.xlu0 %4935
    %v4937 = vsel %vm633, %v4934, 0
    %v4939 = vsel %vm633, %v4936, 0
    %4941 = vmatprep.subr.mxu0 0.0
    %4942 = vmatpush1.xpose.msra.mxu0 0.0
    %4943 = vmatprep.subr.mxu0 0.0
    %4944 = vmatpush1.xpose.msra.mxu0 0.0
    %4945 = vmatprep.subr.mxu0 0.0
    %4946 = vmatpush1.xpose.msra.mxu0 0.0
    %4947 = vmatprep.subr.mxu0 0.0
    %4948 = vmatpush1.xpose.msra.mxu0 0.0
    %4949 = vmatprep.subr.mxu0 0.0
    %4950 = vmatpush1.xpose.msra.mxu0 0.0
    %4951 = vmatprep.subr.mxu0 0.0
    %4952 = vmatpush1.xpose.msra.mxu0 0.0
    %4953 = vmatprep.subr.mxu0 0.0
    %4954 = vmatpush1.xpose.msra.mxu0 0.0
    %4955 = vmatprep.subr.mxu0 0.0
    %4956 = vmatpush1.xpose.msra.mxu0 0.0
    %4957 = vmatprep.subr.mxu0 0.0
    %4958 = vmatpush1.xpose.msra.mxu0 0.0
    %4959 = vmatprep.subr.mxu0 0.0
    %4960 = vmatpush1.xpose.msra.mxu0 0.0
    %4961 = vmatprep.subr.mxu0 0.0
    %4962 = vmatpush1.xpose.msra.mxu0 0.0
    %4963 = vmatprep.subr.mxu0 0.0
    %4964 = vmatpush1.xpose.msra.mxu0 0.0
    %4965 = vmatprep.subr.mxu0 0.0
    %4966 = vmatpush1.xpose.msra.mxu0 0.0
    %4967 = vmatprep.subr.mxu0 0.0
    %4968 = vmatpush1.xpose.msra.mxu0 0.0
    %4969 = vmatprep.subr.mxu0 0.0
    %4970 = vmatpush1.xpose.msra.mxu0 0.0
    %4971 = vmatprep.subr.mxu0 0.0
    %4972 = vmatpush1.xpose.msra.mxu0 %v4939
    %4973 = vmatprep.subr.mxu0 0.0
    %4974 = vmatpush2.xpose.msra.mxu0 0.0
    %4975 = vmatprep.subr.mxu0 0.0
    %4976 = vmatpush2.xpose.msra.mxu0 0.0
    %4977 = vmatprep.subr.mxu0 0.0
    %4978 = vmatpush2.xpose.msra.mxu0 0.0
    %4979 = vmatprep.subr.mxu0 0.0
    %4980 = vmatpush2.xpose.msra.mxu0 0.0
    %4981 = vmatprep.subr.mxu0 0.0
    %4982 = vmatpush2.xpose.msra.mxu0 0.0
    %4983 = vmatprep.subr.mxu0 0.0
    %4984 = vmatpush2.xpose.msra.mxu0 0.0
    %4985 = vmatprep.subr.mxu0 0.0
    %4986 = vmatpush2.xpose.msra.mxu0 0.0
    %4987 = vmatprep.subr.mxu0 0.0
    %4988 = vmatpush2.xpose.msra.mxu0 0.0
    %4989 = vmatprep.subr.mxu0 0.0
    %4990 = vmatpush2.xpose.msra.mxu0 0.0
    %4991 = vmatprep.subr.mxu0 0.0
    %4992 = vmatpush2.xpose.msra.mxu0 0.0
    %4993 = vmatprep.subr.mxu0 0.0
    %4994 = vmatpush2.xpose.msra.mxu0 0.0
    %4995 = vmatprep.subr.mxu0 0.0
    %4996 = vmatpush2.xpose.msra.mxu0 0.0
    %4997 = vmatprep.subr.mxu0 0.0
    %4998 = vmatpush2.xpose.msra.mxu0 0.0
    %4999 = vmatprep.subr.mxu0 0.0
    %5000 = vmatpush2.xpose.msra.mxu0 0.0
    %5001 = vmatprep.subr.mxu0 0.0
    %5002 = vmatpush2.xpose.msra.mxu0 0.0
    %5003 = vmatprep.subr.mxu0 0.0
    %5004 = vmatpush2.xpose.msra.mxu0 0.0
    %5005 = vmatprep.mubr.f32.mxu0 0.0
    %5006 = vmatmul.mubr.f32.gmra.mxu0 %v4937
    %v5007 = vpop.f32.mrf.mxu0
    %v5008 = vadd.f32 0.0, %v5007
    %v5009 = vpop.f32.mrf.mxu0
    %5010 = vdwg.mxu0
    %v5011 = vmul.f32 %v5008, 0.35355338
    %v5012 = vadd.f32 %v5011, %v3229
    %v5013 = vsel %vm633, %v5012, -inf
    %5014 = vmax.xlane.f32.xlu0 %v5013
    %v5015 = vpop.xlane.xlu0 %5014
    %v5016 = vsub.f32 %v5012, %v5015
    %v5017 = vmul.f32 %v5016, 1.442695
    %v5018 = vpow.pop %v5017
    %v5019 = vsel %vm633, %v5018, 0.0
    %5020 = vadd.xlane.f32.xlu0 %v5019
    %v5021 = vpop.xlane.xlu0 %5020
    %v5022 = vrcp.pop %v5021
    %v5023 = vmul.f32 %v5018, %v5022
    %5024 = vrot.lane.b32.xlu0 %v4419, 40
    %v5025 = vpop.permute.xlu0 %5024
    %v5028 = vsel %vm633, %v5023, 0
    %5030 = vmatprep.subr.mxu0 0.0
    %5031 = vmatpush1.msra.mxu0 0.0
    %5032 = vmatprep.subr.mxu0 0.0
    %5033 = vmatpush1.msra.mxu0 0.0
    %5034 = vmatprep.subr.mxu0 0.0
    %5035 = vmatpush1.msra.mxu0 0.0
    %5036 = vmatprep.subr.mxu0 0.0
    %5037 = vmatpush1.msra.mxu0 0.0
    %5038 = vmatprep.subr.mxu0 0.0
    %5039 = vmatpush1.msra.mxu0 0.0
    %5040 = vmatprep.subr.mxu0 0.0
    %5041 = vmatpush1.msra.mxu0 0.0
    %5042 = vmatprep.subr.mxu0 0.0
    %5043 = vmatpush1.msra.mxu0 0.0
    %5044 = vmatprep.subr.mxu0 0.0
    %5045 = vmatpush1.msra.mxu0 0.0
    %5046 = vmatprep.subr.mxu0 0.0
    %5047 = vmatpush1.msra.mxu0 0.0
    %5048 = vmatprep.subr.mxu0 0.0
    %5049 = vmatpush1.msra.mxu0 0.0
    %5050 = vmatprep.subr.mxu0 0.0
    %5051 = vmatpush1.msra.mxu0 0.0
    %5052 = vmatprep.subr.mxu0 0.0
    %5053 = vmatpush1.msra.mxu0 0.0
    %5054 = vmatprep.subr.mxu0 0.0
    %5055 = vmatpush1.msra.mxu0 0.0
    %5056 = vmatprep.subr.mxu0 0.0
    %5057 = vmatpush1.msra.mxu0 0.0
    %5058 = vmatprep.subr.mxu0 0.0
    %5059 = vmatpush1.msra.mxu0 0.0
    %5060 = vmatprep.subr.mxu0 0.0
    %5061 = vmatpush1.msra.mxu0 %v5025
    %5062 = vmatprep.subr.mxu0 0.0
    %5063 = vmatpush2.msra.mxu0 0.0
    %5064 = vmatprep.subr.mxu0 0.0
    %5065 = vmatpush2.msra.mxu0 0.0
    %5066 = vmatprep.subr.mxu0 0.0
    %5067 = vmatpush2.msra.mxu0 0.0
    %5068 = vmatprep.subr.mxu0 0.0
    %5069 = vmatpush2.msra.mxu0 0.0
    %5070 = vmatprep.subr.mxu0 0.0
    %5071 = vmatpush2.msra.mxu0 0.0
    %5072 = vmatprep.subr.mxu0 0.0
    %5073 = vmatpush2.msra.mxu0 0.0
    %5074 = vmatprep.subr.mxu0 0.0
    %5075 = vmatpush2.msra.mxu0 0.0
    %5076 = vmatprep.subr.mxu0 0.0
    %5077 = vmatpush2.msra.mxu0 0.0
    %5078 = vmatprep.subr.mxu0 0.0
    %5079 = vmatpush2.msra.mxu0 0.0
    %5080 = vmatprep.subr.mxu0 0.0
    %5081 = vmatpush2.msra.mxu0 0.0
    %5082 = vmatprep.subr.mxu0 0.0
    %5083 = vmatpush2.msra.mxu0 0.0
    %5084 = vmatprep.subr.mxu0 0.0
    %5085 = vmatpush2.msra.mxu0 0.0
    %5086 = vmatprep.subr.mxu0 0.0
    %5087 = vmatpush2.msra.mxu0 0.0
    %5088 = vmatprep.subr.mxu0 0.0
    %5089 = vmatpush2.msra.mxu0 0.0
    %5090 = vmatprep.subr.mxu0 0.0
    %5091 = vmatpush2.msra.mxu0 0.0
    %5092 = vmatprep.subr.mxu0 0.0
    %5093 = vmatpush2.msra.mxu0 0.0
    %5094 = vmatprep.mubr.f32.mxu0 0.0
    %5095 = vmatmul.mubr.f32.gmra.mxu0 %v5028
    %v5096 = vpop.f32.mrf.mxu0
    %v5097 = vadd.f32 0.0, %v5096
    %v5098 = vpop.f32.mrf.mxu0
    %5099 = vdwg.mxu0
    %5101 = vrot.lane.b32.xlu0 %v5097, 24
    %v5102 = vpop.permute.xlu0 %5101
    %5104 = vst.msk [vmem:[#allocation2] sm:$0xff] %vm1475, %v5102
    %v5105 = vld [vmem:[#allocation2] sm:$0xff]
    %v5107 = vlaneseq
    %v5108 = vshrl.u32 %v5107, 7
    %v5109 = vsub.s32 0, %v5108
    %v5110 = vrot.slane %v4324, %v5109
    %v5113 = vsel %vm545, %v5105, 0
    %5115 = vmatprep.subr.mxu0 0.0
    %5116 = vmatpush1.msra.mxu0 0.0
    %5117 = vmatprep.subr.mxu0 0.0
    %5118 = vmatpush1.msra.mxu0 0.0
    %5119 = vmatprep.subr.mxu0 0.0
    %5120 = vmatpush1.msra.mxu0 0.0
    %5121 = vmatprep.subr.mxu0 0.0
    %5122 = vmatpush1.msra.mxu0 0.0
    %5123 = vmatprep.subr.mxu0 0.0
    %5124 = vmatpush1.msra.mxu0 0.0
    %5125 = vmatprep.subr.mxu0 0.0
    %5126 = vmatpush1.msra.mxu0 0.0
    %5127 = vmatprep.subr.mxu0 0.0
    %5128 = vmatpush1.msra.mxu0 0.0
    %5129 = vmatprep.subr.mxu0 0.0
    %5130 = vmatpush1.msra.mxu0 0.0
    %5131 = vmatprep.subr.mxu0 0.0
    %5132 = vmatpush1.msra.mxu0 0.0
    %5133 = vmatprep.subr.mxu0 0.0
    %5134 = vmatpush1.msra.mxu0 0.0
    %5135 = vmatprep.subr.mxu0 0.0
    %5136 = vmatpush1.msra.mxu0 0.0
    %5137 = vmatprep.subr.mxu0 0.0
    %5138 = vmatpush1.msra.mxu0 0.0
    %5139 = vmatprep.subr.mxu0 0.0
    %5140 = vmatpush1.msra.mxu0 %v4323
    %5141 = vmatprep.subr.mxu0 0.0
    %5142 = vmatpush1.msra.mxu0 %v4322
    %5143 = vmatprep.subr.mxu0 0.0
    %5144 = vmatpush1.msra.mxu0 %v4321
    %5145 = vmatprep.subr.mxu0 0.0
    %5146 = vmatpush1.msra.mxu0 %v4320
    %5147 = vmatprep.subr.mxu0 0.0
    %5148 = vmatpush2.msra.mxu0 0.0
    %5149 = vmatprep.subr.mxu0 0.0
    %5150 = vmatpush2.msra.mxu0 0.0
    %5151 = vmatprep.subr.mxu0 0.0
    %5152 = vmatpush2.msra.mxu0 0.0
    %5153 = vmatprep.subr.mxu0 0.0
    %5154 = vmatpush2.msra.mxu0 0.0
    %5155 = vmatprep.subr.mxu0 0.0
    %5156 = vmatpush2.msra.mxu0 0.0
    %5157 = vmatprep.subr.mxu0 0.0
    %5158 = vmatpush2.msra.mxu0 0.0
    %5159 = vmatprep.subr.mxu0 0.0
    %5160 = vmatpush2.msra.mxu0 0.0
    %5161 = vmatprep.subr.mxu0 0.0
    %5162 = vmatpush2.msra.mxu0 0.0
    %5163 = vmatprep.subr.mxu0 0.0
    %5164 = vmatpush2.msra.mxu0 0.0
    %5165 = vmatprep.subr.mxu0 0.0
    %5166 = vmatpush2.msra.mxu0 0.0
    %5167 = vmatprep.subr.mxu0 0.0
    %5168 = vmatpush2.msra.mxu0 0.0
    %5169 = vmatprep.subr.mxu0 0.0
    %5170 = vmatpush2.msra.mxu0 0.0
    %5171 = vmatprep.subr.mxu0 0.0
    %5172 = vmatpush2.msra.mxu0 0.0
    %5173 = vmatprep.subr.mxu0 0.0
    %5174 = vmatpush2.msra.mxu0 0.0
    %5175 = vmatprep.subr.mxu0 0.0
    %5176 = vmatpush2.msra.mxu0 0.0
    %5177 = vmatprep.subr.mxu0 0.0
    %5178 = vmatpush2.msra.mxu0 0.0
    %5179 = vmatprep.mubr.f32.mxu0 0.0
    %5180 = vmatmul.mubr.f32.gmra.mxu0 %v5113
    %v5181 = vpop.f32.mrf.mxu0
    %v5182 = vadd.f32 %v5110, %v5181
    %v5183 = vpop.f32.mrf.mxu0
    %5184 = vdwg.mxu0
    %v5185 = vadd.f32 %v4314, %v5182
    %v5186 = vsel %vm545, %v5185, 0.0
    %5187 = vadd.xlane.f32.xlu0 %v5186
    %v5188 = vpop.xlane.xlu0 %5187
    %v5189 = vmul.f32 %v5188, %v1575
    %v5190 = vsub.f32 %v5185, %v5189
    %v5191 = vmul.f32 %v5190, %v5190
    %v5192 = vsel %vm545, %v5191, 0.0
    %5193 = vadd.xlane.f32.xlu0 %v5192
    %v5194 = vpop.xlane.xlu0 %5193
    %v5195 = vmul.f32 %v5194, %v1575
    %v5196 = vadd.f32 %v5195, 1e-05
    %v5197 = vrsqrt.pop %v5196
    %v5198 = vmul.f32 %v5190, %v5197
    %v5200 = vlaneseq
    %v5201 = vshrl.u32 %v5200, 7
    %v5202 = vsub.s32 0, %v5201
    %v5203 = vrot.slane %v4325, %v5202
    %v5205 = vmul.f32 %v5198, %v5203
    %v5207 = vlaneseq
    %v5208 = vshrl.u32 %v5207, 7
    %v5209 = vsub.s32 0, %v5208
    %v5210 = vrot.slane %v4326, %v5209
    %v5212 = vadd.f32 %v5205, %v5210
    %v5214 = vlaneseq
    %v5215 = vshrl.u32 %v5214, 7
    %v5216 = vsub.s32 0, %v5215
    %v5217 = vrot.slane %v4331, %v5216
    %v5220 = vsel %vm545, %v5212, 0
    %5222 = vmatprep.subr.mxu0 0.0
    %5223 = vmatpush1.msra.mxu0 0.0
    %5224 = vmatprep.subr.mxu0 0.0
    %5225 = vmatpush1.msra.mxu0 0.0
    %5226 = vmatprep.subr.mxu0 0.0
    %5227 = vmatpush1.msra.mxu0 0.0
    %5228 = vmatprep.subr.mxu0 0.0
    %5229 = vmatpush1.msra.mxu0 0.0
    %5230 = vmatprep.subr.mxu0 0.0
    %5231 = vmatpush1.msra.mxu0 0.0
    %5232 = vmatprep.subr.mxu0 0.0
    %5233 = vmatpush1.msra.mxu0 0.0
    %5234 = vmatprep.subr.mxu0 0.0
    %5235 = vmatpush1.msra.mxu0 0.0
    %5236 = vmatprep.subr.mxu0 0.0
    %5237 = vmatpush1.msra.mxu0 0.0
    %5238 = vmatprep.subr.mxu0 0.0
    %5239 = vmatpush1.msra.mxu0 0.0
    %5240 = vmatprep.subr.mxu0 0.0
    %5241 = vmatpush1.msra.mxu0 0.0
    %5242 = vmatprep.subr.mxu0 0.0
    %5243 = vmatpush1.msra.mxu0 0.0
    %5244 = vmatprep.subr.mxu0 0.0
    %5245 = vmatpush1.msra.mxu0 0.0
    %5246 = vmatprep.subr.mxu0 0.0
    %5247 = vmatpush1.msra.mxu0 %v4330
    %5248 = vmatprep.subr.mxu0 0.0
    %5249 = vmatpush1.msra.mxu0 %v4329
    %5250 = vmatprep.subr.mxu0 0.0
    %5251 = vmatpush1.msra.mxu0 %v4328
    %5252 = vmatprep.subr.mxu0 0.0
    %5253 = vmatpush1.msra.mxu0 %v4327
    %5254 = vmatprep.subr.mxu0 0.0
    %5255 = vmatpush2.msra.mxu0 0.0
    %5256 = vmatprep.subr.mxu0 0.0
    %5257 = vmatpush2.msra.mxu0 0.0
    %5258 = vmatprep.subr.mxu0 0.0
    %5259 = vmatpush2.msra.mxu0 0.0
    %5260 = vmatprep.subr.mxu0 0.0
    %5261 = vmatpush2.msra.mxu0 0.0
    %5262 = vmatprep.subr.mxu0 0.0
    %5263 = vmatpush2.msra.mxu0 0.0
    %5264 = vmatprep.subr.mxu0 0.0
    %5265 = vmatpush2.msra.mxu0 0.0
    %5266 = vmatprep.subr.mxu0 0.0
    %5267 = vmatpush2.msra.mxu0 0.0
    %5268 = vmatprep.subr.mxu0 0.0
    %5269 = vmatpush2.msra.mxu0 0.0
    %5270 = vmatprep.subr.mxu0 0.0
    %5271 = vmatpush2.msra.mxu0 0.0
    %5272 = vmatprep.subr.mxu0 0.0
    %5273 = vmatpush2.msra.mxu0 0.0
    %5274 = vmatprep.subr.mxu0 0.0
    %5275 = vmatpush2.msra.mxu0 0.0
    %5276 = vmatprep.subr.mxu0 0.0
    %5277 = vmatpush2.msra.mxu0 0.0
    %5278 = vmatprep.subr.mxu0 0.0
    %5279 = vmatpush2.msra.mxu0 0.0
    %5280 = vmatprep.subr.mxu0 0.0
    %5281 = vmatpush2.msra.mxu0 0.0
    %5282 = vmatprep.subr.mxu0 0.0
    %5283 = vmatpush2.msra.mxu0 0.0
    %5284 = vmatprep.subr.mxu0 0.0
    %5285 = vmatpush2.msra.mxu0 0.0
    %5286 = vmatprep.mubr.f32.mxu0 0.0
    %5287 = vmatmul.mubr.f32.gmra.mxu0 %v5220
    %v5288 = vpop.f32.mrf.mxu0
    %v5289 = vadd.f32 %v5217, %v5288
    %v5290 = vpop.f32.mrf.mxu0
    %5291 = vdwg.mxu0
    %v5292 = vmax.f32 %v5289, 0.0
    %v5294 = vlaneseq
    %v5295 = vshrl.u32 %v5294, 7
    %v5296 = vsub.s32 0, %v5295
    %v5297 = vrot.slane %v4340, %v5296
    %v5300 = vsel %vm1707, %v5292, 0
    %5302 = vmatprep.subr.mxu0 0.0
    %5303 = vmatpush1.msra.mxu0 0.0
    %5304 = vmatprep.subr.mxu0 0.0
    %5305 = vmatpush1.msra.mxu0 0.0
    %5306 = vmatprep.subr.mxu0 0.0
    %5307 = vmatpush1.msra.mxu0 0.0
    %5308 = vmatprep.subr.mxu0 0.0
    %5309 = vmatpush1.msra.mxu0 0.0
    %5310 = vmatprep.subr.mxu0 0.0
    %5311 = vmatpush1.msra.mxu0 0.0
    %5312 = vmatprep.subr.mxu0 0.0
    %5313 = vmatpush1.msra.mxu0 0.0
    %5314 = vmatprep.subr.mxu0 0.0
    %5315 = vmatpush1.msra.mxu0 0.0
    %5316 = vmatprep.subr.mxu0 0.0
    %5317 = vmatpush1.msra.mxu0 0.0
    %5318 = vmatprep.subr.mxu0 0.0
    %5319 = vmatpush1.msra.mxu0 %v4339
    %5320 = vmatprep.subr.mxu0 0.0
    %5321 = vmatpush1.msra.mxu0 %v4338
    %5322 = vmatprep.subr.mxu0 0.0
    %5323 = vmatpush1.msra.mxu0 %v4337
    %5324 = vmatprep.subr.mxu0 0.0
    %5325 = vmatpush1.msra.mxu0 %v4336
    %5326 = vmatprep.subr.mxu0 0.0
    %5327 = vmatpush1.msra.mxu0 %v4335
    %5328 = vmatprep.subr.mxu0 0.0
    %5329 = vmatpush1.msra.mxu0 %v4334
    %5330 = vmatprep.subr.mxu0 0.0
    %5331 = vmatpush1.msra.mxu0 %v4333
    %5332 = vmatprep.subr.mxu0 0.0
    %5333 = vmatpush1.msra.mxu0 %v4332
    %5334 = vmatprep.subr.mxu0 0.0
    %5335 = vmatpush2.msra.mxu0 0.0
    %5336 = vmatprep.subr.mxu0 0.0
    %5337 = vmatpush2.msra.mxu0 0.0
    %5338 = vmatprep.subr.mxu0 0.0
    %5339 = vmatpush2.msra.mxu0 0.0
    %5340 = vmatprep.subr.mxu0 0.0
    %5341 = vmatpush2.msra.mxu0 0.0
    %5342 = vmatprep.subr.mxu0 0.0
    %5343 = vmatpush2.msra.mxu0 0.0
    %5344 = vmatprep.subr.mxu0 0.0
    %5345 = vmatpush2.msra.mxu0 0.0
    %5346 = vmatprep.subr.mxu0 0.0
    %5347 = vmatpush2.msra.mxu0 0.0
    %5348 = vmatprep.subr.mxu0 0.0
    %5349 = vmatpush2.msra.mxu0 0.0
    %5350 = vmatprep.subr.mxu0 0.0
    %5351 = vmatpush2.msra.mxu0 0.0
    %5352 = vmatprep.subr.mxu0 0.0
    %5353 = vmatpush2.msra.mxu0 0.0
    %5354 = vmatprep.subr.mxu0 0.0
    %5355 = vmatpush2.msra.mxu0 0.0
    %5356 = vmatprep.subr.mxu0 0.0
    %5357 = vmatpush2.msra.mxu0 0.0
    %5358 = vmatprep.subr.mxu0 0.0
    %5359 = vmatpush2.msra.mxu0 0.0
    %5360 = vmatprep.subr.mxu0 0.0
    %5361 = vmatpush2.msra.mxu0 0.0
    %5362 = vmatprep.subr.mxu0 0.0
    %5363 = vmatpush2.msra.mxu0 0.0
    %5364 = vmatprep.subr.mxu0 0.0
    %5365 = vmatpush2.msra.mxu0 0.0
    %5366 = vmatprep.mubr.f32.mxu0 0.0
    %5367 = vmatmul.mubr.f32.gmra.mxu0 %v5300
    %v5368 = vpop.f32.mrf.mxu0
    %v5369 = vadd.f32 %v5297, %v5368
    %v5370 = vpop.f32.mrf.mxu0
    %5371 = vdwg.mxu0
    %v5372 = vadd.f32 %v5212, %v5369
    %v5373 = vsel %vm545, %v5372, 0.0
    %5374 = vadd.xlane.f32.xlu0 %v5373
    %v5375 = vpop.xlane.xlu0 %5374
    %v5376 = vmul.f32 %v5375, %v1575
    %v5377 = vsub.f32 %v5372, %v5376
    %v5378 = vmul.f32 %v5377, %v5377
    %v5379 = vsel %vm545, %v5378, 0.0
    %5380 = vadd.xlane.f32.xlu0 %v5379
    %v5381 = vpop.xlane.xlu0 %5380
    %v5382 = vmul.f32 %v5381, %v1575
    %v5383 = vadd.f32 %v5382, 1e-05
    %v5384 = vrsqrt.pop %v5383
    %v5385 = vmul.f32 %v5377, %v5384
    %v5387 = vlaneseq
    %v5388 = vshrl.u32 %v5387, 7
    %v5389 = vsub.s32 0, %v5388
    %v5390 = vrot.slane %v4341, %v5389
    %v5392 = vmul.f32 %v5385, %v5390
    %v5394 = vlaneseq
    %v5395 = vshrl.u32 %v5394, 7
    %v5396 = vsub.s32 0, %v5395
    %v5397 = vrot.slane %v4342, %v5396
    %v5399 = vadd.f32 %v5392, %v5397
    %vm5400 = vcmask 253952
    %5401 = vst.msk [vmem:[#allocation3] sm:$0x1] %vm5400, %v3145
    %v5404 = vunpack.c.l.s4 1983009808
    %v5405 = vunpack.c.0.s8 %v5404
    %v5406 = vlaneseq
    %v5407 = vshrl.u32 %v5406, 7
    %v5408 = vsub.s32 %v5405, %v5407
    %v5409 = vrot.slane %v3145, %v5408
    %v5410 = vrot.slane %v5409, 7
    %v5411 = vrot.slane %v5410, 2
    %5412 = vrot.lane.b32.xlu0 %v5411, 32
    %v5413 = vpop.permute.xlu0 %5412
    %vm5415 = vcmask 516352
    %5416 = vst.msk [vmem:[#allocation3] sm:$0x1] %vm5415, %v5413
    %v5417 = vcombine.high %v5409, %v5409
    %5418 = vrot.lane.b32.xlu0 %v5417, 64
    %v5419 = vpop.permute.xlu0 %5418
    %vm5421 = vcmask 778752
    %5422 = vst.msk [vmem:[#allocation3] sm:$0x1] %vm5421, %v5419
    %v5423 = vrot.slane %v5417, 7
    %v5424 = vrot.slane %v5423, 2
    %5425 = vrot.lane.b32.xlu0 %v5424, 96
    %v5426 = vpop.permute.xlu0 %5425
    %vm5428 = vcmask 1041152
    %5429 = vst.msk [vmem:[#allocation3] sm:$0x1] %vm5428, %v5426
    %v5430 = vcombine.high %v3145, %v3145
    %v5432 = vunpack.c.l.s4 1983009808
    %v5433 = vunpack.c.0.s8 %v5432
    %v5434 = vlaneseq
    %v5435 = vshrl.u32 %v5434, 7
    %v5436 = vsub.s32 %v5433, %v5435
    %v5437 = vrot.slane %v5430, %v5436
    %5439 = vst.msk [vmem:[#allocation3 + $0x2] sm:$0x1] %vm5400, %v5437
    %v5440 = vrot.slane %v5437, 7
    %v5441 = vrot.slane %v5440, 2
    %5442 = vrot.lane.b32.xlu0 %v5441, 32
    %v5443 = vpop.permute.xlu0 %5442
    %5445 = vst.msk [vmem:[#allocation3 + $0x2] sm:$0x1] %vm5415, %v5443
    %v5446 = vcombine.high %v5437, %v5437
    %5447 = vrot.lane.b32.xlu0 %v5446, 64
    %v5448 = vpop.permute.xlu0 %5447
    %5450 = vst.msk [vmem:[#allocation3 + $0x2] sm:$0x1] %vm5421, %v5448
    %v5451 = vrot.slane %v5446, 7
    %v5452 = vrot.slane %v5451, 2
    %5453 = vrot.lane.b32.xlu0 %v5452, 96
    %v5454 = vpop.permute.xlu0 %5453
    %5456 = vst.msk [vmem:[#allocation3 + $0x2] sm:$0x1] %vm5428, %v5454
    %5457 = vst.msk [vmem:[#allocation4] sm:$0x1] %vm5400, %v5399
    %5459 = vrot.lane.b32.xlu0 %v5399, 32
    %v5460 = vpop.permute.xlu0 %5459
    %vm5462 = vcmask 517377
    %5463 = vst.msk [vmem:[#allocation4 - $0x1] sm:$0x2] %vm5462, %v5460
    %5464 = vrot.lane.b32.xlu0 %v5399, 64
    %v5465 = vpop.permute.xlu0 %5464
    %vm5467 = vcmask 780802
    %5468 = vst.msk [vmem:[#allocation4 - $0x2] sm:$0x4] %vm5467, %v5465
    %5469 = vrot.lane.b32.xlu0 %v5399, 96
    %v5470 = vpop.permute.xlu0 %5469
    %vm5472 = vcmask 1044227
    %5473 = vst.msk [vmem:[#allocation4 - $0x3] sm:$0x8] %vm5472, %v5470
    %5474 = vst.msk [vmem:[#allocation3 + $0x1] sm:$0x1] %vm5400, %v3146
    %v5477 = vunpack.c.l.s4 1983009808
    %v5478 = vunpack.c.0.s8 %v5477
    %v5479 = vlaneseq
    %v5480 = vshrl.u32 %v5479, 7
    %v5481 = vsub.s32 %v5478, %v5480
    %v5482 = vrot.slane %v3146, %v5481
    %v5483 = vrot.slane %v5482, 7
    %v5484 = vrot.slane %v5483, 2
    %5485 = vrot.lane.b32.xlu0 %v5484, 32
    %v5486 = vpop.permute.xlu0 %5485
    %5488 = vst.msk [vmem:[#allocation3 + $0x1] sm:$0x1] %vm5415, %v5486
    %v5489 = vcombine.high %v5482, %v5482
    %5490 = vrot.lane.b32.xlu0 %v5489, 64
    %v5491 = vpop.permute.xlu0 %5490
    %5493 = vst.msk [vmem:[#allocation3 + $0x1] sm:$0x1] %vm5421, %v5491
    %v5494 = vrot.slane %v5489, 7
    %v5495 = vrot.slane %v5494, 2
    %5496 = vrot.lane.b32.xlu0 %v5495, 96
    %v5497 = vpop.permute.xlu0 %5496
    %5499 = vst.msk [vmem:[#allocation3 + $0x1] sm:$0x1] %vm5428, %v5497
    %v5500 = vcombine.high %v3146, %v3146
    %v5502 = vunpack.c.l.s4 1983009808
    %v5503 = vunpack.c.0.s8 %v5502
    %v5504 = vlaneseq
    %v5505 = vshrl.u32 %v5504, 7
    %v5506 = vsub.s32 %v5503, %v5505
    %v5507 = vrot.slane %v5500, %v5506
    %5509 = vst.msk [vmem:[#allocation3 + $0x3] sm:$0x1] %vm5400, %v5507
    %v5510 = vrot.slane %v5507, 7
    %v5511 = vrot.slane %v5510, 2
    %5512 = vrot.lane.b32.xlu0 %v5511, 32
    %v5513 = vpop.permute.xlu0 %5512
    %5515 = vst.msk [vmem:[#allocation3 + $0x3] sm:$0x1] %vm5415, %v5513
    %v5516 = vcombine.high %v5507, %v5507
    %5517 = vrot.lane.b32.xlu0 %v5516, 64
    %v5518 = vpop.permute.xlu0 %5517
    %5520 = vst.msk [vmem:[#allocation3 + $0x3] sm:$0x1] %vm5421, %v5518
    %v5521 = vrot.slane %v5516, 7
    %v5522 = vrot.slane %v5521, 2
    %5523 = vrot.lane.b32.xlu0 %v5522, 96
    %v5524 = vpop.permute.xlu0 %5523
    %5526 = vst.msk [vmem:[#allocation3 + $0x3] sm:$0x1] %vm5428, %v5524
    %vm5527 = vcmask 258052
    %5528 = vst.msk [vmem:[#allocation4 - $0x3] sm:$0x10] %vm5527, %v5399
    %vm5529 = vcmask 521477
    %5530 = vst.msk [vmem:[#allocation4 - $0x4] sm:$0x20] %vm5529, %v5460
    %vm5531 = vcmask 784902
    %5532 = vst.msk [vmem:[#allocation4 - $0x5] sm:$0x40] %vm5531, %v5465
    %vm5533 = vcmask 1048327
    %5534 = vst.msk [vmem:[#allocation4 - $0x6] sm:$0x80] %vm5533, %v5470
    %v5535 = vld [vmem:[#allocation3] sm:$0xf]
    %v5536 = vld [vmem:[%s115] sm:$0xff]
    %v5537 = vld [vmem:[%s115 + $0x8] sm:$0xff]
    %v5538 = vld [vmem:[%s115 + $0x10] sm:$0xff]
    %v5539 = vld [vmem:[%s115 + $0x18] sm:$0xff]
    %v5540 = vld [vmem:[%s115 + $0x20] sm:$0xff]
    %v5541 = vld [vmem:[%s115 + $0x28] sm:$0xff]
    %v5542 = vld [vmem:[%s115 + $0x30] sm:$0xff]
    %v5543 = vld [vmem:[%s115 + $0x38] sm:$0xff]
    %v5544 = vld [vmem:[%s115 + $0x40] sm:$0xff]
    %v5545 = vld [vmem:[%s115 + $0x48] sm:$0xff]
    %v5546 = vld [vmem:[%s115 + $0x50] sm:$0xff]
    %v5547 = vld [vmem:[%s115 + $0x58] sm:$0xff]
    %v5548 = vld [vmem:[%s115 + $0x60] sm:$0xff]
    %v5549 = vld [vmem:[%s115 + $0x68] sm:$0xff]
    %v5550 = vld [vmem:[%s115 + $0x70] sm:$0xff]
    %v5551 = vld [vmem:[%s115 + $0x78] sm:$0xff]
    %v5552 = vld [vmem:[%s115 + $0x80] sm:$0xff]
    %v5553 = vld [vmem:[%s115 + $0x88] sm:$0xff]
    %v5554 = vld [vmem:[%s115 + $0x90] sm:$0xff]
    %v5555 = vld [vmem:[%s115 + $0x98] sm:$0xff]
    %v5556 = vld [vmem:[%s115 + $0xa0] sm:$0xff]
    %v5557 = vld [vmem:[%s115 + $0xa8] sm:$0xff]
    %v5558 = vld [vmem:[%s115 + $0xb0] sm:$0xff]
    %v5559 = vld [vmem:[%s115 + $0xb8] sm:$0xff]
    %v5560 = vld [vmem:[%s115 + $0xc0] sm:$0xff]
    %v5561 = vld [vmem:[%s115 + $0xc8] sm:$0xff]
    %v5562 = vld [vmem:[%s115 + $0xd0] sm:$0xff]
    %v5563 = vld [vmem:[%s115 + $0xd8] sm:$0xff]
    %v5564 = vld [vmem:[%s115 + $0xe0] sm:$0xff]
    %v5565 = vld [vmem:[%s115 + $0xe8] sm:$0xff]
    %v5566 = vld [vmem:[%s115 + $0xf0] sm:$0xff]
    %v5567 = vld [vmem:[%s115 + $0xf8] sm:$0xff]
    %v5570 = vunpack.c.l.s4 1983009808
    %v5571 = vunpack.c.0.s8 %v5570
    %v5572 = vlaneseq
    %v5573 = vshrl.u32 %v5572, 7
    %v5574 = vsub.s32 %v5571, %v5573
    %v5575 = vrot.slane %v5535, %v5574
    %v5576 = vcombine.high %v5575, %v5575
    %5579 = vmatprep.subr.mxu0 0.0
    %5580 = vmatpush1.msra.mxu0 %v5551
    %5581 = vmatprep.subr.mxu0 0.0
    %5582 = vmatpush1.msra.mxu0 %v5550
    %5583 = vmatprep.subr.mxu0 0.0
    %5584 = vmatpush1.msra.mxu0 %v5549
    %5585 = vmatprep.subr.mxu0 0.0
    %5586 = vmatpush1.msra.mxu0 %v5548
    %5587 = vmatprep.subr.mxu0 0.0
    %5588 = vmatpush1.msra.mxu0 %v5547
    %5589 = vmatprep.subr.mxu0 0.0
    %5590 = vmatpush1.msra.mxu0 %v5546
    %5591 = vmatprep.subr.mxu0 0.0
    %5592 = vmatpush1.msra.mxu0 %v5545
    %5593 = vmatprep.subr.mxu0 0.0
    %5594 = vmatpush1.msra.mxu0 %v5544
    %5595 = vmatprep.subr.mxu0 0.0
    %5596 = vmatpush1.msra.mxu0 %v5543
    %5597 = vmatprep.subr.mxu0 0.0
    %5598 = vmatpush1.msra.mxu0 %v5542
    %5599 = vmatprep.subr.mxu0 0.0
    %5600 = vmatpush1.msra.mxu0 %v5541
    %5601 = vmatprep.subr.mxu0 0.0
    %5602 = vmatpush1.msra.mxu0 %v5540
    %5603 = vmatprep.subr.mxu0 0.0
    %5604 = vmatpush1.msra.mxu0 %v5539
    %5605 = vmatprep.subr.mxu0 0.0
    %5606 = vmatpush1.msra.mxu0 %v5538
    %5607 = vmatprep.subr.mxu0 0.0
    %5608 = vmatpush1.msra.mxu0 %v5537
    %5609 = vmatprep.subr.mxu0 0.0
    %5610 = vmatpush1.msra.mxu0 %v5536
    %5611 = vmatprep.subr.mxu0 0.0
    %5612 = vmatpush2.msra.mxu0 %v5567
    %5613 = vmatprep.subr.mxu0 0.0
    %5614 = vmatpush2.msra.mxu0 %v5566
    %5615 = vmatprep.subr.mxu0 0.0
    %5616 = vmatpush2.msra.mxu0 %v5565
    %5617 = vmatprep.subr.mxu0 0.0
    %5618 = vmatpush2.msra.mxu0 %v5564
    %5619 = vmatprep.subr.mxu0 0.0
    %5620 = vmatpush2.msra.mxu0 %v5563
    %5621 = vmatprep.subr.mxu0 0.0
    %5622 = vmatpush2.msra.mxu0 %v5562
    %5623 = vmatprep.subr.mxu0 0.0
    %5624 = vmatpush2.msra.mxu0 %v5561
    %5625 = vmatprep.subr.mxu0 0.0
    %5626 = vmatpush2.msra.mxu0 %v5560
    %5627 = vmatprep.subr.mxu0 0.0
    %5628 = vmatpush2.msra.mxu0 %v5559
    %5629 = vmatprep.subr.mxu0 0.0
    %5630 = vmatpush2.msra.mxu0 %v5558
    %5631 = vmatprep.subr.mxu0 0.0
    %5632 = vmatpush2.msra.mxu0 %v5557
    %5633 = vmatprep.subr.mxu0 0.0
    %5634 = vmatpush2.msra.mxu0 %v5556
    %5635 = vmatprep.subr.mxu0 0.0
    %5636 = vmatpush2.msra.mxu0 %v5555
    %5637 = vmatprep.subr.mxu0 0.0
    %5638 = vmatpush2.msra.mxu0 %v5554
    %5639 = vmatprep.subr.mxu0 0.0
    %5640 = vmatpush2.msra.mxu0 %v5553
    %5641 = vmatprep.subr.mxu0 0.0
    %5642 = vmatpush2.msra.mxu0 %v5552
    %5643 = vmatprep.mubr.f32.mxu0 %v5576
    %5644 = vmatmul.mubr.f32.gmra.mxu0 %v5575
    %v5645 = vpop.f32.mrf.mxu0
    %v5646 = vadd.f32 0.0, %v5645
    %v5647 = vpop.f32.mrf.mxu0
    %5648 = vdwg.mxu0
    %v5649 = vld [vmem:[#allocation4] sm:$0x3]
    %v5650 = vld [vmem:[%s117] sm:$0xff]
    %v5651 = vld [vmem:[%s117 + $0x8] sm:$0xff]
    %v5652 = vld [vmem:[%s117 + $0x10] sm:$0xff]
    %v5653 = vld [vmem:[%s117 + $0x18] sm:$0xff]
    %v5654 = vld [vmem:[%s117 + $0x20] sm:$0xff]
    %v5655 = vld [vmem:[%s117 + $0x28] sm:$0xff]
    %v5656 = vld [vmem:[%s117 + $0x30] sm:$0xff]
    %v5657 = vld [vmem:[%s117 + $0x38] sm:$0xff]
    %v5658 = vld [vmem:[%s117 + $0x40] sm:$0xff]
    %v5659 = vld [vmem:[%s117 + $0x48] sm:$0xff]
    %v5660 = vld [vmem:[%s117 + $0x50] sm:$0xff]
    %v5661 = vld [vmem:[%s117 + $0x58] sm:$0xff]
    %v5662 = vld [vmem:[%s117 + $0x60] sm:$0xff]
    %v5663 = vld [vmem:[%s117 + $0x68] sm:$0xff]
    %v5664 = vld [vmem:[%s117 + $0x70] sm:$0xff]
    %v5665 = vld [vmem:[%s117 + $0x78] sm:$0xff]
    %5666 = vmatprep.subr.mxu0 0.0
    %5667 = vmatpush1.msra.mxu0 %v5665
    %5668 = vmatprep.subr.mxu0 0.0
    %5669 = vmatpush1.msra.mxu0 %v5664
    %5670 = vmatprep.subr.mxu0 0.0
    %5671 = vmatpush1.msra.mxu0 %v5663
    %5672 = vmatprep.subr.mxu0 0.0
    %5673 = vmatpush1.msra.mxu0 %v5662
    %5674 = vmatprep.subr.mxu0 0.0
    %5675 = vmatpush1.msra.mxu0 %v5661
    %5676 = vmatprep.subr.mxu0 0.0
    %5677 = vmatpush1.msra.mxu0 %v5660
    %5678 = vmatprep.subr.mxu0 0.0
    %5679 = vmatpush1.msra.mxu0 %v5659
    %5680 = vmatprep.subr.mxu0 0.0
    %5681 = vmatpush1.msra.mxu0 %v5658
    %5682 = vmatprep.subr.mxu0 0.0
    %5683 = vmatpush1.msra.mxu0 %v5657
    %5684 = vmatprep.subr.mxu0 0.0
    %5685 = vmatpush1.msra.mxu0 %v5656
    %5686 = vmatprep.subr.mxu0 0.0
    %5687 = vmatpush1.msra.mxu0 %v5655
    %5688 = vmatprep.subr.mxu0 0.0
    %5689 = vmatpush1.msra.mxu0 %v5654
    %5690 = vmatprep.subr.mxu0 0.0
    %5691 = vmatpush1.msra.mxu0 %v5653
    %5692 = vmatprep.subr.mxu0 0.0
    %5693 = vmatpush1.msra.mxu0 %v5652
    %5694 = vmatprep.subr.mxu0 0.0
    %5695 = vmatpush1.msra.mxu0 %v5651
    %5696 = vmatprep.subr.mxu0 0.0
    %5697 = vmatpush1.msra.mxu0 %v5650
    %5698 = vmatprep.subr.mxu0 0.0
    %5699 = vmatpush2.msra.mxu0 0.0
    %5700 = vmatprep.subr.mxu0 0.0
    %5701 = vmatpush2.msra.mxu0 0.0
    %5702 = vmatprep.subr.mxu0 0.0
    %5703 = vmatpush2.msra.mxu0 0.0
    %5704 = vmatprep.subr.mxu0 0.0
    %5705 = vmatpush2.msra.mxu0 0.0
    %5706 = vmatprep.subr.mxu0 0.0
    %5707 = vmatpush2.msra.mxu0 0.0
    %5708 = vmatprep.subr.mxu0 0.0
    %5709 = vmatpush2.msra.mxu0 0.0
    %5710 = vmatprep.subr.mxu0 0.0
    %5711 = vmatpush2.msra.mxu0 0.0
    %5712 = vmatprep.subr.mxu0 0.0
    %5713 = vmatpush2.msra.mxu0 0.0
    %5714 = vmatprep.subr.mxu0 0.0
    %5715 = vmatpush2.msra.mxu0 0.0
    %5716 = vmatprep.subr.mxu0 0.0
    %5717 = vmatpush2.msra.mxu0 0.0
    %5718 = vmatprep.subr.mxu0 0.0
    %5719 = vmatpush2.msra.mxu0 0.0
    %5720 = vmatprep.subr.mxu0 0.0
    %5721 = vmatpush2.msra.mxu0 0.0
    %5722 = vmatprep.subr.mxu0 0.0
    %5723 = vmatpush2.msra.mxu0 0.0
    %5724 = vmatprep.subr.mxu0 0.0
    %5725 = vmatpush2.msra.mxu0 0.0
    %5726 = vmatprep.subr.mxu0 0.0
    %5727 = vmatpush2.msra.mxu0 0.0
    %5728 = vmatprep.subr.mxu0 0.0
    %5729 = vmatpush2.msra.mxu0 0.0
    %5730 = vmatprep.mubr.f32.mxu0 0.0
    %5731 = vmatmul.mubr.f32.gmra.mxu0 %v5649
    %v5732 = vpop.f32.mrf.mxu0
    %v5733 = vadd.f32 0.0, %v5732
    %v5734 = vpop.f32.mrf.mxu0
    %5735 = vdwg.mxu0
    %v5736 = vld [vmem:[#allocation26] sm:$0x1]
    %v5737 = vadd.f32 %v5646, %v5733
    %v5739 = vlaneseq
    %v5740 = vshrl.u32 %v5739, 7
    %v5741 = vsub.s32 0, %v5740
    %v5742 = vrot.slane %v5736, %v5741
    %v5744 = vadd.f32 %v5737, %v5742
    %vm5745 = vcmask 9216
    %v5746 = vsel %vm5745, %v5744, -inf
    %5747 = vmax.xlane.f32.xlu0 %v5746
    %v5748 = vpop.xlane.xlu0 %5747
    %v5749 = vsub.f32 %v5744, %v5748
    %v5750 = vmul.f32 %v5749, 1.442695
    %v5751 = vpow.pop %v5750
    %v5752 = vsel %vm5745, %v5751, 0.0
    %5753 = vadd.xlane.f32.xlu0 %v5752
    %v5754 = vpop.xlane.xlu0 %5753
    %v5755 = vrcp.pop %v5754
    %v5756 = vmul.f32 %v5751, %v5755
    %5758 = vset.pattern.permute.xlu0 0
    %5759 = vperm.xlu0 %5758, %v5756
    %v5760 = vpop.permute.xlu0 %5759
    %v5762 = vmul.f32 %v5760, %v5646
    %5763 = vset.pattern.permute.xlu0 1
    %5764 = vperm.xlu0 %5763, %v5756
    %v5765 = vpop.permute.xlu0 %5764
    %v5767 = vmul.f32 %v5765, %v5733
    %v5768 = vadd.f32 %v5762, %v5767
    %v5769 = vadd.f32 %v5768, %v5742
    %5771 = vrot.lane.b32.xlu0 %v5769, 126
    %v5772 = vpop.permute.xlu0 %5771
    %vm5774 = vcmask 25600
    %5775 = vst.msk [vmem:[#allocation28] sm:$0x3] %vm5774, %v5772
    // Predicated region
    $region298: #{gtn_forward.1} parent=1 // pred_check
      _
    $region299: #{gtn_forward.1} parent=1 // pred_check_branch
      %5777 = sbr.rel (0) target = $region301
    $region300: #{gtn_forward.1} parent=1 // pred_region
      %s5779 = ssub.s32 32, 32
      %5780 = vsyncadd [#allocation7], %s5779
      %s5782 = sshll.u32 [#allocation28], 4
      %s5783 = int_to_ptr.vmem [resolvable:$true] %s5782
      %5785 = dma.vmem_to_hbm [thread:$0]  %s5783, 32, %s121, [#allocation7]
    $region301: #{gtn_forward.1} parent=1 // pred_fallthru
      _
    // Predicated region
    $region302: #{gtn_forward.1} parent=1 // pred_check
      _
    $region303: #{gtn_forward.1} parent=1 // pred_check_branch
      %5787 = sbr.rel (0) target = $region305
    $region304: #{gtn_forward.1} parent=1 // pred_region
      %5788 = dma.done [#allocation7], 32
    $region305: #{gtn_forward.1} parent=1 // pred_fallthru
      _
    %5789 = vsyncpa [#allocation6], 1
    %5790 = vsyncpa [#allocation9], 1
    %5791 = vsyncpa [#allocation12], 1
    %5792 = vsyncpa [#allocation15], 1
    %5793 = vsyncpa [#allocation18], 1
    %5794 = vsyncpa [#allocation21], 1
    %5795 = vsyncpa [#allocation24], 1
    %5796 = vsyncpa [#allocation27], 1
    %5797 = vsyncpa [#allocation7], 1

</llo_original>
